<compile_context>
chip_gen: v6e
topology: v6e:2x2x1
jax: 0.10.0
libtpu: 0.0.40
codegen_flags: <defaults>
</compile_context>

<pallas_src>
import jax
import jax.numpy as jnp
import numpy as np
from jax.experimental import pallas as pl
from jax.experimental.pallas import tpu as pltpu


# -----------------------------------------------------------------------------
# Recurrent (multi-layer LSTM) kernel: one grid step == `chunk` decode timesteps.
# -----------------------------------------------------------------------------
def make_lstm_chunk_kernel(n_layers, hid_dim, chunk):
    def kernel(x_ref, h0_ref, c0_ref, *args):
        # args = [w_0..w_{L-1}, b_0..b_{L-1}, hseq_ref, h_out_ref, c_out_ref]
        w = args[0:n_layers]                       # (in_l + hid, 4*hid) bf16, [i,f,o,g]
        b = args[n_layers:2 * n_layers]            # (1, 4*hid) f32
        hseq_ref, h_out_ref, c_out_ref = args[2 * n_layers:]

        # h_out/c_out have constant index_maps -> VMEM-resident across all grid
        # steps; they double as the carried LSTM state.
        @pl.when(pl.program_id(0) == 0)
        def _init_state():
            h_out_ref[...] = h0_ref[...]
            c_out_ref[...] = c0_ref[...]

        # Sequential recurrence: unrolled at trace time over the chunk.
        for s in range(chunk):
            x = x_ref[s]                           # (batch, emb_or_hid) bf16
            h_new = None
            for l in range(n_layers):              # unrolled at trace time
                h_prev = h_out_ref[l]               # (batch, hid) f32
                c_prev = c_out_ref[l]
                # One fused matmul per layer: LHS = [x || h_prev], RHS = [w_ih ; w_hh].
                lhs = jnp.concatenate([x, h_prev.astype(jnp.bfloat16)], axis=-1)
                gates = (
                    jnp.dot(lhs, w[l][...], preferred_element_type=jnp.float32)
                    + b[l][...]
                )                                   # (batch, 4*hid) f32, order [i,f,o,g]
                sig = jax.nn.sigmoid(gates[:, 0:3 * hid_dim])   # one contiguous sigmoid pass
                i_g = sig[:, 0:hid_dim]
                f_g = sig[:, hid_dim:2 * hid_dim]
                o_g = sig[:, 2 * hid_dim:3 * hid_dim]
                g_g = jnp.tanh(gates[:, 3 * hid_dim:4 * hid_dim])
                c_new = f_g * c_prev + i_g * g_g    # state math in f32 (v5e: no bf16 VPU/EUP)
                h_new = o_g * jnp.tanh(c_new)
                h_out_ref[l] = h_new
                c_out_ref[l] = c_new
                x = h_new.astype(jnp.bfloat16)
            hseq_ref[s] = h_new                     # last-layer hidden for this timestep (f32)

    return kernel


# -----------------------------------------------------------------------------
# Vocab projection kernel (hoisted out of the recurrent loop).
# -----------------------------------------------------------------------------
def fc_kernel(h_ref, w_ref, b_ref, out_ref):
    out_ref[...] = (
        jnp.dot(h_ref[...], w_ref[...], preferred_element_type=jnp.float32)
        + b_ref[...]
    )


def _pick_chunk(n_steps, max_chunk=16):
    """Largest divisor of n_steps that is <= max_chunk (==n_steps for small T)."""
    for c in range(min(n_steps, max_chunk), 0, -1):
        if n_steps % c == 0:
            return c
    return 1


def lstm_decode(params, x_all, hidden, cell):
    """Run the multi-layer LSTM for T steps inside a single pallas_call.

    x_all: (T, batch, emb) bf16 pre-gathered embeddings.
    hidden/cell: (n_layers, batch, hid) f32.
    Returns (h_seq (T, batch, hid) f32, h_out, c_out).
    """
    n_steps, batch, emb_dim = x_all.shape
    n_layers, _, hid_dim = hidden.shape
    chunk = _pick_chunk(n_steps)
    kernel = make_lstm_chunk_kernel(n_layers, hid_dim, chunk)

    def resident(arr):
        # Full-array block with a constant index_map: DMA'd to VMEM once, reused
        # by every grid step (no per-step re-fetch).
        # TODO(synk): at production sizes add pipeline_mode=pl.Buffered(1) so these
        # never-changing blocks are single-buffered (halves resident-weight VMEM).
        nd = arr.ndim
        return pl.BlockSpec(arr.shape, lambda g, _nd=nd: (0,) * _nd)

    weights = (
        [params["w"][l] for l in range(n_layers)]
        + [params["b"][l] for l in range(n_layers)]
    )

    h_seq, h_out, c_out = pl.pallas_call(
        kernel,
        grid=(n_steps // chunk,),
        in_specs=(
            [pl.BlockSpec((chunk, batch, emb_dim), lambda g: (g, 0, 0)),
             resident(hidden),
             resident(cell)]
            + [resident(a) for a in weights]
        ),
        out_specs=(
            pl.BlockSpec((chunk, batch, hid_dim), lambda g: (g, 0, 0)),
            resident(hidden),                      # carried state, flushed at end
            resident(cell),
        ),
        out_shape=(
            jax.ShapeDtypeStruct((n_steps, batch, hid_dim), jnp.float32),
            jax.ShapeDtypeStruct(hidden.shape, jnp.float32),
            jax.ShapeDtypeStruct(cell.shape, jnp.float32),
        ),
        compiler_params=pltpu.CompilerParams(
            dimension_semantics=("arbitrary",)),   # sequential state carry over time
        # hidden -> h_out, cell -> c_out buffer reuse (operand 1 -> out 1, 2 -> 2).
        input_output_aliases={1: 1, 2: 2},
        # TODO(synk): on v7x, split the batch over a leading "parallel" grid axis
        # (per-core h/c slices) once batch is large enough (>= 32) to feed both TCs.
    )(x_all, hidden, cell, *weights)
    return h_seq, h_out, c_out


def fc_project(h_seq, fc_w, fc_b, *, max_vocab_tile=1024):
    """One (T*B, hid) x (hid, vocab) matmul, tiled over the vocab axis."""
    n_steps, batch, hid_dim = h_seq.shape
    vocab = fc_w.shape[1]
    m = n_steps * batch

    assert vocab % 128 == 0, "vocab must be lane-dense (multiple of 128)"
    v_tile = vocab
    if vocab > max_vocab_tile:
        for cand in range(max_vocab_tile, 127, -128):
            if vocab % cand == 0:
                v_tile = cand
                break

    h2d = h_seq.reshape(m, hid_dim).astype(jnp.bfloat16)
    # TODO(synk): also tile the (T*B, hid) LHS over rows once T*B no longer fits VMEM.
    out = pl.pallas_call(
        fc_kernel,
        grid=(vocab // v_tile,),
        in_specs=[
            pl.BlockSpec((m, hid_dim), lambda j: (0, 0)),          # resident LHS
            pl.BlockSpec((hid_dim, v_tile), lambda j: (0, j)),
            pl.BlockSpec((1, v_tile), lambda j: (0, j)),
        ],
        out_specs=pl.BlockSpec((m, v_tile), lambda j: (0, j)),
        out_shape=jax.ShapeDtypeStruct((m, vocab), jnp.float32),
        compiler_params=pltpu.CompilerParams(
            dimension_semantics=("parallel",)),    # vocab tiles: megacore / 2nd TC on v7x
    )(h2d, fc_w, fc_b)
    return out.reshape(n_steps, batch, vocab)


# -----------------------------------------------------------------------------
# Decoder API (matches the PyTorch module's forward semantics, eval mode).
# -----------------------------------------------------------------------------
def decoder_decode(params, token_ids, hidden, cell):
    """Run the decoder for T steps.  token_ids: (T, batch) int32.

    Returns (preds (T, batch, vocab) f32, h_out, c_out)."""
    # Embedding gather hoisted out of the kernel (plain XLA gather).
    # TODO(synk): nn.Dropout on the embedding and nn.LSTM inter-layer dropout are
    # omitted (eval-mode semantics => identity).
    x_all = jnp.take(params["embedding"], token_ids, axis=0).astype(jnp.bfloat16)
    h_seq, h_out, c_out = lstm_decode(params, x_all, hidden, cell)
    preds = fc_project(h_seq, params["fc_w"], params["fc_b"])
    return preds, h_out, c_out


def decoder_forward(params, input_ids, hidden, cell):
    """Single-step equivalent of Decoder.forward(input, hidden, cell) (eval mode)."""
    preds, h_out, c_out = decoder_decode(params, input_ids[None, :], hidden, cell)
    return preds[0], h_out, c_out


# -----------------------------------------------------------------------------
# Parameter packing / reference.
# -----------------------------------------------------------------------------
def prepare_params(tp, n_layers, hid_dim):
    """Repack PyTorch-layout params for the kernels:
       - [w_ih ; w_hh] concatenated and transposed to (in+hid, 4*hid)
       - gate columns permuted [i,f,g,o] -> [i,f,o,g]
       - combined bias (b_ih + b_hh), fc transposed
       - matmul weights cast to bf16 (f32 accumulation in-kernel)."""
    perm = np.concatenate([
        np.arange(0, hid_dim),                     # i
        np.arange(hid_dim, 2 * hid_dim),           # f
        np.arange(3 * hid_dim, 4 * hid_dim),       # o
        np.arange(2 * hid_dim, 3 * hid_dim),       # g
    ])
    w, b = [], []
    for l in range(n_layers):
        w_cat = jnp.concatenate(
            [tp[f"weight_ih_l{l}"], tp[f"weight_hh_l{l}"]], axis=1).T   # (in+hid, 4*hid)
        w.append(w_cat[:, perm].astype(jnp.bfloat16))
        bias = (tp[f"bias_ih_l{l}"] + tp[f"bias_hh_l{l}"])[perm]
        b.append(bias.reshape(1, 4 * hid_dim).astype(jnp.float32))
    return {
        "embedding": tp["embedding"].astype(jnp.float32),
        "w": w,
        "b": b,
        "fc_w": tp["fc_weight"].T.astype(jnp.bfloat16),    # (hid, vocab)
        "fc_b": tp["fc_bias"].reshape(1, -1).astype(jnp.float32),
    }


def init_torch_style_params(key, output_dim, emb_dim, hid_dim, n_layers):
    """Deterministic parameters laid out like the PyTorch module's state_dict."""
    keys = iter(jax.random.split(key, 4 * n_layers + 4))
    k = 1.0 / np.sqrt(hid_dim)
    p = {"embedding": jax.random.normal(next(keys), (output_dim, emb_dim), jnp.float32)}
    for l in range(n_layers):
        in_dim = emb_dim if l == 0 else hid_dim
        p[f"weight_ih_l{l}"] = jax.random.uniform(
            next(keys), (4 * hid_dim, in_dim), jnp.float32, -k, k)
        p[f"weight_hh_l{l}"] = jax.random.uniform(
            next(keys), (4 * hid_dim, hid_dim), jnp.float32, -k, k)
        p[f"bias_ih_l{l}"] = jax.random.uniform(
            next(keys), (4 * hid_dim,), jnp.float32, -k, k)
        p[f"bias_hh_l{l}"] = jax.random.uniform(
            next(keys), (4 * hid_dim,), jnp.float32, -k, k)
    p["fc_weight"] = jax.random.uniform(
        next(keys), (output_dim, hid_dim), jnp.float32, -k, k)
    p["fc_bias"] = jax.random.uniform(next(keys), (output_dim,), jnp.float32, -k, k)
    return p


def decoder_reference(tp, token_ids, hidden, cell):
    """Pure-JAX f32 reference: loops Decoder.forward (PyTorch LSTM semantics, eval mode)."""
    n_layers, _, hid = hidden.shape
    h = [hidden[l] for l in range(n_layers)]
    c = [cell[l] for l in range(n_layers)]
    preds = []
    for t in range(token_ids.shape[0]):
        x = tp["embedding"][token_ids[t]]
        for l in range(n_layers):
            gates = (x @ tp[f"weight_ih_l{l}"].T + h[l] @ tp[f"weight_hh_l{l}"].T
                     + tp[f"bias_ih_l{l}"] + tp[f"bias_hh_l{l}"])
            i = jax.nn.sigmoid(gates[:, 0 * hid:1 * hid])
            f = jax.nn.sigmoid(gates[:, 1 * hid:2 * hid])
            g = jnp.tanh(gates[:, 2 * hid:3 * hid])
            o = jax.nn.sigmoid(gates[:, 3 * hid:4 * hid])
            c[l] = f * c[l] + i * g
            h[l] = o * jnp.tanh(c[l])
            x = h[l]
        preds.append(x @ tp["fc_weight"].T + tp["fc_bias"])
    return jnp.stack(preds), jnp.stack(h), jnp.stack(c)


if __name__ == "__main__":
    OUTPUT_DIM = 256   # vocab size (lane-dense: multiple of 128)
    EMB_DIM = 128
    HID_DIM = 128
    N_LAYERS = 2
    BATCH = 8
    T_STEPS = 6

    root = jax.random.PRNGKey(0)
    k_param, k_tok, k_h, k_c = jax.random.split(root, 4)

    torch_params = init_torch_style_params(k_param, OUTPUT_DIM, EMB_DIM, HID_DIM, N_LAYERS)
    params = prepare_params(torch_params, N_LAYERS, HID_DIM)

    token_ids = jax.random.randint(k_tok, (T_STEPS, BATCH), 0, OUTPUT_DIM, dtype=jnp.int32)
    hidden = jax.random.normal(k_h, (N_LAYERS, BATCH, HID_DIM), jnp.float32)
    cell = jax.random.normal(k_c, (N_LAYERS, BATCH, HID_DIM), jnp.float32)

    # Fused multi-step decode: chunked time grid + separate batched vocab projection.
    preds, h_new, c_new = decoder_decode(params, token_ids, hidden, cell)
    jax.block_until_ready((preds, h_new, c_new))

    preds_r, h_r, c_r = decoder_reference(torch_params, token_ids, hidden, cell)
    # bf16 matmul inputs with f32 accumulation => modest tolerance.
    np.testing.assert_allclose(np.asarray(preds), np.asarray(preds_r), rtol=2e-2, atol=2e-2)
    np.testing.assert_allclose(np.asarray(h_new), np.asarray(h_r), rtol=2e-2, atol=2e-2)
    np.testing.assert_allclose(np.asarray(c_new), np.asarray(c_r), rtol=2e-2, atol=2e-2)

    # Single-step call == Decoder.forward(input, hidden, cell).
    pred1, h1, c1 = decoder_forward(params, token_ids[0], hidden, cell)
    jax.block_until_ready((pred1, h1, c1))
    np.testing.assert_allclose(np.asarray(pred1), np.asarray(preds_r[0]), rtol=2e-2, atol=2e-2)

    assert preds.shape == (T_STEPS, BATCH, OUTPUT_DIM)
    assert h_new.shape == (N_LAYERS, BATCH, HID_DIM)
    assert c_new.shape == (N_LAYERS, BATCH, HID_DIM)
    assert pred1.shape == (BATCH, OUTPUT_DIM)
    print("KERNEL_OK")
</pallas_src>

<mosaic_0001>
module attributes {stable_mosaic.version = 11 : i64} {
  func.func @kernel(%arg0: i32, %arg1: memref<6x8x128xbf16, #tpu.memory_space<vmem>>, %arg2: memref<2x8x128xf32, #tpu.memory_space<vmem>>, %arg3: memref<2x8x128xf32, #tpu.memory_space<vmem>>, %arg4: memref<256x512xbf16, #tpu.memory_space<vmem>>, %arg5: memref<256x512xbf16, #tpu.memory_space<vmem>>, %arg6: memref<1x512xf32, #tpu.memory_space<vmem>>, %arg7: memref<1x512xf32, #tpu.memory_space<vmem>>, %arg8: memref<6x8x128xf32, #tpu.memory_space<vmem>>, %arg9: memref<2x8x128xf32, #tpu.memory_space<vmem>>, %arg10: memref<2x8x128xf32, #tpu.memory_space<vmem>>) attributes {dimension_semantics = [#tpu.dimension_semantics<arbitrary>], iteration_bounds = array<i64: 1>, scalar_prefetch = 0 : i64, scratch_operands = 0 : i64, tpu.core_type = #tpu.core_type<tc>, window_params = [{transform_indices = @transform_0, window_bounds = array<i64: 6, 8, 128>}, {pipeline_mode = #tpu.pipeline_mode<synchronous>, transform_indices = @transform_1, window_bounds = array<i64: 2, 8, 128>}, {pipeline_mode = #tpu.pipeline_mode<synchronous>, transform_indices = @transform_2, window_bounds = array<i64: 2, 8, 128>}, {pipeline_mode = #tpu.pipeline_mode<synchronous>, transform_indices = @transform_3, window_bounds = array<i64: 256, 512>}, {pipeline_mode = #tpu.pipeline_mode<synchronous>, transform_indices = @transform_4, window_bounds = array<i64: 256, 512>}, {pipeline_mode = #tpu.pipeline_mode<synchronous>, transform_indices = @transform_5, window_bounds = array<i64: 1, 512>}, {pipeline_mode = #tpu.pipeline_mode<synchronous>, transform_indices = @transform_6, window_bounds = array<i64: 1, 512>}, {transform_indices = @transform_7, window_bounds = array<i64: 6, 8, 128>}, {pipeline_mode = #tpu.pipeline_mode<synchronous>, transform_indices = @transform_8, window_bounds = array<i64: 2, 8, 128>}, {pipeline_mode = #tpu.pipeline_mode<synchronous>, transform_indices = @transform_9, window_bounds = array<i64: 2, 8, 128>}]} {
    %c0_i32 = arith.constant 0 : i32
    %0 = arith.cmpi eq, %arg0, %c0_i32 : i32
    %1 = arith.extui %0 : i1 to i32
    %c0_i32_0 = arith.constant 0 : i32
    %2 = arith.cmpi ne, %1, %c0_i32_0 : i32
    scf.if %2 {
      %c0_246 = arith.constant 0 : index
      %c0_247 = arith.constant 0 : index
      %c0_248 = arith.constant 0 : index
      %435 = vector.load %arg2[%c0_246, %c0_247, %c0_248] : memref<2x8x128xf32, #tpu.memory_space<vmem>>, vector<2x8x128xf32>
      %c0_249 = arith.constant 0 : index
      %c0_250 = arith.constant 0 : index
      %c0_251 = arith.constant 0 : index
      %436 = vector.load %arg9[%c0_249, %c0_250, %c0_251] : memref<2x8x128xf32, #tpu.memory_space<vmem>>, vector<2x8x128xf32>
      tpu.vector_store %arg9[%c0_249, %c0_250, %c0_251], %435 {strides = array<i32>} : memref<2x8x128xf32, #tpu.memory_space<vmem>>, vector<2x8x128xf32>,
      %c0_252 = arith.constant 0 : index
      %c0_253 = arith.constant 0 : index
      %c0_254 = arith.constant 0 : index
      %437 = vector.load %arg3[%c0_252, %c0_253, %c0_254] : memref<2x8x128xf32, #tpu.memory_space<vmem>>, vector<2x8x128xf32>
      %c0_255 = arith.constant 0 : index
      %c0_256 = arith.constant 0 : index
      %c0_257 = arith.constant 0 : index
      %438 = vector.load %arg10[%c0_255, %c0_256, %c0_257] : memref<2x8x128xf32, #tpu.memory_space<vmem>>, vector<2x8x128xf32>
      tpu.vector_store %arg10[%c0_255, %c0_256, %c0_257], %437 {strides = array<i32>} : memref<2x8x128xf32, #tpu.memory_space<vmem>>, vector<2x8x128xf32>,
    } else {
    }
    %c0 = arith.constant 0 : index
    %c0_1 = arith.constant 0 : index
    %c0_2 = arith.constant 0 : index
    %3 = vector.load %arg1[%c0, %c0_1, %c0_2] : memref<6x8x128xbf16, #tpu.memory_space<vmem>>, vector<1x8x128xbf16>
    %4 = vector.shape_cast %3 : vector<1x8x128xbf16> to vector<8x128xbf16>
    %c0_3 = arith.constant 0 : index
    %c0_4 = arith.constant 0 : index
    %c0_5 = arith.constant 0 : index
    %5 = vector.load %arg9[%c0_3, %c0_4, %c0_5] : memref<2x8x128xf32, #tpu.memory_space<vmem>>, vector<1x8x128xf32>
    %6 = vector.shape_cast %5 : vector<1x8x128xf32> to vector<8x128xf32>
    %c0_6 = arith.constant 0 : index
    %c0_7 = arith.constant 0 : index
    %c0_8 = arith.constant 0 : index
    %7 = vector.load %arg10[%c0_6, %c0_7, %c0_8] : memref<2x8x128xf32, #tpu.memory_space<vmem>>, vector<1x8x128xf32>
    %8 = vector.shape_cast %7 : vector<1x8x128xf32> to vector<8x128xf32>
    %9 = arith.truncf %6 : vector<8x128xf32> to vector<8x128xbf16>
    %10 = tpu.concatenate %4, %9 in 1 : vector<8x128xbf16>, vector<8x128xbf16> -> vector<8x256xbf16>
    %c0_9 = arith.constant 0 : index
    %c0_10 = arith.constant 0 : index
    %11 = vector.load %arg4[%c0_9, %c0_10] : memref<256x512xbf16, #tpu.memory_space<vmem>>, vector<256x512xbf16>
    %cst = arith.constant dense<0.000000e+00> : vector<8x512xf32>
    %12 = tpu.matmul %10, %11, %cst {dimension_numbers = #tpu.dot_dimension_numbers<[1], [0], [0], [1], [0, 0, 1, 1], [], []>} : vector<8x256xbf16>, vector<256x512xbf16>, vector<8x512xf32> -> vector<8x512xf32>
    %c0_11 = arith.constant 0 : index
    %c0_12 = arith.constant 0 : index
    %13 = vector.load %arg6[%c0_11, %c0_12] : memref<1x512xf32, #tpu.memory_space<vmem>>, vector<1x512xf32>
    %14 = vector.broadcast %13 : vector<1x512xf32> to vector<8x512xf32>
    %15 = arith.addf %12, %14 : vector<8x512xf32>
    %16 = vector.extract_strided_slice %15 {offsets = [0, 0], sizes = [8, 384], strides = [1, 1]} : vector<8x512xf32> to vector<8x384xf32>
    %17 = arith.negf %16 : vector<8x384xf32>
    %18 = math.exp %17 : vector<8x384xf32>
    %cst_13 = arith.constant 1.000000e+00 : f32
    %19 = vector.broadcast %cst_13 : f32 to vector<8x384xf32>
    %20 = arith.addf %19, %18 : vector<8x384xf32>
    %21 = arith.divf %19, %20 : vector<8x384xf32>
    %22 = vector.extract_strided_slice %21 {offsets = [0, 0], sizes = [8, 128], strides = [1, 1]} : vector<8x384xf32> to vector<8x128xf32>
    %23 = vector.extract_strided_slice %21 {offsets = [0, 128], sizes = [8, 128], strides = [1, 1]} : vector<8x384xf32> to vector<8x128xf32>
    %24 = vector.extract_strided_slice %21 {offsets = [0, 256], sizes = [8, 128], strides = [1, 1]} : vector<8x384xf32> to vector<8x128xf32>
    %25 = vector.extract_strided_slice %15 {offsets = [0, 384], sizes = [8, 128], strides = [1, 1]} : vector<8x512xf32> to vector<8x128xf32>
    %26 = math.tanh %25 : vector<8x128xf32>
    %27 = arith.mulf %23, %8 : vector<8x128xf32>
    %28 = arith.mulf %22, %26 : vector<8x128xf32>
    %29 = arith.addf %27, %28 : vector<8x128xf32>
    %30 = math.tanh %29 : vector<8x128xf32>
    %31 = arith.mulf %24, %30 : vector<8x128xf32>
    %c0_14 = arith.constant 0 : index
    %c0_15 = arith.constant 0 : index
    %c0_16 = arith.constant 0 : index
    %32 = vector.load %arg9[%c0_14, %c0_15, %c0_16] : memref<2x8x128xf32, #tpu.memory_space<vmem>>, vector<1x8x128xf32>
    %33 = vector.shape_cast %32 : vector<1x8x128xf32> to vector<8x128xf32>
    %34 = vector.shape_cast %31 : vector<8x128xf32> to vector<1x8x128xf32>
    tpu.vector_store %arg9[%c0_14, %c0_15, %c0_16], %34 {strides = array<i32>} : memref<2x8x128xf32, #tpu.memory_space<vmem>>, vector<1x8x128xf32>,
    %c0_17 = arith.constant 0 : index
    %c0_18 = arith.constant 0 : index
    %c0_19 = arith.constant 0 : index
    %35 = vector.load %arg10[%c0_17, %c0_18, %c0_19] : memref<2x8x128xf32, #tpu.memory_space<vmem>>, vector<1x8x128xf32>
    %36 = vector.shape_cast %35 : vector<1x8x128xf32> to vector<8x128xf32>
    %37 = vector.shape_cast %29 : vector<8x128xf32> to vector<1x8x128xf32>
    tpu.vector_store %arg10[%c0_17, %c0_18, %c0_19], %37 {strides = array<i32>} : memref<2x8x128xf32, #tpu.memory_space<vmem>>, vector<1x8x128xf32>,
    %38 = arith.truncf %31 : vector<8x128xf32> to vector<8x128xbf16>
    %c1 = arith.constant 1 : index
    %c0_20 = arith.constant 0 : index
    %c0_21 = arith.constant 0 : index
    %39 = vector.load %arg9[%c1, %c0_20, %c0_21] : memref<2x8x128xf32, #tpu.memory_space<vmem>>, vector<1x8x128xf32>
    %40 = vector.shape_cast %39 : vector<1x8x128xf32> to vector<8x128xf32>
    %c1_22 = arith.constant 1 : index
    %c0_23 = arith.constant 0 : index
    %c0_24 = arith.constant 0 : index
    %41 = vector.load %arg10[%c1_22, %c0_23, %c0_24] : memref<2x8x128xf32, #tpu.memory_space<vmem>>, vector<1x8x128xf32>
    %42 = vector.shape_cast %41 : vector<1x8x128xf32> to vector<8x128xf32>
    %43 = arith.truncf %40 : vector<8x128xf32> to vector<8x128xbf16>
    %44 = tpu.concatenate %38, %43 in 1 : vector<8x128xbf16>, vector<8x128xbf16> -> vector<8x256xbf16>
    %c0_25 = arith.constant 0 : index
    %c0_26 = arith.constant 0 : index
    %45 = vector.load %arg5[%c0_25, %c0_26] : memref<256x512xbf16, #tpu.memory_space<vmem>>, vector<256x512xbf16>
    %cst_27 = arith.constant dense<0.000000e+00> : vector<8x512xf32>
    %46 = tpu.matmul %44, %45, %cst_27 {dimension_numbers = #tpu.dot_dimension_numbers<[1], [0], [0], [1], [0, 0, 1, 1], [], []>} : vector<8x256xbf16>, vector<256x512xbf16>, vector<8x512xf32> -> vector<8x512xf32>
    %c0_28 = arith.constant 0 : index
    %c0_29 = arith.constant 0 : index
    %47 = vector.load %arg7[%c0_28, %c0_29] : memref<1x512xf32, #tpu.memory_space<vmem>>, vector<1x512xf32>
    %48 = vector.broadcast %47 : vector<1x512xf32> to vector<8x512xf32>
    %49 = arith.addf %46, %48 : vector<8x512xf32>
    %50 = vector.extract_strided_slice %49 {offsets = [0, 0], sizes = [8, 384], strides = [1, 1]} : vector<8x512xf32> to vector<8x384xf32>
    %51 = arith.negf %50 : vector<8x384xf32>
    %52 = math.exp %51 : vector<8x384xf32>
    %cst_30 = arith.constant 1.000000e+00 : f32
    %53 = vector.broadcast %cst_30 : f32 to vector<8x384xf32>
    %54 = arith.addf %53, %52 : vector<8x384xf32>
    %55 = arith.divf %53, %54 : vector<8x384xf32>
    %56 = vector.extract_strided_slice %55 {offsets = [0, 0], sizes = [8, 128], strides = [1, 1]} : vector<8x384xf32> to vector<8x128xf32>
    %57 = vector.extract_strided_slice %55 {offsets = [0, 128], sizes = [8, 128], strides = [1, 1]} : vector<8x384xf32> to vector<8x128xf32>
    %58 = vector.extract_strided_slice %55 {offsets = [0, 256], sizes = [8, 128], strides = [1, 1]} : vector<8x384xf32> to vector<8x128xf32>
    %59 = vector.extract_strided_slice %49 {offsets = [0, 384], sizes = [8, 128], strides = [1, 1]} : vector<8x512xf32> to vector<8x128xf32>
    %60 = math.tanh %59 : vector<8x128xf32>
    %61 = arith.mulf %57, %42 : vector<8x128xf32>
    %62 = arith.mulf %56, %60 : vector<8x128xf32>
    %63 = arith.addf %61, %62 : vector<8x128xf32>
    %64 = math.tanh %63 : vector<8x128xf32>
    %65 = arith.mulf %58, %64 : vector<8x128xf32>
    %c1_31 = arith.constant 1 : index
    %c0_32 = arith.constant 0 : index
    %c0_33 = arith.constant 0 : index
    %66 = vector.load %arg9[%c1_31, %c0_32, %c0_33] : memref<2x8x128xf32, #tpu.memory_space<vmem>>, vector<1x8x128xf32>
    %67 = vector.shape_cast %66 : vector<1x8x128xf32> to vector<8x128xf32>
    %68 = vector.shape_cast %65 : vector<8x128xf32> to vector<1x8x128xf32>
    tpu.vector_store %arg9[%c1_31, %c0_32, %c0_33], %68 {strides = array<i32>} : memref<2x8x128xf32, #tpu.memory_space<vmem>>, vector<1x8x128xf32>,
    %c1_34 = arith.constant 1 : index
    %c0_35 = arith.constant 0 : index
    %c0_36 = arith.constant 0 : index
    %69 = vector.load %arg10[%c1_34, %c0_35, %c0_36] : memref<2x8x128xf32, #tpu.memory_space<vmem>>, vector<1x8x128xf32>
    %70 = vector.shape_cast %69 : vector<1x8x128xf32> to vector<8x128xf32>
    %71 = vector.shape_cast %63 : vector<8x128xf32> to vector<1x8x128xf32>
    tpu.vector_store %arg10[%c1_34, %c0_35, %c0_36], %71 {strides = array<i32>} : memref<2x8x128xf32, #tpu.memory_space<vmem>>, vector<1x8x128xf32>,
    %c0_37 = arith.constant 0 : index
    %c0_38 = arith.constant 0 : index
    %c0_39 = arith.constant 0 : index
    %72 = vector.load %arg8[%c0_37, %c0_38, %c0_39] : memref<6x8x128xf32, #tpu.memory_space<vmem>>, vector<1x8x128xf32>
    %73 = vector.shape_cast %72 : vector<1x8x128xf32> to vector<8x128xf32>
    %74 = vector.shape_cast %65 : vector<8x128xf32> to vector<1x8x128xf32>
    tpu.vector_store %arg8[%c0_37, %c0_38, %c0_39], %74 {strides = array<i32>} : memref<6x8x128xf32, #tpu.memory_space<vmem>>, vector<1x8x128xf32>,
    %c1_40 = arith.constant 1 : index
    %c0_41 = arith.constant 0 : index
    %c0_42 = arith.constant 0 : index
    %75 = vector.load %arg1[%c1_40, %c0_41, %c0_42] : memref<6x8x128xbf16, #tpu.memory_space<vmem>>, vector<1x8x128xbf16>
    %76 = vector.shape_cast %75 : vector<1x8x128xbf16> to vector<8x128xbf16>
    %c0_43 = arith.constant 0 : index
    %c0_44 = arith.constant 0 : index
    %c0_45 = arith.constant 0 : index
    %77 = vector.load %arg9[%c0_43, %c0_44, %c0_45] : memref<2x8x128xf32, #tpu.memory_space<vmem>>, vector<1x8x128xf32>
    %78 = vector.shape_cast %77 : vector<1x8x128xf32> to vector<8x128xf32>
    %c0_46 = arith.constant 0 : index
    %c0_47 = arith.constant 0 : index
    %c0_48 = arith.constant 0 : index
    %79 = vector.load %arg10[%c0_46, %c0_47, %c0_48] : memref<2x8x128xf32, #tpu.memory_space<vmem>>, vector<1x8x128xf32>
    %80 = vector.shape_cast %79 : vector<1x8x128xf32> to vector<8x128xf32>
    %81 = arith.truncf %78 : vector<8x128xf32> to vector<8x128xbf16>
    %82 = tpu.concatenate %76, %81 in 1 : vector<8x128xbf16>, vector<8x128xbf16> -> vector<8x256xbf16>
    %c0_49 = arith.constant 0 : index
    %c0_50 = arith.constant 0 : index
    %83 = vector.load %arg4[%c0_49, %c0_50] : memref<256x512xbf16, #tpu.memory_space<vmem>>, vector<256x512xbf16>
    %cst_51 = arith.constant dense<0.000000e+00> : vector<8x512xf32>
    %84 = tpu.matmul %82, %83, %cst_51 {dimension_numbers = #tpu.dot_dimension_numbers<[1], [0], [0], [1], [0, 0, 1, 1], [], []>} : vector<8x256xbf16>, vector<256x512xbf16>, vector<8x512xf32> -> vector<8x512xf32>
    %c0_52 = arith.constant 0 : index
    %c0_53 = arith.constant 0 : index
    %85 = vector.load %arg6[%c0_52, %c0_53] : memref<1x512xf32, #tpu.memory_space<vmem>>, vector<1x512xf32>
    %86 = vector.broadcast %85 : vector<1x512xf32> to vector<8x512xf32>
    %87 = arith.addf %84, %86 : vector<8x512xf32>
    %88 = vector.extract_strided_slice %87 {offsets = [0, 0], sizes = [8, 384], strides = [1, 1]} : vector<8x512xf32> to vector<8x384xf32>
    %89 = arith.negf %88 : vector<8x384xf32>
    %90 = math.exp %89 : vector<8x384xf32>
    %cst_54 = arith.constant 1.000000e+00 : f32
    %91 = vector.broadcast %cst_54 : f32 to vector<8x384xf32>
    %92 = arith.addf %91, %90 : vector<8x384xf32>
    %93 = arith.divf %91, %92 : vector<8x384xf32>
    %94 = vector.extract_strided_slice %93 {offsets = [0, 0], sizes = [8, 128], strides = [1, 1]} : vector<8x384xf32> to vector<8x128xf32>
    %95 = vector.extract_strided_slice %93 {offsets = [0, 128], sizes = [8, 128], strides = [1, 1]} : vector<8x384xf32> to vector<8x128xf32>
    %96 = vector.extract_strided_slice %93 {offsets = [0, 256], sizes = [8, 128], strides = [1, 1]} : vector<8x384xf32> to vector<8x128xf32>
    %97 = vector.extract_strided_slice %87 {offsets = [0, 384], sizes = [8, 128], strides = [1, 1]} : vector<8x512xf32> to vector<8x128xf32>
    %98 = math.tanh %97 : vector<8x128xf32>
    %99 = arith.mulf %95, %80 : vector<8x128xf32>
    %100 = arith.mulf %94, %98 : vector<8x128xf32>
    %101 = arith.addf %99, %100 : vector<8x128xf32>
    %102 = math.tanh %101 : vector<8x128xf32>
    %103 = arith.mulf %96, %102 : vector<8x128xf32>
    %c0_55 = arith.constant 0 : index
    %c0_56 = arith.constant 0 : index
    %c0_57 = arith.constant 0 : index
    %104 = vector.load %arg9[%c0_55, %c0_56, %c0_57] : memref<2x8x128xf32, #tpu.memory_space<vmem>>, vector<1x8x128xf32>
    %105 = vector.shape_cast %104 : vector<1x8x128xf32> to vector<8x128xf32>
    %106 = vector.shape_cast %103 : vector<8x128xf32> to vector<1x8x128xf32>
    tpu.vector_store %arg9[%c0_55, %c0_56, %c0_57], %106 {strides = array<i32>} : memref<2x8x128xf32, #tpu.memory_space<vmem>>, vector<1x8x128xf32>,
    %c0_58 = arith.constant 0 : index
    %c0_59 = arith.constant 0 : index
    %c0_60 = arith.constant 0 : index
    %107 = vector.load %arg10[%c0_58, %c0_59, %c0_60] : memref<2x8x128xf32, #tpu.memory_space<vmem>>, vector<1x8x128xf32>
    %108 = vector.shape_cast %107 : vector<1x8x128xf32> to vector<8x128xf32>
    %109 = vector.shape_cast %101 : vector<8x128xf32> to vector<1x8x128xf32>
    tpu.vector_store %arg10[%c0_58, %c0_59, %c0_60], %109 {strides = array<i32>} : memref<2x8x128xf32, #tpu.memory_space<vmem>>, vector<1x8x128xf32>,
    %110 = arith.truncf %103 : vector<8x128xf32> to vector<8x128xbf16>
    %c1_61 = arith.constant 1 : index
    %c0_62 = arith.constant 0 : index
    %c0_63 = arith.constant 0 : index
    %111 = vector.load %arg9[%c1_61, %c0_62, %c0_63] : memref<2x8x128xf32, #tpu.memory_space<vmem>>, vector<1x8x128xf32>
    %112 = vector.shape_cast %111 : vector<1x8x128xf32> to vector<8x128xf32>
    %c1_64 = arith.constant 1 : index
    %c0_65 = arith.constant 0 : index
    %c0_66 = arith.constant 0 : index
    %113 = vector.load %arg10[%c1_64, %c0_65, %c0_66] : memref<2x8x128xf32, #tpu.memory_space<vmem>>, vector<1x8x128xf32>
    %114 = vector.shape_cast %113 : vector<1x8x128xf32> to vector<8x128xf32>
    %115 = arith.truncf %112 : vector<8x128xf32> to vector<8x128xbf16>
    %116 = tpu.concatenate %110, %115 in 1 : vector<8x128xbf16>, vector<8x128xbf16> -> vector<8x256xbf16>
    %c0_67 = arith.constant 0 : index
    %c0_68 = arith.constant 0 : index
    %117 = vector.load %arg5[%c0_67, %c0_68] : memref<256x512xbf16, #tpu.memory_space<vmem>>, vector<256x512xbf16>
    %cst_69 = arith.constant dense<0.000000e+00> : vector<8x512xf32>
    %118 = tpu.matmul %116, %117, %cst_69 {dimension_numbers = #tpu.dot_dimension_numbers<[1], [0], [0], [1], [0, 0, 1, 1], [], []>} : vector<8x256xbf16>, vector<256x512xbf16>, vector<8x512xf32> -> vector<8x512xf32>
    %c0_70 = arith.constant 0 : index
    %c0_71 = arith.constant 0 : index
    %119 = vector.load %arg7[%c0_70, %c0_71] : memref<1x512xf32, #tpu.memory_space<vmem>>, vector<1x512xf32>
    %120 = vector.broadcast %119 : vector<1x512xf32> to vector<8x512xf32>
    %121 = arith.addf %118, %120 : vector<8x512xf32>
    %122 = vector.extract_strided_slice %121 {offsets = [0, 0], sizes = [8, 384], strides = [1, 1]} : vector<8x512xf32> to vector<8x384xf32>
    %123 = arith.negf %122 : vector<8x384xf32>
    %124 = math.exp %123 : vector<8x384xf32>
    %cst_72 = arith.constant 1.000000e+00 : f32
    %125 = vector.broadcast %cst_72 : f32 to vector<8x384xf32>
    %126 = arith.addf %125, %124 : vector<8x384xf32>
    %127 = arith.divf %125, %126 : vector<8x384xf32>
    %128 = vector.extract_strided_slice %127 {offsets = [0, 0], sizes = [8, 128], strides = [1, 1]} : vector<8x384xf32> to vector<8x128xf32>
    %129 = vector.extract_strided_slice %127 {offsets = [0, 128], sizes = [8, 128], strides = [1, 1]} : vector<8x384xf32> to vector<8x128xf32>
    %130 = vector.extract_strided_slice %127 {offsets = [0, 256], sizes = [8, 128], strides = [1, 1]} : vector<8x384xf32> to vector<8x128xf32>
    %131 = vector.extract_strided_slice %121 {offsets = [0, 384], sizes = [8, 128], strides = [1, 1]} : vector<8x512xf32> to vector<8x128xf32>
    %132 = math.tanh %131 : vector<8x128xf32>
    %133 = arith.mulf %129, %114 : vector<8x128xf32>
    %134 = arith.mulf %128, %132 : vector<8x128xf32>
    %135 = arith.addf %133, %134 : vector<8x128xf32>
    %136 = math.tanh %135 : vector<8x128xf32>
    %137 = arith.mulf %130, %136 : vector<8x128xf32>
    %c1_73 = arith.constant 1 : index
    %c0_74 = arith.constant 0 : index
    %c0_75 = arith.constant 0 : index
    %138 = vector.load %arg9[%c1_73, %c0_74, %c0_75] : memref<2x8x128xf32, #tpu.memory_space<vmem>>, vector<1x8x128xf32>
    %139 = vector.shape_cast %138 : vector<1x8x128xf32> to vector<8x128xf32>
    %140 = vector.shape_cast %137 : vector<8x128xf32> to vector<1x8x128xf32>
    tpu.vector_store %arg9[%c1_73, %c0_74, %c0_75], %140 {strides = array<i32>} : memref<2x8x128xf32, #tpu.memory_space<vmem>>, vector<1x8x128xf32>,
    %c1_76 = arith.constant 1 : index
    %c0_77 = arith.constant 0 : index
    %c0_78 = arith.constant 0 : index
    %141 = vector.load %arg10[%c1_76, %c0_77, %c0_78] : memref<2x8x128xf32, #tpu.memory_space<vmem>>, vector<1x8x128xf32>
    %142 = vector.shape_cast %141 : vector<1x8x128xf32> to vector<8x128xf32>
    %143 = vector.shape_cast %135 : vector<8x128xf32> to vector<1x8x128xf32>
    tpu.vector_store %arg10[%c1_76, %c0_77, %c0_78], %143 {strides = array<i32>} : memref<2x8x128xf32, #tpu.memory_space<vmem>>, vector<1x8x128xf32>,
    %c1_79 = arith.constant 1 : index
    %c0_80 = arith.constant 0 : index
    %c0_81 = arith.constant 0 : index
    %144 = vector.load %arg8[%c1_79, %c0_80, %c0_81] : memref<6x8x128xf32, #tpu.memory_space<vmem>>, vector<1x8x128xf32>
    %145 = vector.shape_cast %144 : vector<1x8x128xf32> to vector<8x128xf32>
    %146 = vector.shape_cast %137 : vector<8x128xf32> to vector<1x8x128xf32>
    tpu.vector_store %arg8[%c1_79, %c0_80, %c0_81], %146 {strides = array<i32>} : memref<6x8x128xf32, #tpu.memory_space<vmem>>, vector<1x8x128xf32>,
    %c2 = arith.constant 2 : index
    %c0_82 = arith.constant 0 : index
    %c0_83 = arith.constant 0 : index
    %147 = vector.load %arg1[%c2, %c0_82, %c0_83] : memref<6x8x128xbf16, #tpu.memory_space<vmem>>, vector<1x8x128xbf16>
    %148 = vector.shape_cast %147 : vector<1x8x128xbf16> to vector<8x128xbf16>
    %c0_84 = arith.constant 0 : index
    %c0_85 = arith.constant 0 : index
    %c0_86 = arith.constant 0 : index
    %149 = vector.load %arg9[%c0_84, %c0_85, %c0_86] : memref<2x8x128xf32, #tpu.memory_space<vmem>>, vector<1x8x128xf32>
    %150 = vector.shape_cast %149 : vector<1x8x128xf32> to vector<8x128xf32>
    %c0_87 = arith.constant 0 : index
    %c0_88 = arith.constant 0 : index
    %c0_89 = arith.constant 0 : index
    %151 = vector.load %arg10[%c0_87, %c0_88, %c0_89] : memref<2x8x128xf32, #tpu.memory_space<vmem>>, vector<1x8x128xf32>
    %152 = vector.shape_cast %151 : vector<1x8x128xf32> to vector<8x128xf32>
    %153 = arith.truncf %150 : vector<8x128xf32> to vector<8x128xbf16>
    %154 = tpu.concatenate %148, %153 in 1 : vector<8x128xbf16>, vector<8x128xbf16> -> vector<8x256xbf16>
    %c0_90 = arith.constant 0 : index
    %c0_91 = arith.constant 0 : index
    %155 = vector.load %arg4[%c0_90, %c0_91] : memref<256x512xbf16, #tpu.memory_space<vmem>>, vector<256x512xbf16>
    %cst_92 = arith.constant dense<0.000000e+00> : vector<8x512xf32>
    %156 = tpu.matmul %154, %155, %cst_92 {dimension_numbers = #tpu.dot_dimension_numbers<[1], [0], [0], [1], [0, 0, 1, 1], [], []>} : vector<8x256xbf16>, vector<256x512xbf16>, vector<8x512xf32> -> vector<8x512xf32>
    %c0_93 = arith.constant 0 : index
    %c0_94 = arith.constant 0 : index
    %157 = vector.load %arg6[%c0_93, %c0_94] : memref<1x512xf32, #tpu.memory_space<vmem>>, vector<1x512xf32>
    %158 = vector.broadcast %157 : vector<1x512xf32> to vector<8x512xf32>
    %159 = arith.addf %156, %158 : vector<8x512xf32>
    %160 = vector.extract_strided_slice %159 {offsets = [0, 0], sizes = [8, 384], strides = [1, 1]} : vector<8x512xf32> to vector<8x384xf32>
    %161 = arith.negf %160 : vector<8x384xf32>
    %162 = math.exp %161 : vector<8x384xf32>
    %cst_95 = arith.constant 1.000000e+00 : f32
    %163 = vector.broadcast %cst_95 : f32 to vector<8x384xf32>
    %164 = arith.addf %163, %162 : vector<8x384xf32>
    %165 = arith.divf %163, %164 : vector<8x384xf32>
    %166 = vector.extract_strided_slice %165 {offsets = [0, 0], sizes = [8, 128], strides = [1, 1]} : vector<8x384xf32> to vector<8x128xf32>
    %167 = vector.extract_strided_slice %165 {offsets = [0, 128], sizes = [8, 128], strides = [1, 1]} : vector<8x384xf32> to vector<8x128xf32>
    %168 = vector.extract_strided_slice %165 {offsets = [0, 256], sizes = [8, 128], strides = [1, 1]} : vector<8x384xf32> to vector<8x128xf32>
    %169 = vector.extract_strided_slice %159 {offsets = [0, 384], sizes = [8, 128], strides = [1, 1]} : vector<8x512xf32> to vector<8x128xf32>
    %170 = math.tanh %169 : vector<8x128xf32>
    %171 = arith.mulf %167, %152 : vector<8x128xf32>
    %172 = arith.mulf %166, %170 : vector<8x128xf32>
    %173 = arith.addf %171, %172 : vector<8x128xf32>
    %174 = math.tanh %173 : vector<8x128xf32>
    %175 = arith.mulf %168, %174 : vector<8x128xf32>
    %c0_96 = arith.constant 0 : index
    %c0_97 = arith.constant 0 : index
    %c0_98 = arith.constant 0 : index
    %176 = vector.load %arg9[%c0_96, %c0_97, %c0_98] : memref<2x8x128xf32, #tpu.memory_space<vmem>>, vector<1x8x128xf32>
    %177 = vector.shape_cast %176 : vector<1x8x128xf32> to vector<8x128xf32>
    %178 = vector.shape_cast %175 : vector<8x128xf32> to vector<1x8x128xf32>
    tpu.vector_store %arg9[%c0_96, %c0_97, %c0_98], %178 {strides = array<i32>} : memref<2x8x128xf32, #tpu.memory_space<vmem>>, vector<1x8x128xf32>,
    %c0_99 = arith.constant 0 : index
    %c0_100 = arith.constant 0 : index
    %c0_101 = arith.constant 0 : index
    %179 = vector.load %arg10[%c0_99, %c0_100, %c0_101] : memref<2x8x128xf32, #tpu.memory_space<vmem>>, vector<1x8x128xf32>
    %180 = vector.shape_cast %179 : vector<1x8x128xf32> to vector<8x128xf32>
    %181 = vector.shape_cast %173 : vector<8x128xf32> to vector<1x8x128xf32>
    tpu.vector_store %arg10[%c0_99, %c0_100, %c0_101], %181 {strides = array<i32>} : memref<2x8x128xf32, #tpu.memory_space<vmem>>, vector<1x8x128xf32>,
    %182 = arith.truncf %175 : vector<8x128xf32> to vector<8x128xbf16>
    %c1_102 = arith.constant 1 : index
    %c0_103 = arith.constant 0 : index
    %c0_104 = arith.constant 0 : index
    %183 = vector.load %arg9[%c1_102, %c0_103, %c0_104] : memref<2x8x128xf32, #tpu.memory_space<vmem>>, vector<1x8x128xf32>
    %184 = vector.shape_cast %183 : vector<1x8x128xf32> to vector<8x128xf32>
    %c1_105 = arith.constant 1 : index
    %c0_106 = arith.constant 0 : index
    %c0_107 = arith.constant 0 : index
    %185 = vector.load %arg10[%c1_105, %c0_106, %c0_107] : memref<2x8x128xf32, #tpu.memory_space<vmem>>, vector<1x8x128xf32>
    %186 = vector.shape_cast %185 : vector<1x8x128xf32> to vector<8x128xf32>
    %187 = arith.truncf %184 : vector<8x128xf32> to vector<8x128xbf16>
    %188 = tpu.concatenate %182, %187 in 1 : vector<8x128xbf16>, vector<8x128xbf16> -> vector<8x256xbf16>
    %c0_108 = arith.constant 0 : index
    %c0_109 = arith.constant 0 : index
    %189 = vector.load %arg5[%c0_108, %c0_109] : memref<256x512xbf16, #tpu.memory_space<vmem>>, vector<256x512xbf16>
    %cst_110 = arith.constant dense<0.000000e+00> : vector<8x512xf32>
    %190 = tpu.matmul %188, %189, %cst_110 {dimension_numbers = #tpu.dot_dimension_numbers<[1], [0], [0], [1], [0, 0, 1, 1], [], []>} : vector<8x256xbf16>, vector<256x512xbf16>, vector<8x512xf32> -> vector<8x512xf32>
    %c0_111 = arith.constant 0 : index
    %c0_112 = arith.constant 0 : index
    %191 = vector.load %arg7[%c0_111, %c0_112] : memref<1x512xf32, #tpu.memory_space<vmem>>, vector<1x512xf32>
    %192 = vector.broadcast %191 : vector<1x512xf32> to vector<8x512xf32>
    %193 = arith.addf %190, %192 : vector<8x512xf32>
    %194 = vector.extract_strided_slice %193 {offsets = [0, 0], sizes = [8, 384], strides = [1, 1]} : vector<8x512xf32> to vector<8x384xf32>
    %195 = arith.negf %194 : vector<8x384xf32>
    %196 = math.exp %195 : vector<8x384xf32>
    %cst_113 = arith.constant 1.000000e+00 : f32
    %197 = vector.broadcast %cst_113 : f32 to vector<8x384xf32>
    %198 = arith.addf %197, %196 : vector<8x384xf32>
    %199 = arith.divf %197, %198 : vector<8x384xf32>
    %200 = vector.extract_strided_slice %199 {offsets = [0, 0], sizes = [8, 128], strides = [1, 1]} : vector<8x384xf32> to vector<8x128xf32>
    %201 = vector.extract_strided_slice %199 {offsets = [0, 128], sizes = [8, 128], strides = [1, 1]} : vector<8x384xf32> to vector<8x128xf32>
    %202 = vector.extract_strided_slice %199 {offsets = [0, 256], sizes = [8, 128], strides = [1, 1]} : vector<8x384xf32> to vector<8x128xf32>
    %203 = vector.extract_strided_slice %193 {offsets = [0, 384], sizes = [8, 128], strides = [1, 1]} : vector<8x512xf32> to vector<8x128xf32>
    %204 = math.tanh %203 : vector<8x128xf32>
    %205 = arith.mulf %201, %186 : vector<8x128xf32>
    %206 = arith.mulf %200, %204 : vector<8x128xf32>
    %207 = arith.addf %205, %206 : vector<8x128xf32>
    %208 = math.tanh %207 : vector<8x128xf32>
    %209 = arith.mulf %202, %208 : vector<8x128xf32>
    %c1_114 = arith.constant 1 : index
    %c0_115 = arith.constant 0 : index
    %c0_116 = arith.constant 0 : index
    %210 = vector.load %arg9[%c1_114, %c0_115, %c0_116] : memref<2x8x128xf32, #tpu.memory_space<vmem>>, vector<1x8x128xf32>
    %211 = vector.shape_cast %210 : vector<1x8x128xf32> to vector<8x128xf32>
    %212 = vector.shape_cast %209 : vector<8x128xf32> to vector<1x8x128xf32>
    tpu.vector_store %arg9[%c1_114, %c0_115, %c0_116], %212 {strides = array<i32>} : memref<2x8x128xf32, #tpu.memory_space<vmem>>, vector<1x8x128xf32>,
    %c1_117 = arith.constant 1 : index
    %c0_118 = arith.constant 0 : index
    %c0_119 = arith.constant 0 : index
    %213 = vector.load %arg10[%c1_117, %c0_118, %c0_119] : memref<2x8x128xf32, #tpu.memory_space<vmem>>, vector<1x8x128xf32>
    %214 = vector.shape_cast %213 : vector<1x8x128xf32> to vector<8x128xf32>
    %215 = vector.shape_cast %207 : vector<8x128xf32> to vector<1x8x128xf32>
    tpu.vector_store %arg10[%c1_117, %c0_118, %c0_119], %215 {strides = array<i32>} : memref<2x8x128xf32, #tpu.memory_space<vmem>>, vector<1x8x128xf32>,
    %c2_120 = arith.constant 2 : index
    %c0_121 = arith.constant 0 : index
    %c0_122 = arith.constant 0 : index
    %216 = vector.load %arg8[%c2_120, %c0_121, %c0_122] : memref<6x8x128xf32, #tpu.memory_space<vmem>>, vector<1x8x128xf32>
    %217 = vector.shape_cast %216 : vector<1x8x128xf32> to vector<8x128xf32>
    %218 = vector.shape_cast %209 : vector<8x128xf32> to vector<1x8x128xf32>
    tpu.vector_store %arg8[%c2_120, %c0_121, %c0_122], %218 {strides = array<i32>} : memref<6x8x128xf32, #tpu.memory_space<vmem>>, vector<1x8x128xf32>,
    %c3 = arith.constant 3 : index
    %c0_123 = arith.constant 0 : index
    %c0_124 = arith.constant 0 : index
    %219 = vector.load %arg1[%c3, %c0_123, %c0_124] : memref<6x8x128xbf16, #tpu.memory_space<vmem>>, vector<1x8x128xbf16>
    %220 = vector.shape_cast %219 : vector<1x8x128xbf16> to vector<8x128xbf16>
    %c0_125 = arith.constant 0 : index
    %c0_126 = arith.constant 0 : index
    %c0_127 = arith.constant 0 : index
    %221 = vector.load %arg9[%c0_125, %c0_126, %c0_127] : memref<2x8x128xf32, #tpu.memory_space<vmem>>, vector<1x8x128xf32>
    %222 = vector.shape_cast %221 : vector<1x8x128xf32> to vector<8x128xf32>
    %c0_128 = arith.constant 0 : index
    %c0_129 = arith.constant 0 : index
    %c0_130 = arith.constant 0 : index
    %223 = vector.load %arg10[%c0_128, %c0_129, %c0_130] : memref<2x8x128xf32, #tpu.memory_space<vmem>>, vector<1x8x128xf32>
    %224 = vector.shape_cast %223 : vector<1x8x128xf32> to vector<8x128xf32>
    %225 = arith.truncf %222 : vector<8x128xf32> to vector<8x128xbf16>
    %226 = tpu.concatenate %220, %225 in 1 : vector<8x128xbf16>, vector<8x128xbf16> -> vector<8x256xbf16>
    %c0_131 = arith.constant 0 : index
    %c0_132 = arith.constant 0 : index
    %227 = vector.load %arg4[%c0_131, %c0_132] : memref<256x512xbf16, #tpu.memory_space<vmem>>, vector<256x512xbf16>
    %cst_133 = arith.constant dense<0.000000e+00> : vector<8x512xf32>
    %228 = tpu.matmul %226, %227, %cst_133 {dimension_numbers = #tpu.dot_dimension_numbers<[1], [0], [0], [1], [0, 0, 1, 1], [], []>} : vector<8x256xbf16>, vector<256x512xbf16>, vector<8x512xf32> -> vector<8x512xf32>
    %c0_134 = arith.constant 0 : index
    %c0_135 = arith.constant 0 : index
    %229 = vector.load %arg6[%c0_134, %c0_135] : memref<1x512xf32, #tpu.memory_space<vmem>>, vector<1x512xf32>
    %230 = vector.broadcast %229 : vector<1x512xf32> to vector<8x512xf32>
    %231 = arith.addf %228, %230 : vector<8x512xf32>
    %232 = vector.extract_strided_slice %231 {offsets = [0, 0], sizes = [8, 384], strides = [1, 1]} : vector<8x512xf32> to vector<8x384xf32>
    %233 = arith.negf %232 : vector<8x384xf32>
    %234 = math.exp %233 : vector<8x384xf32>
    %cst_136 = arith.constant 1.000000e+00 : f32
    %235 = vector.broadcast %cst_136 : f32 to vector<8x384xf32>
    %236 = arith.addf %235, %234 : vector<8x384xf32>
    %237 = arith.divf %235, %236 : vector<8x384xf32>
    %238 = vector.extract_strided_slice %237 {offsets = [0, 0], sizes = [8, 128], strides = [1, 1]} : vector<8x384xf32> to vector<8x128xf32>
    %239 = vector.extract_strided_slice %237 {offsets = [0, 128], sizes = [8, 128], strides = [1, 1]} : vector<8x384xf32> to vector<8x128xf32>
    %240 = vector.extract_strided_slice %237 {offsets = [0, 256], sizes = [8, 128], strides = [1, 1]} : vector<8x384xf32> to vector<8x128xf32>
    %241 = vector.extract_strided_slice %231 {offsets = [0, 384], sizes = [8, 128], strides = [1, 1]} : vector<8x512xf32> to vector<8x128xf32>
    %242 = math.tanh %241 : vector<8x128xf32>
    %243 = arith.mulf %239, %224 : vector<8x128xf32>
    %244 = arith.mulf %238, %242 : vector<8x128xf32>
    %245 = arith.addf %243, %244 : vector<8x128xf32>
    %246 = math.tanh %245 : vector<8x128xf32>
    %247 = arith.mulf %240, %246 : vector<8x128xf32>
    %c0_137 = arith.constant 0 : index
    %c0_138 = arith.constant 0 : index
    %c0_139 = arith.constant 0 : index
    %248 = vector.load %arg9[%c0_137, %c0_138, %c0_139] : memref<2x8x128xf32, #tpu.memory_space<vmem>>, vector<1x8x128xf32>
    %249 = vector.shape_cast %248 : vector<1x8x128xf32> to vector<8x128xf32>
    %250 = vector.shape_cast %247 : vector<8x128xf32> to vector<1x8x128xf32>
    tpu.vector_store %arg9[%c0_137, %c0_138, %c0_139], %250 {strides = array<i32>} : memref<2x8x128xf32, #tpu.memory_space<vmem>>, vector<1x8x128xf32>,
    %c0_140 = arith.constant 0 : index
    %c0_141 = arith.constant 0 : index
    %c0_142 = arith.constant 0 : index
    %251 = vector.load %arg10[%c0_140, %c0_141, %c0_142] : memref<2x8x128xf32, #tpu.memory_space<vmem>>, vector<1x8x128xf32>
    %252 = vector.shape_cast %251 : vector<1x8x128xf32> to vector<8x128xf32>
    %253 = vector.shape_cast %245 : vector<8x128xf32> to vector<1x8x128xf32>
    tpu.vector_store %arg10[%c0_140, %c0_141, %c0_142], %253 {strides = array<i32>} : memref<2x8x128xf32, #tpu.memory_space<vmem>>, vector<1x8x128xf32>,
    %254 = arith.truncf %247 : vector<8x128xf32> to vector<8x128xbf16>
    %c1_143 = arith.constant 1 : index
    %c0_144 = arith.constant 0 : index
    %c0_145 = arith.constant 0 : index
    %255 = vector.load %arg9[%c1_143, %c0_144, %c0_145] : memref<2x8x128xf32, #tpu.memory_space<vmem>>, vector<1x8x128xf32>
    %256 = vector.shape_cast %255 : vector<1x8x128xf32> to vector<8x128xf32>
    %c1_146 = arith.constant 1 : index
    %c0_147 = arith.constant 0 : index
    %c0_148 = arith.constant 0 : index
    %257 = vector.load %arg10[%c1_146, %c0_147, %c0_148] : memref<2x8x128xf32, #tpu.memory_space<vmem>>, vector<1x8x128xf32>
    %258 = vector.shape_cast %257 : vector<1x8x128xf32> to vector<8x128xf32>
    %259 = arith.truncf %256 : vector<8x128xf32> to vector<8x128xbf16>
    %260 = tpu.concatenate %254, %259 in 1 : vector<8x128xbf16>, vector<8x128xbf16> -> vector<8x256xbf16>
    %c0_149 = arith.constant 0 : index
    %c0_150 = arith.constant 0 : index
    %261 = vector.load %arg5[%c0_149, %c0_150] : memref<256x512xbf16, #tpu.memory_space<vmem>>, vector<256x512xbf16>
    %cst_151 = arith.constant dense<0.000000e+00> : vector<8x512xf32>
    %262 = tpu.matmul %260, %261, %cst_151 {dimension_numbers = #tpu.dot_dimension_numbers<[1], [0], [0], [1], [0, 0, 1, 1], [], []>} : vector<8x256xbf16>, vector<256x512xbf16>, vector<8x512xf32> -> vector<8x512xf32>
    %c0_152 = arith.constant 0 : index
    %c0_153 = arith.constant 0 : index
    %263 = vector.load %arg7[%c0_152, %c0_153] : memref<1x512xf32, #tpu.memory_space<vmem>>, vector<1x512xf32>
    %264 = vector.broadcast %263 : vector<1x512xf32> to vector<8x512xf32>
    %265 = arith.addf %262, %264 : vector<8x512xf32>
    %266 = vector.extract_strided_slice %265 {offsets = [0, 0], sizes = [8, 384], strides = [1, 1]} : vector<8x512xf32> to vector<8x384xf32>
    %267 = arith.negf %266 : vector<8x384xf32>
    %268 = math.exp %267 : vector<8x384xf32>
    %cst_154 = arith.constant 1.000000e+00 : f32
    %269 = vector.broadcast %cst_154 : f32 to vector<8x384xf32>
    %270 = arith.addf %269, %268 : vector<8x384xf32>
    %271 = arith.divf %269, %270 : vector<8x384xf32>
    %272 = vector.extract_strided_slice %271 {offsets = [0, 0], sizes = [8, 128], strides = [1, 1]} : vector<8x384xf32> to vector<8x128xf32>
    %273 = vector.extract_strided_slice %271 {offsets = [0, 128], sizes = [8, 128], strides = [1, 1]} : vector<8x384xf32> to vector<8x128xf32>
    %274 = vector.extract_strided_slice %271 {offsets = [0, 256], sizes = [8, 128], strides = [1, 1]} : vector<8x384xf32> to vector<8x128xf32>
    %275 = vector.extract_strided_slice %265 {offsets = [0, 384], sizes = [8, 128], strides = [1, 1]} : vector<8x512xf32> to vector<8x128xf32>
    %276 = math.tanh %275 : vector<8x128xf32>
    %277 = arith.mulf %273, %258 : vector<8x128xf32>
    %278 = arith.mulf %272, %276 : vector<8x128xf32>
    %279 = arith.addf %277, %278 : vector<8x128xf32>
    %280 = math.tanh %279 : vector<8x128xf32>
    %281 = arith.mulf %274, %280 : vector<8x128xf32>
    %c1_155 = arith.constant 1 : index
    %c0_156 = arith.constant 0 : index
    %c0_157 = arith.constant 0 : index
    %282 = vector.load %arg9[%c1_155, %c0_156, %c0_157] : memref<2x8x128xf32, #tpu.memory_space<vmem>>, vector<1x8x128xf32>
    %283 = vector.shape_cast %282 : vector<1x8x128xf32> to vector<8x128xf32>
    %284 = vector.shape_cast %281 : vector<8x128xf32> to vector<1x8x128xf32>
    tpu.vector_store %arg9[%c1_155, %c0_156, %c0_157], %284 {strides = array<i32>} : memref<2x8x128xf32, #tpu.memory_space<vmem>>, vector<1x8x128xf32>,
    %c1_158 = arith.constant 1 : index
    %c0_159 = arith.constant 0 : index
    %c0_160 = arith.constant 0 : index
    %285 = vector.load %arg10[%c1_158, %c0_159, %c0_160] : memref<2x8x128xf32, #tpu.memory_space<vmem>>, vector<1x8x128xf32>
    %286 = vector.shape_cast %285 : vector<1x8x128xf32> to vector<8x128xf32>
    %287 = vector.shape_cast %279 : vector<8x128xf32> to vector<1x8x128xf32>
    tpu.vector_store %arg10[%c1_158, %c0_159, %c0_160], %287 {strides = array<i32>} : memref<2x8x128xf32, #tpu.memory_space<vmem>>, vector<1x8x128xf32>,
    %c3_161 = arith.constant 3 : index
    %c0_162 = arith.constant 0 : index
    %c0_163 = arith.constant 0 : index
    %288 = vector.load %arg8[%c3_161, %c0_162, %c0_163] : memref<6x8x128xf32, #tpu.memory_space<vmem>>, vector<1x8x128xf32>
    %289 = vector.shape_cast %288 : vector<1x8x128xf32> to vector<8x128xf32>
    %290 = vector.shape_cast %281 : vector<8x128xf32> to vector<1x8x128xf32>
    tpu.vector_store %arg8[%c3_161, %c0_162, %c0_163], %290 {strides = array<i32>} : memref<6x8x128xf32, #tpu.memory_space<vmem>>, vector<1x8x128xf32>,
    %c4 = arith.constant 4 : index
    %c0_164 = arith.constant 0 : index
    %c0_165 = arith.constant 0 : index
    %291 = vector.load %arg1[%c4, %c0_164, %c0_165] : memref<6x8x128xbf16, #tpu.memory_space<vmem>>, vector<1x8x128xbf16>
    %292 = vector.shape_cast %291 : vector<1x8x128xbf16> to vector<8x128xbf16>
    %c0_166 = arith.constant 0 : index
    %c0_167 = arith.constant 0 : index
    %c0_168 = arith.constant 0 : index
    %293 = vector.load %arg9[%c0_166, %c0_167, %c0_168] : memref<2x8x128xf32, #tpu.memory_space<vmem>>, vector<1x8x128xf32>
    %294 = vector.shape_cast %293 : vector<1x8x128xf32> to vector<8x128xf32>
    %c0_169 = arith.constant 0 : index
    %c0_170 = arith.constant 0 : index
    %c0_171 = arith.constant 0 : index
    %295 = vector.load %arg10[%c0_169, %c0_170, %c0_171] : memref<2x8x128xf32, #tpu.memory_space<vmem>>, vector<1x8x128xf32>
    %296 = vector.shape_cast %295 : vector<1x8x128xf32> to vector<8x128xf32>
    %297 = arith.truncf %294 : vector<8x128xf32> to vector<8x128xbf16>
    %298 = tpu.concatenate %292, %297 in 1 : vector<8x128xbf16>, vector<8x128xbf16> -> vector<8x256xbf16>
    %c0_172 = arith.constant 0 : index
    %c0_173 = arith.constant 0 : index
    %299 = vector.load %arg4[%c0_172, %c0_173] : memref<256x512xbf16, #tpu.memory_space<vmem>>, vector<256x512xbf16>
    %cst_174 = arith.constant dense<0.000000e+00> : vector<8x512xf32>
    %300 = tpu.matmul %298, %299, %cst_174 {dimension_numbers = #tpu.dot_dimension_numbers<[1], [0], [0], [1], [0, 0, 1, 1], [], []>} : vector<8x256xbf16>, vector<256x512xbf16>, vector<8x512xf32> -> vector<8x512xf32>
    %c0_175 = arith.constant 0 : index
    %c0_176 = arith.constant 0 : index
    %301 = vector.load %arg6[%c0_175, %c0_176] : memref<1x512xf32, #tpu.memory_space<vmem>>, vector<1x512xf32>
    %302 = vector.broadcast %301 : vector<1x512xf32> to vector<8x512xf32>
    %303 = arith.addf %300, %302 : vector<8x512xf32>
    %304 = vector.extract_strided_slice %303 {offsets = [0, 0], sizes = [8, 384], strides = [1, 1]} : vector<8x512xf32> to vector<8x384xf32>
    %305 = arith.negf %304 : vector<8x384xf32>
    %306 = math.exp %305 : vector<8x384xf32>
    %cst_177 = arith.constant 1.000000e+00 : f32
    %307 = vector.broadcast %cst_177 : f32 to vector<8x384xf32>
    %308 = arith.addf %307, %306 : vector<8x384xf32>
    %309 = arith.divf %307, %308 : vector<8x384xf32>
    %310 = vector.extract_strided_slice %309 {offsets = [0, 0], sizes = [8, 128], strides = [1, 1]} : vector<8x384xf32> to vector<8x128xf32>
    %311 = vector.extract_strided_slice %309 {offsets = [0, 128], sizes = [8, 128], strides = [1, 1]} : vector<8x384xf32> to vector<8x128xf32>
    %312 = vector.extract_strided_slice %309 {offsets = [0, 256], sizes = [8, 128], strides = [1, 1]} : vector<8x384xf32> to vector<8x128xf32>
    %313 = vector.extract_strided_slice %303 {offsets = [0, 384], sizes = [8, 128], strides = [1, 1]} : vector<8x512xf32> to vector<8x128xf32>
    %314 = math.tanh %313 : vector<8x128xf32>
    %315 = arith.mulf %311, %296 : vector<8x128xf32>
    %316 = arith.mulf %310, %314 : vector<8x128xf32>
    %317 = arith.addf %315, %316 : vector<8x128xf32>
    %318 = math.tanh %317 : vector<8x128xf32>
    %319 = arith.mulf %312, %318 : vector<8x128xf32>
    %c0_178 = arith.constant 0 : index
    %c0_179 = arith.constant 0 : index
    %c0_180 = arith.constant 0 : index
    %320 = vector.load %arg9[%c0_178, %c0_179, %c0_180] : memref<2x8x128xf32, #tpu.memory_space<vmem>>, vector<1x8x128xf32>
    %321 = vector.shape_cast %320 : vector<1x8x128xf32> to vector<8x128xf32>
    %322 = vector.shape_cast %319 : vector<8x128xf32> to vector<1x8x128xf32>
    tpu.vector_store %arg9[%c0_178, %c0_179, %c0_180], %322 {strides = array<i32>} : memref<2x8x128xf32, #tpu.memory_space<vmem>>, vector<1x8x128xf32>,
    %c0_181 = arith.constant 0 : index
    %c0_182 = arith.constant 0 : index
    %c0_183 = arith.constant 0 : index
    %323 = vector.load %arg10[%c0_181, %c0_182, %c0_183] : memref<2x8x128xf32, #tpu.memory_space<vmem>>, vector<1x8x128xf32>
    %324 = vector.shape_cast %323 : vector<1x8x128xf32> to vector<8x128xf32>
    %325 = vector.shape_cast %317 : vector<8x128xf32> to vector<1x8x128xf32>
    tpu.vector_store %arg10[%c0_181, %c0_182, %c0_183], %325 {strides = array<i32>} : memref<2x8x128xf32, #tpu.memory_space<vmem>>, vector<1x8x128xf32>,
    %326 = arith.truncf %319 : vector<8x128xf32> to vector<8x128xbf16>
    %c1_184 = arith.constant 1 : index
    %c0_185 = arith.constant 0 : index
    %c0_186 = arith.constant 0 : index
    %327 = vector.load %arg9[%c1_184, %c0_185, %c0_186] : memref<2x8x128xf32, #tpu.memory_space<vmem>>, vector<1x8x128xf32>
    %328 = vector.shape_cast %327 : vector<1x8x128xf32> to vector<8x128xf32>
    %c1_187 = arith.constant 1 : index
    %c0_188 = arith.constant 0 : index
    %c0_189 = arith.constant 0 : index
    %329 = vector.load %arg10[%c1_187, %c0_188, %c0_189] : memref<2x8x128xf32, #tpu.memory_space<vmem>>, vector<1x8x128xf32>
    %330 = vector.shape_cast %329 : vector<1x8x128xf32> to vector<8x128xf32>
    %331 = arith.truncf %328 : vector<8x128xf32> to vector<8x128xbf16>
    %332 = tpu.concatenate %326, %331 in 1 : vector<8x128xbf16>, vector<8x128xbf16> -> vector<8x256xbf16>
    %c0_190 = arith.constant 0 : index
    %c0_191 = arith.constant 0 : index
    %333 = vector.load %arg5[%c0_190, %c0_191] : memref<256x512xbf16, #tpu.memory_space<vmem>>, vector<256x512xbf16>
    %cst_192 = arith.constant dense<0.000000e+00> : vector<8x512xf32>
    %334 = tpu.matmul %332, %333, %cst_192 {dimension_numbers = #tpu.dot_dimension_numbers<[1], [0], [0], [1], [0, 0, 1, 1], [], []>} : vector<8x256xbf16>, vector<256x512xbf16>, vector<8x512xf32> -> vector<8x512xf32>
    %c0_193 = arith.constant 0 : index
    %c0_194 = arith.constant 0 : index
    %335 = vector.load %arg7[%c0_193, %c0_194] : memref<1x512xf32, #tpu.memory_space<vmem>>, vector<1x512xf32>
    %336 = vector.broadcast %335 : vector<1x512xf32> to vector<8x512xf32>
    %337 = arith.addf %334, %336 : vector<8x512xf32>
    %338 = vector.extract_strided_slice %337 {offsets = [0, 0], sizes = [8, 384], strides = [1, 1]} : vector<8x512xf32> to vector<8x384xf32>
    %339 = arith.negf %338 : vector<8x384xf32>
    %340 = math.exp %339 : vector<8x384xf32>
    %cst_195 = arith.constant 1.000000e+00 : f32
    %341 = vector.broadcast %cst_195 : f32 to vector<8x384xf32>
    %342 = arith.addf %341, %340 : vector<8x384xf32>
    %343 = arith.divf %341, %342 : vector<8x384xf32>
    %344 = vector.extract_strided_slice %343 {offsets = [0, 0], sizes = [8, 128], strides = [1, 1]} : vector<8x384xf32> to vector<8x128xf32>
    %345 = vector.extract_strided_slice %343 {offsets = [0, 128], sizes = [8, 128], strides = [1, 1]} : vector<8x384xf32> to vector<8x128xf32>
    %346 = vector.extract_strided_slice %343 {offsets = [0, 256], sizes = [8, 128], strides = [1, 1]} : vector<8x384xf32> to vector<8x128xf32>
    %347 = vector.extract_strided_slice %337 {offsets = [0, 384], sizes = [8, 128], strides = [1, 1]} : vector<8x512xf32> to vector<8x128xf32>
    %348 = math.tanh %347 : vector<8x128xf32>
    %349 = arith.mulf %345, %330 : vector<8x128xf32>
    %350 = arith.mulf %344, %348 : vector<8x128xf32>
    %351 = arith.addf %349, %350 : vector<8x128xf32>
    %352 = math.tanh %351 : vector<8x128xf32>
    %353 = arith.mulf %346, %352 : vector<8x128xf32>
    %c1_196 = arith.constant 1 : index
    %c0_197 = arith.constant 0 : index
    %c0_198 = arith.constant 0 : index
    %354 = vector.load %arg9[%c1_196, %c0_197, %c0_198] : memref<2x8x128xf32, #tpu.memory_space<vmem>>, vector<1x8x128xf32>
    %355 = vector.shape_cast %354 : vector<1x8x128xf32> to vector<8x128xf32>
    %356 = vector.shape_cast %353 : vector<8x128xf32> to vector<1x8x128xf32>
    tpu.vector_store %arg9[%c1_196, %c0_197, %c0_198], %356 {strides = array<i32>} : memref<2x8x128xf32, #tpu.memory_space<vmem>>, vector<1x8x128xf32>,
    %c1_199 = arith.constant 1 : index
    %c0_200 = arith.constant 0 : index
    %c0_201 = arith.constant 0 : index
    %357 = vector.load %arg10[%c1_199, %c0_200, %c0_201] : memref<2x8x128xf32, #tpu.memory_space<vmem>>, vector<1x8x128xf32>
    %358 = vector.shape_cast %357 : vector<1x8x128xf32> to vector<8x128xf32>
    %359 = vector.shape_cast %351 : vector<8x128xf32> to vector<1x8x128xf32>
    tpu.vector_store %arg10[%c1_199, %c0_200, %c0_201], %359 {strides = array<i32>} : memref<2x8x128xf32, #tpu.memory_space<vmem>>, vector<1x8x128xf32>,
    %c4_202 = arith.constant 4 : index
    %c0_203 = arith.constant 0 : index
    %c0_204 = arith.constant 0 : index
    %360 = vector.load %arg8[%c4_202, %c0_203, %c0_204] : memref<6x8x128xf32, #tpu.memory_space<vmem>>, vector<1x8x128xf32>
    %361 = vector.shape_cast %360 : vector<1x8x128xf32> to vector<8x128xf32>
    %362 = vector.shape_cast %353 : vector<8x128xf32> to vector<1x8x128xf32>
    tpu.vector_store %arg8[%c4_202, %c0_203, %c0_204], %362 {strides = array<i32>} : memref<6x8x128xf32, #tpu.memory_space<vmem>>, vector<1x8x128xf32>,
    %c5 = arith.constant 5 : index
    %c0_205 = arith.constant 0 : index
    %c0_206 = arith.constant 0 : index
    %363 = vector.load %arg1[%c5, %c0_205, %c0_206] : memref<6x8x128xbf16, #tpu.memory_space<vmem>>, vector<1x8x128xbf16>
    %364 = vector.shape_cast %363 : vector<1x8x128xbf16> to vector<8x128xbf16>
    %c0_207 = arith.constant 0 : index
    %c0_208 = arith.constant 0 : index
    %c0_209 = arith.constant 0 : index
    %365 = vector.load %arg9[%c0_207, %c0_208, %c0_209] : memref<2x8x128xf32, #tpu.memory_space<vmem>>, vector<1x8x128xf32>
    %366 = vector.shape_cast %365 : vector<1x8x128xf32> to vector<8x128xf32>
    %c0_210 = arith.constant 0 : index
    %c0_211 = arith.constant 0 : index
    %c0_212 = arith.constant 0 : index
    %367 = vector.load %arg10[%c0_210, %c0_211, %c0_212] : memref<2x8x128xf32, #tpu.memory_space<vmem>>, vector<1x8x128xf32>
    %368 = vector.shape_cast %367 : vector<1x8x128xf32> to vector<8x128xf32>
    %369 = arith.truncf %366 : vector<8x128xf32> to vector<8x128xbf16>
    %370 = tpu.concatenate %364, %369 in 1 : vector<8x128xbf16>, vector<8x128xbf16> -> vector<8x256xbf16>
    %c0_213 = arith.constant 0 : index
    %c0_214 = arith.constant 0 : index
    %371 = vector.load %arg4[%c0_213, %c0_214] : memref<256x512xbf16, #tpu.memory_space<vmem>>, vector<256x512xbf16>
    %cst_215 = arith.constant dense<0.000000e+00> : vector<8x512xf32>
    %372 = tpu.matmul %370, %371, %cst_215 {dimension_numbers = #tpu.dot_dimension_numbers<[1], [0], [0], [1], [0, 0, 1, 1], [], []>} : vector<8x256xbf16>, vector<256x512xbf16>, vector<8x512xf32> -> vector<8x512xf32>
    %c0_216 = arith.constant 0 : index
    %c0_217 = arith.constant 0 : index
    %373 = vector.load %arg6[%c0_216, %c0_217] : memref<1x512xf32, #tpu.memory_space<vmem>>, vector<1x512xf32>
    %374 = vector.broadcast %373 : vector<1x512xf32> to vector<8x512xf32>
    %375 = arith.addf %372, %374 : vector<8x512xf32>
    %376 = vector.extract_strided_slice %375 {offsets = [0, 0], sizes = [8, 384], strides = [1, 1]} : vector<8x512xf32> to vector<8x384xf32>
    %377 = arith.negf %376 : vector<8x384xf32>
    %378 = math.exp %377 : vector<8x384xf32>
    %cst_218 = arith.constant 1.000000e+00 : f32
    %379 = vector.broadcast %cst_218 : f32 to vector<8x384xf32>
    %380 = arith.addf %379, %378 : vector<8x384xf32>
    %381 = arith.divf %379, %380 : vector<8x384xf32>
    %382 = vector.extract_strided_slice %381 {offsets = [0, 0], sizes = [8, 128], strides = [1, 1]} : vector<8x384xf32> to vector<8x128xf32>
    %383 = vector.extract_strided_slice %381 {offsets = [0, 128], sizes = [8, 128], strides = [1, 1]} : vector<8x384xf32> to vector<8x128xf32>
    %384 = vector.extract_strided_slice %381 {offsets = [0, 256], sizes = [8, 128], strides = [1, 1]} : vector<8x384xf32> to vector<8x128xf32>
    %385 = vector.extract_strided_slice %375 {offsets = [0, 384], sizes = [8, 128], strides = [1, 1]} : vector<8x512xf32> to vector<8x128xf32>
    %386 = math.tanh %385 : vector<8x128xf32>
    %387 = arith.mulf %383, %368 : vector<8x128xf32>
    %388 = arith.mulf %382, %386 : vector<8x128xf32>
    %389 = arith.addf %387, %388 : vector<8x128xf32>
    %390 = math.tanh %389 : vector<8x128xf32>
    %391 = arith.mulf %384, %390 : vector<8x128xf32>
    %c0_219 = arith.constant 0 : index
    %c0_220 = arith.constant 0 : index
    %c0_221 = arith.constant 0 : index
    %392 = vector.load %arg9[%c0_219, %c0_220, %c0_221] : memref<2x8x128xf32, #tpu.memory_space<vmem>>, vector<1x8x128xf32>
    %393 = vector.shape_cast %392 : vector<1x8x128xf32> to vector<8x128xf32>
    %394 = vector.shape_cast %391 : vector<8x128xf32> to vector<1x8x128xf32>
    tpu.vector_store %arg9[%c0_219, %c0_220, %c0_221], %394 {strides = array<i32>} : memref<2x8x128xf32, #tpu.memory_space<vmem>>, vector<1x8x128xf32>,
    %c0_222 = arith.constant 0 : index
    %c0_223 = arith.constant 0 : index
    %c0_224 = arith.constant 0 : index
    %395 = vector.load %arg10[%c0_222, %c0_223, %c0_224] : memref<2x8x128xf32, #tpu.memory_space<vmem>>, vector<1x8x128xf32>
    %396 = vector.shape_cast %395 : vector<1x8x128xf32> to vector<8x128xf32>
    %397 = vector.shape_cast %389 : vector<8x128xf32> to vector<1x8x128xf32>
    tpu.vector_store %arg10[%c0_222, %c0_223, %c0_224], %397 {strides = array<i32>} : memref<2x8x128xf32, #tpu.memory_space<vmem>>, vector<1x8x128xf32>,
    %398 = arith.truncf %391 : vector<8x128xf32> to vector<8x128xbf16>
    %c1_225 = arith.constant 1 : index
    %c0_226 = arith.constant 0 : index
    %c0_227 = arith.constant 0 : index
    %399 = vector.load %arg9[%c1_225, %c0_226, %c0_227] : memref<2x8x128xf32, #tpu.memory_space<vmem>>, vector<1x8x128xf32>
    %400 = vector.shape_cast %399 : vector<1x8x128xf32> to vector<8x128xf32>
    %c1_228 = arith.constant 1 : index
    %c0_229 = arith.constant 0 : index
    %c0_230 = arith.constant 0 : index
    %401 = vector.load %arg10[%c1_228, %c0_229, %c0_230] : memref<2x8x128xf32, #tpu.memory_space<vmem>>, vector<1x8x128xf32>
    %402 = vector.shape_cast %401 : vector<1x8x128xf32> to vector<8x128xf32>
    %403 = arith.truncf %400 : vector<8x128xf32> to vector<8x128xbf16>
    %404 = tpu.concatenate %398, %403 in 1 : vector<8x128xbf16>, vector<8x128xbf16> -> vector<8x256xbf16>
    %c0_231 = arith.constant 0 : index
    %c0_232 = arith.constant 0 : index
    %405 = vector.load %arg5[%c0_231, %c0_232] : memref<256x512xbf16, #tpu.memory_space<vmem>>, vector<256x512xbf16>
    %cst_233 = arith.constant dense<0.000000e+00> : vector<8x512xf32>
    %406 = tpu.matmul %404, %405, %cst_233 {dimension_numbers = #tpu.dot_dimension_numbers<[1], [0], [0], [1], [0, 0, 1, 1], [], []>} : vector<8x256xbf16>, vector<256x512xbf16>, vector<8x512xf32> -> vector<8x512xf32>
    %c0_234 = arith.constant 0 : index
    %c0_235 = arith.constant 0 : index
    %407 = vector.load %arg7[%c0_234, %c0_235] : memref<1x512xf32, #tpu.memory_space<vmem>>, vector<1x512xf32>
    %408 = vector.broadcast %407 : vector<1x512xf32> to vector<8x512xf32>
    %409 = arith.addf %406, %408 : vector<8x512xf32>
    %410 = vector.extract_strided_slice %409 {offsets = [0, 0], sizes = [8, 384], strides = [1, 1]} : vector<8x512xf32> to vector<8x384xf32>
    %411 = arith.negf %410 : vector<8x384xf32>
    %412 = math.exp %411 : vector<8x384xf32>
    %cst_236 = arith.constant 1.000000e+00 : f32
    %413 = vector.broadcast %cst_236 : f32 to vector<8x384xf32>
    %414 = arith.addf %413, %412 : vector<8x384xf32>
    %415 = arith.divf %413, %414 : vector<8x384xf32>
    %416 = vector.extract_strided_slice %415 {offsets = [0, 0], sizes = [8, 128], strides = [1, 1]} : vector<8x384xf32> to vector<8x128xf32>
    %417 = vector.extract_strided_slice %415 {offsets = [0, 128], sizes = [8, 128], strides = [1, 1]} : vector<8x384xf32> to vector<8x128xf32>
    %418 = vector.extract_strided_slice %415 {offsets = [0, 256], sizes = [8, 128], strides = [1, 1]} : vector<8x384xf32> to vector<8x128xf32>
    %419 = vector.extract_strided_slice %409 {offsets = [0, 384], sizes = [8, 128], strides = [1, 1]} : vector<8x512xf32> to vector<8x128xf32>
    %420 = math.tanh %419 : vector<8x128xf32>
    %421 = arith.mulf %417, %402 : vector<8x128xf32>
    %422 = arith.mulf %416, %420 : vector<8x128xf32>
    %423 = arith.addf %421, %422 : vector<8x128xf32>
    %424 = math.tanh %423 : vector<8x128xf32>
    %425 = arith.mulf %418, %424 : vector<8x128xf32>
    %c1_237 = arith.constant 1 : index
    %c0_238 = arith.constant 0 : index
    %c0_239 = arith.constant 0 : index
    %426 = vector.load %arg9[%c1_237, %c0_238, %c0_239] : memref<2x8x128xf32, #tpu.memory_space<vmem>>, vector<1x8x128xf32>
    %427 = vector.shape_cast %426 : vector<1x8x128xf32> to vector<8x128xf32>
    %428 = vector.shape_cast %425 : vector<8x128xf32> to vector<1x8x128xf32>
    tpu.vector_store %arg9[%c1_237, %c0_238, %c0_239], %428 {strides = array<i32>} : memref<2x8x128xf32, #tpu.memory_space<vmem>>, vector<1x8x128xf32>,
    %c1_240 = arith.constant 1 : index
    %c0_241 = arith.constant 0 : index
    %c0_242 = arith.constant 0 : index
    %429 = vector.load %arg10[%c1_240, %c0_241, %c0_242] : memref<2x8x128xf32, #tpu.memory_space<vmem>>, vector<1x8x128xf32>
    %430 = vector.shape_cast %429 : vector<1x8x128xf32> to vector<8x128xf32>
    %431 = vector.shape_cast %423 : vector<8x128xf32> to vector<1x8x128xf32>
    tpu.vector_store %arg10[%c1_240, %c0_241, %c0_242], %431 {strides = array<i32>} : memref<2x8x128xf32, #tpu.memory_space<vmem>>, vector<1x8x128xf32>,
    %c5_243 = arith.constant 5 : index
    %c0_244 = arith.constant 0 : index
    %c0_245 = arith.constant 0 : index
    %432 = vector.load %arg8[%c5_243, %c0_244, %c0_245] : memref<6x8x128xf32, #tpu.memory_space<vmem>>, vector<1x8x128xf32>
    %433 = vector.shape_cast %432 : vector<1x8x128xf32> to vector<8x128xf32>
    %434 = vector.shape_cast %425 : vector<8x128xf32> to vector<1x8x128xf32>
    tpu.vector_store %arg8[%c5_243, %c0_244, %c0_245], %434 {strides = array<i32>} : memref<6x8x128xf32, #tpu.memory_space<vmem>>, vector<1x8x128xf32>,
    return
  }
  func.func @transform_0(%arg0: i32) -> (i32, i32, i32) {
    %c0_i32 = arith.constant 0 : i32
    %c0_i32_0 = arith.constant 0 : i32
    %c0_i32_1 = arith.constant 0 : i32
    return %arg0, %c0_i32, %c0_i32_0 : i32, i32, i32
  }
  func.func @transform_1(%arg0: i32) -> (i32, i32, i32) {
    %c0_i32 = arith.constant 0 : i32
    %c0_i32_0 = arith.constant 0 : i32
    %c0_i32_1 = arith.constant 0 : i32
    %c0_i32_2 = arith.constant 0 : i32
    return %c0_i32, %c0_i32_0, %c0_i32_1 : i32, i32, i32
  }
  func.func @transform_2(%arg0: i32) -> (i32, i32, i32) {
    %c0_i32 = arith.constant 0 : i32
    %c0_i32_0 = arith.constant 0 : i32
    %c0_i32_1 = arith.constant 0 : i32
    %c0_i32_2 = arith.constant 0 : i32
    return %c0_i32, %c0_i32_0, %c0_i32_1 : i32, i32, i32
  }
  func.func @transform_3(%arg0: i32) -> (i32, i32) {
    %c0_i32 = arith.constant 0 : i32
    %c0_i32_0 = arith.constant 0 : i32
    %c0_i32_1 = arith.constant 0 : i32
    return %c0_i32, %c0_i32_0 : i32, i32
  }
  func.func @transform_4(%arg0: i32) -> (i32, i32) {
    %c0_i32 = arith.constant 0 : i32
    %c0_i32_0 = arith.constant 0 : i32
    %c0_i32_1 = arith.constant 0 : i32
    return %c0_i32, %c0_i32_0 : i32, i32
  }
  func.func @transform_5(%arg0: i32) -> (i32, i32) {
    %c0_i32 = arith.constant 0 : i32
    %c0_i32_0 = arith.constant 0 : i32
    %c0_i32_1 = arith.constant 0 : i32
    return %c0_i32, %c0_i32_0 : i32, i32
  }
  func.func @transform_6(%arg0: i32) -> (i32, i32) {
    %c0_i32 = arith.constant 0 : i32
    %c0_i32_0 = arith.constant 0 : i32
    %c0_i32_1 = arith.constant 0 : i32
    return %c0_i32, %c0_i32_0 : i32, i32
  }
  func.func @transform_7(%arg0: i32) -> (i32, i32, i32) {
    %c0_i32 = arith.constant 0 : i32
    %c0_i32_0 = arith.constant 0 : i32
    %c0_i32_1 = arith.constant 0 : i32
    return %arg0, %c0_i32, %c0_i32_0 : i32, i32, i32
  }
  func.func @transform_8(%arg0: i32) -> (i32, i32, i32) {
    %c0_i32 = arith.constant 0 : i32
    %c0_i32_0 = arith.constant 0 : i32
    %c0_i32_1 = arith.constant 0 : i32
    %c0_i32_2 = arith.constant 0 : i32
    return %c0_i32, %c0_i32_0, %c0_i32_1 : i32, i32, i32
  }
  func.func @transform_9(%arg0: i32) -> (i32, i32, i32) {
    %c0_i32 = arith.constant 0 : i32
    %c0_i32_0 = arith.constant 0 : i32
    %c0_i32_1 = arith.constant 0 : i32
    %c0_i32_2 = arith.constant 0 : i32
    return %c0_i32, %c0_i32_0, %c0_i32_1 : i32, i32, i32
  }
}

</mosaic_0001>

<llo_original>
// kernel: tpu_custom_call.1
$region0: #{tpu_custom_call.1}
  #allocation0 [shape = 'u32[]', space=smem, size = 0x4, offset = 0x4, fixed_abs, tag = 'smem constant byte address 0x4 - core index']
  #allocation1 [shape = 'u32[144,128]{1,0:T(1,128)}', space=vmem, size = 0x12000, scoped, tag = 'internal scratch']
  %s0 = inlined_call_operand.vmem [shape: bf16[6,8,128], index: 0, kind: input, shape index: {}]
  %s1 = inlined_call_operand.hbm [shape: f32[2,8,128], index: 1, kind: input, shape index: {}, may-alias: {1,8}]
  %s2 = inlined_call_operand.hbm [shape: f32[2,8,128], index: 2, kind: input, shape index: {}, may-alias: {2,9}]
  %s3 = inlined_call_operand.hbm [shape: bf16[256,512], index: 3, kind: input, shape index: {}]
  %s4 = inlined_call_operand.hbm [shape: bf16[256,512], index: 4, kind: input, shape index: {}]
  %s5 = inlined_call_operand.vmem [shape: f32[1,512], index: 5, kind: input, shape index: {}]
  %s6 = inlined_call_operand.vmem [shape: f32[1,512], index: 6, kind: input, shape index: {}]
  %s7 = inlined_call_operand.hbm [shape: f32[6,8,128], index: 7, kind: output, shape index: {0}]
  %s8 = inlined_call_operand.hbm [shape: f32[2,8,128], index: 8, kind: output, shape index: {1}, may-alias: {1,8}]
  %s9 = inlined_call_operand.hbm [shape: f32[2,8,128], index: 9, kind: output, shape index: {2}, may-alias: {2,9}]
  %10 = xla_tuple %s7, %s8, %s9
  %s11 = sld [smem:[#allocation0]]
  $region74: #{tpu_custom_call.1} parent=0
    _
  %s13 = ssub.s32 1, %s11
  %s14 = scalar_select 0, %s13, %s11
  $region1: #{tpu_custom_call.1} parent=0
    #allocation2 [shape = 'u8[8192]{0}', space=vmem, size = 0x2000, scoped, tag = 'input window, operand 1, single buffered']
    #allocation3 [shape = 's32[1]{0}', space=sflag, size = 0x4, scoped, tag = 'scoped memory for tpu_custom_call.1']
    #allocation4 [shape = 's32[1]{0}', space=sflag, size = 0x4, scoped, tag = 'scoped memory for tpu_custom_call.1']
    #allocation5 [shape = 'u8[8192]{0}', space=vmem, size = 0x2000, scoped, tag = 'input window, operand 2, single buffered']
    #allocation6 [shape = 's32[1]{0}', space=sflag, size = 0x4, scoped, tag = 'scoped memory for tpu_custom_call.1']
    #allocation7 [shape = 'u8[262144]{0}', space=vmem, size = 0x40000, scoped, tag = 'input window, operand 3, single buffered']
    #allocation8 [shape = 'u8[262144]{0}', space=vmem, size = 0x40000, scoped, tag = 'input window, operand 4, single buffered']
    #allocation9 [shape = 's32[1]{0}', space=sflag, size = 0x4, scoped, tag = 'scoped memory for tpu_custom_call.1']
    #allocation10 [shape = 'u8[24576]{0}', space=vmem, size = 0x6000, scoped, tag = 'output window, operand 0, single buffered']
    #allocation11 [shape = 'u8[8192]{0}', space=vmem, size = 0x2000, scoped, tag = 'output window, operand 1, single buffered']
    #allocation12 [shape = 's32[1]{0}', space=sflag, size = 0x4, scoped, tag = 'scoped memory for tpu_custom_call.1']
    #allocation13 [shape = 'u8[8192]{0}', space=vmem, size = 0x2000, scoped, tag = 'output window, operand 2, single buffered']
    %15 = vsyncpa [#allocation3], 0
    %16 = vsyncpa [#allocation6], 0
    %17 = vsyncpa [#allocation9], 0
    %18 = vsyncpa [#allocation4], 0
    %19 = vsyncpa [#allocation12], 0
    // Predicated region
    $region2: #{tpu_custom_call.1} parent=1 // pred_check
      _
    $region3: #{tpu_custom_call.1} parent=1 // pred_check_branch
      %21 = sbr.rel (0) target = $region5
    $region4: #{tpu_custom_call.1} parent=1 // pred_region
      _
    $region5: #{tpu_custom_call.1} parent=1 // pred_fallthru
      _
    // Predicated region
    $region6: #{tpu_custom_call.1} parent=1 // pred_check
      _
    $region7: #{tpu_custom_call.1} parent=1 // pred_check_branch
      %23 = sbr.rel (0) target = $region9
    $region8: #{tpu_custom_call.1} parent=1 // pred_region
      %s25 = ssub.s32 256, 256
      %26 = vsyncadd [#allocation3], %s25
      %s27 = sshll.u32 [#allocation2], 4
      %s28 = int_to_ptr.vmem [resolvable:$true] %s27
      %33 = dma.hbm_to_vmem [thread:$0]  %s1, 256, %s28, [#allocation3], 128, 128, 8
    $region9: #{tpu_custom_call.1} parent=1 // pred_fallthru
      _
    // Predicated region
    $region10: #{tpu_custom_call.1} parent=1 // pred_check
      _
    $region11: #{tpu_custom_call.1} parent=1 // pred_check_branch
      %35 = sbr.rel (0) target = $region13
    $region12: #{tpu_custom_call.1} parent=1 // pred_region
      %s37 = ssub.s32 256, 256
      %38 = vsyncadd [#allocation6], %s37
      %s39 = sshll.u32 [#allocation5], 4
      %s40 = int_to_ptr.vmem [resolvable:$true] %s39
      %45 = dma.hbm_to_vmem [thread:$0]  %s2, 256, %s40, [#allocation6], 128, 128, 8
    $region13: #{tpu_custom_call.1} parent=1 // pred_fallthru
      _
    // Predicated region
    $region14: #{tpu_custom_call.1} parent=1 // pred_check
      _
    $region15: #{tpu_custom_call.1} parent=1 // pred_check_branch
      %47 = sbr.rel (0) target = $region17
    $region16: #{tpu_custom_call.1} parent=1 // pred_region
      %s49 = ssub.s32 8192, 8192
      %50 = vsyncadd [#allocation6], %s49
      %s51 = sshll.u32 [#allocation7], 4
      %s52 = int_to_ptr.vmem [resolvable:$true] %s51
      %57 = dma.hbm_to_vmem [thread:$0]  %s3, 8192, %s52, [#allocation6], 256, 256, 16
    $region17: #{tpu_custom_call.1} parent=1 // pred_fallthru
      _
    // Predicated region
    $region18: #{tpu_custom_call.1} parent=1 // pred_check
      _
    $region19: #{tpu_custom_call.1} parent=1 // pred_check_branch
      %59 = sbr.rel (0) target = $region21
    $region20: #{tpu_custom_call.1} parent=1 // pred_region
      %s61 = ssub.s32 8192, 8192
      %62 = vsyncadd [#allocation9], %s61
      %s63 = sshll.u32 [#allocation8], 4
      %s64 = int_to_ptr.vmem [resolvable:$true] %s63
      %69 = dma.hbm_to_vmem [thread:$0]  %s4, 8192, %s64, [#allocation9], 256, 256, 16
    $region21: #{tpu_custom_call.1} parent=1 // pred_fallthru
      _
    // Predicated region
    $region22: #{tpu_custom_call.1} parent=1 // pred_check
      _
    $region23: #{tpu_custom_call.1} parent=1 // pred_check_branch
      %71 = sbr.rel (0) target = $region25
    $region24: #{tpu_custom_call.1} parent=1 // pred_region
      _
    $region25: #{tpu_custom_call.1} parent=1 // pred_fallthru
      _
    // Predicated region
    $region26: #{tpu_custom_call.1} parent=1 // pred_check
      _
    $region27: #{tpu_custom_call.1} parent=1 // pred_check_branch
      %73 = sbr.rel (0) target = $region29
    $region28: #{tpu_custom_call.1} parent=1 // pred_region
      _
    $region29: #{tpu_custom_call.1} parent=1 // pred_fallthru
      _
    // Predicated region
    $region30: #{tpu_custom_call.1} parent=1 // pred_check
      _
    $region31: #{tpu_custom_call.1} parent=1 // pred_check_branch
      %75 = sbr.rel (0) target = $region33
    $region32: #{tpu_custom_call.1} parent=1 // pred_region
      %76 = dma.done [#allocation3], 256
    $region33: #{tpu_custom_call.1} parent=1 // pred_fallthru
      _
    // Predicated region
    $region34: #{tpu_custom_call.1} parent=1 // pred_check
      _
    $region35: #{tpu_custom_call.1} parent=1 // pred_check_branch
      %78 = sbr.rel (0) target = $region37
    $region36: #{tpu_custom_call.1} parent=1 // pred_region
      %79 = dma.done [#allocation6], 256
    $region37: #{tpu_custom_call.1} parent=1 // pred_fallthru
      _
    // Predicated region
    $region38: #{tpu_custom_call.1} parent=1 // pred_check
      _
    $region39: #{tpu_custom_call.1} parent=1 // pred_check_branch
      %81 = sbr.rel (0) target = $region41
    $region40: #{tpu_custom_call.1} parent=1 // pred_region
      %82 = dma.done [#allocation6], 8192
    $region41: #{tpu_custom_call.1} parent=1 // pred_fallthru
      _
    // Predicated region
    $region42: #{tpu_custom_call.1} parent=1 // pred_check
      _
    $region43: #{tpu_custom_call.1} parent=1 // pred_check_branch
      %84 = sbr.rel (0) target = $region45
    $region44: #{tpu_custom_call.1} parent=1 // pred_region
      %85 = dma.done [#allocation9], 8192
    $region45: #{tpu_custom_call.1} parent=1 // pred_fallthru
      _
    %p86 = scmp.eq.s32.totalorder 0, 0
    // Predicated region
    $region46: #{tpu_custom_call.1} parent=1 // pred_check
      %p87 = pneg %p86
    $region47: #{tpu_custom_call.1} parent=1 // pred_check_branch
      %89 = sbr.rel (%p87) target = $region49
    $region48: #{tpu_custom_call.1} parent=1 // pred_region
      %v90 = vld [vmem:[#allocation2] sm:$0xff]
      %v91 = vld [vmem:[#allocation2 + $0x8] sm:$0xff]
      %92 = vst [vmem:[#allocation11] sm:$0xff] %v90
      %93 = vst [vmem:[#allocation11 + $0x8] sm:$0xff] %v91
      %v94 = vld [vmem:[#allocation5] sm:$0xff]
      %v95 = vld [vmem:[#allocation5 + $0x8] sm:$0xff]
      %96 = vst [vmem:[#allocation13] sm:$0xff] %v94
      %97 = vst [vmem:[#allocation13 + $0x8] sm:$0xff] %v95
    $region49: #{tpu_custom_call.1} parent=1 // pred_fallthru
      _
    %v98 = vld [vmem:[%s0] sm:$0xf]
    %v99 = vld [vmem:[#allocation11] sm:$0xff]
    %v100 = vld [vmem:[#allocation13] sm:$0xff]
    %v101 = vpack.c.bf16 %v99, %v99
    %v102 = vld [vmem:[#allocation7] sm:$0xff]
    %v103 = vld [vmem:[#allocation7 + $0x8] sm:$0xff]
    %v104 = vld [vmem:[#allocation7 + $0x10] sm:$0xff]
    %v105 = vld [vmem:[#allocation7 + $0x18] sm:$0xff]
    %v106 = vld [vmem:[#allocation7 + $0x20] sm:$0xff]
    %v107 = vld [vmem:[#allocation7 + $0x28] sm:$0xff]
    %v108 = vld [vmem:[#allocation7 + $0x30] sm:$0xff]
    %v109 = vld [vmem:[#allocation7 + $0x38] sm:$0xff]
    %v110 = vld [vmem:[#allocation7 + $0x40] sm:$0xff]
    %v111 = vld [vmem:[#allocation7 + $0x48] sm:$0xff]
    %v112 = vld [vmem:[#allocation7 + $0x50] sm:$0xff]
    %v113 = vld [vmem:[#allocation7 + $0x58] sm:$0xff]
    %v114 = vld [vmem:[#allocation7 + $0x60] sm:$0xff]
    %v115 = vld [vmem:[#allocation7 + $0x68] sm:$0xff]
    %v116 = vld [vmem:[#allocation7 + $0x70] sm:$0xff]
    %v117 = vld [vmem:[#allocation7 + $0x78] sm:$0xff]
    %v118 = vld [vmem:[#allocation7 + $0x80] sm:$0xff]
    %v119 = vld [vmem:[#allocation7 + $0x88] sm:$0xff]
    %v120 = vld [vmem:[#allocation7 + $0x90] sm:$0xff]
    %v121 = vld [vmem:[#allocation7 + $0x98] sm:$0xff]
    %v122 = vld [vmem:[#allocation7 + $0xa0] sm:$0xff]
    %v123 = vld [vmem:[#allocation7 + $0xa8] sm:$0xff]
    %v124 = vld [vmem:[#allocation7 + $0xb0] sm:$0xff]
    %v125 = vld [vmem:[#allocation7 + $0xb8] sm:$0xff]
    %v126 = vld [vmem:[#allocation7 + $0xc0] sm:$0xff]
    %v127 = vld [vmem:[#allocation7 + $0xc8] sm:$0xff]
    %v128 = vld [vmem:[#allocation7 + $0xd0] sm:$0xff]
    %v129 = vld [vmem:[#allocation7 + $0xd8] sm:$0xff]
    %v130 = vld [vmem:[#allocation7 + $0xe0] sm:$0xff]
    %v131 = vld [vmem:[#allocation7 + $0xe8] sm:$0xff]
    %v132 = vld [vmem:[#allocation7 + $0xf0] sm:$0xff]
    %v133 = vld [vmem:[#allocation7 + $0xf8] sm:$0xff]
    %v134 = vld [vmem:[#allocation7 + $0x100] sm:$0xff]
    %v135 = vld [vmem:[#allocation7 + $0x108] sm:$0xff]
    %v136 = vld [vmem:[#allocation7 + $0x110] sm:$0xff]
    %v137 = vld [vmem:[#allocation7 + $0x118] sm:$0xff]
    %v138 = vld [vmem:[#allocation7 + $0x120] sm:$0xff]
    %v139 = vld [vmem:[#allocation7 + $0x128] sm:$0xff]
    %v140 = vld [vmem:[#allocation7 + $0x130] sm:$0xff]
    %v141 = vld [vmem:[#allocation7 + $0x138] sm:$0xff]
    %v142 = vld [vmem:[#allocation7 + $0x140] sm:$0xff]
    %v143 = vld [vmem:[#allocation7 + $0x148] sm:$0xff]
    %v144 = vld [vmem:[#allocation7 + $0x150] sm:$0xff]
    %v145 = vld [vmem:[#allocation7 + $0x158] sm:$0xff]
    %v146 = vld [vmem:[#allocation7 + $0x160] sm:$0xff]
    %v147 = vld [vmem:[#allocation7 + $0x168] sm:$0xff]
    %v148 = vld [vmem:[#allocation7 + $0x170] sm:$0xff]
    %v149 = vld [vmem:[#allocation7 + $0x178] sm:$0xff]
    %v150 = vld [vmem:[#allocation7 + $0x180] sm:$0xff]
    %v151 = vld [vmem:[#allocation7 + $0x188] sm:$0xff]
    %v152 = vld [vmem:[#allocation7 + $0x190] sm:$0xff]
    %v153 = vld [vmem:[#allocation7 + $0x198] sm:$0xff]
    %v154 = vld [vmem:[#allocation7 + $0x1a0] sm:$0xff]
    %v155 = vld [vmem:[#allocation7 + $0x1a8] sm:$0xff]
    %v156 = vld [vmem:[#allocation7 + $0x1b0] sm:$0xff]
    %v157 = vld [vmem:[#allocation7 + $0x1b8] sm:$0xff]
    %v158 = vld [vmem:[#allocation7 + $0x1c0] sm:$0xff]
    %v159 = vld [vmem:[#allocation7 + $0x1c8] sm:$0xff]
    %v160 = vld [vmem:[#allocation7 + $0x1d0] sm:$0xff]
    %v161 = vld [vmem:[#allocation7 + $0x1d8] sm:$0xff]
    %v162 = vld [vmem:[#allocation7 + $0x1e0] sm:$0xff]
    %v163 = vld [vmem:[#allocation7 + $0x1e8] sm:$0xff]
    %v164 = vld [vmem:[#allocation7 + $0x1f0] sm:$0xff]
    %v165 = vld [vmem:[#allocation7 + $0x1f8] sm:$0xff]
    %v166 = vld [vmem:[%s5] sm:$0xf]
    %v168 = vlaneseq
    %v169 = vshrl.u32 %v168, 7
    %v170 = vsub.s32 0, %v169
    %v171 = vrot.slane %v166, %v170
    %v172 = vlaneseq
    %v173 = vshrl.u32 %v172, 7
    %v174 = vsub.s32 1, %v173
    %v175 = vrot.slane %v166, %v174
    %v176 = vlaneseq
    %v177 = vshrl.u32 %v176, 7
    %v178 = vsub.s32 2, %v177
    %v179 = vrot.slane %v166, %v178
    %v180 = vlaneseq
    %v181 = vshrl.u32 %v180, 7
    %v182 = vsub.s32 3, %v181
    %v183 = vrot.slane %v166, %v182
    %v252 = vunpack.c.l.b16 %v102
    %v253 = vunpack.c.h.b16 %v102
    %v254 = vunpack.c.l.b16 %v103
    %v255 = vunpack.c.h.b16 %v103
    %v256 = vunpack.c.l.b16 %v104
    %v257 = vunpack.c.h.b16 %v104
    %v258 = vunpack.c.l.b16 %v105
    %v259 = vunpack.c.h.b16 %v105
    %v260 = vunpack.c.l.b16 %v106
    %v261 = vunpack.c.h.b16 %v106
    %v262 = vunpack.c.l.b16 %v107
    %v263 = vunpack.c.h.b16 %v107
    %v264 = vunpack.c.l.b16 %v108
    %v265 = vunpack.c.h.b16 %v108
    %v266 = vunpack.c.l.b16 %v109
    %v267 = vunpack.c.h.b16 %v109
    %v268 = vunpack.c.l.b16 %v110
    %v269 = vunpack.c.h.b16 %v110
    %v270 = vunpack.c.l.b16 %v111
    %v271 = vunpack.c.h.b16 %v111
    %v272 = vunpack.c.l.b16 %v112
    %v273 = vunpack.c.h.b16 %v112
    %v274 = vunpack.c.l.b16 %v113
    %v275 = vunpack.c.h.b16 %v113
    %v276 = vunpack.c.l.b16 %v114
    %v277 = vunpack.c.h.b16 %v114
    %v278 = vunpack.c.l.b16 %v115
    %v279 = vunpack.c.h.b16 %v115
    %v280 = vunpack.c.l.b16 %v116
    %v281 = vunpack.c.h.b16 %v116
    %v282 = vunpack.c.l.b16 %v117
    %v283 = vunpack.c.h.b16 %v117
    %v284 = vunpack.c.l.b16 %v118
    %v285 = vunpack.c.h.b16 %v118
    %v286 = vunpack.c.l.b16 %v119
    %v287 = vunpack.c.h.b16 %v119
    %v288 = vunpack.c.l.b16 %v120
    %v289 = vunpack.c.h.b16 %v120
    %v290 = vunpack.c.l.b16 %v121
    %v291 = vunpack.c.h.b16 %v121
    %v292 = vunpack.c.l.b16 %v122
    %v293 = vunpack.c.h.b16 %v122
    %v294 = vunpack.c.l.b16 %v123
    %v295 = vunpack.c.h.b16 %v123
    %v296 = vunpack.c.l.b16 %v124
    %v297 = vunpack.c.h.b16 %v124
    %v298 = vunpack.c.l.b16 %v125
    %v299 = vunpack.c.h.b16 %v125
    %v300 = vunpack.c.l.b16 %v126
    %v301 = vunpack.c.h.b16 %v126
    %v302 = vunpack.c.l.b16 %v127
    %v303 = vunpack.c.h.b16 %v127
    %v304 = vunpack.c.l.b16 %v128
    %v305 = vunpack.c.h.b16 %v128
    %v306 = vunpack.c.l.b16 %v129
    %v307 = vunpack.c.h.b16 %v129
    %v308 = vunpack.c.l.b16 %v130
    %v309 = vunpack.c.h.b16 %v130
    %v310 = vunpack.c.l.b16 %v131
    %v311 = vunpack.c.h.b16 %v131
    %v312 = vunpack.c.l.b16 %v132
    %v313 = vunpack.c.h.b16 %v132
    %v314 = vunpack.c.l.b16 %v133
    %v315 = vunpack.c.h.b16 %v133
    %v316 = vunpack.c.l.b16 %v134
    %v317 = vunpack.c.h.b16 %v134
    %v318 = vunpack.c.l.b16 %v135
    %v319 = vunpack.c.h.b16 %v135
    %v320 = vunpack.c.l.b16 %v136
    %v321 = vunpack.c.h.b16 %v136
    %v322 = vunpack.c.l.b16 %v137
    %v323 = vunpack.c.h.b16 %v137
    %v324 = vunpack.c.l.b16 %v138
    %v325 = vunpack.c.h.b16 %v138
    %v326 = vunpack.c.l.b16 %v139
    %v327 = vunpack.c.h.b16 %v139
    %v328 = vunpack.c.l.b16 %v140
    %v329 = vunpack.c.h.b16 %v140
    %v330 = vunpack.c.l.b16 %v141
    %v331 = vunpack.c.h.b16 %v141
    %v332 = vunpack.c.l.b16 %v142
    %v333 = vunpack.c.h.b16 %v142
    %v334 = vunpack.c.l.b16 %v143
    %v335 = vunpack.c.h.b16 %v143
    %v336 = vunpack.c.l.b16 %v144
    %v337 = vunpack.c.h.b16 %v144
    %v338 = vunpack.c.l.b16 %v145
    %v339 = vunpack.c.h.b16 %v145
    %v340 = vunpack.c.l.b16 %v146
    %v341 = vunpack.c.h.b16 %v146
    %v342 = vunpack.c.l.b16 %v147
    %v343 = vunpack.c.h.b16 %v147
    %v344 = vunpack.c.l.b16 %v148
    %v345 = vunpack.c.h.b16 %v148
    %v346 = vunpack.c.l.b16 %v149
    %v347 = vunpack.c.h.b16 %v149
    %v348 = vunpack.c.l.b16 %v150
    %v349 = vunpack.c.h.b16 %v150
    %v350 = vunpack.c.l.b16 %v151
    %v351 = vunpack.c.h.b16 %v151
    %v352 = vunpack.c.l.b16 %v152
    %v353 = vunpack.c.h.b16 %v152
    %v354 = vunpack.c.l.b16 %v153
    %v355 = vunpack.c.h.b16 %v153
    %v356 = vunpack.c.l.b16 %v154
    %v357 = vunpack.c.h.b16 %v154
    %v358 = vunpack.c.l.b16 %v155
    %v359 = vunpack.c.h.b16 %v155
    %v360 = vunpack.c.l.b16 %v156
    %v361 = vunpack.c.h.b16 %v156
    %v362 = vunpack.c.l.b16 %v157
    %v363 = vunpack.c.h.b16 %v157
    %v364 = vunpack.c.l.b16 %v158
    %v365 = vunpack.c.h.b16 %v158
    %v366 = vunpack.c.l.b16 %v159
    %v367 = vunpack.c.h.b16 %v159
    %v368 = vunpack.c.l.b16 %v160
    %v369 = vunpack.c.h.b16 %v160
    %v370 = vunpack.c.l.b16 %v161
    %v371 = vunpack.c.h.b16 %v161
    %v372 = vunpack.c.l.b16 %v162
    %v373 = vunpack.c.h.b16 %v162
    %v374 = vunpack.c.l.b16 %v163
    %v375 = vunpack.c.h.b16 %v163
    %v376 = vunpack.c.l.b16 %v164
    %v377 = vunpack.c.h.b16 %v164
    %v378 = vunpack.c.l.b16 %v165
    %v379 = vunpack.c.h.b16 %v165
    %v380 = vpack.c.b16 %v256, %v252
    %v381 = vpack.c.b16 %v257, %v253
    %v382 = vpack.c.b16 %v258, %v254
    %v383 = vpack.c.b16 %v259, %v255
    %v384 = vpack.c.b16 %v264, %v260
    %v385 = vpack.c.b16 %v265, %v261
    %v386 = vpack.c.b16 %v266, %v262
    %v387 = vpack.c.b16 %v267, %v263
    %v388 = vpack.c.b16 %v272, %v268
    %v389 = vpack.c.b16 %v273, %v269
    %v390 = vpack.c.b16 %v274, %v270
    %v391 = vpack.c.b16 %v275, %v271
    %v392 = vpack.c.b16 %v280, %v276
    %v393 = vpack.c.b16 %v281, %v277
    %v394 = vpack.c.b16 %v282, %v278
    %v395 = vpack.c.b16 %v283, %v279
    %v396 = vpack.c.b16 %v288, %v284
    %v397 = vpack.c.b16 %v289, %v285
    %v398 = vpack.c.b16 %v290, %v286
    %v399 = vpack.c.b16 %v291, %v287
    %v400 = vpack.c.b16 %v296, %v292
    %v401 = vpack.c.b16 %v297, %v293
    %v402 = vpack.c.b16 %v298, %v294
    %v403 = vpack.c.b16 %v299, %v295
    %v404 = vpack.c.b16 %v304, %v300
    %v405 = vpack.c.b16 %v305, %v301
    %v406 = vpack.c.b16 %v306, %v302
    %v407 = vpack.c.b16 %v307, %v303
    %v408 = vpack.c.b16 %v312, %v308
    %v409 = vpack.c.b16 %v313, %v309
    %v410 = vpack.c.b16 %v314, %v310
    %v411 = vpack.c.b16 %v315, %v311
    %v412 = vpack.c.b16 %v320, %v316
    %v413 = vpack.c.b16 %v321, %v317
    %v414 = vpack.c.b16 %v322, %v318
    %v415 = vpack.c.b16 %v323, %v319
    %v416 = vpack.c.b16 %v328, %v324
    %v417 = vpack.c.b16 %v329, %v325
    %v418 = vpack.c.b16 %v330, %v326
    %v419 = vpack.c.b16 %v331, %v327
    %v420 = vpack.c.b16 %v336, %v332
    %v421 = vpack.c.b16 %v337, %v333
    %v422 = vpack.c.b16 %v338, %v334
    %v423 = vpack.c.b16 %v339, %v335
    %v424 = vpack.c.b16 %v344, %v340
    %v425 = vpack.c.b16 %v345, %v341
    %v426 = vpack.c.b16 %v346, %v342
    %v427 = vpack.c.b16 %v347, %v343
    %v428 = vpack.c.b16 %v352, %v348
    %v429 = vpack.c.b16 %v353, %v349
    %v430 = vpack.c.b16 %v354, %v350
    %v431 = vpack.c.b16 %v355, %v351
    %v432 = vpack.c.b16 %v360, %v356
    %v433 = vpack.c.b16 %v361, %v357
    %v434 = vpack.c.b16 %v362, %v358
    %v435 = vpack.c.b16 %v363, %v359
    %v436 = vpack.c.b16 %v368, %v364
    %v437 = vpack.c.b16 %v369, %v365
    %v438 = vpack.c.b16 %v370, %v366
    %v439 = vpack.c.b16 %v371, %v367
    %v440 = vpack.c.b16 %v376, %v372
    %v441 = vpack.c.b16 %v377, %v373
    %v442 = vpack.c.b16 %v378, %v374
    %v443 = vpack.c.b16 %v379, %v375
    %508 = vmatprep.subr.bf16.mxu0 %v409
    %509 = vmatpush1.bf16.msra.mxu0 %v408
    %510 = vmatprep.subr.bf16.mxu0 %v405
    %511 = vmatpush1.bf16.msra.mxu0 %v404
    %512 = vmatprep.subr.bf16.mxu0 %v401
    %513 = vmatpush1.bf16.msra.mxu0 %v400
    %514 = vmatprep.subr.bf16.mxu0 %v397
    %515 = vmatpush1.bf16.msra.mxu0 %v396
    %516 = vmatprep.subr.bf16.mxu0 %v393
    %517 = vmatpush1.bf16.msra.mxu0 %v392
    %518 = vmatprep.subr.bf16.mxu0 %v389
    %519 = vmatpush1.bf16.msra.mxu0 %v388
    %520 = vmatprep.subr.bf16.mxu0 %v385
    %521 = vmatpush1.bf16.msra.mxu0 %v384
    %522 = vmatprep.subr.bf16.mxu0 %v381
    %523 = vmatpush1.bf16.msra.mxu0 %v380
    %524 = vmatprep.subr.bf16.mxu0 %v441
    %525 = vmatpush2.bf16.msra.mxu0 %v440
    %526 = vmatprep.subr.bf16.mxu0 %v437
    %527 = vmatpush2.bf16.msra.mxu0 %v436
    %528 = vmatprep.subr.bf16.mxu0 %v433
    %529 = vmatpush2.bf16.msra.mxu0 %v432
    %530 = vmatprep.subr.bf16.mxu0 %v429
    %531 = vmatpush2.bf16.msra.mxu0 %v428
    %532 = vmatprep.subr.bf16.mxu0 %v425
    %533 = vmatpush2.bf16.msra.mxu0 %v424
    %534 = vmatprep.subr.bf16.mxu0 %v421
    %535 = vmatpush2.bf16.msra.mxu0 %v420
    %536 = vmatprep.subr.bf16.mxu0 %v417
    %537 = vmatpush2.bf16.msra.mxu0 %v416
    %538 = vmatprep.subr.bf16.mxu0 %v413
    %539 = vmatpush2.bf16.msra.mxu0 %v412
    %540 = vmatprep.mubr.bf16.mxu0 %v101
    %541 = vmatmul.mubr.bf16.gmra.mxu0 %v98
    %v542 = vpop.f32.mrf.mxu0
    %v543 = vadd.f32 %v171, %v542
    %v544 = vpop.f32.mrf.mxu0
    %v545 = vadd.f32 %v175, %v544
    %v546 = vpop.f32.mrf.mxu0
    %v547 = vpop.f32.mrf.mxu0
    %548 = vdwg.mxu0
    %549 = vmatprep.subr.bf16.mxu0 %v411
    %550 = vmatpush1.bf16.msra.mxu0 %v410
    %551 = vmatprep.subr.bf16.mxu0 %v407
    %552 = vmatpush1.bf16.msra.mxu0 %v406
    %553 = vmatprep.subr.bf16.mxu0 %v403
    %554 = vmatpush1.bf16.msra.mxu0 %v402
    %555 = vmatprep.subr.bf16.mxu0 %v399
    %556 = vmatpush1.bf16.msra.mxu0 %v398
    %557 = vmatprep.subr.bf16.mxu0 %v395
    %558 = vmatpush1.bf16.msra.mxu0 %v394
    %559 = vmatprep.subr.bf16.mxu0 %v391
    %560 = vmatpush1.bf16.msra.mxu0 %v390
    %561 = vmatprep.subr.bf16.mxu0 %v387
    %562 = vmatpush1.bf16.msra.mxu0 %v386
    %563 = vmatprep.subr.bf16.mxu0 %v383
    %564 = vmatpush1.bf16.msra.mxu0 %v382
    %565 = vmatprep.subr.bf16.mxu0 %v443
    %566 = vmatpush2.bf16.msra.mxu0 %v442
    %567 = vmatprep.subr.bf16.mxu0 %v439
    %568 = vmatpush2.bf16.msra.mxu0 %v438
    %569 = vmatprep.subr.bf16.mxu0 %v435
    %570 = vmatpush2.bf16.msra.mxu0 %v434
    %571 = vmatprep.subr.bf16.mxu0 %v431
    %572 = vmatpush2.bf16.msra.mxu0 %v430
    %573 = vmatprep.subr.bf16.mxu0 %v427
    %574 = vmatpush2.bf16.msra.mxu0 %v426
    %575 = vmatprep.subr.bf16.mxu0 %v423
    %576 = vmatpush2.bf16.msra.mxu0 %v422
    %577 = vmatprep.subr.bf16.mxu0 %v419
    %578 = vmatpush2.bf16.msra.mxu0 %v418
    %579 = vmatprep.subr.bf16.mxu0 %v415
    %580 = vmatpush2.bf16.msra.mxu0 %v414
    %581 = vmatprep.mubr.bf16.mxu0 %v101
    %582 = vmatmul.mubr.bf16.gmra.mxu0 %v98
    %v583 = vpop.f32.mrf.mxu0
    %v584 = vadd.f32 %v179, %v583
    %v585 = vpop.f32.mrf.mxu0
    %v586 = vadd.f32 %v183, %v585
    %v587 = vpop.f32.mrf.mxu0
    %v588 = vpop.f32.mrf.mxu0
    %589 = vdwg.mxu0
    %v590 = vxor.u32 %v543, 2147483648
    %v591 = vxor.u32 %v545, 2147483648
    %v592 = vxor.u32 %v584, 2147483648
    %v593 = vmul.f32 %v590, 1.442695
    %v594 = vpow.pop %v593
    %v595 = vmul.f32 %v591, 1.442695
    %v596 = vpow.pop %v595
    %v597 = vmul.f32 %v592, 1.442695
    %v598 = vpow.pop %v597
    %v599 = vadd.f32 %v594, 1.0
    %v600 = vadd.f32 %v596, 1.0
    %v601 = vadd.f32 %v598, 1.0
    %v602 = vrcp.pop %v599
    %v603 = vmul.f32 1.0, %v602
    %v604 = vrcp.pop %v600
    %v605 = vmul.f32 1.0, %v604
    %v606 = vrcp.pop %v601
    %v607 = vmul.f32 1.0, %v606
    %v608 = vtanh.pop %v586
    %v609 = vmul.f32 %v605, %v100
    %v610 = vmul.f32 %v603, %v608
    %v611 = vadd.f32 %v609, %v610
    %v612 = vtanh.pop %v611
    %v613 = vmul.f32 %v607, %v612
    %614 = vst [vmem:[#allocation11] sm:$0xff] %v613
    %615 = vst [vmem:[#allocation13] sm:$0xff] %v611
    %v616 = vpack.c.bf16 %v613, %v613
    %s617 = scalar_lea.vmem [#allocation11], 8
    %v618 = vld [vmem:[%s617] sm:$0xff]
    %s619 = scalar_lea.vmem [#allocation13], 8
    %v620 = vld [vmem:[%s619] sm:$0xff]
    %v621 = vpack.c.bf16 %v618, %v618
    %v622 = vld [vmem:[#allocation8] sm:$0xff]
    %v623 = vld [vmem:[#allocation8 + $0x8] sm:$0xff]
    %v624 = vld [vmem:[#allocation8 + $0x10] sm:$0xff]
    %v625 = vld [vmem:[#allocation8 + $0x18] sm:$0xff]
    %v626 = vld [vmem:[#allocation8 + $0x20] sm:$0xff]
    %v627 = vld [vmem:[#allocation8 + $0x28] sm:$0xff]
    %v628 = vld [vmem:[#allocation8 + $0x30] sm:$0xff]
    %v629 = vld [vmem:[#allocation8 + $0x38] sm:$0xff]
    %v630 = vld [vmem:[#allocation8 + $0x40] sm:$0xff]
    %v631 = vld [vmem:[#allocation8 + $0x48] sm:$0xff]
    %v632 = vld [vmem:[#allocation8 + $0x50] sm:$0xff]
    %v633 = vld [vmem:[#allocation8 + $0x58] sm:$0xff]
    %v634 = vld [vmem:[#allocation8 + $0x60] sm:$0xff]
    %v635 = vld [vmem:[#allocation8 + $0x68] sm:$0xff]
    %v636 = vld [vmem:[#allocation8 + $0x70] sm:$0xff]
    %v637 = vld [vmem:[#allocation8 + $0x78] sm:$0xff]
    %v638 = vld [vmem:[#allocation8 + $0x80] sm:$0xff]
    %v639 = vld [vmem:[#allocation8 + $0x88] sm:$0xff]
    %v640 = vld [vmem:[#allocation8 + $0x90] sm:$0xff]
    %v641 = vld [vmem:[#allocation8 + $0x98] sm:$0xff]
    %v642 = vld [vmem:[#allocation8 + $0xa0] sm:$0xff]
    %v643 = vld [vmem:[#allocation8 + $0xa8] sm:$0xff]
    %v644 = vld [vmem:[#allocation8 + $0xb0] sm:$0xff]
    %v645 = vld [vmem:[#allocation8 + $0xb8] sm:$0xff]
    %v646 = vld [vmem:[#allocation8 + $0xc0] sm:$0xff]
    %v647 = vld [vmem:[#allocation8 + $0xc8] sm:$0xff]
    %v648 = vld [vmem:[#allocation8 + $0xd0] sm:$0xff]
    %v649 = vld [vmem:[#allocation8 + $0xd8] sm:$0xff]
    %v650 = vld [vmem:[#allocation8 + $0xe0] sm:$0xff]
    %v651 = vld [vmem:[#allocation8 + $0xe8] sm:$0xff]
    %v652 = vld [vmem:[#allocation8 + $0xf0] sm:$0xff]
    %v653 = vld [vmem:[#allocation8 + $0xf8] sm:$0xff]
    %v654 = vld [vmem:[#allocation8 + $0x100] sm:$0xff]
    %v655 = vld [vmem:[#allocation8 + $0x108] sm:$0xff]
    %v656 = vld [vmem:[#allocation8 + $0x110] sm:$0xff]
    %v657 = vld [vmem:[#allocation8 + $0x118] sm:$0xff]
    %v658 = vld [vmem:[#allocation8 + $0x120] sm:$0xff]
    %v659 = vld [vmem:[#allocation8 + $0x128] sm:$0xff]
    %v660 = vld [vmem:[#allocation8 + $0x130] sm:$0xff]
    %v661 = vld [vmem:[#allocation8 + $0x138] sm:$0xff]
    %v662 = vld [vmem:[#allocation8 + $0x140] sm:$0xff]
    %v663 = vld [vmem:[#allocation8 + $0x148] sm:$0xff]
    %v664 = vld [vmem:[#allocation8 + $0x150] sm:$0xff]
    %v665 = vld [vmem:[#allocation8 + $0x158] sm:$0xff]
    %v666 = vld [vmem:[#allocation8 + $0x160] sm:$0xff]
    %v667 = vld [vmem:[#allocation8 + $0x168] sm:$0xff]
    %v668 = vld [vmem:[#allocation8 + $0x170] sm:$0xff]
    %v669 = vld [vmem:[#allocation8 + $0x178] sm:$0xff]
    %v670 = vld [vmem:[#allocation8 + $0x180] sm:$0xff]
    %v671 = vld [vmem:[#allocation8 + $0x188] sm:$0xff]
    %v672 = vld [vmem:[#allocation8 + $0x190] sm:$0xff]
    %v673 = vld [vmem:[#allocation8 + $0x198] sm:$0xff]
    %v674 = vld [vmem:[#allocation8 + $0x1a0] sm:$0xff]
    %v675 = vld [vmem:[#allocation8 + $0x1a8] sm:$0xff]
    %v676 = vld [vmem:[#allocation8 + $0x1b0] sm:$0xff]
    %v677 = vld [vmem:[#allocation8 + $0x1b8] sm:$0xff]
    %v678 = vld [vmem:[#allocation8 + $0x1c0] sm:$0xff]
    %v679 = vld [vmem:[#allocation8 + $0x1c8] sm:$0xff]
    %v680 = vld [vmem:[#allocation8 + $0x1d0] sm:$0xff]
    %v681 = vld [vmem:[#allocation8 + $0x1d8] sm:$0xff]
    %v682 = vld [vmem:[#allocation8 + $0x1e0] sm:$0xff]
    %v683 = vld [vmem:[#allocation8 + $0x1e8] sm:$0xff]
    %v684 = vld [vmem:[#allocation8 + $0x1f0] sm:$0xff]
    %v685 = vld [vmem:[#allocation8 + $0x1f8] sm:$0xff]
    %v686 = vld [vmem:[%s6] sm:$0xf]
    %v688 = vlaneseq
    %v689 = vshrl.u32 %v688, 7
    %v690 = vsub.s32 0, %v689
    %v691 = vrot.slane %v686, %v690
    %v692 = vlaneseq
    %v693 = vshrl.u32 %v692, 7
    %v694 = vsub.s32 1, %v693
    %v695 = vrot.slane %v686, %v694
    %v696 = vlaneseq
    %v697 = vshrl.u32 %v696, 7
    %v698 = vsub.s32 2, %v697
    %v699 = vrot.slane %v686, %v698
    %v700 = vlaneseq
    %v701 = vshrl.u32 %v700, 7
    %v702 = vsub.s32 3, %v701
    %v703 = vrot.slane %v686, %v702
    %v772 = vunpack.c.l.b16 %v622
    %v773 = vunpack.c.h.b16 %v622
    %v774 = vunpack.c.l.b16 %v623
    %v775 = vunpack.c.h.b16 %v623
    %v776 = vunpack.c.l.b16 %v624
    %v777 = vunpack.c.h.b16 %v624
    %v778 = vunpack.c.l.b16 %v625
    %v779 = vunpack.c.h.b16 %v625
    %v780 = vunpack.c.l.b16 %v626
    %v781 = vunpack.c.h.b16 %v626
    %v782 = vunpack.c.l.b16 %v627
    %v783 = vunpack.c.h.b16 %v627
    %v784 = vunpack.c.l.b16 %v628
    %v785 = vunpack.c.h.b16 %v628
    %v786 = vunpack.c.l.b16 %v629
    %v787 = vunpack.c.h.b16 %v629
    %v788 = vunpack.c.l.b16 %v630
    %v789 = vunpack.c.h.b16 %v630
    %v790 = vunpack.c.l.b16 %v631
    %v791 = vunpack.c.h.b16 %v631
    %v792 = vunpack.c.l.b16 %v632
    %v793 = vunpack.c.h.b16 %v632
    %v794 = vunpack.c.l.b16 %v633
    %v795 = vunpack.c.h.b16 %v633
    %v796 = vunpack.c.l.b16 %v634
    %v797 = vunpack.c.h.b16 %v634
    %v798 = vunpack.c.l.b16 %v635
    %v799 = vunpack.c.h.b16 %v635
    %v800 = vunpack.c.l.b16 %v636
    %v801 = vunpack.c.h.b16 %v636
    %v802 = vunpack.c.l.b16 %v637
    %v803 = vunpack.c.h.b16 %v637
    %v804 = vunpack.c.l.b16 %v638
    %v805 = vunpack.c.h.b16 %v638
    %v806 = vunpack.c.l.b16 %v639
    %v807 = vunpack.c.h.b16 %v639
    %v808 = vunpack.c.l.b16 %v640
    %v809 = vunpack.c.h.b16 %v640
    %v810 = vunpack.c.l.b16 %v641
    %v811 = vunpack.c.h.b16 %v641
    %v812 = vunpack.c.l.b16 %v642
    %v813 = vunpack.c.h.b16 %v642
    %v814 = vunpack.c.l.b16 %v643
    %v815 = vunpack.c.h.b16 %v643
    %v816 = vunpack.c.l.b16 %v644
    %v817 = vunpack.c.h.b16 %v644
    %v818 = vunpack.c.l.b16 %v645
    %v819 = vunpack.c.h.b16 %v645
    %v820 = vunpack.c.l.b16 %v646
    %v821 = vunpack.c.h.b16 %v646
    %v822 = vunpack.c.l.b16 %v647
    %v823 = vunpack.c.h.b16 %v647
    %v824 = vunpack.c.l.b16 %v648
    %v825 = vunpack.c.h.b16 %v648
    %v826 = vunpack.c.l.b16 %v649
    %v827 = vunpack.c.h.b16 %v649
    %v828 = vunpack.c.l.b16 %v650
    %v829 = vunpack.c.h.b16 %v650
    %v830 = vunpack.c.l.b16 %v651
    %v831 = vunpack.c.h.b16 %v651
    %v832 = vunpack.c.l.b16 %v652
    %v833 = vunpack.c.h.b16 %v652
    %v834 = vunpack.c.l.b16 %v653
    %v835 = vunpack.c.h.b16 %v653
    %v836 = vunpack.c.l.b16 %v654
    %v837 = vunpack.c.h.b16 %v654
    %v838 = vunpack.c.l.b16 %v655
    %v839 = vunpack.c.h.b16 %v655
    %v840 = vunpack.c.l.b16 %v656
    %v841 = vunpack.c.h.b16 %v656
    %v842 = vunpack.c.l.b16 %v657
    %v843 = vunpack.c.h.b16 %v657
    %v844 = vunpack.c.l.b16 %v658
    %v845 = vunpack.c.h.b16 %v658
    %v846 = vunpack.c.l.b16 %v659
    %v847 = vunpack.c.h.b16 %v659
    %v848 = vunpack.c.l.b16 %v660
    %v849 = vunpack.c.h.b16 %v660
    %v850 = vunpack.c.l.b16 %v661
    %v851 = vunpack.c.h.b16 %v661
    %v852 = vunpack.c.l.b16 %v662
    %v853 = vunpack.c.h.b16 %v662
    %v854 = vunpack.c.l.b16 %v663
    %v855 = vunpack.c.h.b16 %v663
    %v856 = vunpack.c.l.b16 %v664
    %v857 = vunpack.c.h.b16 %v664
    %v858 = vunpack.c.l.b16 %v665
    %v859 = vunpack.c.h.b16 %v665
    %v860 = vunpack.c.l.b16 %v666
    %v861 = vunpack.c.h.b16 %v666
    %v862 = vunpack.c.l.b16 %v667
    %v863 = vunpack.c.h.b16 %v667
    %v864 = vunpack.c.l.b16 %v668
    %v865 = vunpack.c.h.b16 %v668
    %v866 = vunpack.c.l.b16 %v669
    %v867 = vunpack.c.h.b16 %v669
    %v868 = vunpack.c.l.b16 %v670
    %v869 = vunpack.c.h.b16 %v670
    %v870 = vunpack.c.l.b16 %v671
    %v871 = vunpack.c.h.b16 %v671
    %v872 = vunpack.c.l.b16 %v672
    %v873 = vunpack.c.h.b16 %v672
    %v874 = vunpack.c.l.b16 %v673
    %v875 = vunpack.c.h.b16 %v673
    %v876 = vunpack.c.l.b16 %v674
    %v877 = vunpack.c.h.b16 %v674
    %v878 = vunpack.c.l.b16 %v675
    %v879 = vunpack.c.h.b16 %v675
    %v880 = vunpack.c.l.b16 %v676
    %v881 = vunpack.c.h.b16 %v676
    %v882 = vunpack.c.l.b16 %v677
    %v883 = vunpack.c.h.b16 %v677
    %v884 = vunpack.c.l.b16 %v678
    %v885 = vunpack.c.h.b16 %v678
    %v886 = vunpack.c.l.b16 %v679
    %v887 = vunpack.c.h.b16 %v679
    %v888 = vunpack.c.l.b16 %v680
    %v889 = vunpack.c.h.b16 %v680
    %v890 = vunpack.c.l.b16 %v681
    %v891 = vunpack.c.h.b16 %v681
    %v892 = vunpack.c.l.b16 %v682
    %v893 = vunpack.c.h.b16 %v682
    %v894 = vunpack.c.l.b16 %v683
    %v895 = vunpack.c.h.b16 %v683
    %v896 = vunpack.c.l.b16 %v684
    %v897 = vunpack.c.h.b16 %v684
    %v898 = vunpack.c.l.b16 %v685
    %v899 = vunpack.c.h.b16 %v685
    %v900 = vpack.c.b16 %v776, %v772
    %v901 = vpack.c.b16 %v777, %v773
    %v902 = vpack.c.b16 %v778, %v774
    %v903 = vpack.c.b16 %v779, %v775
    %v904 = vpack.c.b16 %v784, %v780
    %v905 = vpack.c.b16 %v785, %v781
    %v906 = vpack.c.b16 %v786, %v782
    %v907 = vpack.c.b16 %v787, %v783
    %v908 = vpack.c.b16 %v792, %v788
    %v909 = vpack.c.b16 %v793, %v789
    %v910 = vpack.c.b16 %v794, %v790
    %v911 = vpack.c.b16 %v795, %v791
    %v912 = vpack.c.b16 %v800, %v796
    %v913 = vpack.c.b16 %v801, %v797
    %v914 = vpack.c.b16 %v802, %v798
    %v915 = vpack.c.b16 %v803, %v799
    %v916 = vpack.c.b16 %v808, %v804
    %v917 = vpack.c.b16 %v809, %v805
    %v918 = vpack.c.b16 %v810, %v806
    %v919 = vpack.c.b16 %v811, %v807
    %v920 = vpack.c.b16 %v816, %v812
    %v921 = vpack.c.b16 %v817, %v813
    %v922 = vpack.c.b16 %v818, %v814
    %v923 = vpack.c.b16 %v819, %v815
    %v924 = vpack.c.b16 %v824, %v820
    %v925 = vpack.c.b16 %v825, %v821
    %v926 = vpack.c.b16 %v826, %v822
    %v927 = vpack.c.b16 %v827, %v823
    %v928 = vpack.c.b16 %v832, %v828
    %v929 = vpack.c.b16 %v833, %v829
    %v930 = vpack.c.b16 %v834, %v830
    %v931 = vpack.c.b16 %v835, %v831
    %v932 = vpack.c.b16 %v840, %v836
    %v933 = vpack.c.b16 %v841, %v837
    %v934 = vpack.c.b16 %v842, %v838
    %v935 = vpack.c.b16 %v843, %v839
    %v936 = vpack.c.b16 %v848, %v844
    %v937 = vpack.c.b16 %v849, %v845
    %v938 = vpack.c.b16 %v850, %v846
    %v939 = vpack.c.b16 %v851, %v847
    %v940 = vpack.c.b16 %v856, %v852
    %v941 = vpack.c.b16 %v857, %v853
    %v942 = vpack.c.b16 %v858, %v854
    %v943 = vpack.c.b16 %v859, %v855
    %v944 = vpack.c.b16 %v864, %v860
    %v945 = vpack.c.b16 %v865, %v861
    %v946 = vpack.c.b16 %v866, %v862
    %v947 = vpack.c.b16 %v867, %v863
    %v948 = vpack.c.b16 %v872, %v868
    %v949 = vpack.c.b16 %v873, %v869
    %v950 = vpack.c.b16 %v874, %v870
    %v951 = vpack.c.b16 %v875, %v871
    %v952 = vpack.c.b16 %v880, %v876
    %v953 = vpack.c.b16 %v881, %v877
    %v954 = vpack.c.b16 %v882, %v878
    %v955 = vpack.c.b16 %v883, %v879
    %v956 = vpack.c.b16 %v888, %v884
    %v957 = vpack.c.b16 %v889, %v885
    %v958 = vpack.c.b16 %v890, %v886
    %v959 = vpack.c.b16 %v891, %v887
    %v960 = vpack.c.b16 %v896, %v892
    %v961 = vpack.c.b16 %v897, %v893
    %v962 = vpack.c.b16 %v898, %v894
    %v963 = vpack.c.b16 %v899, %v895
    %1028 = vmatprep.subr.bf16.mxu0 %v929
    %1029 = vmatpush1.bf16.msra.mxu0 %v928
    %1030 = vmatprep.subr.bf16.mxu0 %v925
    %1031 = vmatpush1.bf16.msra.mxu0 %v924
    %1032 = vmatprep.subr.bf16.mxu0 %v921
    %1033 = vmatpush1.bf16.msra.mxu0 %v920
    %1034 = vmatprep.subr.bf16.mxu0 %v917
    %1035 = vmatpush1.bf16.msra.mxu0 %v916
    %1036 = vmatprep.subr.bf16.mxu0 %v913
    %1037 = vmatpush1.bf16.msra.mxu0 %v912
    %1038 = vmatprep.subr.bf16.mxu0 %v909
    %1039 = vmatpush1.bf16.msra.mxu0 %v908
    %1040 = vmatprep.subr.bf16.mxu0 %v905
    %1041 = vmatpush1.bf16.msra.mxu0 %v904
    %1042 = vmatprep.subr.bf16.mxu0 %v901
    %1043 = vmatpush1.bf16.msra.mxu0 %v900
    %1044 = vmatprep.subr.bf16.mxu0 %v961
    %1045 = vmatpush2.bf16.msra.mxu0 %v960
    %1046 = vmatprep.subr.bf16.mxu0 %v957
    %1047 = vmatpush2.bf16.msra.mxu0 %v956
    %1048 = vmatprep.subr.bf16.mxu0 %v953
    %1049 = vmatpush2.bf16.msra.mxu0 %v952
    %1050 = vmatprep.subr.bf16.mxu0 %v949
    %1051 = vmatpush2.bf16.msra.mxu0 %v948
    %1052 = vmatprep.subr.bf16.mxu0 %v945
    %1053 = vmatpush2.bf16.msra.mxu0 %v944
    %1054 = vmatprep.subr.bf16.mxu0 %v941
    %1055 = vmatpush2.bf16.msra.mxu0 %v940
    %1056 = vmatprep.subr.bf16.mxu0 %v937
    %1057 = vmatpush2.bf16.msra.mxu0 %v936
    %1058 = vmatprep.subr.bf16.mxu0 %v933
    %1059 = vmatpush2.bf16.msra.mxu0 %v932
    %1060 = vmatprep.mubr.bf16.mxu0 %v621
    %1061 = vmatmul.mubr.bf16.gmra.mxu0 %v616
    %v1062 = vpop.f32.mrf.mxu0
    %v1063 = vadd.f32 %v691, %v1062
    %v1064 = vpop.f32.mrf.mxu0
    %v1065 = vadd.f32 %v695, %v1064
    %v1066 = vpop.f32.mrf.mxu0
    %v1067 = vpop.f32.mrf.mxu0
    %1068 = vdwg.mxu0
    %1069 = vmatprep.subr.bf16.mxu0 %v931
    %1070 = vmatpush1.bf16.msra.mxu0 %v930
    %1071 = vmatprep.subr.bf16.mxu0 %v927
    %1072 = vmatpush1.bf16.msra.mxu0 %v926
    %1073 = vmatprep.subr.bf16.mxu0 %v923
    %1074 = vmatpush1.bf16.msra.mxu0 %v922
    %1075 = vmatprep.subr.bf16.mxu0 %v919
    %1076 = vmatpush1.bf16.msra.mxu0 %v918
    %1077 = vmatprep.subr.bf16.mxu0 %v915
    %1078 = vmatpush1.bf16.msra.mxu0 %v914
    %1079 = vmatprep.subr.bf16.mxu0 %v911
    %1080 = vmatpush1.bf16.msra.mxu0 %v910
    %1081 = vmatprep.subr.bf16.mxu0 %v907
    %1082 = vmatpush1.bf16.msra.mxu0 %v906
    %1083 = vmatprep.subr.bf16.mxu0 %v903
    %1084 = vmatpush1.bf16.msra.mxu0 %v902
    %1085 = vmatprep.subr.bf16.mxu0 %v963
    %1086 = vmatpush2.bf16.msra.mxu0 %v962
    %1087 = vmatprep.subr.bf16.mxu0 %v959
    %1088 = vmatpush2.bf16.msra.mxu0 %v958
    %1089 = vmatprep.subr.bf16.mxu0 %v955
    %1090 = vmatpush2.bf16.msra.mxu0 %v954
    %1091 = vmatprep.subr.bf16.mxu0 %v951
    %1092 = vmatpush2.bf16.msra.mxu0 %v950
    %1093 = vmatprep.subr.bf16.mxu0 %v947
    %1094 = vmatpush2.bf16.msra.mxu0 %v946
    %1095 = vmatprep.subr.bf16.mxu0 %v943
    %1096 = vmatpush2.bf16.msra.mxu0 %v942
    %1097 = vmatprep.subr.bf16.mxu0 %v939
    %1098 = vmatpush2.bf16.msra.mxu0 %v938
    %1099 = vmatprep.subr.bf16.mxu0 %v935
    %1100 = vmatpush2.bf16.msra.mxu0 %v934
    %1101 = vmatprep.mubr.bf16.mxu0 %v621
    %1102 = vmatmul.mubr.bf16.gmra.mxu0 %v616
    %v1103 = vpop.f32.mrf.mxu0
    %v1104 = vadd.f32 %v699, %v1103
    %v1105 = vpop.f32.mrf.mxu0
    %v1106 = vadd.f32 %v703, %v1105
    %v1107 = vpop.f32.mrf.mxu0
    %v1108 = vpop.f32.mrf.mxu0
    %1109 = vdwg.mxu0
    %v1110 = vxor.u32 %v1063, 2147483648
    %v1111 = vxor.u32 %v1065, 2147483648
    %v1112 = vxor.u32 %v1104, 2147483648
    %v1113 = vmul.f32 %v1110, 1.442695
    %v1114 = vpow.pop %v1113
    %v1115 = vmul.f32 %v1111, 1.442695
    %v1116 = vpow.pop %v1115
    %v1117 = vmul.f32 %v1112, 1.442695
    %v1118 = vpow.pop %v1117
    %v1119 = vadd.f32 %v1114, 1.0
    %v1120 = vadd.f32 %v1116, 1.0
    %v1121 = vadd.f32 %v1118, 1.0
    %v1122 = vrcp.pop %v1119
    %v1123 = vmul.f32 1.0, %v1122
    %v1124 = vrcp.pop %v1120
    %v1125 = vmul.f32 1.0, %v1124
    %v1126 = vrcp.pop %v1121
    %v1127 = vmul.f32 1.0, %v1126
    %v1128 = vtanh.pop %v1106
    %v1129 = vmul.f32 %v1125, %v620
    %v1130 = vmul.f32 %v1123, %v1128
    %v1131 = vadd.f32 %v1129, %v1130
    %v1132 = vtanh.pop %v1131
    %v1133 = vmul.f32 %v1127, %v1132
    %1134 = vst [vmem:[%s617] sm:$0xff] %v1133
    %1135 = vst [vmem:[%s619] sm:$0xff] %v1131
    %1136 = vst [vmem:[#allocation10] sm:$0xff] %v1133
    %s1137 = scalar_lea.vmem %s0, 4
    %v1138 = vld [vmem:[%s1137] sm:$0xf]
    %v1139 = vld [vmem:[#allocation11] sm:$0xff]
    %v1140 = vld [vmem:[#allocation13] sm:$0xff]
    %v1141 = vpack.c.bf16 %v1139, %v1139
    %v1142 = vld [vmem:[#allocation7] sm:$0xff]
    %v1143 = vld [vmem:[#allocation7 + $0x8] sm:$0xff]
    %v1144 = vld [vmem:[#allocation7 + $0x10] sm:$0xff]
    %v1145 = vld [vmem:[#allocation7 + $0x18] sm:$0xff]
    %v1146 = vld [vmem:[#allocation7 + $0x20] sm:$0xff]
    %v1147 = vld [vmem:[#allocation7 + $0x28] sm:$0xff]
    %v1148 = vld [vmem:[#allocation7 + $0x30] sm:$0xff]
    %v1149 = vld [vmem:[#allocation7 + $0x38] sm:$0xff]
    %v1150 = vld [vmem:[#allocation7 + $0x40] sm:$0xff]
    %v1151 = vld [vmem:[#allocation7 + $0x48] sm:$0xff]
    %v1152 = vld [vmem:[#allocation7 + $0x50] sm:$0xff]
    %v1153 = vld [vmem:[#allocation7 + $0x58] sm:$0xff]
    %v1154 = vld [vmem:[#allocation7 + $0x60] sm:$0xff]
    %v1155 = vld [vmem:[#allocation7 + $0x68] sm:$0xff]
    %v1156 = vld [vmem:[#allocation7 + $0x70] sm:$0xff]
    %v1157 = vld [vmem:[#allocation7 + $0x78] sm:$0xff]
    %v1158 = vld [vmem:[#allocation7 + $0x80] sm:$0xff]
    %v1159 = vld [vmem:[#allocation7 + $0x88] sm:$0xff]
    %v1160 = vld [vmem:[#allocation7 + $0x90] sm:$0xff]
    %v1161 = vld [vmem:[#allocation7 + $0x98] sm:$0xff]
    %v1162 = vld [vmem:[#allocation7 + $0xa0] sm:$0xff]
    %v1163 = vld [vmem:[#allocation7 + $0xa8] sm:$0xff]
    %v1164 = vld [vmem:[#allocation7 + $0xb0] sm:$0xff]
    %v1165 = vld [vmem:[#allocation7 + $0xb8] sm:$0xff]
    %v1166 = vld [vmem:[#allocation7 + $0xc0] sm:$0xff]
    %v1167 = vld [vmem:[#allocation7 + $0xc8] sm:$0xff]
    %v1168 = vld [vmem:[#allocation7 + $0xd0] sm:$0xff]
    %v1169 = vld [vmem:[#allocation7 + $0xd8] sm:$0xff]
    %v1170 = vld [vmem:[#allocation7 + $0xe0] sm:$0xff]
    %v1171 = vld [vmem:[#allocation7 + $0xe8] sm:$0xff]
    %v1172 = vld [vmem:[#allocation7 + $0xf0] sm:$0xff]
    %v1173 = vld [vmem:[#allocation7 + $0xf8] sm:$0xff]
    %v1174 = vld [vmem:[#allocation7 + $0x100] sm:$0xff]
    %v1175 = vld [vmem:[#allocation7 + $0x108] sm:$0xff]
    %v1176 = vld [vmem:[#allocation7 + $0x110] sm:$0xff]
    %v1177 = vld [vmem:[#allocation7 + $0x118] sm:$0xff]
    %v1178 = vld [vmem:[#allocation7 + $0x120] sm:$0xff]
    %v1179 = vld [vmem:[#allocation7 + $0x128] sm:$0xff]
    %v1180 = vld [vmem:[#allocation7 + $0x130] sm:$0xff]
    %v1181 = vld [vmem:[#allocation7 + $0x138] sm:$0xff]
    %v1182 = vld [vmem:[#allocation7 + $0x140] sm:$0xff]
    %v1183 = vld [vmem:[#allocation7 + $0x148] sm:$0xff]
    %v1184 = vld [vmem:[#allocation7 + $0x150] sm:$0xff]
    %v1185 = vld [vmem:[#allocation7 + $0x158] sm:$0xff]
    %v1186 = vld [vmem:[#allocation7 + $0x160] sm:$0xff]
    %v1187 = vld [vmem:[#allocation7 + $0x168] sm:$0xff]
    %v1188 = vld [vmem:[#allocation7 + $0x170] sm:$0xff]
    %v1189 = vld [vmem:[#allocation7 + $0x178] sm:$0xff]
    %v1190 = vld [vmem:[#allocation7 + $0x180] sm:$0xff]
    %v1191 = vld [vmem:[#allocation7 + $0x188] sm:$0xff]
    %v1192 = vld [vmem:[#allocation7 + $0x190] sm:$0xff]
    %v1193 = vld [vmem:[#allocation7 + $0x198] sm:$0xff]
    %v1194 = vld [vmem:[#allocation7 + $0x1a0] sm:$0xff]
    %v1195 = vld [vmem:[#allocation7 + $0x1a8] sm:$0xff]
    %v1196 = vld [vmem:[#allocation7 + $0x1b0] sm:$0xff]
    %v1197 = vld [vmem:[#allocation7 + $0x1b8] sm:$0xff]
    %v1198 = vld [vmem:[#allocation7 + $0x1c0] sm:$0xff]
    %v1199 = vld [vmem:[#allocation7 + $0x1c8] sm:$0xff]
    %v1200 = vld [vmem:[#allocation7 + $0x1d0] sm:$0xff]
    %v1201 = vld [vmem:[#allocation7 + $0x1d8] sm:$0xff]
    %v1202 = vld [vmem:[#allocation7 + $0x1e0] sm:$0xff]
    %v1203 = vld [vmem:[#allocation7 + $0x1e8] sm:$0xff]
    %v1204 = vld [vmem:[#allocation7 + $0x1f0] sm:$0xff]
    %v1205 = vld [vmem:[#allocation7 + $0x1f8] sm:$0xff]
    %v1206 = vld [vmem:[%s5] sm:$0xf]
    %v1208 = vlaneseq
    %v1209 = vshrl.u32 %v1208, 7
    %v1210 = vsub.s32 0, %v1209
    %v1211 = vrot.slane %v1206, %v1210
    %v1212 = vlaneseq
    %v1213 = vshrl.u32 %v1212, 7
    %v1214 = vsub.s32 1, %v1213
    %v1215 = vrot.slane %v1206, %v1214
    %v1216 = vlaneseq
    %v1217 = vshrl.u32 %v1216, 7
    %v1218 = vsub.s32 2, %v1217
    %v1219 = vrot.slane %v1206, %v1218
    %v1220 = vlaneseq
    %v1221 = vshrl.u32 %v1220, 7
    %v1222 = vsub.s32 3, %v1221
    %v1223 = vrot.slane %v1206, %v1222
    %v1292 = vunpack.c.l.b16 %v1142
    %v1293 = vunpack.c.h.b16 %v1142
    %v1294 = vunpack.c.l.b16 %v1143
    %v1295 = vunpack.c.h.b16 %v1143
    %v1296 = vunpack.c.l.b16 %v1144
    %v1297 = vunpack.c.h.b16 %v1144
    %v1298 = vunpack.c.l.b16 %v1145
    %v1299 = vunpack.c.h.b16 %v1145
    %v1300 = vunpack.c.l.b16 %v1146
    %v1301 = vunpack.c.h.b16 %v1146
    %v1302 = vunpack.c.l.b16 %v1147
    %v1303 = vunpack.c.h.b16 %v1147
    %v1304 = vunpack.c.l.b16 %v1148
    %v1305 = vunpack.c.h.b16 %v1148
    %v1306 = vunpack.c.l.b16 %v1149
    %v1307 = vunpack.c.h.b16 %v1149
    %v1308 = vunpack.c.l.b16 %v1150
    %v1309 = vunpack.c.h.b16 %v1150
    %v1310 = vunpack.c.l.b16 %v1151
    %v1311 = vunpack.c.h.b16 %v1151
    %v1312 = vunpack.c.l.b16 %v1152
    %v1313 = vunpack.c.h.b16 %v1152
    %v1314 = vunpack.c.l.b16 %v1153
    %v1315 = vunpack.c.h.b16 %v1153
    %v1316 = vunpack.c.l.b16 %v1154
    %v1317 = vunpack.c.h.b16 %v1154
    %v1318 = vunpack.c.l.b16 %v1155
    %v1319 = vunpack.c.h.b16 %v1155
    %v1320 = vunpack.c.l.b16 %v1156
    %v1321 = vunpack.c.h.b16 %v1156
    %v1322 = vunpack.c.l.b16 %v1157
    %v1323 = vunpack.c.h.b16 %v1157
    %v1324 = vunpack.c.l.b16 %v1158
    %v1325 = vunpack.c.h.b16 %v1158
    %v1326 = vunpack.c.l.b16 %v1159
    %v1327 = vunpack.c.h.b16 %v1159
    %v1328 = vunpack.c.l.b16 %v1160
    %v1329 = vunpack.c.h.b16 %v1160
    %v1330 = vunpack.c.l.b16 %v1161
    %v1331 = vunpack.c.h.b16 %v1161
    %v1332 = vunpack.c.l.b16 %v1162
    %v1333 = vunpack.c.h.b16 %v1162
    %v1334 = vunpack.c.l.b16 %v1163
    %v1335 = vunpack.c.h.b16 %v1163
    %v1336 = vunpack.c.l.b16 %v1164
    %v1337 = vunpack.c.h.b16 %v1164
    %v1338 = vunpack.c.l.b16 %v1165
    %v1339 = vunpack.c.h.b16 %v1165
    %v1340 = vunpack.c.l.b16 %v1166
    %v1341 = vunpack.c.h.b16 %v1166
    %v1342 = vunpack.c.l.b16 %v1167
    %v1343 = vunpack.c.h.b16 %v1167
    %v1344 = vunpack.c.l.b16 %v1168
    %v1345 = vunpack.c.h.b16 %v1168
    %v1346 = vunpack.c.l.b16 %v1169
    %v1347 = vunpack.c.h.b16 %v1169
    %v1348 = vunpack.c.l.b16 %v1170
    %v1349 = vunpack.c.h.b16 %v1170
    %v1350 = vunpack.c.l.b16 %v1171
    %v1351 = vunpack.c.h.b16 %v1171
    %v1352 = vunpack.c.l.b16 %v1172
    %v1353 = vunpack.c.h.b16 %v1172
    %v1354 = vunpack.c.l.b16 %v1173
    %v1355 = vunpack.c.h.b16 %v1173
    %v1356 = vunpack.c.l.b16 %v1174
    %v1357 = vunpack.c.h.b16 %v1174
    %v1358 = vunpack.c.l.b16 %v1175
    %v1359 = vunpack.c.h.b16 %v1175
    %v1360 = vunpack.c.l.b16 %v1176
    %v1361 = vunpack.c.h.b16 %v1176
    %v1362 = vunpack.c.l.b16 %v1177
    %v1363 = vunpack.c.h.b16 %v1177
    %v1364 = vunpack.c.l.b16 %v1178
    %v1365 = vunpack.c.h.b16 %v1178
    %v1366 = vunpack.c.l.b16 %v1179
    %v1367 = vunpack.c.h.b16 %v1179
    %v1368 = vunpack.c.l.b16 %v1180
    %v1369 = vunpack.c.h.b16 %v1180
    %v1370 = vunpack.c.l.b16 %v1181
    %v1371 = vunpack.c.h.b16 %v1181
    %v1372 = vunpack.c.l.b16 %v1182
    %v1373 = vunpack.c.h.b16 %v1182
    %v1374 = vunpack.c.l.b16 %v1183
    %v1375 = vunpack.c.h.b16 %v1183
    %v1376 = vunpack.c.l.b16 %v1184
    %v1377 = vunpack.c.h.b16 %v1184
    %v1378 = vunpack.c.l.b16 %v1185
    %v1379 = vunpack.c.h.b16 %v1185
    %v1380 = vunpack.c.l.b16 %v1186
    %v1381 = vunpack.c.h.b16 %v1186
    %v1382 = vunpack.c.l.b16 %v1187
    %v1383 = vunpack.c.h.b16 %v1187
    %v1384 = vunpack.c.l.b16 %v1188
    %v1385 = vunpack.c.h.b16 %v1188
    %v1386 = vunpack.c.l.b16 %v1189
    %v1387 = vunpack.c.h.b16 %v1189
    %v1388 = vunpack.c.l.b16 %v1190
    %v1389 = vunpack.c.h.b16 %v1190
    %v1390 = vunpack.c.l.b16 %v1191
    %v1391 = vunpack.c.h.b16 %v1191
    %v1392 = vunpack.c.l.b16 %v1192
    %v1393 = vunpack.c.h.b16 %v1192
    %v1394 = vunpack.c.l.b16 %v1193
    %v1395 = vunpack.c.h.b16 %v1193
    %v1396 = vunpack.c.l.b16 %v1194
    %v1397 = vunpack.c.h.b16 %v1194
    %v1398 = vunpack.c.l.b16 %v1195
    %v1399 = vunpack.c.h.b16 %v1195
    %v1400 = vunpack.c.l.b16 %v1196
    %v1401 = vunpack.c.h.b16 %v1196
    %v1402 = vunpack.c.l.b16 %v1197
    %v1403 = vunpack.c.h.b16 %v1197
    %v1404 = vunpack.c.l.b16 %v1198
    %v1405 = vunpack.c.h.b16 %v1198
    %v1406 = vunpack.c.l.b16 %v1199
    %v1407 = vunpack.c.h.b16 %v1199
    %v1408 = vunpack.c.l.b16 %v1200
    %v1409 = vunpack.c.h.b16 %v1200
    %v1410 = vunpack.c.l.b16 %v1201
    %v1411 = vunpack.c.h.b16 %v1201
    %v1412 = vunpack.c.l.b16 %v1202
    %v1413 = vunpack.c.h.b16 %v1202
    %v1414 = vunpack.c.l.b16 %v1203
    %v1415 = vunpack.c.h.b16 %v1203
    %v1416 = vunpack.c.l.b16 %v1204
    %v1417 = vunpack.c.h.b16 %v1204
    %v1418 = vunpack.c.l.b16 %v1205
    %v1419 = vunpack.c.h.b16 %v1205
    %v1420 = vpack.c.b16 %v1296, %v1292
    %v1421 = vpack.c.b16 %v1297, %v1293
    %v1422 = vpack.c.b16 %v1298, %v1294
    %v1423 = vpack.c.b16 %v1299, %v1295
    %v1424 = vpack.c.b16 %v1304, %v1300
    %v1425 = vpack.c.b16 %v1305, %v1301
    %v1426 = vpack.c.b16 %v1306, %v1302
    %v1427 = vpack.c.b16 %v1307, %v1303
    %v1428 = vpack.c.b16 %v1312, %v1308
    %v1429 = vpack.c.b16 %v1313, %v1309
    %v1430 = vpack.c.b16 %v1314, %v1310
    %v1431 = vpack.c.b16 %v1315, %v1311
    %v1432 = vpack.c.b16 %v1320, %v1316
    %v1433 = vpack.c.b16 %v1321, %v1317
    %v1434 = vpack.c.b16 %v1322, %v1318
    %v1435 = vpack.c.b16 %v1323, %v1319
    %v1436 = vpack.c.b16 %v1328, %v1324
    %v1437 = vpack.c.b16 %v1329, %v1325
    %v1438 = vpack.c.b16 %v1330, %v1326
    %v1439 = vpack.c.b16 %v1331, %v1327
    %v1440 = vpack.c.b16 %v1336, %v1332
    %v1441 = vpack.c.b16 %v1337, %v1333
    %v1442 = vpack.c.b16 %v1338, %v1334
    %v1443 = vpack.c.b16 %v1339, %v1335
    %v1444 = vpack.c.b16 %v1344, %v1340
    %v1445 = vpack.c.b16 %v1345, %v1341
    %v1446 = vpack.c.b16 %v1346, %v1342
    %v1447 = vpack.c.b16 %v1347, %v1343
    %v1448 = vpack.c.b16 %v1352, %v1348
    %v1449 = vpack.c.b16 %v1353, %v1349
    %v1450 = vpack.c.b16 %v1354, %v1350
    %v1451 = vpack.c.b16 %v1355, %v1351
    %v1452 = vpack.c.b16 %v1360, %v1356
    %v1453 = vpack.c.b16 %v1361, %v1357
    %v1454 = vpack.c.b16 %v1362, %v1358
    %v1455 = vpack.c.b16 %v1363, %v1359
    %v1456 = vpack.c.b16 %v1368, %v1364
    %v1457 = vpack.c.b16 %v1369, %v1365
    %v1458 = vpack.c.b16 %v1370, %v1366
    %v1459 = vpack.c.b16 %v1371, %v1367
    %v1460 = vpack.c.b16 %v1376, %v1372
    %v1461 = vpack.c.b16 %v1377, %v1373
    %v1462 = vpack.c.b16 %v1378, %v1374
    %v1463 = vpack.c.b16 %v1379, %v1375
    %v1464 = vpack.c.b16 %v1384, %v1380
    %v1465 = vpack.c.b16 %v1385, %v1381
    %v1466 = vpack.c.b16 %v1386, %v1382
    %v1467 = vpack.c.b16 %v1387, %v1383
    %v1468 = vpack.c.b16 %v1392, %v1388
    %v1469 = vpack.c.b16 %v1393, %v1389
    %v1470 = vpack.c.b16 %v1394, %v1390
    %v1471 = vpack.c.b16 %v1395, %v1391
    %v1472 = vpack.c.b16 %v1400, %v1396
    %v1473 = vpack.c.b16 %v1401, %v1397
    %v1474 = vpack.c.b16 %v1402, %v1398
    %v1475 = vpack.c.b16 %v1403, %v1399
    %v1476 = vpack.c.b16 %v1408, %v1404
    %v1477 = vpack.c.b16 %v1409, %v1405
    %v1478 = vpack.c.b16 %v1410, %v1406
    %v1479 = vpack.c.b16 %v1411, %v1407
    %v1480 = vpack.c.b16 %v1416, %v1412
    %v1481 = vpack.c.b16 %v1417, %v1413
    %v1482 = vpack.c.b16 %v1418, %v1414
    %v1483 = vpack.c.b16 %v1419, %v1415
    %1548 = vmatprep.subr.bf16.mxu0 %v1449
    %1549 = vmatpush1.bf16.msra.mxu0 %v1448
    %1550 = vmatprep.subr.bf16.mxu0 %v1445
    %1551 = vmatpush1.bf16.msra.mxu0 %v1444
    %1552 = vmatprep.subr.bf16.mxu0 %v1441
    %1553 = vmatpush1.bf16.msra.mxu0 %v1440
    %1554 = vmatprep.subr.bf16.mxu0 %v1437
    %1555 = vmatpush1.bf16.msra.mxu0 %v1436
    %1556 = vmatprep.subr.bf16.mxu0 %v1433
    %1557 = vmatpush1.bf16.msra.mxu0 %v1432
    %1558 = vmatprep.subr.bf16.mxu0 %v1429
    %1559 = vmatpush1.bf16.msra.mxu0 %v1428
    %1560 = vmatprep.subr.bf16.mxu0 %v1425
    %1561 = vmatpush1.bf16.msra.mxu0 %v1424
    %1562 = vmatprep.subr.bf16.mxu0 %v1421
    %1563 = vmatpush1.bf16.msra.mxu0 %v1420
    %1564 = vmatprep.subr.bf16.mxu0 %v1481
    %1565 = vmatpush2.bf16.msra.mxu0 %v1480
    %1566 = vmatprep.subr.bf16.mxu0 %v1477
    %1567 = vmatpush2.bf16.msra.mxu0 %v1476
    %1568 = vmatprep.subr.bf16.mxu0 %v1473
    %1569 = vmatpush2.bf16.msra.mxu0 %v1472
    %1570 = vmatprep.subr.bf16.mxu0 %v1469
    %1571 = vmatpush2.bf16.msra.mxu0 %v1468
    %1572 = vmatprep.subr.bf16.mxu0 %v1465
    %1573 = vmatpush2.bf16.msra.mxu0 %v1464
    %1574 = vmatprep.subr.bf16.mxu0 %v1461
    %1575 = vmatpush2.bf16.msra.mxu0 %v1460
    %1576 = vmatprep.subr.bf16.mxu0 %v1457
    %1577 = vmatpush2.bf16.msra.mxu0 %v1456
    %1578 = vmatprep.subr.bf16.mxu0 %v1453
    %1579 = vmatpush2.bf16.msra.mxu0 %v1452
    %1580 = vmatprep.mubr.bf16.mxu0 %v1141
    %1581 = vmatmul.mubr.bf16.gmra.mxu0 %v1138
    %v1582 = vpop.f32.mrf.mxu0
    %v1583 = vadd.f32 %v1211, %v1582
    %v1584 = vpop.f32.mrf.mxu0
    %v1585 = vadd.f32 %v1215, %v1584
    %v1586 = vpop.f32.mrf.mxu0
    %v1587 = vpop.f32.mrf.mxu0
    %1588 = vdwg.mxu0
    %1589 = vmatprep.subr.bf16.mxu0 %v1451
    %1590 = vmatpush1.bf16.msra.mxu0 %v1450
    %1591 = vmatprep.subr.bf16.mxu0 %v1447
    %1592 = vmatpush1.bf16.msra.mxu0 %v1446
    %1593 = vmatprep.subr.bf16.mxu0 %v1443
    %1594 = vmatpush1.bf16.msra.mxu0 %v1442
    %1595 = vmatprep.subr.bf16.mxu0 %v1439
    %1596 = vmatpush1.bf16.msra.mxu0 %v1438
    %1597 = vmatprep.subr.bf16.mxu0 %v1435
    %1598 = vmatpush1.bf16.msra.mxu0 %v1434
    %1599 = vmatprep.subr.bf16.mxu0 %v1431
    %1600 = vmatpush1.bf16.msra.mxu0 %v1430
    %1601 = vmatprep.subr.bf16.mxu0 %v1427
    %1602 = vmatpush1.bf16.msra.mxu0 %v1426
    %1603 = vmatprep.subr.bf16.mxu0 %v1423
    %1604 = vmatpush1.bf16.msra.mxu0 %v1422
    %1605 = vmatprep.subr.bf16.mxu0 %v1483
    %1606 = vmatpush2.bf16.msra.mxu0 %v1482
    %1607 = vmatprep.subr.bf16.mxu0 %v1479
    %1608 = vmatpush2.bf16.msra.mxu0 %v1478
    %1609 = vmatprep.subr.bf16.mxu0 %v1475
    %1610 = vmatpush2.bf16.msra.mxu0 %v1474
    %1611 = vmatprep.subr.bf16.mxu0 %v1471
    %1612 = vmatpush2.bf16.msra.mxu0 %v1470
    %1613 = vmatprep.subr.bf16.mxu0 %v1467
    %1614 = vmatpush2.bf16.msra.mxu0 %v1466
    %1615 = vmatprep.subr.bf16.mxu0 %v1463
    %1616 = vmatpush2.bf16.msra.mxu0 %v1462
    %1617 = vmatprep.subr.bf16.mxu0 %v1459
    %1618 = vmatpush2.bf16.msra.mxu0 %v1458
    %1619 = vmatprep.subr.bf16.mxu0 %v1455
    %1620 = vmatpush2.bf16.msra.mxu0 %v1454
    %1621 = vmatprep.mubr.bf16.mxu0 %v1141
    %1622 = vmatmul.mubr.bf16.gmra.mxu0 %v1138
    %v1623 = vpop.f32.mrf.mxu0
    %v1624 = vadd.f32 %v1219, %v1623
    %v1625 = vpop.f32.mrf.mxu0
    %v1626 = vadd.f32 %v1223, %v1625
    %v1627 = vpop.f32.mrf.mxu0
    %v1628 = vpop.f32.mrf.mxu0
    %1629 = vdwg.mxu0
    %v1630 = vxor.u32 %v1583, 2147483648
    %v1631 = vxor.u32 %v1585, 2147483648
    %v1632 = vxor.u32 %v1624, 2147483648
    %v1633 = vmul.f32 %v1630, 1.442695
    %v1634 = vpow.pop %v1633
    %v1635 = vmul.f32 %v1631, 1.442695
    %v1636 = vpow.pop %v1635
    %v1637 = vmul.f32 %v1632, 1.442695
    %v1638 = vpow.pop %v1637
    %v1639 = vadd.f32 %v1634, 1.0
    %v1640 = vadd.f32 %v1636, 1.0
    %v1641 = vadd.f32 %v1638, 1.0
    %v1642 = vrcp.pop %v1639
    %v1643 = vmul.f32 1.0, %v1642
    %v1644 = vrcp.pop %v1640
    %v1645 = vmul.f32 1.0, %v1644
    %v1646 = vrcp.pop %v1641
    %v1647 = vmul.f32 1.0, %v1646
    %v1648 = vtanh.pop %v1626
    %v1649 = vmul.f32 %v1645, %v1140
    %v1650 = vmul.f32 %v1643, %v1648
    %v1651 = vadd.f32 %v1649, %v1650
    %v1652 = vtanh.pop %v1651
    %v1653 = vmul.f32 %v1647, %v1652
    %1654 = vst [vmem:[#allocation11] sm:$0xff] %v1653
    %1655 = vst [vmem:[#allocation13] sm:$0xff] %v1651
    %v1656 = vpack.c.bf16 %v1653, %v1653
    %v1657 = vld [vmem:[%s617] sm:$0xff]
    %v1658 = vld [vmem:[%s619] sm:$0xff]
    %v1659 = vpack.c.bf16 %v1657, %v1657
    %v1660 = vld [vmem:[#allocation8] sm:$0xff]
    %v1661 = vld [vmem:[#allocation8 + $0x8] sm:$0xff]
    %v1662 = vld [vmem:[#allocation8 + $0x10] sm:$0xff]
    %v1663 = vld [vmem:[#allocation8 + $0x18] sm:$0xff]
    %v1664 = vld [vmem:[#allocation8 + $0x20] sm:$0xff]
    %v1665 = vld [vmem:[#allocation8 + $0x28] sm:$0xff]
    %v1666 = vld [vmem:[#allocation8 + $0x30] sm:$0xff]
    %v1667 = vld [vmem:[#allocation8 + $0x38] sm:$0xff]
    %v1668 = vld [vmem:[#allocation8 + $0x40] sm:$0xff]
    %v1669 = vld [vmem:[#allocation8 + $0x48] sm:$0xff]
    %v1670 = vld [vmem:[#allocation8 + $0x50] sm:$0xff]
    %v1671 = vld [vmem:[#allocation8 + $0x58] sm:$0xff]
    %v1672 = vld [vmem:[#allocation8 + $0x60] sm:$0xff]
    %v1673 = vld [vmem:[#allocation8 + $0x68] sm:$0xff]
    %v1674 = vld [vmem:[#allocation8 + $0x70] sm:$0xff]
    %v1675 = vld [vmem:[#allocation8 + $0x78] sm:$0xff]
    %v1676 = vld [vmem:[#allocation8 + $0x80] sm:$0xff]
    %v1677 = vld [vmem:[#allocation8 + $0x88] sm:$0xff]
    %v1678 = vld [vmem:[#allocation8 + $0x90] sm:$0xff]
    %v1679 = vld [vmem:[#allocation8 + $0x98] sm:$0xff]
    %v1680 = vld [vmem:[#allocation8 + $0xa0] sm:$0xff]
    %v1681 = vld [vmem:[#allocation8 + $0xa8] sm:$0xff]
    %v1682 = vld [vmem:[#allocation8 + $0xb0] sm:$0xff]
    %v1683 = vld [vmem:[#allocation8 + $0xb8] sm:$0xff]
    %v1684 = vld [vmem:[#allocation8 + $0xc0] sm:$0xff]
    %v1685 = vld [vmem:[#allocation8 + $0xc8] sm:$0xff]
    %v1686 = vld [vmem:[#allocation8 + $0xd0] sm:$0xff]
    %v1687 = vld [vmem:[#allocation8 + $0xd8] sm:$0xff]
    %v1688 = vld [vmem:[#allocation8 + $0xe0] sm:$0xff]
    %v1689 = vld [vmem:[#allocation8 + $0xe8] sm:$0xff]
    %v1690 = vld [vmem:[#allocation8 + $0xf0] sm:$0xff]
    %v1691 = vld [vmem:[#allocation8 + $0xf8] sm:$0xff]
    %v1692 = vld [vmem:[#allocation8 + $0x100] sm:$0xff]
    %v1693 = vld [vmem:[#allocation8 + $0x108] sm:$0xff]
    %v1694 = vld [vmem:[#allocation8 + $0x110] sm:$0xff]
    %v1695 = vld [vmem:[#allocation8 + $0x118] sm:$0xff]
    %v1696 = vld [vmem:[#allocation8 + $0x120] sm:$0xff]
    %v1697 = vld [vmem:[#allocation8 + $0x128] sm:$0xff]
    %v1698 = vld [vmem:[#allocation8 + $0x130] sm:$0xff]
    %v1699 = vld [vmem:[#allocation8 + $0x138] sm:$0xff]
    %v1700 = vld [vmem:[#allocation8 + $0x140] sm:$0xff]
    %v1701 = vld [vmem:[#allocation8 + $0x148] sm:$0xff]
    %v1702 = vld [vmem:[#allocation8 + $0x150] sm:$0xff]
    %v1703 = vld [vmem:[#allocation8 + $0x158] sm:$0xff]
    %v1704 = vld [vmem:[#allocation8 + $0x160] sm:$0xff]
    %v1705 = vld [vmem:[#allocation8 + $0x168] sm:$0xff]
    %v1706 = vld [vmem:[#allocation8 + $0x170] sm:$0xff]
    %v1707 = vld [vmem:[#allocation8 + $0x178] sm:$0xff]
    %v1708 = vld [vmem:[#allocation8 + $0x180] sm:$0xff]
    %v1709 = vld [vmem:[#allocation8 + $0x188] sm:$0xff]
    %v1710 = vld [vmem:[#allocation8 + $0x190] sm:$0xff]
    %v1711 = vld [vmem:[#allocation8 + $0x198] sm:$0xff]
    %v1712 = vld [vmem:[#allocation8 + $0x1a0] sm:$0xff]
    %v1713 = vld [vmem:[#allocation8 + $0x1a8] sm:$0xff]
    %v1714 = vld [vmem:[#allocation8 + $0x1b0] sm:$0xff]
    %v1715 = vld [vmem:[#allocation8 + $0x1b8] sm:$0xff]
    %v1716 = vld [vmem:[#allocation8 + $0x1c0] sm:$0xff]
    %v1717 = vld [vmem:[#allocation8 + $0x1c8] sm:$0xff]
    %v1718 = vld [vmem:[#allocation8 + $0x1d0] sm:$0xff]
    %v1719 = vld [vmem:[#allocation8 + $0x1d8] sm:$0xff]
    %v1720 = vld [vmem:[#allocation8 + $0x1e0] sm:$0xff]
    %v1721 = vld [vmem:[#allocation8 + $0x1e8] sm:$0xff]
    %v1722 = vld [vmem:[#allocation8 + $0x1f0] sm:$0xff]
    %v1723 = vld [vmem:[#allocation8 + $0x1f8] sm:$0xff]
    %v1724 = vld [vmem:[%s6] sm:$0xf]
    %v1726 = vlaneseq
    %v1727 = vshrl.u32 %v1726, 7
    %v1728 = vsub.s32 0, %v1727
    %v1729 = vrot.slane %v1724, %v1728
    %v1730 = vlaneseq
    %v1731 = vshrl.u32 %v1730, 7
    %v1732 = vsub.s32 1, %v1731
    %v1733 = vrot.slane %v1724, %v1732
    %v1734 = vlaneseq
    %v1735 = vshrl.u32 %v1734, 7
    %v1736 = vsub.s32 2, %v1735
    %v1737 = vrot.slane %v1724, %v1736
    %v1738 = vlaneseq
    %v1739 = vshrl.u32 %v1738, 7
    %v1740 = vsub.s32 3, %v1739
    %v1741 = vrot.slane %v1724, %v1740
    %v1810 = vunpack.c.l.b16 %v1660
    %v1811 = vunpack.c.h.b16 %v1660
    %v1812 = vunpack.c.l.b16 %v1661
    %v1813 = vunpack.c.h.b16 %v1661
    %v1814 = vunpack.c.l.b16 %v1662
    %v1815 = vunpack.c.h.b16 %v1662
    %v1816 = vunpack.c.l.b16 %v1663
    %v1817 = vunpack.c.h.b16 %v1663
    %v1818 = vunpack.c.l.b16 %v1664
    %v1819 = vunpack.c.h.b16 %v1664
    %v1820 = vunpack.c.l.b16 %v1665
    %v1821 = vunpack.c.h.b16 %v1665
    %v1822 = vunpack.c.l.b16 %v1666
    %v1823 = vunpack.c.h.b16 %v1666
    %v1824 = vunpack.c.l.b16 %v1667
    %v1825 = vunpack.c.h.b16 %v1667
    %v1826 = vunpack.c.l.b16 %v1668
    %v1827 = vunpack.c.h.b16 %v1668
    %v1828 = vunpack.c.l.b16 %v1669
    %v1829 = vunpack.c.h.b16 %v1669
    %v1830 = vunpack.c.l.b16 %v1670
    %v1831 = vunpack.c.h.b16 %v1670
    %v1832 = vunpack.c.l.b16 %v1671
    %v1833 = vunpack.c.h.b16 %v1671
    %v1834 = vunpack.c.l.b16 %v1672
    %v1835 = vunpack.c.h.b16 %v1672
    %v1836 = vunpack.c.l.b16 %v1673
    %v1837 = vunpack.c.h.b16 %v1673
    %v1838 = vunpack.c.l.b16 %v1674
    %v1839 = vunpack.c.h.b16 %v1674
    %v1840 = vunpack.c.l.b16 %v1675
    %v1841 = vunpack.c.h.b16 %v1675
    %v1842 = vunpack.c.l.b16 %v1676
    %v1843 = vunpack.c.h.b16 %v1676
    %v1844 = vunpack.c.l.b16 %v1677
    %v1845 = vunpack.c.h.b16 %v1677
    %v1846 = vunpack.c.l.b16 %v1678
    %v1847 = vunpack.c.h.b16 %v1678
    %v1848 = vunpack.c.l.b16 %v1679
    %v1849 = vunpack.c.h.b16 %v1679
    %v1850 = vunpack.c.l.b16 %v1680
    %v1851 = vunpack.c.h.b16 %v1680
    %v1852 = vunpack.c.l.b16 %v1681
    %v1853 = vunpack.c.h.b16 %v1681
    %v1854 = vunpack.c.l.b16 %v1682
    %v1855 = vunpack.c.h.b16 %v1682
    %v1856 = vunpack.c.l.b16 %v1683
    %v1857 = vunpack.c.h.b16 %v1683
    %v1858 = vunpack.c.l.b16 %v1684
    %v1859 = vunpack.c.h.b16 %v1684
    %v1860 = vunpack.c.l.b16 %v1685
    %v1861 = vunpack.c.h.b16 %v1685
    %v1862 = vunpack.c.l.b16 %v1686
    %v1863 = vunpack.c.h.b16 %v1686
    %v1864 = vunpack.c.l.b16 %v1687
    %v1865 = vunpack.c.h.b16 %v1687
    %v1866 = vunpack.c.l.b16 %v1688
    %v1867 = vunpack.c.h.b16 %v1688
    %v1868 = vunpack.c.l.b16 %v1689
    %v1869 = vunpack.c.h.b16 %v1689
    %v1870 = vunpack.c.l.b16 %v1690
    %v1871 = vunpack.c.h.b16 %v1690
    %v1872 = vunpack.c.l.b16 %v1691
    %v1873 = vunpack.c.h.b16 %v1691
    %v1874 = vunpack.c.l.b16 %v1692
    %v1875 = vunpack.c.h.b16 %v1692
    %v1876 = vunpack.c.l.b16 %v1693
    %v1877 = vunpack.c.h.b16 %v1693
    %v1878 = vunpack.c.l.b16 %v1694
    %v1879 = vunpack.c.h.b16 %v1694
    %v1880 = vunpack.c.l.b16 %v1695
    %v1881 = vunpack.c.h.b16 %v1695
    %v1882 = vunpack.c.l.b16 %v1696
    %v1883 = vunpack.c.h.b16 %v1696
    %v1884 = vunpack.c.l.b16 %v1697
    %v1885 = vunpack.c.h.b16 %v1697
    %v1886 = vunpack.c.l.b16 %v1698
    %v1887 = vunpack.c.h.b16 %v1698
    %v1888 = vunpack.c.l.b16 %v1699
    %v1889 = vunpack.c.h.b16 %v1699
    %v1890 = vunpack.c.l.b16 %v1700
    %v1891 = vunpack.c.h.b16 %v1700
    %v1892 = vunpack.c.l.b16 %v1701
    %v1893 = vunpack.c.h.b16 %v1701
    %v1894 = vunpack.c.l.b16 %v1702
    %v1895 = vunpack.c.h.b16 %v1702
    %v1896 = vunpack.c.l.b16 %v1703
    %v1897 = vunpack.c.h.b16 %v1703
    %v1898 = vunpack.c.l.b16 %v1704
    %v1899 = vunpack.c.h.b16 %v1704
    %v1900 = vunpack.c.l.b16 %v1705
    %v1901 = vunpack.c.h.b16 %v1705
    %v1902 = vunpack.c.l.b16 %v1706
    %v1903 = vunpack.c.h.b16 %v1706
    %v1904 = vunpack.c.l.b16 %v1707
    %v1905 = vunpack.c.h.b16 %v1707
    %v1906 = vunpack.c.l.b16 %v1708
    %v1907 = vunpack.c.h.b16 %v1708
    %v1908 = vunpack.c.l.b16 %v1709
    %v1909 = vunpack.c.h.b16 %v1709
    %v1910 = vunpack.c.l.b16 %v1710
    %v1911 = vunpack.c.h.b16 %v1710
    %v1912 = vunpack.c.l.b16 %v1711
    %v1913 = vunpack.c.h.b16 %v1711
    %v1914 = vunpack.c.l.b16 %v1712
    %v1915 = vunpack.c.h.b16 %v1712
    %v1916 = vunpack.c.l.b16 %v1713
    %v1917 = vunpack.c.h.b16 %v1713
    %v1918 = vunpack.c.l.b16 %v1714
    %v1919 = vunpack.c.h.b16 %v1714
    %v1920 = vunpack.c.l.b16 %v1715
    %v1921 = vunpack.c.h.b16 %v1715
    %v1922 = vunpack.c.l.b16 %v1716
    %v1923 = vunpack.c.h.b16 %v1716
    %v1924 = vunpack.c.l.b16 %v1717
    %v1925 = vunpack.c.h.b16 %v1717
    %v1926 = vunpack.c.l.b16 %v1718
    %v1927 = vunpack.c.h.b16 %v1718
    %v1928 = vunpack.c.l.b16 %v1719
    %v1929 = vunpack.c.h.b16 %v1719
    %v1930 = vunpack.c.l.b16 %v1720
    %v1931 = vunpack.c.h.b16 %v1720
    %v1932 = vunpack.c.l.b16 %v1721
    %v1933 = vunpack.c.h.b16 %v1721
    %v1934 = vunpack.c.l.b16 %v1722
    %v1935 = vunpack.c.h.b16 %v1722
    %v1936 = vunpack.c.l.b16 %v1723
    %v1937 = vunpack.c.h.b16 %v1723
    %v1938 = vpack.c.b16 %v1814, %v1810
    %v1939 = vpack.c.b16 %v1815, %v1811
    %v1940 = vpack.c.b16 %v1816, %v1812
    %v1941 = vpack.c.b16 %v1817, %v1813
    %v1942 = vpack.c.b16 %v1822, %v1818
    %v1943 = vpack.c.b16 %v1823, %v1819
    %v1944 = vpack.c.b16 %v1824, %v1820
    %v1945 = vpack.c.b16 %v1825, %v1821
    %v1946 = vpack.c.b16 %v1830, %v1826
    %v1947 = vpack.c.b16 %v1831, %v1827
    %v1948 = vpack.c.b16 %v1832, %v1828
    %v1949 = vpack.c.b16 %v1833, %v1829
    %v1950 = vpack.c.b16 %v1838, %v1834
    %v1951 = vpack.c.b16 %v1839, %v1835
    %v1952 = vpack.c.b16 %v1840, %v1836
    %v1953 = vpack.c.b16 %v1841, %v1837
    %v1954 = vpack.c.b16 %v1846, %v1842
    %v1955 = vpack.c.b16 %v1847, %v1843
    %v1956 = vpack.c.b16 %v1848, %v1844
    %v1957 = vpack.c.b16 %v1849, %v1845
    %v1958 = vpack.c.b16 %v1854, %v1850
    %v1959 = vpack.c.b16 %v1855, %v1851
    %v1960 = vpack.c.b16 %v1856, %v1852
    %v1961 = vpack.c.b16 %v1857, %v1853
    %v1962 = vpack.c.b16 %v1862, %v1858
    %v1963 = vpack.c.b16 %v1863, %v1859
    %v1964 = vpack.c.b16 %v1864, %v1860
    %v1965 = vpack.c.b16 %v1865, %v1861
    %v1966 = vpack.c.b16 %v1870, %v1866
    %v1967 = vpack.c.b16 %v1871, %v1867
    %v1968 = vpack.c.b16 %v1872, %v1868
    %v1969 = vpack.c.b16 %v1873, %v1869
    %v1970 = vpack.c.b16 %v1878, %v1874
    %v1971 = vpack.c.b16 %v1879, %v1875
    %v1972 = vpack.c.b16 %v1880, %v1876
    %v1973 = vpack.c.b16 %v1881, %v1877
    %v1974 = vpack.c.b16 %v1886, %v1882
    %v1975 = vpack.c.b16 %v1887, %v1883
    %v1976 = vpack.c.b16 %v1888, %v1884
    %v1977 = vpack.c.b16 %v1889, %v1885
    %v1978 = vpack.c.b16 %v1894, %v1890
    %v1979 = vpack.c.b16 %v1895, %v1891
    %v1980 = vpack.c.b16 %v1896, %v1892
    %v1981 = vpack.c.b16 %v1897, %v1893
    %v1982 = vpack.c.b16 %v1902, %v1898
    %v1983 = vpack.c.b16 %v1903, %v1899
    %v1984 = vpack.c.b16 %v1904, %v1900
    %v1985 = vpack.c.b16 %v1905, %v1901
    %v1986 = vpack.c.b16 %v1910, %v1906
    %v1987 = vpack.c.b16 %v1911, %v1907
    %v1988 = vpack.c.b16 %v1912, %v1908
    %v1989 = vpack.c.b16 %v1913, %v1909
    %v1990 = vpack.c.b16 %v1918, %v1914
    %v1991 = vpack.c.b16 %v1919, %v1915
    %v1992 = vpack.c.b16 %v1920, %v1916
    %v1993 = vpack.c.b16 %v1921, %v1917
    %v1994 = vpack.c.b16 %v1926, %v1922
    %v1995 = vpack.c.b16 %v1927, %v1923
    %v1996 = vpack.c.b16 %v1928, %v1924
    %v1997 = vpack.c.b16 %v1929, %v1925
    %v1998 = vpack.c.b16 %v1934, %v1930
    %v1999 = vpack.c.b16 %v1935, %v1931
    %v2000 = vpack.c.b16 %v1936, %v1932
    %v2001 = vpack.c.b16 %v1937, %v1933
    %2066 = vmatprep.subr.bf16.mxu0 %v1967
    %2067 = vmatpush1.bf16.msra.mxu0 %v1966
    %2068 = vmatprep.subr.bf16.mxu0 %v1963
    %2069 = vmatpush1.bf16.msra.mxu0 %v1962
    %2070 = vmatprep.subr.bf16.mxu0 %v1959
    %2071 = vmatpush1.bf16.msra.mxu0 %v1958
    %2072 = vmatprep.subr.bf16.mxu0 %v1955
    %2073 = vmatpush1.bf16.msra.mxu0 %v1954
    %2074 = vmatprep.subr.bf16.mxu0 %v1951
    %2075 = vmatpush1.bf16.msra.mxu0 %v1950
    %2076 = vmatprep.subr.bf16.mxu0 %v1947
    %2077 = vmatpush1.bf16.msra.mxu0 %v1946
    %2078 = vmatprep.subr.bf16.mxu0 %v1943
    %2079 = vmatpush1.bf16.msra.mxu0 %v1942
    %2080 = vmatprep.subr.bf16.mxu0 %v1939
    %2081 = vmatpush1.bf16.msra.mxu0 %v1938
    %2082 = vmatprep.subr.bf16.mxu0 %v1999
    %2083 = vmatpush2.bf16.msra.mxu0 %v1998
    %2084 = vmatprep.subr.bf16.mxu0 %v1995
    %2085 = vmatpush2.bf16.msra.mxu0 %v1994
    %2086 = vmatprep.subr.bf16.mxu0 %v1991
    %2087 = vmatpush2.bf16.msra.mxu0 %v1990
    %2088 = vmatprep.subr.bf16.mxu0 %v1987
    %2089 = vmatpush2.bf16.msra.mxu0 %v1986
    %2090 = vmatprep.subr.bf16.mxu0 %v1983
    %2091 = vmatpush2.bf16.msra.mxu0 %v1982
    %2092 = vmatprep.subr.bf16.mxu0 %v1979
    %2093 = vmatpush2.bf16.msra.mxu0 %v1978
    %2094 = vmatprep.subr.bf16.mxu0 %v1975
    %2095 = vmatpush2.bf16.msra.mxu0 %v1974
    %2096 = vmatprep.subr.bf16.mxu0 %v1971
    %2097 = vmatpush2.bf16.msra.mxu0 %v1970
    %2098 = vmatprep.mubr.bf16.mxu0 %v1659
    %2099 = vmatmul.mubr.bf16.gmra.mxu0 %v1656
    %v2100 = vpop.f32.mrf.mxu0
    %v2101 = vadd.f32 %v1729, %v2100
    %v2102 = vpop.f32.mrf.mxu0
    %v2103 = vadd.f32 %v1733, %v2102
    %v2104 = vpop.f32.mrf.mxu0
    %v2105 = vpop.f32.mrf.mxu0
    %2106 = vdwg.mxu0
    %2107 = vmatprep.subr.bf16.mxu0 %v1969
    %2108 = vmatpush1.bf16.msra.mxu0 %v1968
    %2109 = vmatprep.subr.bf16.mxu0 %v1965
    %2110 = vmatpush1.bf16.msra.mxu0 %v1964
    %2111 = vmatprep.subr.bf16.mxu0 %v1961
    %2112 = vmatpush1.bf16.msra.mxu0 %v1960
    %2113 = vmatprep.subr.bf16.mxu0 %v1957
    %2114 = vmatpush1.bf16.msra.mxu0 %v1956
    %2115 = vmatprep.subr.bf16.mxu0 %v1953
    %2116 = vmatpush1.bf16.msra.mxu0 %v1952
    %2117 = vmatprep.subr.bf16.mxu0 %v1949
    %2118 = vmatpush1.bf16.msra.mxu0 %v1948
    %2119 = vmatprep.subr.bf16.mxu0 %v1945
    %2120 = vmatpush1.bf16.msra.mxu0 %v1944
    %2121 = vmatprep.subr.bf16.mxu0 %v1941
    %2122 = vmatpush1.bf16.msra.mxu0 %v1940
    %2123 = vmatprep.subr.bf16.mxu0 %v2001
    %2124 = vmatpush2.bf16.msra.mxu0 %v2000
    %2125 = vmatprep.subr.bf16.mxu0 %v1997
    %2126 = vmatpush2.bf16.msra.mxu0 %v1996
    %2127 = vmatprep.subr.bf16.mxu0 %v1993
    %2128 = vmatpush2.bf16.msra.mxu0 %v1992
    %2129 = vmatprep.subr.bf16.mxu0 %v1989
    %2130 = vmatpush2.bf16.msra.mxu0 %v1988
    %2131 = vmatprep.subr.bf16.mxu0 %v1985
    %2132 = vmatpush2.bf16.msra.mxu0 %v1984
    %2133 = vmatprep.subr.bf16.mxu0 %v1981
    %2134 = vmatpush2.bf16.msra.mxu0 %v1980
    %2135 = vmatprep.subr.bf16.mxu0 %v1977
    %2136 = vmatpush2.bf16.msra.mxu0 %v1976
    %2137 = vmatprep.subr.bf16.mxu0 %v1973
    %2138 = vmatpush2.bf16.msra.mxu0 %v1972
    %2139 = vmatprep.mubr.bf16.mxu0 %v1659
    %2140 = vmatmul.mubr.bf16.gmra.mxu0 %v1656
    %v2141 = vpop.f32.mrf.mxu0
    %v2142 = vadd.f32 %v1737, %v2141
    %v2143 = vpop.f32.mrf.mxu0
    %v2144 = vadd.f32 %v1741, %v2143
    %v2145 = vpop.f32.mrf.mxu0
    %v2146 = vpop.f32.mrf.mxu0
    %2147 = vdwg.mxu0
    %v2148 = vxor.u32 %v2101, 2147483648
    %v2149 = vxor.u32 %v2103, 2147483648
    %v2150 = vxor.u32 %v2142, 2147483648
    %v2151 = vmul.f32 %v2148, 1.442695
    %v2152 = vpow.pop %v2151
    %v2153 = vmul.f32 %v2149, 1.442695
    %v2154 = vpow.pop %v2153
    %v2155 = vmul.f32 %v2150, 1.442695
    %v2156 = vpow.pop %v2155
    %v2157 = vadd.f32 %v2152, 1.0
    %v2158 = vadd.f32 %v2154, 1.0
    %v2159 = vadd.f32 %v2156, 1.0
    %v2160 = vrcp.pop %v2157
    %v2161 = vmul.f32 1.0, %v2160
    %v2162 = vrcp.pop %v2158
    %v2163 = vmul.f32 1.0, %v2162
    %v2164 = vrcp.pop %v2159
    %v2165 = vmul.f32 1.0, %v2164
    %v2166 = vtanh.pop %v2144
    %v2167 = vmul.f32 %v2163, %v1658
    %v2168 = vmul.f32 %v2161, %v2166
    %v2169 = vadd.f32 %v2167, %v2168
    %v2170 = vtanh.pop %v2169
    %v2171 = vmul.f32 %v2165, %v2170
    %2172 = vst [vmem:[%s617] sm:$0xff] %v2171
    %2173 = vst [vmem:[%s619] sm:$0xff] %v2169
    %s2174 = scalar_lea.vmem [#allocation10], 8
    %2175 = vst [vmem:[%s2174] sm:$0xff] %v2171
    %s2176 = scalar_lea.vmem %s0, 8
    %v2177 = vld [vmem:[%s2176] sm:$0xf]
    %v2178 = vld [vmem:[#allocation11] sm:$0xff]
    %v2179 = vld [vmem:[#allocation13] sm:$0xff]
    %v2180 = vpack.c.bf16 %v2178, %v2178
    %v2181 = vld [vmem:[#allocation7] sm:$0xff]
    %v2182 = vld [vmem:[#allocation7 + $0x8] sm:$0xff]
    %v2183 = vld [vmem:[#allocation7 + $0x10] sm:$0xff]
    %v2184 = vld [vmem:[#allocation7 + $0x18] sm:$0xff]
    %v2185 = vld [vmem:[#allocation7 + $0x20] sm:$0xff]
    %v2186 = vld [vmem:[#allocation7 + $0x28] sm:$0xff]
    %v2187 = vld [vmem:[#allocation7 + $0x30] sm:$0xff]
    %v2188 = vld [vmem:[#allocation7 + $0x38] sm:$0xff]
    %v2189 = vld [vmem:[#allocation7 + $0x40] sm:$0xff]
    %v2190 = vld [vmem:[#allocation7 + $0x48] sm:$0xff]
    %v2191 = vld [vmem:[#allocation7 + $0x50] sm:$0xff]
    %v2192 = vld [vmem:[#allocation7 + $0x58] sm:$0xff]
    %v2193 = vld [vmem:[#allocation7 + $0x60] sm:$0xff]
    %v2194 = vld [vmem:[#allocation7 + $0x68] sm:$0xff]
    %v2195 = vld [vmem:[#allocation7 + $0x70] sm:$0xff]
    %v2196 = vld [vmem:[#allocation7 + $0x78] sm:$0xff]
    %v2197 = vld [vmem:[#allocation7 + $0x80] sm:$0xff]
    %v2198 = vld [vmem:[#allocation7 + $0x88] sm:$0xff]
    %v2199 = vld [vmem:[#allocation7 + $0x90] sm:$0xff]
    %v2200 = vld [vmem:[#allocation7 + $0x98] sm:$0xff]
    %v2201 = vld [vmem:[#allocation7 + $0xa0] sm:$0xff]
    %v2202 = vld [vmem:[#allocation7 + $0xa8] sm:$0xff]
    %v2203 = vld [vmem:[#allocation7 + $0xb0] sm:$0xff]
    %v2204 = vld [vmem:[#allocation7 + $0xb8] sm:$0xff]
    %v2205 = vld [vmem:[#allocation7 + $0xc0] sm:$0xff]
    %v2206 = vld [vmem:[#allocation7 + $0xc8] sm:$0xff]
    %v2207 = vld [vmem:[#allocation7 + $0xd0] sm:$0xff]
    %v2208 = vld [vmem:[#allocation7 + $0xd8] sm:$0xff]
    %v2209 = vld [vmem:[#allocation7 + $0xe0] sm:$0xff]
    %v2210 = vld [vmem:[#allocation7 + $0xe8] sm:$0xff]
    %v2211 = vld [vmem:[#allocation7 + $0xf0] sm:$0xff]
    %v2212 = vld [vmem:[#allocation7 + $0xf8] sm:$0xff]
    %v2213 = vld [vmem:[#allocation7 + $0x100] sm:$0xff]
    %v2214 = vld [vmem:[#allocation7 + $0x108] sm:$0xff]
    %v2215 = vld [vmem:[#allocation7 + $0x110] sm:$0xff]
    %v2216 = vld [vmem:[#allocation7 + $0x118] sm:$0xff]
    %v2217 = vld [vmem:[#allocation7 + $0x120] sm:$0xff]
    %v2218 = vld [vmem:[#allocation7 + $0x128] sm:$0xff]
    %v2219 = vld [vmem:[#allocation7 + $0x130] sm:$0xff]
    %v2220 = vld [vmem:[#allocation7 + $0x138] sm:$0xff]
    %v2221 = vld [vmem:[#allocation7 + $0x140] sm:$0xff]
    %v2222 = vld [vmem:[#allocation7 + $0x148] sm:$0xff]
    %v2223 = vld [vmem:[#allocation7 + $0x150] sm:$0xff]
    %v2224 = vld [vmem:[#allocation7 + $0x158] sm:$0xff]
    %v2225 = vld [vmem:[#allocation7 + $0x160] sm:$0xff]
    %v2226 = vld [vmem:[#allocation7 + $0x168] sm:$0xff]
    %v2227 = vld [vmem:[#allocation7 + $0x170] sm:$0xff]
    %v2228 = vld [vmem:[#allocation7 + $0x178] sm:$0xff]
    %v2229 = vld [vmem:[#allocation7 + $0x180] sm:$0xff]
    %v2230 = vld [vmem:[#allocation7 + $0x188] sm:$0xff]
    %v2231 = vld [vmem:[#allocation7 + $0x190] sm:$0xff]
    %v2232 = vld [vmem:[#allocation7 + $0x198] sm:$0xff]
    %v2233 = vld [vmem:[#allocation7 + $0x1a0] sm:$0xff]
    %v2234 = vld [vmem:[#allocation7 + $0x1a8] sm:$0xff]
    %v2235 = vld [vmem:[#allocation7 + $0x1b0] sm:$0xff]
    %v2236 = vld [vmem:[#allocation7 + $0x1b8] sm:$0xff]
    %v2237 = vld [vmem:[#allocation7 + $0x1c0] sm:$0xff]
    %v2238 = vld [vmem:[#allocation7 + $0x1c8] sm:$0xff]
    %v2239 = vld [vmem:[#allocation7 + $0x1d0] sm:$0xff]
    %v2240 = vld [vmem:[#allocation7 + $0x1d8] sm:$0xff]
    %v2241 = vld [vmem:[#allocation7 + $0x1e0] sm:$0xff]
    %v2242 = vld [vmem:[#allocation7 + $0x1e8] sm:$0xff]
    %v2243 = vld [vmem:[#allocation7 + $0x1f0] sm:$0xff]
    %v2244 = vld [vmem:[#allocation7 + $0x1f8] sm:$0xff]
    %v2245 = vld [vmem:[%s5] sm:$0xf]
    %v2247 = vlaneseq
    %v2248 = vshrl.u32 %v2247, 7
    %v2249 = vsub.s32 0, %v2248
    %v2250 = vrot.slane %v2245, %v2249
    %v2251 = vlaneseq
    %v2252 = vshrl.u32 %v2251, 7
    %v2253 = vsub.s32 1, %v2252
    %v2254 = vrot.slane %v2245, %v2253
    %v2255 = vlaneseq
    %v2256 = vshrl.u32 %v2255, 7
    %v2257 = vsub.s32 2, %v2256
    %v2258 = vrot.slane %v2245, %v2257
    %v2259 = vlaneseq
    %v2260 = vshrl.u32 %v2259, 7
    %v2261 = vsub.s32 3, %v2260
    %v2262 = vrot.slane %v2245, %v2261
    %v2331 = vunpack.c.l.b16 %v2181
    %v2332 = vunpack.c.h.b16 %v2181
    %v2333 = vunpack.c.l.b16 %v2182
    %v2334 = vunpack.c.h.b16 %v2182
    %v2335 = vunpack.c.l.b16 %v2183
    %v2336 = vunpack.c.h.b16 %v2183
    %v2337 = vunpack.c.l.b16 %v2184
    %v2338 = vunpack.c.h.b16 %v2184
    %v2339 = vunpack.c.l.b16 %v2185
    %v2340 = vunpack.c.h.b16 %v2185
    %v2341 = vunpack.c.l.b16 %v2186
    %v2342 = vunpack.c.h.b16 %v2186
    %v2343 = vunpack.c.l.b16 %v2187
    %v2344 = vunpack.c.h.b16 %v2187
    %v2345 = vunpack.c.l.b16 %v2188
    %v2346 = vunpack.c.h.b16 %v2188
    %v2347 = vunpack.c.l.b16 %v2189
    %v2348 = vunpack.c.h.b16 %v2189
    %v2349 = vunpack.c.l.b16 %v2190
    %v2350 = vunpack.c.h.b16 %v2190
    %v2351 = vunpack.c.l.b16 %v2191
    %v2352 = vunpack.c.h.b16 %v2191
    %v2353 = vunpack.c.l.b16 %v2192
    %v2354 = vunpack.c.h.b16 %v2192
    %v2355 = vunpack.c.l.b16 %v2193
    %v2356 = vunpack.c.h.b16 %v2193
    %v2357 = vunpack.c.l.b16 %v2194
    %v2358 = vunpack.c.h.b16 %v2194
    %v2359 = vunpack.c.l.b16 %v2195
    %v2360 = vunpack.c.h.b16 %v2195
    %v2361 = vunpack.c.l.b16 %v2196
    %v2362 = vunpack.c.h.b16 %v2196
    %v2363 = vunpack.c.l.b16 %v2197
    %v2364 = vunpack.c.h.b16 %v2197
    %v2365 = vunpack.c.l.b16 %v2198
    %v2366 = vunpack.c.h.b16 %v2198
    %v2367 = vunpack.c.l.b16 %v2199
    %v2368 = vunpack.c.h.b16 %v2199
    %v2369 = vunpack.c.l.b16 %v2200
    %v2370 = vunpack.c.h.b16 %v2200
    %v2371 = vunpack.c.l.b16 %v2201
    %v2372 = vunpack.c.h.b16 %v2201
    %v2373 = vunpack.c.l.b16 %v2202
    %v2374 = vunpack.c.h.b16 %v2202
    %v2375 = vunpack.c.l.b16 %v2203
    %v2376 = vunpack.c.h.b16 %v2203
    %v2377 = vunpack.c.l.b16 %v2204
    %v2378 = vunpack.c.h.b16 %v2204
    %v2379 = vunpack.c.l.b16 %v2205
    %v2380 = vunpack.c.h.b16 %v2205
    %v2381 = vunpack.c.l.b16 %v2206
    %v2382 = vunpack.c.h.b16 %v2206
    %v2383 = vunpack.c.l.b16 %v2207
    %v2384 = vunpack.c.h.b16 %v2207
    %v2385 = vunpack.c.l.b16 %v2208
    %v2386 = vunpack.c.h.b16 %v2208
    %v2387 = vunpack.c.l.b16 %v2209
    %v2388 = vunpack.c.h.b16 %v2209
    %v2389 = vunpack.c.l.b16 %v2210
    %v2390 = vunpack.c.h.b16 %v2210
    %v2391 = vunpack.c.l.b16 %v2211
    %v2392 = vunpack.c.h.b16 %v2211
    %v2393 = vunpack.c.l.b16 %v2212
    %v2394 = vunpack.c.h.b16 %v2212
    %v2395 = vunpack.c.l.b16 %v2213
    %v2396 = vunpack.c.h.b16 %v2213
    %v2397 = vunpack.c.l.b16 %v2214
    %v2398 = vunpack.c.h.b16 %v2214
    %v2399 = vunpack.c.l.b16 %v2215
    %v2400 = vunpack.c.h.b16 %v2215
    %v2401 = vunpack.c.l.b16 %v2216
    %v2402 = vunpack.c.h.b16 %v2216
    %v2403 = vunpack.c.l.b16 %v2217
    %v2404 = vunpack.c.h.b16 %v2217
    %v2405 = vunpack.c.l.b16 %v2218
    %v2406 = vunpack.c.h.b16 %v2218
    %v2407 = vunpack.c.l.b16 %v2219
    %v2408 = vunpack.c.h.b16 %v2219
    %v2409 = vunpack.c.l.b16 %v2220
    %v2410 = vunpack.c.h.b16 %v2220
    %v2411 = vunpack.c.l.b16 %v2221
    %v2412 = vunpack.c.h.b16 %v2221
    %v2413 = vunpack.c.l.b16 %v2222
    %v2414 = vunpack.c.h.b16 %v2222
    %v2415 = vunpack.c.l.b16 %v2223
    %v2416 = vunpack.c.h.b16 %v2223
    %v2417 = vunpack.c.l.b16 %v2224
    %v2418 = vunpack.c.h.b16 %v2224
    %v2419 = vunpack.c.l.b16 %v2225
    %v2420 = vunpack.c.h.b16 %v2225
    %v2421 = vunpack.c.l.b16 %v2226
    %v2422 = vunpack.c.h.b16 %v2226
    %v2423 = vunpack.c.l.b16 %v2227
    %v2424 = vunpack.c.h.b16 %v2227
    %v2425 = vunpack.c.l.b16 %v2228
    %v2426 = vunpack.c.h.b16 %v2228
    %v2427 = vunpack.c.l.b16 %v2229
    %v2428 = vunpack.c.h.b16 %v2229
    %v2429 = vunpack.c.l.b16 %v2230
    %v2430 = vunpack.c.h.b16 %v2230
    %v2431 = vunpack.c.l.b16 %v2231
    %v2432 = vunpack.c.h.b16 %v2231
    %v2433 = vunpack.c.l.b16 %v2232
    %v2434 = vunpack.c.h.b16 %v2232
    %v2435 = vunpack.c.l.b16 %v2233
    %v2436 = vunpack.c.h.b16 %v2233
    %v2437 = vunpack.c.l.b16 %v2234
    %v2438 = vunpack.c.h.b16 %v2234
    %v2439 = vunpack.c.l.b16 %v2235
    %v2440 = vunpack.c.h.b16 %v2235
    %v2441 = vunpack.c.l.b16 %v2236
    %v2442 = vunpack.c.h.b16 %v2236
    %v2443 = vunpack.c.l.b16 %v2237
    %v2444 = vunpack.c.h.b16 %v2237
    %v2445 = vunpack.c.l.b16 %v2238
    %v2446 = vunpack.c.h.b16 %v2238
    %v2447 = vunpack.c.l.b16 %v2239
    %v2448 = vunpack.c.h.b16 %v2239
    %v2449 = vunpack.c.l.b16 %v2240
    %v2450 = vunpack.c.h.b16 %v2240
    %v2451 = vunpack.c.l.b16 %v2241
    %v2452 = vunpack.c.h.b16 %v2241
    %v2453 = vunpack.c.l.b16 %v2242
    %v2454 = vunpack.c.h.b16 %v2242
    %v2455 = vunpack.c.l.b16 %v2243
    %v2456 = vunpack.c.h.b16 %v2243
    %v2457 = vunpack.c.l.b16 %v2244
    %v2458 = vunpack.c.h.b16 %v2244
    %v2459 = vpack.c.b16 %v2335, %v2331
    %v2460 = vpack.c.b16 %v2336, %v2332
    %v2461 = vpack.c.b16 %v2337, %v2333
    %v2462 = vpack.c.b16 %v2338, %v2334
    %v2463 = vpack.c.b16 %v2343, %v2339
    %v2464 = vpack.c.b16 %v2344, %v2340
    %v2465 = vpack.c.b16 %v2345, %v2341
    %v2466 = vpack.c.b16 %v2346, %v2342
    %v2467 = vpack.c.b16 %v2351, %v2347
    %v2468 = vpack.c.b16 %v2352, %v2348
    %v2469 = vpack.c.b16 %v2353, %v2349
    %v2470 = vpack.c.b16 %v2354, %v2350
    %v2471 = vpack.c.b16 %v2359, %v2355
    %v2472 = vpack.c.b16 %v2360, %v2356
    %v2473 = vpack.c.b16 %v2361, %v2357
    %v2474 = vpack.c.b16 %v2362, %v2358
    %v2475 = vpack.c.b16 %v2367, %v2363
    %v2476 = vpack.c.b16 %v2368, %v2364
    %v2477 = vpack.c.b16 %v2369, %v2365
    %v2478 = vpack.c.b16 %v2370, %v2366
    %v2479 = vpack.c.b16 %v2375, %v2371
    %v2480 = vpack.c.b16 %v2376, %v2372
    %v2481 = vpack.c.b16 %v2377, %v2373
    %v2482 = vpack.c.b16 %v2378, %v2374
    %v2483 = vpack.c.b16 %v2383, %v2379
    %v2484 = vpack.c.b16 %v2384, %v2380
    %v2485 = vpack.c.b16 %v2385, %v2381
    %v2486 = vpack.c.b16 %v2386, %v2382
    %v2487 = vpack.c.b16 %v2391, %v2387
    %v2488 = vpack.c.b16 %v2392, %v2388
    %v2489 = vpack.c.b16 %v2393, %v2389
    %v2490 = vpack.c.b16 %v2394, %v2390
    %v2491 = vpack.c.b16 %v2399, %v2395
    %v2492 = vpack.c.b16 %v2400, %v2396
    %v2493 = vpack.c.b16 %v2401, %v2397
    %v2494 = vpack.c.b16 %v2402, %v2398
    %v2495 = vpack.c.b16 %v2407, %v2403
    %v2496 = vpack.c.b16 %v2408, %v2404
    %v2497 = vpack.c.b16 %v2409, %v2405
    %v2498 = vpack.c.b16 %v2410, %v2406
    %v2499 = vpack.c.b16 %v2415, %v2411
    %v2500 = vpack.c.b16 %v2416, %v2412
    %v2501 = vpack.c.b16 %v2417, %v2413
    %v2502 = vpack.c.b16 %v2418, %v2414
    %v2503 = vpack.c.b16 %v2423, %v2419
    %v2504 = vpack.c.b16 %v2424, %v2420
    %v2505 = vpack.c.b16 %v2425, %v2421
    %v2506 = vpack.c.b16 %v2426, %v2422
    %v2507 = vpack.c.b16 %v2431, %v2427
    %v2508 = vpack.c.b16 %v2432, %v2428
    %v2509 = vpack.c.b16 %v2433, %v2429
    %v2510 = vpack.c.b16 %v2434, %v2430
    %v2511 = vpack.c.b16 %v2439, %v2435
    %v2512 = vpack.c.b16 %v2440, %v2436
    %v2513 = vpack.c.b16 %v2441, %v2437
    %v2514 = vpack.c.b16 %v2442, %v2438
    %v2515 = vpack.c.b16 %v2447, %v2443
    %v2516 = vpack.c.b16 %v2448, %v2444
    %v2517 = vpack.c.b16 %v2449, %v2445
    %v2518 = vpack.c.b16 %v2450, %v2446
    %v2519 = vpack.c.b16 %v2455, %v2451
    %v2520 = vpack.c.b16 %v2456, %v2452
    %v2521 = vpack.c.b16 %v2457, %v2453
    %v2522 = vpack.c.b16 %v2458, %v2454
    %2587 = vmatprep.subr.bf16.mxu0 %v2488
    %2588 = vmatpush1.bf16.msra.mxu0 %v2487
    %2589 = vmatprep.subr.bf16.mxu0 %v2484
    %2590 = vmatpush1.bf16.msra.mxu0 %v2483
    %2591 = vmatprep.subr.bf16.mxu0 %v2480
    %2592 = vmatpush1.bf16.msra.mxu0 %v2479
    %2593 = vmatprep.subr.bf16.mxu0 %v2476
    %2594 = vmatpush1.bf16.msra.mxu0 %v2475
    %2595 = vmatprep.subr.bf16.mxu0 %v2472
    %2596 = vmatpush1.bf16.msra.mxu0 %v2471
    %2597 = vmatprep.subr.bf16.mxu0 %v2468
    %2598 = vmatpush1.bf16.msra.mxu0 %v2467
    %2599 = vmatprep.subr.bf16.mxu0 %v2464
    %2600 = vmatpush1.bf16.msra.mxu0 %v2463
    %2601 = vmatprep.subr.bf16.mxu0 %v2460
    %2602 = vmatpush1.bf16.msra.mxu0 %v2459
    %2603 = vmatprep.subr.bf16.mxu0 %v2520
    %2604 = vmatpush2.bf16.msra.mxu0 %v2519
    %2605 = vmatprep.subr.bf16.mxu0 %v2516
    %2606 = vmatpush2.bf16.msra.mxu0 %v2515
    %2607 = vmatprep.subr.bf16.mxu0 %v2512
    %2608 = vmatpush2.bf16.msra.mxu0 %v2511
    %2609 = vmatprep.subr.bf16.mxu0 %v2508
    %2610 = vmatpush2.bf16.msra.mxu0 %v2507
    %2611 = vmatprep.subr.bf16.mxu0 %v2504
    %2612 = vmatpush2.bf16.msra.mxu0 %v2503
    %2613 = vmatprep.subr.bf16.mxu0 %v2500
    %2614 = vmatpush2.bf16.msra.mxu0 %v2499
    %2615 = vmatprep.subr.bf16.mxu0 %v2496
    %2616 = vmatpush2.bf16.msra.mxu0 %v2495
    %2617 = vmatprep.subr.bf16.mxu0 %v2492
    %2618 = vmatpush2.bf16.msra.mxu0 %v2491
    %2619 = vmatprep.mubr.bf16.mxu0 %v2180
    %2620 = vmatmul.mubr.bf16.gmra.mxu0 %v2177
    %v2621 = vpop.f32.mrf.mxu0
    %v2622 = vadd.f32 %v2250, %v2621
    %v2623 = vpop.f32.mrf.mxu0
    %v2624 = vadd.f32 %v2254, %v2623
    %v2625 = vpop.f32.mrf.mxu0
    %v2626 = vpop.f32.mrf.mxu0
    %2627 = vdwg.mxu0
    %2628 = vmatprep.subr.bf16.mxu0 %v2490
    %2629 = vmatpush1.bf16.msra.mxu0 %v2489
    %2630 = vmatprep.subr.bf16.mxu0 %v2486
    %2631 = vmatpush1.bf16.msra.mxu0 %v2485
    %2632 = vmatprep.subr.bf16.mxu0 %v2482
    %2633 = vmatpush1.bf16.msra.mxu0 %v2481
    %2634 = vmatprep.subr.bf16.mxu0 %v2478
    %2635 = vmatpush1.bf16.msra.mxu0 %v2477
    %2636 = vmatprep.subr.bf16.mxu0 %v2474
    %2637 = vmatpush1.bf16.msra.mxu0 %v2473
    %2638 = vmatprep.subr.bf16.mxu0 %v2470
    %2639 = vmatpush1.bf16.msra.mxu0 %v2469
    %2640 = vmatprep.subr.bf16.mxu0 %v2466
    %2641 = vmatpush1.bf16.msra.mxu0 %v2465
    %2642 = vmatprep.subr.bf16.mxu0 %v2462
    %2643 = vmatpush1.bf16.msra.mxu0 %v2461
    %2644 = vmatprep.subr.bf16.mxu0 %v2522
    %2645 = vmatpush2.bf16.msra.mxu0 %v2521
    %2646 = vmatprep.subr.bf16.mxu0 %v2518
    %2647 = vmatpush2.bf16.msra.mxu0 %v2517
    %2648 = vmatprep.subr.bf16.mxu0 %v2514
    %2649 = vmatpush2.bf16.msra.mxu0 %v2513
    %2650 = vmatprep.subr.bf16.mxu0 %v2510
    %2651 = vmatpush2.bf16.msra.mxu0 %v2509
    %2652 = vmatprep.subr.bf16.mxu0 %v2506
    %2653 = vmatpush2.bf16.msra.mxu0 %v2505
    %2654 = vmatprep.subr.bf16.mxu0 %v2502
    %2655 = vmatpush2.bf16.msra.mxu0 %v2501
    %2656 = vmatprep.subr.bf16.mxu0 %v2498
    %2657 = vmatpush2.bf16.msra.mxu0 %v2497
    %2658 = vmatprep.subr.bf16.mxu0 %v2494
    %2659 = vmatpush2.bf16.msra.mxu0 %v2493
    %2660 = vmatprep.mubr.bf16.mxu0 %v2180
    %2661 = vmatmul.mubr.bf16.gmra.mxu0 %v2177
    %v2662 = vpop.f32.mrf.mxu0
    %v2663 = vadd.f32 %v2258, %v2662
    %v2664 = vpop.f32.mrf.mxu0
    %v2665 = vadd.f32 %v2262, %v2664
    %v2666 = vpop.f32.mrf.mxu0
    %v2667 = vpop.f32.mrf.mxu0
    %2668 = vdwg.mxu0
    %v2669 = vxor.u32 %v2622, 2147483648
    %v2670 = vxor.u32 %v2624, 2147483648
    %v2671 = vxor.u32 %v2663, 2147483648
    %v2672 = vmul.f32 %v2669, 1.442695
    %v2673 = vpow.pop %v2672
    %v2674 = vmul.f32 %v2670, 1.442695
    %v2675 = vpow.pop %v2674
    %v2676 = vmul.f32 %v2671, 1.442695
    %v2677 = vpow.pop %v2676
    %v2678 = vadd.f32 %v2673, 1.0
    %v2679 = vadd.f32 %v2675, 1.0
    %v2680 = vadd.f32 %v2677, 1.0
    %v2681 = vrcp.pop %v2678
    %v2682 = vmul.f32 1.0, %v2681
    %v2683 = vrcp.pop %v2679
    %v2684 = vmul.f32 1.0, %v2683
    %v2685 = vrcp.pop %v2680
    %v2686 = vmul.f32 1.0, %v2685
    %v2687 = vtanh.pop %v2665
    %v2688 = vmul.f32 %v2684, %v2179
    %v2689 = vmul.f32 %v2682, %v2687
    %v2690 = vadd.f32 %v2688, %v2689
    %v2691 = vtanh.pop %v2690
    %v2692 = vmul.f32 %v2686, %v2691
    %2693 = vst [vmem:[#allocation11] sm:$0xff] %v2692
    %2694 = vst [vmem:[#allocation13] sm:$0xff] %v2690
    %v2695 = vpack.c.bf16 %v2692, %v2692
    %v2696 = vld [vmem:[%s617] sm:$0xff]
    %v2697 = vld [vmem:[%s619] sm:$0xff]
    %v2698 = vpack.c.bf16 %v2696, %v2696
    %v2699 = vld [vmem:[#allocation8] sm:$0xff]
    %v2700 = vld [vmem:[#allocation8 + $0x8] sm:$0xff]
    %v2701 = vld [vmem:[#allocation8 + $0x10] sm:$0xff]
    %v2702 = vld [vmem:[#allocation8 + $0x18] sm:$0xff]
    %v2703 = vld [vmem:[#allocation8 + $0x20] sm:$0xff]
    %v2704 = vld [vmem:[#allocation8 + $0x28] sm:$0xff]
    %v2705 = vld [vmem:[#allocation8 + $0x30] sm:$0xff]
    %v2706 = vld [vmem:[#allocation8 + $0x38] sm:$0xff]
    %v2707 = vld [vmem:[#allocation8 + $0x40] sm:$0xff]
    %v2708 = vld [vmem:[#allocation8 + $0x48] sm:$0xff]
    %v2709 = vld [vmem:[#allocation8 + $0x50] sm:$0xff]
    %v2710 = vld [vmem:[#allocation8 + $0x58] sm:$0xff]
    %v2711 = vld [vmem:[#allocation8 + $0x60] sm:$0xff]
    %v2712 = vld [vmem:[#allocation8 + $0x68] sm:$0xff]
    %v2713 = vld [vmem:[#allocation8 + $0x70] sm:$0xff]
    %v2714 = vld [vmem:[#allocation8 + $0x78] sm:$0xff]
    %v2715 = vld [vmem:[#allocation8 + $0x80] sm:$0xff]
    %v2716 = vld [vmem:[#allocation8 + $0x88] sm:$0xff]
    %v2717 = vld [vmem:[#allocation8 + $0x90] sm:$0xff]
    %v2718 = vld [vmem:[#allocation8 + $0x98] sm:$0xff]
    %v2719 = vld [vmem:[#allocation8 + $0xa0] sm:$0xff]
    %v2720 = vld [vmem:[#allocation8 + $0xa8] sm:$0xff]
    %v2721 = vld [vmem:[#allocation8 + $0xb0] sm:$0xff]
    %v2722 = vld [vmem:[#allocation8 + $0xb8] sm:$0xff]
    %v2723 = vld [vmem:[#allocation8 + $0xc0] sm:$0xff]
    %v2724 = vld [vmem:[#allocation8 + $0xc8] sm:$0xff]
    %v2725 = vld [vmem:[#allocation8 + $0xd0] sm:$0xff]
    %v2726 = vld [vmem:[#allocation8 + $0xd8] sm:$0xff]
    %v2727 = vld [vmem:[#allocation8 + $0xe0] sm:$0xff]
    %v2728 = vld [vmem:[#allocation8 + $0xe8] sm:$0xff]
    %v2729 = vld [vmem:[#allocation8 + $0xf0] sm:$0xff]
    %v2730 = vld [vmem:[#allocation8 + $0xf8] sm:$0xff]
    %v2731 = vld [vmem:[#allocation8 + $0x100] sm:$0xff]
    %v2732 = vld [vmem:[#allocation8 + $0x108] sm:$0xff]
    %v2733 = vld [vmem:[#allocation8 + $0x110] sm:$0xff]
    %v2734 = vld [vmem:[#allocation8 + $0x118] sm:$0xff]
    %v2735 = vld [vmem:[#allocation8 + $0x120] sm:$0xff]
    %v2736 = vld [vmem:[#allocation8 + $0x128] sm:$0xff]
    %v2737 = vld [vmem:[#allocation8 + $0x130] sm:$0xff]
    %v2738 = vld [vmem:[#allocation8 + $0x138] sm:$0xff]
    %v2739 = vld [vmem:[#allocation8 + $0x140] sm:$0xff]
    %v2740 = vld [vmem:[#allocation8 + $0x148] sm:$0xff]
    %v2741 = vld [vmem:[#allocation8 + $0x150] sm:$0xff]
    %v2742 = vld [vmem:[#allocation8 + $0x158] sm:$0xff]
    %v2743 = vld [vmem:[#allocation8 + $0x160] sm:$0xff]
    %v2744 = vld [vmem:[#allocation8 + $0x168] sm:$0xff]
    %v2745 = vld [vmem:[#allocation8 + $0x170] sm:$0xff]
    %v2746 = vld [vmem:[#allocation8 + $0x178] sm:$0xff]
    %v2747 = vld [vmem:[#allocation8 + $0x180] sm:$0xff]
    %v2748 = vld [vmem:[#allocation8 + $0x188] sm:$0xff]
    %v2749 = vld [vmem:[#allocation8 + $0x190] sm:$0xff]
    %v2750 = vld [vmem:[#allocation8 + $0x198] sm:$0xff]
    %v2751 = vld [vmem:[#allocation8 + $0x1a0] sm:$0xff]
    %v2752 = vld [vmem:[#allocation8 + $0x1a8] sm:$0xff]
    %v2753 = vld [vmem:[#allocation8 + $0x1b0] sm:$0xff]
    %v2754 = vld [vmem:[#allocation8 + $0x1b8] sm:$0xff]
    %v2755 = vld [vmem:[#allocation8 + $0x1c0] sm:$0xff]
    %v2756 = vld [vmem:[#allocation8 + $0x1c8] sm:$0xff]
    %v2757 = vld [vmem:[#allocation8 + $0x1d0] sm:$0xff]
    %v2758 = vld [vmem:[#allocation8 + $0x1d8] sm:$0xff]
    %v2759 = vld [vmem:[#allocation8 + $0x1e0] sm:$0xff]
    %v2760 = vld [vmem:[#allocation8 + $0x1e8] sm:$0xff]
    %v2761 = vld [vmem:[#allocation8 + $0x1f0] sm:$0xff]
    %v2762 = vld [vmem:[#allocation8 + $0x1f8] sm:$0xff]
    %v2763 = vld [vmem:[%s6] sm:$0xf]
    %v2765 = vlaneseq
    %v2766 = vshrl.u32 %v2765, 7
    %v2767 = vsub.s32 0, %v2766
    %v2768 = vrot.slane %v2763, %v2767
    %v2769 = vlaneseq
    %v2770 = vshrl.u32 %v2769, 7
    %v2771 = vsub.s32 1, %v2770
    %v2772 = vrot.slane %v2763, %v2771
    %v2773 = vlaneseq
    %v2774 = vshrl.u32 %v2773, 7
    %v2775 = vsub.s32 2, %v2774
    %v2776 = vrot.slane %v2763, %v2775
    %v2777 = vlaneseq
    %v2778 = vshrl.u32 %v2777, 7
    %v2779 = vsub.s32 3, %v2778
    %v2780 = vrot.slane %v2763, %v2779
    %v2849 = vunpack.c.l.b16 %v2699
    %v2850 = vunpack.c.h.b16 %v2699
    %v2851 = vunpack.c.l.b16 %v2700
    %v2852 = vunpack.c.h.b16 %v2700
    %v2853 = vunpack.c.l.b16 %v2701
    %v2854 = vunpack.c.h.b16 %v2701
    %v2855 = vunpack.c.l.b16 %v2702
    %v2856 = vunpack.c.h.b16 %v2702
    %v2857 = vunpack.c.l.b16 %v2703
    %v2858 = vunpack.c.h.b16 %v2703
    %v2859 = vunpack.c.l.b16 %v2704
    %v2860 = vunpack.c.h.b16 %v2704
    %v2861 = vunpack.c.l.b16 %v2705
    %v2862 = vunpack.c.h.b16 %v2705
    %v2863 = vunpack.c.l.b16 %v2706
    %v2864 = vunpack.c.h.b16 %v2706
    %v2865 = vunpack.c.l.b16 %v2707
    %v2866 = vunpack.c.h.b16 %v2707
    %v2867 = vunpack.c.l.b16 %v2708
    %v2868 = vunpack.c.h.b16 %v2708
    %v2869 = vunpack.c.l.b16 %v2709
    %v2870 = vunpack.c.h.b16 %v2709
    %v2871 = vunpack.c.l.b16 %v2710
    %v2872 = vunpack.c.h.b16 %v2710
    %v2873 = vunpack.c.l.b16 %v2711
    %v2874 = vunpack.c.h.b16 %v2711
    %v2875 = vunpack.c.l.b16 %v2712
    %v2876 = vunpack.c.h.b16 %v2712
    %v2877 = vunpack.c.l.b16 %v2713
    %v2878 = vunpack.c.h.b16 %v2713
    %v2879 = vunpack.c.l.b16 %v2714
    %v2880 = vunpack.c.h.b16 %v2714
    %v2881 = vunpack.c.l.b16 %v2715
    %v2882 = vunpack.c.h.b16 %v2715
    %v2883 = vunpack.c.l.b16 %v2716
    %v2884 = vunpack.c.h.b16 %v2716
    %v2885 = vunpack.c.l.b16 %v2717
    %v2886 = vunpack.c.h.b16 %v2717
    %v2887 = vunpack.c.l.b16 %v2718
    %v2888 = vunpack.c.h.b16 %v2718
    %v2889 = vunpack.c.l.b16 %v2719
    %v2890 = vunpack.c.h.b16 %v2719
    %v2891 = vunpack.c.l.b16 %v2720
    %v2892 = vunpack.c.h.b16 %v2720
    %v2893 = vunpack.c.l.b16 %v2721
    %v2894 = vunpack.c.h.b16 %v2721
    %v2895 = vunpack.c.l.b16 %v2722
    %v2896 = vunpack.c.h.b16 %v2722
    %v2897 = vunpack.c.l.b16 %v2723
    %v2898 = vunpack.c.h.b16 %v2723
    %v2899 = vunpack.c.l.b16 %v2724
    %v2900 = vunpack.c.h.b16 %v2724
    %v2901 = vunpack.c.l.b16 %v2725
    %v2902 = vunpack.c.h.b16 %v2725
    %v2903 = vunpack.c.l.b16 %v2726
    %v2904 = vunpack.c.h.b16 %v2726
    %v2905 = vunpack.c.l.b16 %v2727
    %v2906 = vunpack.c.h.b16 %v2727
    %v2907 = vunpack.c.l.b16 %v2728
    %v2908 = vunpack.c.h.b16 %v2728
    %v2909 = vunpack.c.l.b16 %v2729
    %v2910 = vunpack.c.h.b16 %v2729
    %v2911 = vunpack.c.l.b16 %v2730
    %v2912 = vunpack.c.h.b16 %v2730
    %v2913 = vunpack.c.l.b16 %v2731
    %v2914 = vunpack.c.h.b16 %v2731
    %v2915 = vunpack.c.l.b16 %v2732
    %v2916 = vunpack.c.h.b16 %v2732
    %v2917 = vunpack.c.l.b16 %v2733
    %v2918 = vunpack.c.h.b16 %v2733
    %v2919 = vunpack.c.l.b16 %v2734
    %v2920 = vunpack.c.h.b16 %v2734
    %v2921 = vunpack.c.l.b16 %v2735
    %v2922 = vunpack.c.h.b16 %v2735
    %v2923 = vunpack.c.l.b16 %v2736
    %v2924 = vunpack.c.h.b16 %v2736
    %v2925 = vunpack.c.l.b16 %v2737
    %v2926 = vunpack.c.h.b16 %v2737
    %v2927 = vunpack.c.l.b16 %v2738
    %v2928 = vunpack.c.h.b16 %v2738
    %v2929 = vunpack.c.l.b16 %v2739
    %v2930 = vunpack.c.h.b16 %v2739
    %v2931 = vunpack.c.l.b16 %v2740
    %v2932 = vunpack.c.h.b16 %v2740
    %v2933 = vunpack.c.l.b16 %v2741
    %v2934 = vunpack.c.h.b16 %v2741
    %v2935 = vunpack.c.l.b16 %v2742
    %v2936 = vunpack.c.h.b16 %v2742
    %v2937 = vunpack.c.l.b16 %v2743
    %v2938 = vunpack.c.h.b16 %v2743
    %v2939 = vunpack.c.l.b16 %v2744
    %v2940 = vunpack.c.h.b16 %v2744
    %v2941 = vunpack.c.l.b16 %v2745
    %v2942 = vunpack.c.h.b16 %v2745
    %v2943 = vunpack.c.l.b16 %v2746
    %v2944 = vunpack.c.h.b16 %v2746
    %v2945 = vunpack.c.l.b16 %v2747
    %v2946 = vunpack.c.h.b16 %v2747
    %v2947 = vunpack.c.l.b16 %v2748
    %v2948 = vunpack.c.h.b16 %v2748
    %v2949 = vunpack.c.l.b16 %v2749
    %v2950 = vunpack.c.h.b16 %v2749
    %v2951 = vunpack.c.l.b16 %v2750
    %v2952 = vunpack.c.h.b16 %v2750
    %v2953 = vunpack.c.l.b16 %v2751
    %v2954 = vunpack.c.h.b16 %v2751
    %v2955 = vunpack.c.l.b16 %v2752
    %v2956 = vunpack.c.h.b16 %v2752
    %v2957 = vunpack.c.l.b16 %v2753
    %v2958 = vunpack.c.h.b16 %v2753
    %v2959 = vunpack.c.l.b16 %v2754
    %v2960 = vunpack.c.h.b16 %v2754
    %v2961 = vunpack.c.l.b16 %v2755
    %v2962 = vunpack.c.h.b16 %v2755
    %v2963 = vunpack.c.l.b16 %v2756
    %v2964 = vunpack.c.h.b16 %v2756
    %v2965 = vunpack.c.l.b16 %v2757
    %v2966 = vunpack.c.h.b16 %v2757
    %v2967 = vunpack.c.l.b16 %v2758
    %v2968 = vunpack.c.h.b16 %v2758
    %v2969 = vunpack.c.l.b16 %v2759
    %v2970 = vunpack.c.h.b16 %v2759
    %v2971 = vunpack.c.l.b16 %v2760
    %v2972 = vunpack.c.h.b16 %v2760
    %v2973 = vunpack.c.l.b16 %v2761
    %v2974 = vunpack.c.h.b16 %v2761
    %v2975 = vunpack.c.l.b16 %v2762
    %v2976 = vunpack.c.h.b16 %v2762
    %v2977 = vpack.c.b16 %v2853, %v2849
    %v2978 = vpack.c.b16 %v2854, %v2850
    %v2979 = vpack.c.b16 %v2855, %v2851
    %v2980 = vpack.c.b16 %v2856, %v2852
    %v2981 = vpack.c.b16 %v2861, %v2857
    %v2982 = vpack.c.b16 %v2862, %v2858
    %v2983 = vpack.c.b16 %v2863, %v2859
    %v2984 = vpack.c.b16 %v2864, %v2860
    %v2985 = vpack.c.b16 %v2869, %v2865
    %v2986 = vpack.c.b16 %v2870, %v2866
    %v2987 = vpack.c.b16 %v2871, %v2867
    %v2988 = vpack.c.b16 %v2872, %v2868
    %v2989 = vpack.c.b16 %v2877, %v2873
    %v2990 = vpack.c.b16 %v2878, %v2874
    %v2991 = vpack.c.b16 %v2879, %v2875
    %v2992 = vpack.c.b16 %v2880, %v2876
    %v2993 = vpack.c.b16 %v2885, %v2881
    %v2994 = vpack.c.b16 %v2886, %v2882
    %v2995 = vpack.c.b16 %v2887, %v2883
    %v2996 = vpack.c.b16 %v2888, %v2884
    %v2997 = vpack.c.b16 %v2893, %v2889
    %v2998 = vpack.c.b16 %v2894, %v2890
    %v2999 = vpack.c.b16 %v2895, %v2891
    %v3000 = vpack.c.b16 %v2896, %v2892
    %v3001 = vpack.c.b16 %v2901, %v2897
    %v3002 = vpack.c.b16 %v2902, %v2898
    %v3003 = vpack.c.b16 %v2903, %v2899
    %v3004 = vpack.c.b16 %v2904, %v2900
    %v3005 = vpack.c.b16 %v2909, %v2905
    %v3006 = vpack.c.b16 %v2910, %v2906
    %v3007 = vpack.c.b16 %v2911, %v2907
    %v3008 = vpack.c.b16 %v2912, %v2908
    %v3009 = vpack.c.b16 %v2917, %v2913
    %v3010 = vpack.c.b16 %v2918, %v2914
    %v3011 = vpack.c.b16 %v2919, %v2915
    %v3012 = vpack.c.b16 %v2920, %v2916
    %v3013 = vpack.c.b16 %v2925, %v2921
    %v3014 = vpack.c.b16 %v2926, %v2922
    %v3015 = vpack.c.b16 %v2927, %v2923
    %v3016 = vpack.c.b16 %v2928, %v2924
    %v3017 = vpack.c.b16 %v2933, %v2929
    %v3018 = vpack.c.b16 %v2934, %v2930
    %v3019 = vpack.c.b16 %v2935, %v2931
    %v3020 = vpack.c.b16 %v2936, %v2932
    %v3021 = vpack.c.b16 %v2941, %v2937
    %v3022 = vpack.c.b16 %v2942, %v2938
    %v3023 = vpack.c.b16 %v2943, %v2939
    %v3024 = vpack.c.b16 %v2944, %v2940
    %v3025 = vpack.c.b16 %v2949, %v2945
    %v3026 = vpack.c.b16 %v2950, %v2946
    %v3027 = vpack.c.b16 %v2951, %v2947
    %v3028 = vpack.c.b16 %v2952, %v2948
    %v3029 = vpack.c.b16 %v2957, %v2953
    %v3030 = vpack.c.b16 %v2958, %v2954
    %v3031 = vpack.c.b16 %v2959, %v2955
    %v3032 = vpack.c.b16 %v2960, %v2956
    %v3033 = vpack.c.b16 %v2965, %v2961
    %v3034 = vpack.c.b16 %v2966, %v2962
    %v3035 = vpack.c.b16 %v2967, %v2963
    %v3036 = vpack.c.b16 %v2968, %v2964
    %v3037 = vpack.c.b16 %v2973, %v2969
    %v3038 = vpack.c.b16 %v2974, %v2970
    %v3039 = vpack.c.b16 %v2975, %v2971
    %v3040 = vpack.c.b16 %v2976, %v2972
    %3105 = vmatprep.subr.bf16.mxu0 %v3006
    %3106 = vmatpush1.bf16.msra.mxu0 %v3005
    %3107 = vmatprep.subr.bf16.mxu0 %v3002
    %3108 = vmatpush1.bf16.msra.mxu0 %v3001
    %3109 = vmatprep.subr.bf16.mxu0 %v2998
    %3110 = vmatpush1.bf16.msra.mxu0 %v2997
    %3111 = vmatprep.subr.bf16.mxu0 %v2994
    %3112 = vmatpush1.bf16.msra.mxu0 %v2993
    %3113 = vmatprep.subr.bf16.mxu0 %v2990
    %3114 = vmatpush1.bf16.msra.mxu0 %v2989
    %3115 = vmatprep.subr.bf16.mxu0 %v2986
    %3116 = vmatpush1.bf16.msra.mxu0 %v2985
    %3117 = vmatprep.subr.bf16.mxu0 %v2982
    %3118 = vmatpush1.bf16.msra.mxu0 %v2981
    %3119 = vmatprep.subr.bf16.mxu0 %v2978
    %3120 = vmatpush1.bf16.msra.mxu0 %v2977
    %3121 = vmatprep.subr.bf16.mxu0 %v3038
    %3122 = vmatpush2.bf16.msra.mxu0 %v3037
    %3123 = vmatprep.subr.bf16.mxu0 %v3034
    %3124 = vmatpush2.bf16.msra.mxu0 %v3033
    %3125 = vmatprep.subr.bf16.mxu0 %v3030
    %3126 = vmatpush2.bf16.msra.mxu0 %v3029
    %3127 = vmatprep.subr.bf16.mxu0 %v3026
    %3128 = vmatpush2.bf16.msra.mxu0 %v3025
    %3129 = vmatprep.subr.bf16.mxu0 %v3022
    %3130 = vmatpush2.bf16.msra.mxu0 %v3021
    %3131 = vmatprep.subr.bf16.mxu0 %v3018
    %3132 = vmatpush2.bf16.msra.mxu0 %v3017
    %3133 = vmatprep.subr.bf16.mxu0 %v3014
    %3134 = vmatpush2.bf16.msra.mxu0 %v3013
    %3135 = vmatprep.subr.bf16.mxu0 %v3010
    %3136 = vmatpush2.bf16.msra.mxu0 %v3009
    %3137 = vmatprep.mubr.bf16.mxu0 %v2698
    %3138 = vmatmul.mubr.bf16.gmra.mxu0 %v2695
    %v3139 = vpop.f32.mrf.mxu0
    %v3140 = vadd.f32 %v2768, %v3139
    %v3141 = vpop.f32.mrf.mxu0
    %v3142 = vadd.f32 %v2772, %v3141
    %v3143 = vpop.f32.mrf.mxu0
    %v3144 = vpop.f32.mrf.mxu0
    %3145 = vdwg.mxu0
    %3146 = vmatprep.subr.bf16.mxu0 %v3008
    %3147 = vmatpush1.bf16.msra.mxu0 %v3007
    %3148 = vmatprep.subr.bf16.mxu0 %v3004
    %3149 = vmatpush1.bf16.msra.mxu0 %v3003
    %3150 = vmatprep.subr.bf16.mxu0 %v3000
    %3151 = vmatpush1.bf16.msra.mxu0 %v2999
    %3152 = vmatprep.subr.bf16.mxu0 %v2996
    %3153 = vmatpush1.bf16.msra.mxu0 %v2995
    %3154 = vmatprep.subr.bf16.mxu0 %v2992
    %3155 = vmatpush1.bf16.msra.mxu0 %v2991
    %3156 = vmatprep.subr.bf16.mxu0 %v2988
    %3157 = vmatpush1.bf16.msra.mxu0 %v2987
    %3158 = vmatprep.subr.bf16.mxu0 %v2984
    %3159 = vmatpush1.bf16.msra.mxu0 %v2983
    %3160 = vmatprep.subr.bf16.mxu0 %v2980
    %3161 = vmatpush1.bf16.msra.mxu0 %v2979
    %3162 = vmatprep.subr.bf16.mxu0 %v3040
    %3163 = vmatpush2.bf16.msra.mxu0 %v3039
    %3164 = vmatprep.subr.bf16.mxu0 %v3036
    %3165 = vmatpush2.bf16.msra.mxu0 %v3035
    %3166 = vmatprep.subr.bf16.mxu0 %v3032
    %3167 = vmatpush2.bf16.msra.mxu0 %v3031
    %3168 = vmatprep.subr.bf16.mxu0 %v3028
    %3169 = vmatpush2.bf16.msra.mxu0 %v3027
    %3170 = vmatprep.subr.bf16.mxu0 %v3024
    %3171 = vmatpush2.bf16.msra.mxu0 %v3023
    %3172 = vmatprep.subr.bf16.mxu0 %v3020
    %3173 = vmatpush2.bf16.msra.mxu0 %v3019
    %3174 = vmatprep.subr.bf16.mxu0 %v3016
    %3175 = vmatpush2.bf16.msra.mxu0 %v3015
    %3176 = vmatprep.subr.bf16.mxu0 %v3012
    %3177 = vmatpush2.bf16.msra.mxu0 %v3011
    %3178 = vmatprep.mubr.bf16.mxu0 %v2698
    %3179 = vmatmul.mubr.bf16.gmra.mxu0 %v2695
    %v3180 = vpop.f32.mrf.mxu0
    %v3181 = vadd.f32 %v2776, %v3180
    %v3182 = vpop.f32.mrf.mxu0
    %v3183 = vadd.f32 %v2780, %v3182
    %v3184 = vpop.f32.mrf.mxu0
    %v3185 = vpop.f32.mrf.mxu0
    %3186 = vdwg.mxu0
    %v3187 = vxor.u32 %v3140, 2147483648
    %v3188 = vxor.u32 %v3142, 2147483648
    %v3189 = vxor.u32 %v3181, 2147483648
    %v3190 = vmul.f32 %v3187, 1.442695
    %v3191 = vpow.pop %v3190
    %v3192 = vmul.f32 %v3188, 1.442695
    %v3193 = vpow.pop %v3192
    %v3194 = vmul.f32 %v3189, 1.442695
    %v3195 = vpow.pop %v3194
    %v3196 = vadd.f32 %v3191, 1.0
    %v3197 = vadd.f32 %v3193, 1.0
    %v3198 = vadd.f32 %v3195, 1.0
    %v3199 = vrcp.pop %v3196
    %v3200 = vmul.f32 1.0, %v3199
    %v3201 = vrcp.pop %v3197
    %v3202 = vmul.f32 1.0, %v3201
    %v3203 = vrcp.pop %v3198
    %v3204 = vmul.f32 1.0, %v3203
    %v3205 = vtanh.pop %v3183
    %v3206 = vmul.f32 %v3202, %v2697
    %v3207 = vmul.f32 %v3200, %v3205
    %v3208 = vadd.f32 %v3206, %v3207
    %v3209 = vtanh.pop %v3208
    %v3210 = vmul.f32 %v3204, %v3209
    %3211 = vst [vmem:[%s617] sm:$0xff] %v3210
    %3212 = vst [vmem:[%s619] sm:$0xff] %v3208
    %s3213 = scalar_lea.vmem [#allocation10], 16
    %3214 = vst [vmem:[%s3213] sm:$0xff] %v3210
    %s3215 = scalar_lea.vmem %s0, 12
    %v3216 = vld [vmem:[%s3215] sm:$0xf]
    %v3217 = vld [vmem:[#allocation11] sm:$0xff]
    %v3218 = vld [vmem:[#allocation13] sm:$0xff]
    %v3219 = vpack.c.bf16 %v3217, %v3217
    %v3220 = vld [vmem:[#allocation7] sm:$0xff]
    %v3221 = vld [vmem:[#allocation7 + $0x8] sm:$0xff]
    %v3222 = vld [vmem:[#allocation7 + $0x10] sm:$0xff]
    %v3223 = vld [vmem:[#allocation7 + $0x18] sm:$0xff]
    %v3224 = vld [vmem:[#allocation7 + $0x20] sm:$0xff]
    %v3225 = vld [vmem:[#allocation7 + $0x28] sm:$0xff]
    %v3226 = vld [vmem:[#allocation7 + $0x30] sm:$0xff]
    %v3227 = vld [vmem:[#allocation7 + $0x38] sm:$0xff]
    %v3228 = vld [vmem:[#allocation7 + $0x40] sm:$0xff]
    %v3229 = vld [vmem:[#allocation7 + $0x48] sm:$0xff]
    %v3230 = vld [vmem:[#allocation7 + $0x50] sm:$0xff]
    %v3231 = vld [vmem:[#allocation7 + $0x58] sm:$0xff]
    %v3232 = vld [vmem:[#allocation7 + $0x60] sm:$0xff]
    %v3233 = vld [vmem:[#allocation7 + $0x68] sm:$0xff]
    %v3234 = vld [vmem:[#allocation7 + $0x70] sm:$0xff]
    %v3235 = vld [vmem:[#allocation7 + $0x78] sm:$0xff]
    %v3236 = vld [vmem:[#allocation7 + $0x80] sm:$0xff]
    %v3237 = vld [vmem:[#allocation7 + $0x88] sm:$0xff]
    %v3238 = vld [vmem:[#allocation7 + $0x90] sm:$0xff]
    %v3239 = vld [vmem:[#allocation7 + $0x98] sm:$0xff]
    %v3240 = vld [vmem:[#allocation7 + $0xa0] sm:$0xff]
    %v3241 = vld [vmem:[#allocation7 + $0xa8] sm:$0xff]
    %v3242 = vld [vmem:[#allocation7 + $0xb0] sm:$0xff]
    %v3243 = vld [vmem:[#allocation7 + $0xb8] sm:$0xff]
    %v3244 = vld [vmem:[#allocation7 + $0xc0] sm:$0xff]
    %v3245 = vld [vmem:[#allocation7 + $0xc8] sm:$0xff]
    %v3246 = vld [vmem:[#allocation7 + $0xd0] sm:$0xff]
    %v3247 = vld [vmem:[#allocation7 + $0xd8] sm:$0xff]
    %v3248 = vld [vmem:[#allocation7 + $0xe0] sm:$0xff]
    %v3249 = vld [vmem:[#allocation7 + $0xe8] sm:$0xff]
    %v3250 = vld [vmem:[#allocation7 + $0xf0] sm:$0xff]
    %v3251 = vld [vmem:[#allocation7 + $0xf8] sm:$0xff]
    %v3252 = vld [vmem:[#allocation7 + $0x100] sm:$0xff]
    %v3253 = vld [vmem:[#allocation7 + $0x108] sm:$0xff]
    %v3254 = vld [vmem:[#allocation7 + $0x110] sm:$0xff]
    %v3255 = vld [vmem:[#allocation7 + $0x118] sm:$0xff]
    %v3256 = vld [vmem:[#allocation7 + $0x120] sm:$0xff]
    %v3257 = vld [vmem:[#allocation7 + $0x128] sm:$0xff]
    %v3258 = vld [vmem:[#allocation7 + $0x130] sm:$0xff]
    %v3259 = vld [vmem:[#allocation7 + $0x138] sm:$0xff]
    %v3260 = vld [vmem:[#allocation7 + $0x140] sm:$0xff]
    %v3261 = vld [vmem:[#allocation7 + $0x148] sm:$0xff]
    %v3262 = vld [vmem:[#allocation7 + $0x150] sm:$0xff]
    %v3263 = vld [vmem:[#allocation7 + $0x158] sm:$0xff]
    %v3264 = vld [vmem:[#allocation7 + $0x160] sm:$0xff]
    %v3265 = vld [vmem:[#allocation7 + $0x168] sm:$0xff]
    %v3266 = vld [vmem:[#allocation7 + $0x170] sm:$0xff]
    %v3267 = vld [vmem:[#allocation7 + $0x178] sm:$0xff]
    %v3268 = vld [vmem:[#allocation7 + $0x180] sm:$0xff]
    %v3269 = vld [vmem:[#allocation7 + $0x188] sm:$0xff]
    %v3270 = vld [vmem:[#allocation7 + $0x190] sm:$0xff]
    %v3271 = vld [vmem:[#allocation7 + $0x198] sm:$0xff]
    %v3272 = vld [vmem:[#allocation7 + $0x1a0] sm:$0xff]
    %v3273 = vld [vmem:[#allocation7 + $0x1a8] sm:$0xff]
    %v3274 = vld [vmem:[#allocation7 + $0x1b0] sm:$0xff]
    %v3275 = vld [vmem:[#allocation7 + $0x1b8] sm:$0xff]
    %v3276 = vld [vmem:[#allocation7 + $0x1c0] sm:$0xff]
    %v3277 = vld [vmem:[#allocation7 + $0x1c8] sm:$0xff]
    %v3278 = vld [vmem:[#allocation7 + $0x1d0] sm:$0xff]
    %v3279 = vld [vmem:[#allocation7 + $0x1d8] sm:$0xff]
    %v3280 = vld [vmem:[#allocation7 + $0x1e0] sm:$0xff]
    %v3281 = vld [vmem:[#allocation7 + $0x1e8] sm:$0xff]
    %v3282 = vld [vmem:[#allocation7 + $0x1f0] sm:$0xff]
    %v3283 = vld [vmem:[#allocation7 + $0x1f8] sm:$0xff]
    %v3284 = vld [vmem:[%s5] sm:$0xf]
    %v3286 = vlaneseq
    %v3287 = vshrl.u32 %v3286, 7
    %v3288 = vsub.s32 0, %v3287
    %v3289 = vrot.slane %v3284, %v3288
    %v3290 = vlaneseq
    %v3291 = vshrl.u32 %v3290, 7
    %v3292 = vsub.s32 1, %v3291
    %v3293 = vrot.slane %v3284, %v3292
    %v3294 = vlaneseq
    %v3295 = vshrl.u32 %v3294, 7
    %v3296 = vsub.s32 2, %v3295
    %v3297 = vrot.slane %v3284, %v3296
    %v3298 = vlaneseq
    %v3299 = vshrl.u32 %v3298, 7
    %v3300 = vsub.s32 3, %v3299
    %v3301 = vrot.slane %v3284, %v3300
    %v3370 = vunpack.c.l.b16 %v3220
    %v3371 = vunpack.c.h.b16 %v3220
    %v3372 = vunpack.c.l.b16 %v3221
    %v3373 = vunpack.c.h.b16 %v3221
    %v3374 = vunpack.c.l.b16 %v3222
    %v3375 = vunpack.c.h.b16 %v3222
    %v3376 = vunpack.c.l.b16 %v3223
    %v3377 = vunpack.c.h.b16 %v3223
    %v3378 = vunpack.c.l.b16 %v3224
    %v3379 = vunpack.c.h.b16 %v3224
    %v3380 = vunpack.c.l.b16 %v3225
    %v3381 = vunpack.c.h.b16 %v3225
    %v3382 = vunpack.c.l.b16 %v3226
    %v3383 = vunpack.c.h.b16 %v3226
    %v3384 = vunpack.c.l.b16 %v3227
    %v3385 = vunpack.c.h.b16 %v3227
    %v3386 = vunpack.c.l.b16 %v3228
    %v3387 = vunpack.c.h.b16 %v3228
    %v3388 = vunpack.c.l.b16 %v3229
    %v3389 = vunpack.c.h.b16 %v3229
    %v3390 = vunpack.c.l.b16 %v3230
    %v3391 = vunpack.c.h.b16 %v3230
    %v3392 = vunpack.c.l.b16 %v3231
    %v3393 = vunpack.c.h.b16 %v3231
    %v3394 = vunpack.c.l.b16 %v3232
    %v3395 = vunpack.c.h.b16 %v3232
    %v3396 = vunpack.c.l.b16 %v3233
    %v3397 = vunpack.c.h.b16 %v3233
    %v3398 = vunpack.c.l.b16 %v3234
    %v3399 = vunpack.c.h.b16 %v3234
    %v3400 = vunpack.c.l.b16 %v3235
    %v3401 = vunpack.c.h.b16 %v3235
    %v3402 = vunpack.c.l.b16 %v3236
    %v3403 = vunpack.c.h.b16 %v3236
    %v3404 = vunpack.c.l.b16 %v3237
    %v3405 = vunpack.c.h.b16 %v3237
    %v3406 = vunpack.c.l.b16 %v3238
    %v3407 = vunpack.c.h.b16 %v3238
    %v3408 = vunpack.c.l.b16 %v3239
    %v3409 = vunpack.c.h.b16 %v3239
    %v3410 = vunpack.c.l.b16 %v3240
    %v3411 = vunpack.c.h.b16 %v3240
    %v3412 = vunpack.c.l.b16 %v3241
    %v3413 = vunpack.c.h.b16 %v3241
    %v3414 = vunpack.c.l.b16 %v3242
    %v3415 = vunpack.c.h.b16 %v3242
    %v3416 = vunpack.c.l.b16 %v3243
    %v3417 = vunpack.c.h.b16 %v3243
    %v3418 = vunpack.c.l.b16 %v3244
    %v3419 = vunpack.c.h.b16 %v3244
    %v3420 = vunpack.c.l.b16 %v3245
    %v3421 = vunpack.c.h.b16 %v3245
    %v3422 = vunpack.c.l.b16 %v3246
    %v3423 = vunpack.c.h.b16 %v3246
    %v3424 = vunpack.c.l.b16 %v3247
    %v3425 = vunpack.c.h.b16 %v3247
    %v3426 = vunpack.c.l.b16 %v3248
    %v3427 = vunpack.c.h.b16 %v3248
    %v3428 = vunpack.c.l.b16 %v3249
    %v3429 = vunpack.c.h.b16 %v3249
    %v3430 = vunpack.c.l.b16 %v3250
    %v3431 = vunpack.c.h.b16 %v3250
    %v3432 = vunpack.c.l.b16 %v3251
    %v3433 = vunpack.c.h.b16 %v3251
    %v3434 = vunpack.c.l.b16 %v3252
    %v3435 = vunpack.c.h.b16 %v3252
    %v3436 = vunpack.c.l.b16 %v3253
    %v3437 = vunpack.c.h.b16 %v3253
    %v3438 = vunpack.c.l.b16 %v3254
    %v3439 = vunpack.c.h.b16 %v3254
    %v3440 = vunpack.c.l.b16 %v3255
    %v3441 = vunpack.c.h.b16 %v3255
    %v3442 = vunpack.c.l.b16 %v3256
    %v3443 = vunpack.c.h.b16 %v3256
    %v3444 = vunpack.c.l.b16 %v3257
    %v3445 = vunpack.c.h.b16 %v3257
    %v3446 = vunpack.c.l.b16 %v3258
    %v3447 = vunpack.c.h.b16 %v3258
    %v3448 = vunpack.c.l.b16 %v3259
    %v3449 = vunpack.c.h.b16 %v3259
    %v3450 = vunpack.c.l.b16 %v3260
    %v3451 = vunpack.c.h.b16 %v3260
    %v3452 = vunpack.c.l.b16 %v3261
    %v3453 = vunpack.c.h.b16 %v3261
    %v3454 = vunpack.c.l.b16 %v3262
    %v3455 = vunpack.c.h.b16 %v3262
    %v3456 = vunpack.c.l.b16 %v3263
    %v3457 = vunpack.c.h.b16 %v3263
    %v3458 = vunpack.c.l.b16 %v3264
    %v3459 = vunpack.c.h.b16 %v3264
    %v3460 = vunpack.c.l.b16 %v3265
    %v3461 = vunpack.c.h.b16 %v3265
    %v3462 = vunpack.c.l.b16 %v3266
    %v3463 = vunpack.c.h.b16 %v3266
    %v3464 = vunpack.c.l.b16 %v3267
    %v3465 = vunpack.c.h.b16 %v3267
    %v3466 = vunpack.c.l.b16 %v3268
    %v3467 = vunpack.c.h.b16 %v3268
    %v3468 = vunpack.c.l.b16 %v3269
    %v3469 = vunpack.c.h.b16 %v3269
    %v3470 = vunpack.c.l.b16 %v3270
    %v3471 = vunpack.c.h.b16 %v3270
    %v3472 = vunpack.c.l.b16 %v3271
    %v3473 = vunpack.c.h.b16 %v3271
    %v3474 = vunpack.c.l.b16 %v3272
    %v3475 = vunpack.c.h.b16 %v3272
    %v3476 = vunpack.c.l.b16 %v3273
    %v3477 = vunpack.c.h.b16 %v3273
    %v3478 = vunpack.c.l.b16 %v3274
    %v3479 = vunpack.c.h.b16 %v3274
    %v3480 = vunpack.c.l.b16 %v3275
    %v3481 = vunpack.c.h.b16 %v3275
    %v3482 = vunpack.c.l.b16 %v3276
    %v3483 = vunpack.c.h.b16 %v3276
    %v3484 = vunpack.c.l.b16 %v3277
    %v3485 = vunpack.c.h.b16 %v3277
    %v3486 = vunpack.c.l.b16 %v3278
    %v3487 = vunpack.c.h.b16 %v3278
    %v3488 = vunpack.c.l.b16 %v3279
    %v3489 = vunpack.c.h.b16 %v3279
    %v3490 = vunpack.c.l.b16 %v3280
    %v3491 = vunpack.c.h.b16 %v3280
    %v3492 = vunpack.c.l.b16 %v3281
    %v3493 = vunpack.c.h.b16 %v3281
    %v3494 = vunpack.c.l.b16 %v3282
    %v3495 = vunpack.c.h.b16 %v3282
    %v3496 = vunpack.c.l.b16 %v3283
    %v3497 = vunpack.c.h.b16 %v3283
    %v3498 = vpack.c.b16 %v3374, %v3370
    %v3499 = vpack.c.b16 %v3375, %v3371
    %v3500 = vpack.c.b16 %v3376, %v3372
    %v3501 = vpack.c.b16 %v3377, %v3373
    %v3502 = vpack.c.b16 %v3382, %v3378
    %v3503 = vpack.c.b16 %v3383, %v3379
    %v3504 = vpack.c.b16 %v3384, %v3380
    %v3505 = vpack.c.b16 %v3385, %v3381
    %v3506 = vpack.c.b16 %v3390, %v3386
    %v3507 = vpack.c.b16 %v3391, %v3387
    %v3508 = vpack.c.b16 %v3392, %v3388
    %v3509 = vpack.c.b16 %v3393, %v3389
    %v3510 = vpack.c.b16 %v3398, %v3394
    %v3511 = vpack.c.b16 %v3399, %v3395
    %v3512 = vpack.c.b16 %v3400, %v3396
    %v3513 = vpack.c.b16 %v3401, %v3397
    %v3514 = vpack.c.b16 %v3406, %v3402
    %v3515 = vpack.c.b16 %v3407, %v3403
    %v3516 = vpack.c.b16 %v3408, %v3404
    %v3517 = vpack.c.b16 %v3409, %v3405
    %v3518 = vpack.c.b16 %v3414, %v3410
    %v3519 = vpack.c.b16 %v3415, %v3411
    %v3520 = vpack.c.b16 %v3416, %v3412
    %v3521 = vpack.c.b16 %v3417, %v3413
    %v3522 = vpack.c.b16 %v3422, %v3418
    %v3523 = vpack.c.b16 %v3423, %v3419
    %v3524 = vpack.c.b16 %v3424, %v3420
    %v3525 = vpack.c.b16 %v3425, %v3421
    %v3526 = vpack.c.b16 %v3430, %v3426
    %v3527 = vpack.c.b16 %v3431, %v3427
    %v3528 = vpack.c.b16 %v3432, %v3428
    %v3529 = vpack.c.b16 %v3433, %v3429
    %v3530 = vpack.c.b16 %v3438, %v3434
    %v3531 = vpack.c.b16 %v3439, %v3435
    %v3532 = vpack.c.b16 %v3440, %v3436
    %v3533 = vpack.c.b16 %v3441, %v3437
    %v3534 = vpack.c.b16 %v3446, %v3442
    %v3535 = vpack.c.b16 %v3447, %v3443
    %v3536 = vpack.c.b16 %v3448, %v3444
    %v3537 = vpack.c.b16 %v3449, %v3445
    %v3538 = vpack.c.b16 %v3454, %v3450
    %v3539 = vpack.c.b16 %v3455, %v3451
    %v3540 = vpack.c.b16 %v3456, %v3452
    %v3541 = vpack.c.b16 %v3457, %v3453
    %v3542 = vpack.c.b16 %v3462, %v3458
    %v3543 = vpack.c.b16 %v3463, %v3459
    %v3544 = vpack.c.b16 %v3464, %v3460
    %v3545 = vpack.c.b16 %v3465, %v3461
    %v3546 = vpack.c.b16 %v3470, %v3466
    %v3547 = vpack.c.b16 %v3471, %v3467
    %v3548 = vpack.c.b16 %v3472, %v3468
    %v3549 = vpack.c.b16 %v3473, %v3469
    %v3550 = vpack.c.b16 %v3478, %v3474
    %v3551 = vpack.c.b16 %v3479, %v3475
    %v3552 = vpack.c.b16 %v3480, %v3476
    %v3553 = vpack.c.b16 %v3481, %v3477
    %v3554 = vpack.c.b16 %v3486, %v3482
    %v3555 = vpack.c.b16 %v3487, %v3483
    %v3556 = vpack.c.b16 %v3488, %v3484
    %v3557 = vpack.c.b16 %v3489, %v3485
    %v3558 = vpack.c.b16 %v3494, %v3490
    %v3559 = vpack.c.b16 %v3495, %v3491
    %v3560 = vpack.c.b16 %v3496, %v3492
    %v3561 = vpack.c.b16 %v3497, %v3493
    %3626 = vmatprep.subr.bf16.mxu0 %v3527
    %3627 = vmatpush1.bf16.msra.mxu0 %v3526
    %3628 = vmatprep.subr.bf16.mxu0 %v3523
    %3629 = vmatpush1.bf16.msra.mxu0 %v3522
    %3630 = vmatprep.subr.bf16.mxu0 %v3519
    %3631 = vmatpush1.bf16.msra.mxu0 %v3518
    %3632 = vmatprep.subr.bf16.mxu0 %v3515
    %3633 = vmatpush1.bf16.msra.mxu0 %v3514
    %3634 = vmatprep.subr.bf16.mxu0 %v3511
    %3635 = vmatpush1.bf16.msra.mxu0 %v3510
    %3636 = vmatprep.subr.bf16.mxu0 %v3507
    %3637 = vmatpush1.bf16.msra.mxu0 %v3506
    %3638 = vmatprep.subr.bf16.mxu0 %v3503
    %3639 = vmatpush1.bf16.msra.mxu0 %v3502
    %3640 = vmatprep.subr.bf16.mxu0 %v3499
    %3641 = vmatpush1.bf16.msra.mxu0 %v3498
    %3642 = vmatprep.subr.bf16.mxu0 %v3559
    %3643 = vmatpush2.bf16.msra.mxu0 %v3558
    %3644 = vmatprep.subr.bf16.mxu0 %v3555
    %3645 = vmatpush2.bf16.msra.mxu0 %v3554
    %3646 = vmatprep.subr.bf16.mxu0 %v3551
    %3647 = vmatpush2.bf16.msra.mxu0 %v3550
    %3648 = vmatprep.subr.bf16.mxu0 %v3547
    %3649 = vmatpush2.bf16.msra.mxu0 %v3546
    %3650 = vmatprep.subr.bf16.mxu0 %v3543
    %3651 = vmatpush2.bf16.msra.mxu0 %v3542
    %3652 = vmatprep.subr.bf16.mxu0 %v3539
    %3653 = vmatpush2.bf16.msra.mxu0 %v3538
    %3654 = vmatprep.subr.bf16.mxu0 %v3535
    %3655 = vmatpush2.bf16.msra.mxu0 %v3534
    %3656 = vmatprep.subr.bf16.mxu0 %v3531
    %3657 = vmatpush2.bf16.msra.mxu0 %v3530
    %3658 = vmatprep.mubr.bf16.mxu0 %v3219
    %3659 = vmatmul.mubr.bf16.gmra.mxu0 %v3216
    %v3660 = vpop.f32.mrf.mxu0
    %v3661 = vadd.f32 %v3289, %v3660
    %v3662 = vpop.f32.mrf.mxu0
    %v3663 = vadd.f32 %v3293, %v3662
    %v3664 = vpop.f32.mrf.mxu0
    %v3665 = vpop.f32.mrf.mxu0
    %3666 = vdwg.mxu0
    %3667 = vmatprep.subr.bf16.mxu0 %v3529
    %3668 = vmatpush1.bf16.msra.mxu0 %v3528
    %3669 = vmatprep.subr.bf16.mxu0 %v3525
    %3670 = vmatpush1.bf16.msra.mxu0 %v3524
    %3671 = vmatprep.subr.bf16.mxu0 %v3521
    %3672 = vmatpush1.bf16.msra.mxu0 %v3520
    %3673 = vmatprep.subr.bf16.mxu0 %v3517
    %3674 = vmatpush1.bf16.msra.mxu0 %v3516
    %3675 = vmatprep.subr.bf16.mxu0 %v3513
    %3676 = vmatpush1.bf16.msra.mxu0 %v3512
    %3677 = vmatprep.subr.bf16.mxu0 %v3509
    %3678 = vmatpush1.bf16.msra.mxu0 %v3508
    %3679 = vmatprep.subr.bf16.mxu0 %v3505
    %3680 = vmatpush1.bf16.msra.mxu0 %v3504
    %3681 = vmatprep.subr.bf16.mxu0 %v3501
    %3682 = vmatpush1.bf16.msra.mxu0 %v3500
    %3683 = vmatprep.subr.bf16.mxu0 %v3561
    %3684 = vmatpush2.bf16.msra.mxu0 %v3560
    %3685 = vmatprep.subr.bf16.mxu0 %v3557
    %3686 = vmatpush2.bf16.msra.mxu0 %v3556
    %3687 = vmatprep.subr.bf16.mxu0 %v3553
    %3688 = vmatpush2.bf16.msra.mxu0 %v3552
    %3689 = vmatprep.subr.bf16.mxu0 %v3549
    %3690 = vmatpush2.bf16.msra.mxu0 %v3548
    %3691 = vmatprep.subr.bf16.mxu0 %v3545
    %3692 = vmatpush2.bf16.msra.mxu0 %v3544
    %3693 = vmatprep.subr.bf16.mxu0 %v3541
    %3694 = vmatpush2.bf16.msra.mxu0 %v3540
    %3695 = vmatprep.subr.bf16.mxu0 %v3537
    %3696 = vmatpush2.bf16.msra.mxu0 %v3536
    %3697 = vmatprep.subr.bf16.mxu0 %v3533
    %3698 = vmatpush2.bf16.msra.mxu0 %v3532
    %3699 = vmatprep.mubr.bf16.mxu0 %v3219
    %3700 = vmatmul.mubr.bf16.gmra.mxu0 %v3216
    %v3701 = vpop.f32.mrf.mxu0
    %v3702 = vadd.f32 %v3297, %v3701
    %v3703 = vpop.f32.mrf.mxu0
    %v3704 = vadd.f32 %v3301, %v3703
    %v3705 = vpop.f32.mrf.mxu0
    %v3706 = vpop.f32.mrf.mxu0
    %3707 = vdwg.mxu0
    %v3708 = vxor.u32 %v3661, 2147483648
    %v3709 = vxor.u32 %v3663, 2147483648
    %v3710 = vxor.u32 %v3702, 2147483648
    %v3711 = vmul.f32 %v3708, 1.442695
    %v3712 = vpow.pop %v3711
    %v3713 = vmul.f32 %v3709, 1.442695
    %v3714 = vpow.pop %v3713
    %v3715 = vmul.f32 %v3710, 1.442695
    %v3716 = vpow.pop %v3715
    %v3717 = vadd.f32 %v3712, 1.0
    %v3718 = vadd.f32 %v3714, 1.0
    %v3719 = vadd.f32 %v3716, 1.0
    %v3720 = vrcp.pop %v3717
    %v3721 = vmul.f32 1.0, %v3720
    %v3722 = vrcp.pop %v3718
    %v3723 = vmul.f32 1.0, %v3722
    %v3724 = vrcp.pop %v3719
    %v3725 = vmul.f32 1.0, %v3724
    %v3726 = vtanh.pop %v3704
    %v3727 = vmul.f32 %v3723, %v3218
    %v3728 = vmul.f32 %v3721, %v3726
    %v3729 = vadd.f32 %v3727, %v3728
    %v3730 = vtanh.pop %v3729
    %v3731 = vmul.f32 %v3725, %v3730
    %3732 = vst [vmem:[#allocation11] sm:$0xff] %v3731
    %3733 = vst [vmem:[#allocation13] sm:$0xff] %v3729
    %v3734 = vpack.c.bf16 %v3731, %v3731
    %v3735 = vld [vmem:[%s617] sm:$0xff]
    %v3736 = vld [vmem:[%s619] sm:$0xff]
    %v3737 = vpack.c.bf16 %v3735, %v3735
    %v3738 = vld [vmem:[#allocation8] sm:$0xff]
    %v3739 = vld [vmem:[#allocation8 + $0x8] sm:$0xff]
    %v3740 = vld [vmem:[#allocation8 + $0x10] sm:$0xff]
    %v3741 = vld [vmem:[#allocation8 + $0x18] sm:$0xff]
    %v3742 = vld [vmem:[#allocation8 + $0x20] sm:$0xff]
    %v3743 = vld [vmem:[#allocation8 + $0x28] sm:$0xff]
    %v3744 = vld [vmem:[#allocation8 + $0x30] sm:$0xff]
    %v3745 = vld [vmem:[#allocation8 + $0x38] sm:$0xff]
    %v3746 = vld [vmem:[#allocation8 + $0x40] sm:$0xff]
    %v3747 = vld [vmem:[#allocation8 + $0x48] sm:$0xff]
    %v3748 = vld [vmem:[#allocation8 + $0x50] sm:$0xff]
    %v3749 = vld [vmem:[#allocation8 + $0x58] sm:$0xff]
    %v3750 = vld [vmem:[#allocation8 + $0x60] sm:$0xff]
    %v3751 = vld [vmem:[#allocation8 + $0x68] sm:$0xff]
    %v3752 = vld [vmem:[#allocation8 + $0x70] sm:$0xff]
    %v3753 = vld [vmem:[#allocation8 + $0x78] sm:$0xff]
    %v3754 = vld [vmem:[#allocation8 + $0x80] sm:$0xff]
    %v3755 = vld [vmem:[#allocation8 + $0x88] sm:$0xff]
    %v3756 = vld [vmem:[#allocation8 + $0x90] sm:$0xff]
    %v3757 = vld [vmem:[#allocation8 + $0x98] sm:$0xff]
    %v3758 = vld [vmem:[#allocation8 + $0xa0] sm:$0xff]
    %v3759 = vld [vmem:[#allocation8 + $0xa8] sm:$0xff]
    %v3760 = vld [vmem:[#allocation8 + $0xb0] sm:$0xff]
    %v3761 = vld [vmem:[#allocation8 + $0xb8] sm:$0xff]
    %v3762 = vld [vmem:[#allocation8 + $0xc0] sm:$0xff]
    %v3763 = vld [vmem:[#allocation8 + $0xc8] sm:$0xff]
    %v3764 = vld [vmem:[#allocation8 + $0xd0] sm:$0xff]
    %v3765 = vld [vmem:[#allocation8 + $0xd8] sm:$0xff]
    %v3766 = vld [vmem:[#allocation8 + $0xe0] sm:$0xff]
    %v3767 = vld [vmem:[#allocation8 + $0xe8] sm:$0xff]
    %v3768 = vld [vmem:[#allocation8 + $0xf0] sm:$0xff]
    %v3769 = vld [vmem:[#allocation8 + $0xf8] sm:$0xff]
    %v3770 = vld [vmem:[#allocation8 + $0x100] sm:$0xff]
    %v3771 = vld [vmem:[#allocation8 + $0x108] sm:$0xff]
    %v3772 = vld [vmem:[#allocation8 + $0x110] sm:$0xff]
    %v3773 = vld [vmem:[#allocation8 + $0x118] sm:$0xff]
    %v3774 = vld [vmem:[#allocation8 + $0x120] sm:$0xff]
    %v3775 = vld [vmem:[#allocation8 + $0x128] sm:$0xff]
    %v3776 = vld [vmem:[#allocation8 + $0x130] sm:$0xff]
    %v3777 = vld [vmem:[#allocation8 + $0x138] sm:$0xff]
    %v3778 = vld [vmem:[#allocation8 + $0x140] sm:$0xff]
    %v3779 = vld [vmem:[#allocation8 + $0x148] sm:$0xff]
    %v3780 = vld [vmem:[#allocation8 + $0x150] sm:$0xff]
    %v3781 = vld [vmem:[#allocation8 + $0x158] sm:$0xff]
    %v3782 = vld [vmem:[#allocation8 + $0x160] sm:$0xff]
    %v3783 = vld [vmem:[#allocation8 + $0x168] sm:$0xff]
    %v3784 = vld [vmem:[#allocation8 + $0x170] sm:$0xff]
    %v3785 = vld [vmem:[#allocation8 + $0x178] sm:$0xff]
    %v3786 = vld [vmem:[#allocation8 + $0x180] sm:$0xff]
    %v3787 = vld [vmem:[#allocation8 + $0x188] sm:$0xff]
    %v3788 = vld [vmem:[#allocation8 + $0x190] sm:$0xff]
    %v3789 = vld [vmem:[#allocation8 + $0x198] sm:$0xff]
    %v3790 = vld [vmem:[#allocation8 + $0x1a0] sm:$0xff]
    %v3791 = vld [vmem:[#allocation8 + $0x1a8] sm:$0xff]
    %v3792 = vld [vmem:[#allocation8 + $0x1b0] sm:$0xff]
    %v3793 = vld [vmem:[#allocation8 + $0x1b8] sm:$0xff]
    %v3794 = vld [vmem:[#allocation8 + $0x1c0] sm:$0xff]
    %v3795 = vld [vmem:[#allocation8 + $0x1c8] sm:$0xff]
    %v3796 = vld [vmem:[#allocation8 + $0x1d0] sm:$0xff]
    %v3797 = vld [vmem:[#allocation8 + $0x1d8] sm:$0xff]
    %v3798 = vld [vmem:[#allocation8 + $0x1e0] sm:$0xff]
    %v3799 = vld [vmem:[#allocation8 + $0x1e8] sm:$0xff]
    %v3800 = vld [vmem:[#allocation8 + $0x1f0] sm:$0xff]
    %v3801 = vld [vmem:[#allocation8 + $0x1f8] sm:$0xff]
    %v3802 = vld [vmem:[%s6] sm:$0xf]
    %v3804 = vlaneseq
    %v3805 = vshrl.u32 %v3804, 7
    %v3806 = vsub.s32 0, %v3805
    %v3807 = vrot.slane %v3802, %v3806
    %v3808 = vlaneseq
    %v3809 = vshrl.u32 %v3808, 7
    %v3810 = vsub.s32 1, %v3809
    %v3811 = vrot.slane %v3802, %v3810
    %v3812 = vlaneseq
    %v3813 = vshrl.u32 %v3812, 7
    %v3814 = vsub.s32 2, %v3813
    %v3815 = vrot.slane %v3802, %v3814
    %v3816 = vlaneseq
    %v3817 = vshrl.u32 %v3816, 7
    %v3818 = vsub.s32 3, %v3817
    %v3819 = vrot.slane %v3802, %v3818
    %v3888 = vunpack.c.l.b16 %v3738
    %v3889 = vunpack.c.h.b16 %v3738
    %v3890 = vunpack.c.l.b16 %v3739
    %v3891 = vunpack.c.h.b16 %v3739
    %v3892 = vunpack.c.l.b16 %v3740
    %v3893 = vunpack.c.h.b16 %v3740
    %v3894 = vunpack.c.l.b16 %v3741
    %v3895 = vunpack.c.h.b16 %v3741
    %v3896 = vunpack.c.l.b16 %v3742
    %v3897 = vunpack.c.h.b16 %v3742
    %v3898 = vunpack.c.l.b16 %v3743
    %v3899 = vunpack.c.h.b16 %v3743
    %v3900 = vunpack.c.l.b16 %v3744
    %v3901 = vunpack.c.h.b16 %v3744
    %v3902 = vunpack.c.l.b16 %v3745
    %v3903 = vunpack.c.h.b16 %v3745
    %v3904 = vunpack.c.l.b16 %v3746
    %v3905 = vunpack.c.h.b16 %v3746
    %v3906 = vunpack.c.l.b16 %v3747
    %v3907 = vunpack.c.h.b16 %v3747
    %v3908 = vunpack.c.l.b16 %v3748
    %v3909 = vunpack.c.h.b16 %v3748
    %v3910 = vunpack.c.l.b16 %v3749
    %v3911 = vunpack.c.h.b16 %v3749
    %v3912 = vunpack.c.l.b16 %v3750
    %v3913 = vunpack.c.h.b16 %v3750
    %v3914 = vunpack.c.l.b16 %v3751
    %v3915 = vunpack.c.h.b16 %v3751
    %v3916 = vunpack.c.l.b16 %v3752
    %v3917 = vunpack.c.h.b16 %v3752
    %v3918 = vunpack.c.l.b16 %v3753
    %v3919 = vunpack.c.h.b16 %v3753
    %v3920 = vunpack.c.l.b16 %v3754
    %v3921 = vunpack.c.h.b16 %v3754
    %v3922 = vunpack.c.l.b16 %v3755
    %v3923 = vunpack.c.h.b16 %v3755
    %v3924 = vunpack.c.l.b16 %v3756
    %v3925 = vunpack.c.h.b16 %v3756
    %v3926 = vunpack.c.l.b16 %v3757
    %v3927 = vunpack.c.h.b16 %v3757
    %v3928 = vunpack.c.l.b16 %v3758
    %v3929 = vunpack.c.h.b16 %v3758
    %v3930 = vunpack.c.l.b16 %v3759
    %v3931 = vunpack.c.h.b16 %v3759
    %v3932 = vunpack.c.l.b16 %v3760
    %v3933 = vunpack.c.h.b16 %v3760
    %v3934 = vunpack.c.l.b16 %v3761
    %v3935 = vunpack.c.h.b16 %v3761
    %v3936 = vunpack.c.l.b16 %v3762
    %v3937 = vunpack.c.h.b16 %v3762
    %v3938 = vunpack.c.l.b16 %v3763
    %v3939 = vunpack.c.h.b16 %v3763
    %v3940 = vunpack.c.l.b16 %v3764
    %v3941 = vunpack.c.h.b16 %v3764
    %v3942 = vunpack.c.l.b16 %v3765
    %v3943 = vunpack.c.h.b16 %v3765
    %v3944 = vunpack.c.l.b16 %v3766
    %v3945 = vunpack.c.h.b16 %v3766
    %v3946 = vunpack.c.l.b16 %v3767
    %v3947 = vunpack.c.h.b16 %v3767
    %v3948 = vunpack.c.l.b16 %v3768
    %v3949 = vunpack.c.h.b16 %v3768
    %v3950 = vunpack.c.l.b16 %v3769
    %v3951 = vunpack.c.h.b16 %v3769
    %v3952 = vunpack.c.l.b16 %v3770
    %v3953 = vunpack.c.h.b16 %v3770
    %v3954 = vunpack.c.l.b16 %v3771
    %v3955 = vunpack.c.h.b16 %v3771
    %v3956 = vunpack.c.l.b16 %v3772
    %v3957 = vunpack.c.h.b16 %v3772
    %v3958 = vunpack.c.l.b16 %v3773
    %v3959 = vunpack.c.h.b16 %v3773
    %v3960 = vunpack.c.l.b16 %v3774
    %v3961 = vunpack.c.h.b16 %v3774
    %v3962 = vunpack.c.l.b16 %v3775
    %v3963 = vunpack.c.h.b16 %v3775
    %v3964 = vunpack.c.l.b16 %v3776
    %v3965 = vunpack.c.h.b16 %v3776
    %v3966 = vunpack.c.l.b16 %v3777
    %v3967 = vunpack.c.h.b16 %v3777
    %v3968 = vunpack.c.l.b16 %v3778
    %v3969 = vunpack.c.h.b16 %v3778
    %v3970 = vunpack.c.l.b16 %v3779
    %v3971 = vunpack.c.h.b16 %v3779
    %v3972 = vunpack.c.l.b16 %v3780
    %v3973 = vunpack.c.h.b16 %v3780
    %v3974 = vunpack.c.l.b16 %v3781
    %v3975 = vunpack.c.h.b16 %v3781
    %v3976 = vunpack.c.l.b16 %v3782
    %v3977 = vunpack.c.h.b16 %v3782
    %v3978 = vunpack.c.l.b16 %v3783
    %v3979 = vunpack.c.h.b16 %v3783
    %v3980 = vunpack.c.l.b16 %v3784
    %v3981 = vunpack.c.h.b16 %v3784
    %v3982 = vunpack.c.l.b16 %v3785
    %v3983 = vunpack.c.h.b16 %v3785
    %v3984 = vunpack.c.l.b16 %v3786
    %v3985 = vunpack.c.h.b16 %v3786
    %v3986 = vunpack.c.l.b16 %v3787
    %v3987 = vunpack.c.h.b16 %v3787
    %v3988 = vunpack.c.l.b16 %v3788
    %v3989 = vunpack.c.h.b16 %v3788
    %v3990 = vunpack.c.l.b16 %v3789
    %v3991 = vunpack.c.h.b16 %v3789
    %v3992 = vunpack.c.l.b16 %v3790
    %v3993 = vunpack.c.h.b16 %v3790
    %v3994 = vunpack.c.l.b16 %v3791
    %v3995 = vunpack.c.h.b16 %v3791
    %v3996 = vunpack.c.l.b16 %v3792
    %v3997 = vunpack.c.h.b16 %v3792
    %v3998 = vunpack.c.l.b16 %v3793
    %v3999 = vunpack.c.h.b16 %v3793
    %v4000 = vunpack.c.l.b16 %v3794
    %v4001 = vunpack.c.h.b16 %v3794
    %v4002 = vunpack.c.l.b16 %v3795
    %v4003 = vunpack.c.h.b16 %v3795
    %v4004 = vunpack.c.l.b16 %v3796
    %v4005 = vunpack.c.h.b16 %v3796
    %v4006 = vunpack.c.l.b16 %v3797
    %v4007 = vunpack.c.h.b16 %v3797
    %v4008 = vunpack.c.l.b16 %v3798
    %v4009 = vunpack.c.h.b16 %v3798
    %v4010 = vunpack.c.l.b16 %v3799
    %v4011 = vunpack.c.h.b16 %v3799
    %v4012 = vunpack.c.l.b16 %v3800
    %v4013 = vunpack.c.h.b16 %v3800
    %v4014 = vunpack.c.l.b16 %v3801
    %v4015 = vunpack.c.h.b16 %v3801
    %v4016 = vpack.c.b16 %v3892, %v3888
    %v4017 = vpack.c.b16 %v3893, %v3889
    %v4018 = vpack.c.b16 %v3894, %v3890
    %v4019 = vpack.c.b16 %v3895, %v3891
    %v4020 = vpack.c.b16 %v3900, %v3896
    %v4021 = vpack.c.b16 %v3901, %v3897
    %v4022 = vpack.c.b16 %v3902, %v3898
    %v4023 = vpack.c.b16 %v3903, %v3899
    %v4024 = vpack.c.b16 %v3908, %v3904
    %v4025 = vpack.c.b16 %v3909, %v3905
    %v4026 = vpack.c.b16 %v3910, %v3906
    %v4027 = vpack.c.b16 %v3911, %v3907
    %v4028 = vpack.c.b16 %v3916, %v3912
    %v4029 = vpack.c.b16 %v3917, %v3913
    %v4030 = vpack.c.b16 %v3918, %v3914
    %v4031 = vpack.c.b16 %v3919, %v3915
    %v4032 = vpack.c.b16 %v3924, %v3920
    %v4033 = vpack.c.b16 %v3925, %v3921
    %v4034 = vpack.c.b16 %v3926, %v3922
    %v4035 = vpack.c.b16 %v3927, %v3923
    %v4036 = vpack.c.b16 %v3932, %v3928
    %v4037 = vpack.c.b16 %v3933, %v3929
    %v4038 = vpack.c.b16 %v3934, %v3930
    %v4039 = vpack.c.b16 %v3935, %v3931
    %v4040 = vpack.c.b16 %v3940, %v3936
    %v4041 = vpack.c.b16 %v3941, %v3937
    %v4042 = vpack.c.b16 %v3942, %v3938
    %v4043 = vpack.c.b16 %v3943, %v3939
    %v4044 = vpack.c.b16 %v3948, %v3944
    %v4045 = vpack.c.b16 %v3949, %v3945
    %v4046 = vpack.c.b16 %v3950, %v3946
    %v4047 = vpack.c.b16 %v3951, %v3947
    %v4048 = vpack.c.b16 %v3956, %v3952
    %v4049 = vpack.c.b16 %v3957, %v3953
    %v4050 = vpack.c.b16 %v3958, %v3954
    %v4051 = vpack.c.b16 %v3959, %v3955
    %v4052 = vpack.c.b16 %v3964, %v3960
    %v4053 = vpack.c.b16 %v3965, %v3961
    %v4054 = vpack.c.b16 %v3966, %v3962
    %v4055 = vpack.c.b16 %v3967, %v3963
    %v4056 = vpack.c.b16 %v3972, %v3968
    %v4057 = vpack.c.b16 %v3973, %v3969
    %v4058 = vpack.c.b16 %v3974, %v3970
    %v4059 = vpack.c.b16 %v3975, %v3971
    %v4060 = vpack.c.b16 %v3980, %v3976
    %v4061 = vpack.c.b16 %v3981, %v3977
    %v4062 = vpack.c.b16 %v3982, %v3978
    %v4063 = vpack.c.b16 %v3983, %v3979
    %v4064 = vpack.c.b16 %v3988, %v3984
    %v4065 = vpack.c.b16 %v3989, %v3985
    %v4066 = vpack.c.b16 %v3990, %v3986
    %v4067 = vpack.c.b16 %v3991, %v3987
    %v4068 = vpack.c.b16 %v3996, %v3992
    %v4069 = vpack.c.b16 %v3997, %v3993
    %v4070 = vpack.c.b16 %v3998, %v3994
    %v4071 = vpack.c.b16 %v3999, %v3995
    %v4072 = vpack.c.b16 %v4004, %v4000
    %v4073 = vpack.c.b16 %v4005, %v4001
    %v4074 = vpack.c.b16 %v4006, %v4002
    %v4075 = vpack.c.b16 %v4007, %v4003
    %v4076 = vpack.c.b16 %v4012, %v4008
    %v4077 = vpack.c.b16 %v4013, %v4009
    %v4078 = vpack.c.b16 %v4014, %v4010
    %v4079 = vpack.c.b16 %v4015, %v4011
    %4144 = vmatprep.subr.bf16.mxu0 %v4045
    %4145 = vmatpush1.bf16.msra.mxu0 %v4044
    %4146 = vmatprep.subr.bf16.mxu0 %v4041
    %4147 = vmatpush1.bf16.msra.mxu0 %v4040
    %4148 = vmatprep.subr.bf16.mxu0 %v4037
    %4149 = vmatpush1.bf16.msra.mxu0 %v4036
    %4150 = vmatprep.subr.bf16.mxu0 %v4033
    %4151 = vmatpush1.bf16.msra.mxu0 %v4032
    %4152 = vmatprep.subr.bf16.mxu0 %v4029
    %4153 = vmatpush1.bf16.msra.mxu0 %v4028
    %4154 = vmatprep.subr.bf16.mxu0 %v4025
    %4155 = vmatpush1.bf16.msra.mxu0 %v4024
    %4156 = vmatprep.subr.bf16.mxu0 %v4021
    %4157 = vmatpush1.bf16.msra.mxu0 %v4020
    %4158 = vmatprep.subr.bf16.mxu0 %v4017
    %4159 = vmatpush1.bf16.msra.mxu0 %v4016
    %4160 = vmatprep.subr.bf16.mxu0 %v4077
    %4161 = vmatpush2.bf16.msra.mxu0 %v4076
    %4162 = vmatprep.subr.bf16.mxu0 %v4073
    %4163 = vmatpush2.bf16.msra.mxu0 %v4072
    %4164 = vmatprep.subr.bf16.mxu0 %v4069
    %4165 = vmatpush2.bf16.msra.mxu0 %v4068
    %4166 = vmatprep.subr.bf16.mxu0 %v4065
    %4167 = vmatpush2.bf16.msra.mxu0 %v4064
    %4168 = vmatprep.subr.bf16.mxu0 %v4061
    %4169 = vmatpush2.bf16.msra.mxu0 %v4060
    %4170 = vmatprep.subr.bf16.mxu0 %v4057
    %4171 = vmatpush2.bf16.msra.mxu0 %v4056
    %4172 = vmatprep.subr.bf16.mxu0 %v4053
    %4173 = vmatpush2.bf16.msra.mxu0 %v4052
    %4174 = vmatprep.subr.bf16.mxu0 %v4049
    %4175 = vmatpush2.bf16.msra.mxu0 %v4048
    %4176 = vmatprep.mubr.bf16.mxu0 %v3737
    %4177 = vmatmul.mubr.bf16.gmra.mxu0 %v3734
    %v4178 = vpop.f32.mrf.mxu0
    %v4179 = vadd.f32 %v3807, %v4178
    %v4180 = vpop.f32.mrf.mxu0
    %v4181 = vadd.f32 %v3811, %v4180
    %v4182 = vpop.f32.mrf.mxu0
    %v4183 = vpop.f32.mrf.mxu0
    %4184 = vdwg.mxu0
    %4185 = vmatprep.subr.bf16.mxu0 %v4047
    %4186 = vmatpush1.bf16.msra.mxu0 %v4046
    %4187 = vmatprep.subr.bf16.mxu0 %v4043
    %4188 = vmatpush1.bf16.msra.mxu0 %v4042
    %4189 = vmatprep.subr.bf16.mxu0 %v4039
    %4190 = vmatpush1.bf16.msra.mxu0 %v4038
    %4191 = vmatprep.subr.bf16.mxu0 %v4035
    %4192 = vmatpush1.bf16.msra.mxu0 %v4034
    %4193 = vmatprep.subr.bf16.mxu0 %v4031
    %4194 = vmatpush1.bf16.msra.mxu0 %v4030
    %4195 = vmatprep.subr.bf16.mxu0 %v4027
    %4196 = vmatpush1.bf16.msra.mxu0 %v4026
    %4197 = vmatprep.subr.bf16.mxu0 %v4023
    %4198 = vmatpush1.bf16.msra.mxu0 %v4022
    %4199 = vmatprep.subr.bf16.mxu0 %v4019
    %4200 = vmatpush1.bf16.msra.mxu0 %v4018
    %4201 = vmatprep.subr.bf16.mxu0 %v4079
    %4202 = vmatpush2.bf16.msra.mxu0 %v4078
    %4203 = vmatprep.subr.bf16.mxu0 %v4075
    %4204 = vmatpush2.bf16.msra.mxu0 %v4074
    %4205 = vmatprep.subr.bf16.mxu0 %v4071
    %4206 = vmatpush2.bf16.msra.mxu0 %v4070
    %4207 = vmatprep.subr.bf16.mxu0 %v4067
    %4208 = vmatpush2.bf16.msra.mxu0 %v4066
    %4209 = vmatprep.subr.bf16.mxu0 %v4063
    %4210 = vmatpush2.bf16.msra.mxu0 %v4062
    %4211 = vmatprep.subr.bf16.mxu0 %v4059
    %4212 = vmatpush2.bf16.msra.mxu0 %v4058
    %4213 = vmatprep.subr.bf16.mxu0 %v4055
    %4214 = vmatpush2.bf16.msra.mxu0 %v4054
    %4215 = vmatprep.subr.bf16.mxu0 %v4051
    %4216 = vmatpush2.bf16.msra.mxu0 %v4050
    %4217 = vmatprep.mubr.bf16.mxu0 %v3737
    %4218 = vmatmul.mubr.bf16.gmra.mxu0 %v3734
    %v4219 = vpop.f32.mrf.mxu0
    %v4220 = vadd.f32 %v3815, %v4219
    %v4221 = vpop.f32.mrf.mxu0
    %v4222 = vadd.f32 %v3819, %v4221
    %v4223 = vpop.f32.mrf.mxu0
    %v4224 = vpop.f32.mrf.mxu0
    %4225 = vdwg.mxu0
    %v4226 = vxor.u32 %v4179, 2147483648
    %v4227 = vxor.u32 %v4181, 2147483648
    %v4228 = vxor.u32 %v4220, 2147483648
    %v4229 = vmul.f32 %v4226, 1.442695
    %v4230 = vpow.pop %v4229
    %v4231 = vmul.f32 %v4227, 1.442695
    %v4232 = vpow.pop %v4231
    %v4233 = vmul.f32 %v4228, 1.442695
    %v4234 = vpow.pop %v4233
    %v4235 = vadd.f32 %v4230, 1.0
    %v4236 = vadd.f32 %v4232, 1.0
    %v4237 = vadd.f32 %v4234, 1.0
    %v4238 = vrcp.pop %v4235
    %v4239 = vmul.f32 1.0, %v4238
    %v4240 = vrcp.pop %v4236
    %v4241 = vmul.f32 1.0, %v4240
    %v4242 = vrcp.pop %v4237
    %v4243 = vmul.f32 1.0, %v4242
    %v4244 = vtanh.pop %v4222
    %v4245 = vmul.f32 %v4241, %v3736
    %v4246 = vmul.f32 %v4239, %v4244
    %v4247 = vadd.f32 %v4245, %v4246
    %v4248 = vtanh.pop %v4247
    %v4249 = vmul.f32 %v4243, %v4248
    %4250 = vst [vmem:[%s617] sm:$0xff] %v4249
    %4251 = vst [vmem:[%s619] sm:$0xff] %v4247
    %s4252 = scalar_lea.vmem [#allocation10], 24
    %4253 = vst [vmem:[%s4252] sm:$0xff] %v4249
    %s4254 = scalar_lea.vmem %s0, 16
    %v4255 = vld [vmem:[%s4254] sm:$0xf]
    %v4256 = vld [vmem:[#allocation11] sm:$0xff]
    %v4257 = vld [vmem:[#allocation13] sm:$0xff]
    %v4258 = vpack.c.bf16 %v4256, %v4256
    %v4259 = vld [vmem:[#allocation7] sm:$0xff]
    %v4260 = vld [vmem:[#allocation7 + $0x8] sm:$0xff]
    %v4261 = vld [vmem:[#allocation7 + $0x10] sm:$0xff]
    %v4262 = vld [vmem:[#allocation7 + $0x18] sm:$0xff]
    %v4263 = vld [vmem:[#allocation7 + $0x20] sm:$0xff]
    %v4264 = vld [vmem:[#allocation7 + $0x28] sm:$0xff]
    %v4265 = vld [vmem:[#allocation7 + $0x30] sm:$0xff]
    %v4266 = vld [vmem:[#allocation7 + $0x38] sm:$0xff]
    %v4267 = vld [vmem:[#allocation7 + $0x40] sm:$0xff]
    %v4268 = vld [vmem:[#allocation7 + $0x48] sm:$0xff]
    %v4269 = vld [vmem:[#allocation7 + $0x50] sm:$0xff]
    %v4270 = vld [vmem:[#allocation7 + $0x58] sm:$0xff]
    %v4271 = vld [vmem:[#allocation7 + $0x60] sm:$0xff]
    %v4272 = vld [vmem:[#allocation7 + $0x68] sm:$0xff]
    %v4273 = vld [vmem:[#allocation7 + $0x70] sm:$0xff]
    %v4274 = vld [vmem:[#allocation7 + $0x78] sm:$0xff]
    %v4275 = vld [vmem:[#allocation7 + $0x80] sm:$0xff]
    %v4276 = vld [vmem:[#allocation7 + $0x88] sm:$0xff]
    %v4277 = vld [vmem:[#allocation7 + $0x90] sm:$0xff]
    %v4278 = vld [vmem:[#allocation7 + $0x98] sm:$0xff]
    %v4279 = vld [vmem:[#allocation7 + $0xa0] sm:$0xff]
    %v4280 = vld [vmem:[#allocation7 + $0xa8] sm:$0xff]
    %v4281 = vld [vmem:[#allocation7 + $0xb0] sm:$0xff]
    %v4282 = vld [vmem:[#allocation7 + $0xb8] sm:$0xff]
    %v4283 = vld [vmem:[#allocation7 + $0xc0] sm:$0xff]
    %v4284 = vld [vmem:[#allocation7 + $0xc8] sm:$0xff]
    %v4285 = vld [vmem:[#allocation7 + $0xd0] sm:$0xff]
    %v4286 = vld [vmem:[#allocation7 + $0xd8] sm:$0xff]
    %v4287 = vld [vmem:[#allocation7 + $0xe0] sm:$0xff]
    %v4288 = vld [vmem:[#allocation7 + $0xe8] sm:$0xff]
    %v4289 = vld [vmem:[#allocation7 + $0xf0] sm:$0xff]
    %v4290 = vld [vmem:[#allocation7 + $0xf8] sm:$0xff]
    %v4291 = vld [vmem:[#allocation7 + $0x100] sm:$0xff]
    %v4292 = vld [vmem:[#allocation7 + $0x108] sm:$0xff]
    %v4293 = vld [vmem:[#allocation7 + $0x110] sm:$0xff]
    %v4294 = vld [vmem:[#allocation7 + $0x118] sm:$0xff]
    %v4295 = vld [vmem:[#allocation7 + $0x120] sm:$0xff]
    %v4296 = vld [vmem:[#allocation7 + $0x128] sm:$0xff]
    %v4297 = vld [vmem:[#allocation7 + $0x130] sm:$0xff]
    %v4298 = vld [vmem:[#allocation7 + $0x138] sm:$0xff]
    %v4299 = vld [vmem:[#allocation7 + $0x140] sm:$0xff]
    %v4300 = vld [vmem:[#allocation7 + $0x148] sm:$0xff]
    %v4301 = vld [vmem:[#allocation7 + $0x150] sm:$0xff]
    %v4302 = vld [vmem:[#allocation7 + $0x158] sm:$0xff]
    %v4303 = vld [vmem:[#allocation7 + $0x160] sm:$0xff]
    %v4304 = vld [vmem:[#allocation7 + $0x168] sm:$0xff]
    %v4305 = vld [vmem:[#allocation7 + $0x170] sm:$0xff]
    %v4306 = vld [vmem:[#allocation7 + $0x178] sm:$0xff]
    %v4307 = vld [vmem:[#allocation7 + $0x180] sm:$0xff]
    %v4308 = vld [vmem:[#allocation7 + $0x188] sm:$0xff]
    %v4309 = vld [vmem:[#allocation7 + $0x190] sm:$0xff]
    %v4310 = vld [vmem:[#allocation7 + $0x198] sm:$0xff]
    %v4311 = vld [vmem:[#allocation7 + $0x1a0] sm:$0xff]
    %v4312 = vld [vmem:[#allocation7 + $0x1a8] sm:$0xff]
    %v4313 = vld [vmem:[#allocation7 + $0x1b0] sm:$0xff]
    %v4314 = vld [vmem:[#allocation7 + $0x1b8] sm:$0xff]
    %v4315 = vld [vmem:[#allocation7 + $0x1c0] sm:$0xff]
    %v4316 = vld [vmem:[#allocation7 + $0x1c8] sm:$0xff]
    %v4317 = vld [vmem:[#allocation7 + $0x1d0] sm:$0xff]
    %v4318 = vld [vmem:[#allocation7 + $0x1d8] sm:$0xff]
    %v4319 = vld [vmem:[#allocation7 + $0x1e0] sm:$0xff]
    %v4320 = vld [vmem:[#allocation7 + $0x1e8] sm:$0xff]
    %v4321 = vld [vmem:[#allocation7 + $0x1f0] sm:$0xff]
    %v4322 = vld [vmem:[#allocation7 + $0x1f8] sm:$0xff]
    %v4323 = vld [vmem:[%s5] sm:$0xf]
    %v4325 = vlaneseq
    %v4326 = vshrl.u32 %v4325, 7
    %v4327 = vsub.s32 0, %v4326
    %v4328 = vrot.slane %v4323, %v4327
    %v4329 = vlaneseq
    %v4330 = vshrl.u32 %v4329, 7
    %v4331 = vsub.s32 1, %v4330
    %v4332 = vrot.slane %v4323, %v4331
    %v4333 = vlaneseq
    %v4334 = vshrl.u32 %v4333, 7
    %v4335 = vsub.s32 2, %v4334
    %v4336 = vrot.slane %v4323, %v4335
    %v4337 = vlaneseq
    %v4338 = vshrl.u32 %v4337, 7
    %v4339 = vsub.s32 3, %v4338
    %v4340 = vrot.slane %v4323, %v4339
    %v4409 = vunpack.c.l.b16 %v4259
    %v4410 = vunpack.c.h.b16 %v4259
    %v4411 = vunpack.c.l.b16 %v4260
    %v4412 = vunpack.c.h.b16 %v4260
    %v4413 = vunpack.c.l.b16 %v4261
    %v4414 = vunpack.c.h.b16 %v4261
    %v4415 = vunpack.c.l.b16 %v4262
    %v4416 = vunpack.c.h.b16 %v4262
    %v4417 = vunpack.c.l.b16 %v4263
    %v4418 = vunpack.c.h.b16 %v4263
    %v4419 = vunpack.c.l.b16 %v4264
    %v4420 = vunpack.c.h.b16 %v4264
    %v4421 = vunpack.c.l.b16 %v4265
    %v4422 = vunpack.c.h.b16 %v4265
    %v4423 = vunpack.c.l.b16 %v4266
    %v4424 = vunpack.c.h.b16 %v4266
    %v4425 = vunpack.c.l.b16 %v4267
    %v4426 = vunpack.c.h.b16 %v4267
    %v4427 = vunpack.c.l.b16 %v4268
    %v4428 = vunpack.c.h.b16 %v4268
    %v4429 = vunpack.c.l.b16 %v4269
    %v4430 = vunpack.c.h.b16 %v4269
    %v4431 = vunpack.c.l.b16 %v4270
    %v4432 = vunpack.c.h.b16 %v4270
    %v4433 = vunpack.c.l.b16 %v4271
    %v4434 = vunpack.c.h.b16 %v4271
    %v4435 = vunpack.c.l.b16 %v4272
    %v4436 = vunpack.c.h.b16 %v4272
    %v4437 = vunpack.c.l.b16 %v4273
    %v4438 = vunpack.c.h.b16 %v4273
    %v4439 = vunpack.c.l.b16 %v4274
    %v4440 = vunpack.c.h.b16 %v4274
    %v4441 = vunpack.c.l.b16 %v4275
    %v4442 = vunpack.c.h.b16 %v4275
    %v4443 = vunpack.c.l.b16 %v4276
    %v4444 = vunpack.c.h.b16 %v4276
    %v4445 = vunpack.c.l.b16 %v4277
    %v4446 = vunpack.c.h.b16 %v4277
    %v4447 = vunpack.c.l.b16 %v4278
    %v4448 = vunpack.c.h.b16 %v4278
    %v4449 = vunpack.c.l.b16 %v4279
    %v4450 = vunpack.c.h.b16 %v4279
    %v4451 = vunpack.c.l.b16 %v4280
    %v4452 = vunpack.c.h.b16 %v4280
    %v4453 = vunpack.c.l.b16 %v4281
    %v4454 = vunpack.c.h.b16 %v4281
    %v4455 = vunpack.c.l.b16 %v4282
    %v4456 = vunpack.c.h.b16 %v4282
    %v4457 = vunpack.c.l.b16 %v4283
    %v4458 = vunpack.c.h.b16 %v4283
    %v4459 = vunpack.c.l.b16 %v4284
    %v4460 = vunpack.c.h.b16 %v4284
    %v4461 = vunpack.c.l.b16 %v4285
    %v4462 = vunpack.c.h.b16 %v4285
    %v4463 = vunpack.c.l.b16 %v4286
    %v4464 = vunpack.c.h.b16 %v4286
    %v4465 = vunpack.c.l.b16 %v4287
    %v4466 = vunpack.c.h.b16 %v4287
    %v4467 = vunpack.c.l.b16 %v4288
    %v4468 = vunpack.c.h.b16 %v4288
    %v4469 = vunpack.c.l.b16 %v4289
    %v4470 = vunpack.c.h.b16 %v4289
    %v4471 = vunpack.c.l.b16 %v4290
    %v4472 = vunpack.c.h.b16 %v4290
    %v4473 = vunpack.c.l.b16 %v4291
    %v4474 = vunpack.c.h.b16 %v4291
    %v4475 = vunpack.c.l.b16 %v4292
    %v4476 = vunpack.c.h.b16 %v4292
    %v4477 = vunpack.c.l.b16 %v4293
    %v4478 = vunpack.c.h.b16 %v4293
    %v4479 = vunpack.c.l.b16 %v4294
    %v4480 = vunpack.c.h.b16 %v4294
    %v4481 = vunpack.c.l.b16 %v4295
    %v4482 = vunpack.c.h.b16 %v4295
    %v4483 = vunpack.c.l.b16 %v4296
    %v4484 = vunpack.c.h.b16 %v4296
    %v4485 = vunpack.c.l.b16 %v4297
    %v4486 = vunpack.c.h.b16 %v4297
    %v4487 = vunpack.c.l.b16 %v4298
    %v4488 = vunpack.c.h.b16 %v4298
    %v4489 = vunpack.c.l.b16 %v4299
    %v4490 = vunpack.c.h.b16 %v4299
    %v4491 = vunpack.c.l.b16 %v4300
    %v4492 = vunpack.c.h.b16 %v4300
    %v4493 = vunpack.c.l.b16 %v4301
    %v4494 = vunpack.c.h.b16 %v4301
    %v4495 = vunpack.c.l.b16 %v4302
    %v4496 = vunpack.c.h.b16 %v4302
    %v4497 = vunpack.c.l.b16 %v4303
    %v4498 = vunpack.c.h.b16 %v4303
    %v4499 = vunpack.c.l.b16 %v4304
    %v4500 = vunpack.c.h.b16 %v4304
    %v4501 = vunpack.c.l.b16 %v4305
    %v4502 = vunpack.c.h.b16 %v4305
    %v4503 = vunpack.c.l.b16 %v4306
    %v4504 = vunpack.c.h.b16 %v4306
    %v4505 = vunpack.c.l.b16 %v4307
    %v4506 = vunpack.c.h.b16 %v4307
    %v4507 = vunpack.c.l.b16 %v4308
    %v4508 = vunpack.c.h.b16 %v4308
    %v4509 = vunpack.c.l.b16 %v4309
    %v4510 = vunpack.c.h.b16 %v4309
    %v4511 = vunpack.c.l.b16 %v4310
    %v4512 = vunpack.c.h.b16 %v4310
    %v4513 = vunpack.c.l.b16 %v4311
    %v4514 = vunpack.c.h.b16 %v4311
    %v4515 = vunpack.c.l.b16 %v4312
    %v4516 = vunpack.c.h.b16 %v4312
    %v4517 = vunpack.c.l.b16 %v4313
    %v4518 = vunpack.c.h.b16 %v4313
    %v4519 = vunpack.c.l.b16 %v4314
    %v4520 = vunpack.c.h.b16 %v4314
    %v4521 = vunpack.c.l.b16 %v4315
    %v4522 = vunpack.c.h.b16 %v4315
    %v4523 = vunpack.c.l.b16 %v4316
    %v4524 = vunpack.c.h.b16 %v4316
    %v4525 = vunpack.c.l.b16 %v4317
    %v4526 = vunpack.c.h.b16 %v4317
    %v4527 = vunpack.c.l.b16 %v4318
    %v4528 = vunpack.c.h.b16 %v4318
    %v4529 = vunpack.c.l.b16 %v4319
    %v4530 = vunpack.c.h.b16 %v4319
    %v4531 = vunpack.c.l.b16 %v4320
    %v4532 = vunpack.c.h.b16 %v4320
    %v4533 = vunpack.c.l.b16 %v4321
    %v4534 = vunpack.c.h.b16 %v4321
    %v4535 = vunpack.c.l.b16 %v4322
    %v4536 = vunpack.c.h.b16 %v4322
    %v4537 = vpack.c.b16 %v4413, %v4409
    %v4538 = vpack.c.b16 %v4414, %v4410
    %v4539 = vpack.c.b16 %v4415, %v4411
    %v4540 = vpack.c.b16 %v4416, %v4412
    %v4541 = vpack.c.b16 %v4421, %v4417
    %v4542 = vpack.c.b16 %v4422, %v4418
    %v4543 = vpack.c.b16 %v4423, %v4419
    %v4544 = vpack.c.b16 %v4424, %v4420
    %v4545 = vpack.c.b16 %v4429, %v4425
    %v4546 = vpack.c.b16 %v4430, %v4426
    %v4547 = vpack.c.b16 %v4431, %v4427
    %v4548 = vpack.c.b16 %v4432, %v4428
    %v4549 = vpack.c.b16 %v4437, %v4433
    %v4550 = vpack.c.b16 %v4438, %v4434
    %v4551 = vpack.c.b16 %v4439, %v4435
    %v4552 = vpack.c.b16 %v4440, %v4436
    %v4553 = vpack.c.b16 %v4445, %v4441
    %v4554 = vpack.c.b16 %v4446, %v4442
    %v4555 = vpack.c.b16 %v4447, %v4443
    %v4556 = vpack.c.b16 %v4448, %v4444
    %v4557 = vpack.c.b16 %v4453, %v4449
    %v4558 = vpack.c.b16 %v4454, %v4450
    %v4559 = vpack.c.b16 %v4455, %v4451
    %v4560 = vpack.c.b16 %v4456, %v4452
    %v4561 = vpack.c.b16 %v4461, %v4457
    %v4562 = vpack.c.b16 %v4462, %v4458
    %v4563 = vpack.c.b16 %v4463, %v4459
    %v4564 = vpack.c.b16 %v4464, %v4460
    %v4565 = vpack.c.b16 %v4469, %v4465
    %v4566 = vpack.c.b16 %v4470, %v4466
    %v4567 = vpack.c.b16 %v4471, %v4467
    %v4568 = vpack.c.b16 %v4472, %v4468
    %v4569 = vpack.c.b16 %v4477, %v4473
    %v4570 = vpack.c.b16 %v4478, %v4474
    %v4571 = vpack.c.b16 %v4479, %v4475
    %v4572 = vpack.c.b16 %v4480, %v4476
    %v4573 = vpack.c.b16 %v4485, %v4481
    %v4574 = vpack.c.b16 %v4486, %v4482
    %v4575 = vpack.c.b16 %v4487, %v4483
    %v4576 = vpack.c.b16 %v4488, %v4484
    %v4577 = vpack.c.b16 %v4493, %v4489
    %v4578 = vpack.c.b16 %v4494, %v4490
    %v4579 = vpack.c.b16 %v4495, %v4491
    %v4580 = vpack.c.b16 %v4496, %v4492
    %v4581 = vpack.c.b16 %v4501, %v4497
    %v4582 = vpack.c.b16 %v4502, %v4498
    %v4583 = vpack.c.b16 %v4503, %v4499
    %v4584 = vpack.c.b16 %v4504, %v4500
    %v4585 = vpack.c.b16 %v4509, %v4505
    %v4586 = vpack.c.b16 %v4510, %v4506
    %v4587 = vpack.c.b16 %v4511, %v4507
    %v4588 = vpack.c.b16 %v4512, %v4508
    %v4589 = vpack.c.b16 %v4517, %v4513
    %v4590 = vpack.c.b16 %v4518, %v4514
    %v4591 = vpack.c.b16 %v4519, %v4515
    %v4592 = vpack.c.b16 %v4520, %v4516
    %v4593 = vpack.c.b16 %v4525, %v4521
    %v4594 = vpack.c.b16 %v4526, %v4522
    %v4595 = vpack.c.b16 %v4527, %v4523
    %v4596 = vpack.c.b16 %v4528, %v4524
    %v4597 = vpack.c.b16 %v4533, %v4529
    %v4598 = vpack.c.b16 %v4534, %v4530
    %v4599 = vpack.c.b16 %v4535, %v4531
    %v4600 = vpack.c.b16 %v4536, %v4532
    %4665 = vmatprep.subr.bf16.mxu0 %v4566
    %4666 = vmatpush1.bf16.msra.mxu0 %v4565
    %4667 = vmatprep.subr.bf16.mxu0 %v4562
    %4668 = vmatpush1.bf16.msra.mxu0 %v4561
    %4669 = vmatprep.subr.bf16.mxu0 %v4558
    %4670 = vmatpush1.bf16.msra.mxu0 %v4557
    %4671 = vmatprep.subr.bf16.mxu0 %v4554
    %4672 = vmatpush1.bf16.msra.mxu0 %v4553
    %4673 = vmatprep.subr.bf16.mxu0 %v4550
    %4674 = vmatpush1.bf16.msra.mxu0 %v4549
    %4675 = vmatprep.subr.bf16.mxu0 %v4546
    %4676 = vmatpush1.bf16.msra.mxu0 %v4545
    %4677 = vmatprep.subr.bf16.mxu0 %v4542
    %4678 = vmatpush1.bf16.msra.mxu0 %v4541
    %4679 = vmatprep.subr.bf16.mxu0 %v4538
    %4680 = vmatpush1.bf16.msra.mxu0 %v4537
    %4681 = vmatprep.subr.bf16.mxu0 %v4598
    %4682 = vmatpush2.bf16.msra.mxu0 %v4597
    %4683 = vmatprep.subr.bf16.mxu0 %v4594
    %4684 = vmatpush2.bf16.msra.mxu0 %v4593
    %4685 = vmatprep.subr.bf16.mxu0 %v4590
    %4686 = vmatpush2.bf16.msra.mxu0 %v4589
    %4687 = vmatprep.subr.bf16.mxu0 %v4586
    %4688 = vmatpush2.bf16.msra.mxu0 %v4585
    %4689 = vmatprep.subr.bf16.mxu0 %v4582
    %4690 = vmatpush2.bf16.msra.mxu0 %v4581
    %4691 = vmatprep.subr.bf16.mxu0 %v4578
    %4692 = vmatpush2.bf16.msra.mxu0 %v4577
    %4693 = vmatprep.subr.bf16.mxu0 %v4574
    %4694 = vmatpush2.bf16.msra.mxu0 %v4573
    %4695 = vmatprep.subr.bf16.mxu0 %v4570
    %4696 = vmatpush2.bf16.msra.mxu0 %v4569
    %4697 = vmatprep.mubr.bf16.mxu0 %v4258
    %4698 = vmatmul.mubr.bf16.gmra.mxu0 %v4255
    %v4699 = vpop.f32.mrf.mxu0
    %v4700 = vadd.f32 %v4328, %v4699
    %v4701 = vpop.f32.mrf.mxu0
    %v4702 = vadd.f32 %v4332, %v4701
    %v4703 = vpop.f32.mrf.mxu0
    %v4704 = vpop.f32.mrf.mxu0
    %4705 = vdwg.mxu0
    %4706 = vmatprep.subr.bf16.mxu0 %v4568
    %4707 = vmatpush1.bf16.msra.mxu0 %v4567
    %4708 = vmatprep.subr.bf16.mxu0 %v4564
    %4709 = vmatpush1.bf16.msra.mxu0 %v4563
    %4710 = vmatprep.subr.bf16.mxu0 %v4560
    %4711 = vmatpush1.bf16.msra.mxu0 %v4559
    %4712 = vmatprep.subr.bf16.mxu0 %v4556
    %4713 = vmatpush1.bf16.msra.mxu0 %v4555
    %4714 = vmatprep.subr.bf16.mxu0 %v4552
    %4715 = vmatpush1.bf16.msra.mxu0 %v4551
    %4716 = vmatprep.subr.bf16.mxu0 %v4548
    %4717 = vmatpush1.bf16.msra.mxu0 %v4547
    %4718 = vmatprep.subr.bf16.mxu0 %v4544
    %4719 = vmatpush1.bf16.msra.mxu0 %v4543
    %4720 = vmatprep.subr.bf16.mxu0 %v4540
    %4721 = vmatpush1.bf16.msra.mxu0 %v4539
    %4722 = vmatprep.subr.bf16.mxu0 %v4600
    %4723 = vmatpush2.bf16.msra.mxu0 %v4599
    %4724 = vmatprep.subr.bf16.mxu0 %v4596
    %4725 = vmatpush2.bf16.msra.mxu0 %v4595
    %4726 = vmatprep.subr.bf16.mxu0 %v4592
    %4727 = vmatpush2.bf16.msra.mxu0 %v4591
    %4728 = vmatprep.subr.bf16.mxu0 %v4588
    %4729 = vmatpush2.bf16.msra.mxu0 %v4587
    %4730 = vmatprep.subr.bf16.mxu0 %v4584
    %4731 = vmatpush2.bf16.msra.mxu0 %v4583
    %4732 = vmatprep.subr.bf16.mxu0 %v4580
    %4733 = vmatpush2.bf16.msra.mxu0 %v4579
    %4734 = vmatprep.subr.bf16.mxu0 %v4576
    %4735 = vmatpush2.bf16.msra.mxu0 %v4575
    %4736 = vmatprep.subr.bf16.mxu0 %v4572
    %4737 = vmatpush2.bf16.msra.mxu0 %v4571
    %4738 = vmatprep.mubr.bf16.mxu0 %v4258
    %4739 = vmatmul.mubr.bf16.gmra.mxu0 %v4255
    %v4740 = vpop.f32.mrf.mxu0
    %v4741 = vadd.f32 %v4336, %v4740
    %v4742 = vpop.f32.mrf.mxu0
    %v4743 = vadd.f32 %v4340, %v4742
    %v4744 = vpop.f32.mrf.mxu0
    %v4745 = vpop.f32.mrf.mxu0
    %4746 = vdwg.mxu0
    %v4747 = vxor.u32 %v4700, 2147483648
    %v4748 = vxor.u32 %v4702, 2147483648
    %v4749 = vxor.u32 %v4741, 2147483648
    %v4750 = vmul.f32 %v4747, 1.442695
    %v4751 = vpow.pop %v4750
    %v4752 = vmul.f32 %v4748, 1.442695
    %v4753 = vpow.pop %v4752
    %v4754 = vmul.f32 %v4749, 1.442695
    %v4755 = vpow.pop %v4754
    %v4756 = vadd.f32 %v4751, 1.0
    %v4757 = vadd.f32 %v4753, 1.0
    %v4758 = vadd.f32 %v4755, 1.0
    %v4759 = vrcp.pop %v4756
    %v4760 = vmul.f32 1.0, %v4759
    %v4761 = vrcp.pop %v4757
    %v4762 = vmul.f32 1.0, %v4761
    %v4763 = vrcp.pop %v4758
    %v4764 = vmul.f32 1.0, %v4763
    %v4765 = vtanh.pop %v4743
    %v4766 = vmul.f32 %v4762, %v4257
    %v4767 = vmul.f32 %v4760, %v4765
    %v4768 = vadd.f32 %v4766, %v4767
    %v4769 = vtanh.pop %v4768
    %v4770 = vmul.f32 %v4764, %v4769
    %4771 = vst [vmem:[#allocation11] sm:$0xff] %v4770
    %4772 = vst [vmem:[#allocation13] sm:$0xff] %v4768
    %v4773 = vpack.c.bf16 %v4770, %v4770
    %v4774 = vld [vmem:[%s617] sm:$0xff]
    %v4775 = vld [vmem:[%s619] sm:$0xff]
    %v4776 = vpack.c.bf16 %v4774, %v4774
    %v4777 = vld [vmem:[#allocation8] sm:$0xff]
    %v4778 = vld [vmem:[#allocation8 + $0x8] sm:$0xff]
    %v4779 = vld [vmem:[#allocation8 + $0x10] sm:$0xff]
    %v4780 = vld [vmem:[#allocation8 + $0x18] sm:$0xff]
    %v4781 = vld [vmem:[#allocation8 + $0x20] sm:$0xff]
    %v4782 = vld [vmem:[#allocation8 + $0x28] sm:$0xff]
    %v4783 = vld [vmem:[#allocation8 + $0x30] sm:$0xff]
    %v4784 = vld [vmem:[#allocation8 + $0x38] sm:$0xff]
    %v4785 = vld [vmem:[#allocation8 + $0x40] sm:$0xff]
    %v4786 = vld [vmem:[#allocation8 + $0x48] sm:$0xff]
    %v4787 = vld [vmem:[#allocation8 + $0x50] sm:$0xff]
    %v4788 = vld [vmem:[#allocation8 + $0x58] sm:$0xff]
    %v4789 = vld [vmem:[#allocation8 + $0x60] sm:$0xff]
    %v4790 = vld [vmem:[#allocation8 + $0x68] sm:$0xff]
    %v4791 = vld [vmem:[#allocation8 + $0x70] sm:$0xff]
    %v4792 = vld [vmem:[#allocation8 + $0x78] sm:$0xff]
    %v4793 = vld [vmem:[#allocation8 + $0x80] sm:$0xff]
    %v4794 = vld [vmem:[#allocation8 + $0x88] sm:$0xff]
    %v4795 = vld [vmem:[#allocation8 + $0x90] sm:$0xff]
    %v4796 = vld [vmem:[#allocation8 + $0x98] sm:$0xff]
    %v4797 = vld [vmem:[#allocation8 + $0xa0] sm:$0xff]
    %v4798 = vld [vmem:[#allocation8 + $0xa8] sm:$0xff]
    %v4799 = vld [vmem:[#allocation8 + $0xb0] sm:$0xff]
    %v4800 = vld [vmem:[#allocation8 + $0xb8] sm:$0xff]
    %v4801 = vld [vmem:[#allocation8 + $0xc0] sm:$0xff]
    %v4802 = vld [vmem:[#allocation8 + $0xc8] sm:$0xff]
    %v4803 = vld [vmem:[#allocation8 + $0xd0] sm:$0xff]
    %v4804 = vld [vmem:[#allocation8 + $0xd8] sm:$0xff]
    %v4805 = vld [vmem:[#allocation8 + $0xe0] sm:$0xff]
    %v4806 = vld [vmem:[#allocation8 + $0xe8] sm:$0xff]
    %v4807 = vld [vmem:[#allocation8 + $0xf0] sm:$0xff]
    %v4808 = vld [vmem:[#allocation8 + $0xf8] sm:$0xff]
    %v4809 = vld [vmem:[#allocation8 + $0x100] sm:$0xff]
    %v4810 = vld [vmem:[#allocation8 + $0x108] sm:$0xff]
    %v4811 = vld [vmem:[#allocation8 + $0x110] sm:$0xff]
    %v4812 = vld [vmem:[#allocation8 + $0x118] sm:$0xff]
    %v4813 = vld [vmem:[#allocation8 + $0x120] sm:$0xff]
    %v4814 = vld [vmem:[#allocation8 + $0x128] sm:$0xff]
    %v4815 = vld [vmem:[#allocation8 + $0x130] sm:$0xff]
    %v4816 = vld [vmem:[#allocation8 + $0x138] sm:$0xff]
    %v4817 = vld [vmem:[#allocation8 + $0x140] sm:$0xff]
    %v4818 = vld [vmem:[#allocation8 + $0x148] sm:$0xff]
    %v4819 = vld [vmem:[#allocation8 + $0x150] sm:$0xff]
    %v4820 = vld [vmem:[#allocation8 + $0x158] sm:$0xff]
    %v4821 = vld [vmem:[#allocation8 + $0x160] sm:$0xff]
    %v4822 = vld [vmem:[#allocation8 + $0x168] sm:$0xff]
    %v4823 = vld [vmem:[#allocation8 + $0x170] sm:$0xff]
    %v4824 = vld [vmem:[#allocation8 + $0x178] sm:$0xff]
    %v4825 = vld [vmem:[#allocation8 + $0x180] sm:$0xff]
    %v4826 = vld [vmem:[#allocation8 + $0x188] sm:$0xff]
    %v4827 = vld [vmem:[#allocation8 + $0x190] sm:$0xff]
    %v4828 = vld [vmem:[#allocation8 + $0x198] sm:$0xff]
    %v4829 = vld [vmem:[#allocation8 + $0x1a0] sm:$0xff]
    %v4830 = vld [vmem:[#allocation8 + $0x1a8] sm:$0xff]
    %v4831 = vld [vmem:[#allocation8 + $0x1b0] sm:$0xff]
    %v4832 = vld [vmem:[#allocation8 + $0x1b8] sm:$0xff]
    %v4833 = vld [vmem:[#allocation8 + $0x1c0] sm:$0xff]
    %v4834 = vld [vmem:[#allocation8 + $0x1c8] sm:$0xff]
    %v4835 = vld [vmem:[#allocation8 + $0x1d0] sm:$0xff]
    %v4836 = vld [vmem:[#allocation8 + $0x1d8] sm:$0xff]
    %v4837 = vld [vmem:[#allocation8 + $0x1e0] sm:$0xff]
    %v4838 = vld [vmem:[#allocation8 + $0x1e8] sm:$0xff]
    %v4839 = vld [vmem:[#allocation8 + $0x1f0] sm:$0xff]
    %v4840 = vld [vmem:[#allocation8 + $0x1f8] sm:$0xff]
    %v4841 = vld [vmem:[%s6] sm:$0xf]
    %v4843 = vlaneseq
    %v4844 = vshrl.u32 %v4843, 7
    %v4845 = vsub.s32 0, %v4844
    %v4846 = vrot.slane %v4841, %v4845
    %v4847 = vlaneseq
    %v4848 = vshrl.u32 %v4847, 7
    %v4849 = vsub.s32 1, %v4848
    %v4850 = vrot.slane %v4841, %v4849
    %v4851 = vlaneseq
    %v4852 = vshrl.u32 %v4851, 7
    %v4853 = vsub.s32 2, %v4852
    %v4854 = vrot.slane %v4841, %v4853
    %v4855 = vlaneseq
    %v4856 = vshrl.u32 %v4855, 7
    %v4857 = vsub.s32 3, %v4856
    %v4858 = vrot.slane %v4841, %v4857
    %v4927 = vunpack.c.l.b16 %v4777
    %v4928 = vunpack.c.h.b16 %v4777
    %v4929 = vunpack.c.l.b16 %v4778
    %v4930 = vunpack.c.h.b16 %v4778
    %v4931 = vunpack.c.l.b16 %v4779
    %v4932 = vunpack.c.h.b16 %v4779
    %v4933 = vunpack.c.l.b16 %v4780
    %v4934 = vunpack.c.h.b16 %v4780
    %v4935 = vunpack.c.l.b16 %v4781
    %v4936 = vunpack.c.h.b16 %v4781
    %v4937 = vunpack.c.l.b16 %v4782
    %v4938 = vunpack.c.h.b16 %v4782
    %v4939 = vunpack.c.l.b16 %v4783
    %v4940 = vunpack.c.h.b16 %v4783
    %v4941 = vunpack.c.l.b16 %v4784
    %v4942 = vunpack.c.h.b16 %v4784
    %v4943 = vunpack.c.l.b16 %v4785
    %v4944 = vunpack.c.h.b16 %v4785
    %v4945 = vunpack.c.l.b16 %v4786
    %v4946 = vunpack.c.h.b16 %v4786
    %v4947 = vunpack.c.l.b16 %v4787
    %v4948 = vunpack.c.h.b16 %v4787
    %v4949 = vunpack.c.l.b16 %v4788
    %v4950 = vunpack.c.h.b16 %v4788
    %v4951 = vunpack.c.l.b16 %v4789
    %v4952 = vunpack.c.h.b16 %v4789
    %v4953 = vunpack.c.l.b16 %v4790
    %v4954 = vunpack.c.h.b16 %v4790
    %v4955 = vunpack.c.l.b16 %v4791
    %v4956 = vunpack.c.h.b16 %v4791
    %v4957 = vunpack.c.l.b16 %v4792
    %v4958 = vunpack.c.h.b16 %v4792
    %v4959 = vunpack.c.l.b16 %v4793
    %v4960 = vunpack.c.h.b16 %v4793
    %v4961 = vunpack.c.l.b16 %v4794
    %v4962 = vunpack.c.h.b16 %v4794
    %v4963 = vunpack.c.l.b16 %v4795
    %v4964 = vunpack.c.h.b16 %v4795
    %v4965 = vunpack.c.l.b16 %v4796
    %v4966 = vunpack.c.h.b16 %v4796
    %v4967 = vunpack.c.l.b16 %v4797
    %v4968 = vunpack.c.h.b16 %v4797
    %v4969 = vunpack.c.l.b16 %v4798
    %v4970 = vunpack.c.h.b16 %v4798
    %v4971 = vunpack.c.l.b16 %v4799
    %v4972 = vunpack.c.h.b16 %v4799
    %v4973 = vunpack.c.l.b16 %v4800
    %v4974 = vunpack.c.h.b16 %v4800
    %v4975 = vunpack.c.l.b16 %v4801
    %v4976 = vunpack.c.h.b16 %v4801
    %v4977 = vunpack.c.l.b16 %v4802
    %v4978 = vunpack.c.h.b16 %v4802
    %v4979 = vunpack.c.l.b16 %v4803
    %v4980 = vunpack.c.h.b16 %v4803
    %v4981 = vunpack.c.l.b16 %v4804
    %v4982 = vunpack.c.h.b16 %v4804
    %v4983 = vunpack.c.l.b16 %v4805
    %v4984 = vunpack.c.h.b16 %v4805
    %v4985 = vunpack.c.l.b16 %v4806
    %v4986 = vunpack.c.h.b16 %v4806
    %v4987 = vunpack.c.l.b16 %v4807
    %v4988 = vunpack.c.h.b16 %v4807
    %v4989 = vunpack.c.l.b16 %v4808
    %v4990 = vunpack.c.h.b16 %v4808
    %v4991 = vunpack.c.l.b16 %v4809
    %v4992 = vunpack.c.h.b16 %v4809
    %v4993 = vunpack.c.l.b16 %v4810
    %v4994 = vunpack.c.h.b16 %v4810
    %v4995 = vunpack.c.l.b16 %v4811
    %v4996 = vunpack.c.h.b16 %v4811
    %v4997 = vunpack.c.l.b16 %v4812
    %v4998 = vunpack.c.h.b16 %v4812
    %v4999 = vunpack.c.l.b16 %v4813
    %v5000 = vunpack.c.h.b16 %v4813
    %v5001 = vunpack.c.l.b16 %v4814
    %v5002 = vunpack.c.h.b16 %v4814
    %v5003 = vunpack.c.l.b16 %v4815
    %v5004 = vunpack.c.h.b16 %v4815
    %v5005 = vunpack.c.l.b16 %v4816
    %v5006 = vunpack.c.h.b16 %v4816
    %v5007 = vunpack.c.l.b16 %v4817
    %v5008 = vunpack.c.h.b16 %v4817
    %v5009 = vunpack.c.l.b16 %v4818
    %v5010 = vunpack.c.h.b16 %v4818
    %v5011 = vunpack.c.l.b16 %v4819
    %v5012 = vunpack.c.h.b16 %v4819
    %v5013 = vunpack.c.l.b16 %v4820
    %v5014 = vunpack.c.h.b16 %v4820
    %v5015 = vunpack.c.l.b16 %v4821
    %v5016 = vunpack.c.h.b16 %v4821
    %v5017 = vunpack.c.l.b16 %v4822
    %v5018 = vunpack.c.h.b16 %v4822
    %v5019 = vunpack.c.l.b16 %v4823
    %v5020 = vunpack.c.h.b16 %v4823
    %v5021 = vunpack.c.l.b16 %v4824
    %v5022 = vunpack.c.h.b16 %v4824
    %v5023 = vunpack.c.l.b16 %v4825
    %v5024 = vunpack.c.h.b16 %v4825
    %v5025 = vunpack.c.l.b16 %v4826
    %v5026 = vunpack.c.h.b16 %v4826
    %v5027 = vunpack.c.l.b16 %v4827
    %v5028 = vunpack.c.h.b16 %v4827
    %v5029 = vunpack.c.l.b16 %v4828
    %v5030 = vunpack.c.h.b16 %v4828
    %v5031 = vunpack.c.l.b16 %v4829
    %v5032 = vunpack.c.h.b16 %v4829
    %v5033 = vunpack.c.l.b16 %v4830
    %v5034 = vunpack.c.h.b16 %v4830
    %v5035 = vunpack.c.l.b16 %v4831
    %v5036 = vunpack.c.h.b16 %v4831
    %v5037 = vunpack.c.l.b16 %v4832
    %v5038 = vunpack.c.h.b16 %v4832
    %v5039 = vunpack.c.l.b16 %v4833
    %v5040 = vunpack.c.h.b16 %v4833
    %v5041 = vunpack.c.l.b16 %v4834
    %v5042 = vunpack.c.h.b16 %v4834
    %v5043 = vunpack.c.l.b16 %v4835
    %v5044 = vunpack.c.h.b16 %v4835
    %v5045 = vunpack.c.l.b16 %v4836
    %v5046 = vunpack.c.h.b16 %v4836
    %v5047 = vunpack.c.l.b16 %v4837
    %v5048 = vunpack.c.h.b16 %v4837
    %v5049 = vunpack.c.l.b16 %v4838
    %v5050 = vunpack.c.h.b16 %v4838
    %v5051 = vunpack.c.l.b16 %v4839
    %v5052 = vunpack.c.h.b16 %v4839
    %v5053 = vunpack.c.l.b16 %v4840
    %v5054 = vunpack.c.h.b16 %v4840
    %v5055 = vpack.c.b16 %v4931, %v4927
    %v5056 = vpack.c.b16 %v4932, %v4928
    %v5057 = vpack.c.b16 %v4933, %v4929
    %v5058 = vpack.c.b16 %v4934, %v4930
    %v5059 = vpack.c.b16 %v4939, %v4935
    %v5060 = vpack.c.b16 %v4940, %v4936
    %v5061 = vpack.c.b16 %v4941, %v4937
    %v5062 = vpack.c.b16 %v4942, %v4938
    %v5063 = vpack.c.b16 %v4947, %v4943
    %v5064 = vpack.c.b16 %v4948, %v4944
    %v5065 = vpack.c.b16 %v4949, %v4945
    %v5066 = vpack.c.b16 %v4950, %v4946
    %v5067 = vpack.c.b16 %v4955, %v4951
    %v5068 = vpack.c.b16 %v4956, %v4952
    %v5069 = vpack.c.b16 %v4957, %v4953
    %v5070 = vpack.c.b16 %v4958, %v4954
    %v5071 = vpack.c.b16 %v4963, %v4959
    %v5072 = vpack.c.b16 %v4964, %v4960
    %v5073 = vpack.c.b16 %v4965, %v4961
    %v5074 = vpack.c.b16 %v4966, %v4962
    %v5075 = vpack.c.b16 %v4971, %v4967
    %v5076 = vpack.c.b16 %v4972, %v4968
    %v5077 = vpack.c.b16 %v4973, %v4969
    %v5078 = vpack.c.b16 %v4974, %v4970
    %v5079 = vpack.c.b16 %v4979, %v4975
    %v5080 = vpack.c.b16 %v4980, %v4976
    %v5081 = vpack.c.b16 %v4981, %v4977
    %v5082 = vpack.c.b16 %v4982, %v4978
    %v5083 = vpack.c.b16 %v4987, %v4983
    %v5084 = vpack.c.b16 %v4988, %v4984
    %v5085 = vpack.c.b16 %v4989, %v4985
    %v5086 = vpack.c.b16 %v4990, %v4986
    %v5087 = vpack.c.b16 %v4995, %v4991
    %v5088 = vpack.c.b16 %v4996, %v4992
    %v5089 = vpack.c.b16 %v4997, %v4993
    %v5090 = vpack.c.b16 %v4998, %v4994
    %v5091 = vpack.c.b16 %v5003, %v4999
    %v5092 = vpack.c.b16 %v5004, %v5000
    %v5093 = vpack.c.b16 %v5005, %v5001
    %v5094 = vpack.c.b16 %v5006, %v5002
    %v5095 = vpack.c.b16 %v5011, %v5007
    %v5096 = vpack.c.b16 %v5012, %v5008
    %v5097 = vpack.c.b16 %v5013, %v5009
    %v5098 = vpack.c.b16 %v5014, %v5010
    %v5099 = vpack.c.b16 %v5019, %v5015
    %v5100 = vpack.c.b16 %v5020, %v5016
    %v5101 = vpack.c.b16 %v5021, %v5017
    %v5102 = vpack.c.b16 %v5022, %v5018
    %v5103 = vpack.c.b16 %v5027, %v5023
    %v5104 = vpack.c.b16 %v5028, %v5024
    %v5105 = vpack.c.b16 %v5029, %v5025
    %v5106 = vpack.c.b16 %v5030, %v5026
    %v5107 = vpack.c.b16 %v5035, %v5031
    %v5108 = vpack.c.b16 %v5036, %v5032
    %v5109 = vpack.c.b16 %v5037, %v5033
    %v5110 = vpack.c.b16 %v5038, %v5034
    %v5111 = vpack.c.b16 %v5043, %v5039
    %v5112 = vpack.c.b16 %v5044, %v5040
    %v5113 = vpack.c.b16 %v5045, %v5041
    %v5114 = vpack.c.b16 %v5046, %v5042
    %v5115 = vpack.c.b16 %v5051, %v5047
    %v5116 = vpack.c.b16 %v5052, %v5048
    %v5117 = vpack.c.b16 %v5053, %v5049
    %v5118 = vpack.c.b16 %v5054, %v5050
    %5183 = vmatprep.subr.bf16.mxu0 %v5084
    %5184 = vmatpush1.bf16.msra.mxu0 %v5083
    %5185 = vmatprep.subr.bf16.mxu0 %v5080
    %5186 = vmatpush1.bf16.msra.mxu0 %v5079
    %5187 = vmatprep.subr.bf16.mxu0 %v5076
    %5188 = vmatpush1.bf16.msra.mxu0 %v5075
    %5189 = vmatprep.subr.bf16.mxu0 %v5072
    %5190 = vmatpush1.bf16.msra.mxu0 %v5071
    %5191 = vmatprep.subr.bf16.mxu0 %v5068
    %5192 = vmatpush1.bf16.msra.mxu0 %v5067
    %5193 = vmatprep.subr.bf16.mxu0 %v5064
    %5194 = vmatpush1.bf16.msra.mxu0 %v5063
    %5195 = vmatprep.subr.bf16.mxu0 %v5060
    %5196 = vmatpush1.bf16.msra.mxu0 %v5059
    %5197 = vmatprep.subr.bf16.mxu0 %v5056
    %5198 = vmatpush1.bf16.msra.mxu0 %v5055
    %5199 = vmatprep.subr.bf16.mxu0 %v5116
    %5200 = vmatpush2.bf16.msra.mxu0 %v5115
    %5201 = vmatprep.subr.bf16.mxu0 %v5112
    %5202 = vmatpush2.bf16.msra.mxu0 %v5111
    %5203 = vmatprep.subr.bf16.mxu0 %v5108
    %5204 = vmatpush2.bf16.msra.mxu0 %v5107
    %5205 = vmatprep.subr.bf16.mxu0 %v5104
    %5206 = vmatpush2.bf16.msra.mxu0 %v5103
    %5207 = vmatprep.subr.bf16.mxu0 %v5100
    %5208 = vmatpush2.bf16.msra.mxu0 %v5099
    %5209 = vmatprep.subr.bf16.mxu0 %v5096
    %5210 = vmatpush2.bf16.msra.mxu0 %v5095
    %5211 = vmatprep.subr.bf16.mxu0 %v5092
    %5212 = vmatpush2.bf16.msra.mxu0 %v5091
    %5213 = vmatprep.subr.bf16.mxu0 %v5088
    %5214 = vmatpush2.bf16.msra.mxu0 %v5087
    %5215 = vmatprep.mubr.bf16.mxu0 %v4776
    %5216 = vmatmul.mubr.bf16.gmra.mxu0 %v4773
    %v5217 = vpop.f32.mrf.mxu0
    %v5218 = vadd.f32 %v4846, %v5217
    %v5219 = vpop.f32.mrf.mxu0
    %v5220 = vadd.f32 %v4850, %v5219
    %v5221 = vpop.f32.mrf.mxu0
    %v5222 = vpop.f32.mrf.mxu0
    %5223 = vdwg.mxu0
    %5224 = vmatprep.subr.bf16.mxu0 %v5086
    %5225 = vmatpush1.bf16.msra.mxu0 %v5085
    %5226 = vmatprep.subr.bf16.mxu0 %v5082
    %5227 = vmatpush1.bf16.msra.mxu0 %v5081
    %5228 = vmatprep.subr.bf16.mxu0 %v5078
    %5229 = vmatpush1.bf16.msra.mxu0 %v5077
    %5230 = vmatprep.subr.bf16.mxu0 %v5074
    %5231 = vmatpush1.bf16.msra.mxu0 %v5073
    %5232 = vmatprep.subr.bf16.mxu0 %v5070
    %5233 = vmatpush1.bf16.msra.mxu0 %v5069
    %5234 = vmatprep.subr.bf16.mxu0 %v5066
    %5235 = vmatpush1.bf16.msra.mxu0 %v5065
    %5236 = vmatprep.subr.bf16.mxu0 %v5062
    %5237 = vmatpush1.bf16.msra.mxu0 %v5061
    %5238 = vmatprep.subr.bf16.mxu0 %v5058
    %5239 = vmatpush1.bf16.msra.mxu0 %v5057
    %5240 = vmatprep.subr.bf16.mxu0 %v5118
    %5241 = vmatpush2.bf16.msra.mxu0 %v5117
    %5242 = vmatprep.subr.bf16.mxu0 %v5114
    %5243 = vmatpush2.bf16.msra.mxu0 %v5113
    %5244 = vmatprep.subr.bf16.mxu0 %v5110
    %5245 = vmatpush2.bf16.msra.mxu0 %v5109
    %5246 = vmatprep.subr.bf16.mxu0 %v5106
    %5247 = vmatpush2.bf16.msra.mxu0 %v5105
    %5248 = vmatprep.subr.bf16.mxu0 %v5102
    %5249 = vmatpush2.bf16.msra.mxu0 %v5101
    %5250 = vmatprep.subr.bf16.mxu0 %v5098
    %5251 = vmatpush2.bf16.msra.mxu0 %v5097
    %5252 = vmatprep.subr.bf16.mxu0 %v5094
    %5253 = vmatpush2.bf16.msra.mxu0 %v5093
    %5254 = vmatprep.subr.bf16.mxu0 %v5090
    %5255 = vmatpush2.bf16.msra.mxu0 %v5089
    %5256 = vmatprep.mubr.bf16.mxu0 %v4776
    %5257 = vmatmul.mubr.bf16.gmra.mxu0 %v4773
    %v5258 = vpop.f32.mrf.mxu0
    %v5259 = vadd.f32 %v4854, %v5258
    %v5260 = vpop.f32.mrf.mxu0
    %v5261 = vadd.f32 %v4858, %v5260
    %v5262 = vpop.f32.mrf.mxu0
    %v5263 = vpop.f32.mrf.mxu0
    %5264 = vdwg.mxu0
    %v5265 = vxor.u32 %v5218, 2147483648
    %v5266 = vxor.u32 %v5220, 2147483648
    %v5267 = vxor.u32 %v5259, 2147483648
    %v5268 = vmul.f32 %v5265, 1.442695
    %v5269 = vpow.pop %v5268
    %v5270 = vmul.f32 %v5266, 1.442695
    %v5271 = vpow.pop %v5270
    %v5272 = vmul.f32 %v5267, 1.442695
    %v5273 = vpow.pop %v5272
    %v5274 = vadd.f32 %v5269, 1.0
    %v5275 = vadd.f32 %v5271, 1.0
    %v5276 = vadd.f32 %v5273, 1.0
    %v5277 = vrcp.pop %v5274
    %v5278 = vmul.f32 1.0, %v5277
    %v5279 = vrcp.pop %v5275
    %v5280 = vmul.f32 1.0, %v5279
    %v5281 = vrcp.pop %v5276
    %v5282 = vmul.f32 1.0, %v5281
    %v5283 = vtanh.pop %v5261
    %v5284 = vmul.f32 %v5280, %v4775
    %v5285 = vmul.f32 %v5278, %v5283
    %v5286 = vadd.f32 %v5284, %v5285
    %v5287 = vtanh.pop %v5286
    %v5288 = vmul.f32 %v5282, %v5287
    %5289 = vst [vmem:[%s617] sm:$0xff] %v5288
    %5290 = vst [vmem:[%s619] sm:$0xff] %v5286
    %s5291 = scalar_lea.vmem [#allocation10], 32
    %5292 = vst [vmem:[%s5291] sm:$0xff] %v5288
    %s5293 = scalar_lea.vmem %s0, 20
    %v5294 = vld [vmem:[%s5293] sm:$0xf]
    %v5295 = vld [vmem:[#allocation11] sm:$0xff]
    %v5296 = vld [vmem:[#allocation13] sm:$0xff]
    %v5297 = vpack.c.bf16 %v5295, %v5295
    %v5298 = vld [vmem:[#allocation7] sm:$0xff]
    %v5299 = vld [vmem:[#allocation7 + $0x8] sm:$0xff]
    %v5300 = vld [vmem:[#allocation7 + $0x10] sm:$0xff]
    %v5301 = vld [vmem:[#allocation7 + $0x18] sm:$0xff]
    %v5302 = vld [vmem:[#allocation7 + $0x20] sm:$0xff]
    %v5303 = vld [vmem:[#allocation7 + $0x28] sm:$0xff]
    %v5304 = vld [vmem:[#allocation7 + $0x30] sm:$0xff]
    %v5305 = vld [vmem:[#allocation7 + $0x38] sm:$0xff]
    %v5306 = vld [vmem:[#allocation7 + $0x40] sm:$0xff]
    %v5307 = vld [vmem:[#allocation7 + $0x48] sm:$0xff]
    %v5308 = vld [vmem:[#allocation7 + $0x50] sm:$0xff]
    %v5309 = vld [vmem:[#allocation7 + $0x58] sm:$0xff]
    %v5310 = vld [vmem:[#allocation7 + $0x60] sm:$0xff]
    %v5311 = vld [vmem:[#allocation7 + $0x68] sm:$0xff]
    %v5312 = vld [vmem:[#allocation7 + $0x70] sm:$0xff]
    %v5313 = vld [vmem:[#allocation7 + $0x78] sm:$0xff]
    %v5314 = vld [vmem:[#allocation7 + $0x80] sm:$0xff]
    %v5315 = vld [vmem:[#allocation7 + $0x88] sm:$0xff]
    %v5316 = vld [vmem:[#allocation7 + $0x90] sm:$0xff]
    %v5317 = vld [vmem:[#allocation7 + $0x98] sm:$0xff]
    %v5318 = vld [vmem:[#allocation7 + $0xa0] sm:$0xff]
    %v5319 = vld [vmem:[#allocation7 + $0xa8] sm:$0xff]
    %v5320 = vld [vmem:[#allocation7 + $0xb0] sm:$0xff]
    %v5321 = vld [vmem:[#allocation7 + $0xb8] sm:$0xff]
    %v5322 = vld [vmem:[#allocation7 + $0xc0] sm:$0xff]
    %v5323 = vld [vmem:[#allocation7 + $0xc8] sm:$0xff]
    %v5324 = vld [vmem:[#allocation7 + $0xd0] sm:$0xff]
    %v5325 = vld [vmem:[#allocation7 + $0xd8] sm:$0xff]
    %v5326 = vld [vmem:[#allocation7 + $0xe0] sm:$0xff]
    %v5327 = vld [vmem:[#allocation7 + $0xe8] sm:$0xff]
    %v5328 = vld [vmem:[#allocation7 + $0xf0] sm:$0xff]
    %v5329 = vld [vmem:[#allocation7 + $0xf8] sm:$0xff]
    %v5330 = vld [vmem:[#allocation7 + $0x100] sm:$0xff]
    %v5331 = vld [vmem:[#allocation7 + $0x108] sm:$0xff]
    %v5332 = vld [vmem:[#allocation7 + $0x110] sm:$0xff]
    %v5333 = vld [vmem:[#allocation7 + $0x118] sm:$0xff]
    %v5334 = vld [vmem:[#allocation7 + $0x120] sm:$0xff]
    %v5335 = vld [vmem:[#allocation7 + $0x128] sm:$0xff]
    %v5336 = vld [vmem:[#allocation7 + $0x130] sm:$0xff]
    %v5337 = vld [vmem:[#allocation7 + $0x138] sm:$0xff]
    %v5338 = vld [vmem:[#allocation7 + $0x140] sm:$0xff]
    %v5339 = vld [vmem:[#allocation7 + $0x148] sm:$0xff]
    %v5340 = vld [vmem:[#allocation7 + $0x150] sm:$0xff]
    %v5341 = vld [vmem:[#allocation7 + $0x158] sm:$0xff]
    %v5342 = vld [vmem:[#allocation7 + $0x160] sm:$0xff]
    %v5343 = vld [vmem:[#allocation7 + $0x168] sm:$0xff]
    %v5344 = vld [vmem:[#allocation7 + $0x170] sm:$0xff]
    %v5345 = vld [vmem:[#allocation7 + $0x178] sm:$0xff]
    %v5346 = vld [vmem:[#allocation7 + $0x180] sm:$0xff]
    %v5347 = vld [vmem:[#allocation7 + $0x188] sm:$0xff]
    %v5348 = vld [vmem:[#allocation7 + $0x190] sm:$0xff]
    %v5349 = vld [vmem:[#allocation7 + $0x198] sm:$0xff]
    %v5350 = vld [vmem:[#allocation7 + $0x1a0] sm:$0xff]
    %v5351 = vld [vmem:[#allocation7 + $0x1a8] sm:$0xff]
    %v5352 = vld [vmem:[#allocation7 + $0x1b0] sm:$0xff]
    %v5353 = vld [vmem:[#allocation7 + $0x1b8] sm:$0xff]
    %v5354 = vld [vmem:[#allocation7 + $0x1c0] sm:$0xff]
    %v5355 = vld [vmem:[#allocation7 + $0x1c8] sm:$0xff]
    %v5356 = vld [vmem:[#allocation7 + $0x1d0] sm:$0xff]
    %v5357 = vld [vmem:[#allocation7 + $0x1d8] sm:$0xff]
    %v5358 = vld [vmem:[#allocation7 + $0x1e0] sm:$0xff]
    %v5359 = vld [vmem:[#allocation7 + $0x1e8] sm:$0xff]
    %v5360 = vld [vmem:[#allocation7 + $0x1f0] sm:$0xff]
    %v5361 = vld [vmem:[#allocation7 + $0x1f8] sm:$0xff]
    %v5362 = vld [vmem:[%s5] sm:$0xf]
    %v5364 = vlaneseq
    %v5365 = vshrl.u32 %v5364, 7
    %v5366 = vsub.s32 0, %v5365
    %v5367 = vrot.slane %v5362, %v5366
    %v5368 = vlaneseq
    %v5369 = vshrl.u32 %v5368, 7
    %v5370 = vsub.s32 1, %v5369
    %v5371 = vrot.slane %v5362, %v5370
    %v5372 = vlaneseq
    %v5373 = vshrl.u32 %v5372, 7
    %v5374 = vsub.s32 2, %v5373
    %v5375 = vrot.slane %v5362, %v5374
    %v5376 = vlaneseq
    %v5377 = vshrl.u32 %v5376, 7
    %v5378 = vsub.s32 3, %v5377
    %v5379 = vrot.slane %v5362, %v5378
    %v5448 = vunpack.c.l.b16 %v5298
    %v5449 = vunpack.c.h.b16 %v5298
    %v5450 = vunpack.c.l.b16 %v5299
    %v5451 = vunpack.c.h.b16 %v5299
    %v5452 = vunpack.c.l.b16 %v5300
    %v5453 = vunpack.c.h.b16 %v5300
    %v5454 = vunpack.c.l.b16 %v5301
    %v5455 = vunpack.c.h.b16 %v5301
    %v5456 = vunpack.c.l.b16 %v5302
    %v5457 = vunpack.c.h.b16 %v5302
    %v5458 = vunpack.c.l.b16 %v5303
    %v5459 = vunpack.c.h.b16 %v5303
    %v5460 = vunpack.c.l.b16 %v5304
    %v5461 = vunpack.c.h.b16 %v5304
    %v5462 = vunpack.c.l.b16 %v5305
    %v5463 = vunpack.c.h.b16 %v5305
    %v5464 = vunpack.c.l.b16 %v5306
    %v5465 = vunpack.c.h.b16 %v5306
    %v5466 = vunpack.c.l.b16 %v5307
    %v5467 = vunpack.c.h.b16 %v5307
    %v5468 = vunpack.c.l.b16 %v5308
    %v5469 = vunpack.c.h.b16 %v5308
    %v5470 = vunpack.c.l.b16 %v5309
    %v5471 = vunpack.c.h.b16 %v5309
    %v5472 = vunpack.c.l.b16 %v5310
    %v5473 = vunpack.c.h.b16 %v5310
    %v5474 = vunpack.c.l.b16 %v5311
    %v5475 = vunpack.c.h.b16 %v5311
    %v5476 = vunpack.c.l.b16 %v5312
    %v5477 = vunpack.c.h.b16 %v5312
    %v5478 = vunpack.c.l.b16 %v5313
    %v5479 = vunpack.c.h.b16 %v5313
    %v5480 = vunpack.c.l.b16 %v5314
    %v5481 = vunpack.c.h.b16 %v5314
    %v5482 = vunpack.c.l.b16 %v5315
    %v5483 = vunpack.c.h.b16 %v5315
    %v5484 = vunpack.c.l.b16 %v5316
    %v5485 = vunpack.c.h.b16 %v5316
    %v5486 = vunpack.c.l.b16 %v5317
    %v5487 = vunpack.c.h.b16 %v5317
    %v5488 = vunpack.c.l.b16 %v5318
    %v5489 = vunpack.c.h.b16 %v5318
    %v5490 = vunpack.c.l.b16 %v5319
    %v5491 = vunpack.c.h.b16 %v5319
    %v5492 = vunpack.c.l.b16 %v5320
    %v5493 = vunpack.c.h.b16 %v5320
    %v5494 = vunpack.c.l.b16 %v5321
    %v5495 = vunpack.c.h.b16 %v5321
    %v5496 = vunpack.c.l.b16 %v5322
    %v5497 = vunpack.c.h.b16 %v5322
    %v5498 = vunpack.c.l.b16 %v5323
    %v5499 = vunpack.c.h.b16 %v5323
    %v5500 = vunpack.c.l.b16 %v5324
    %v5501 = vunpack.c.h.b16 %v5324
    %v5502 = vunpack.c.l.b16 %v5325
    %v5503 = vunpack.c.h.b16 %v5325
    %v5504 = vunpack.c.l.b16 %v5326
    %v5505 = vunpack.c.h.b16 %v5326
    %v5506 = vunpack.c.l.b16 %v5327
    %v5507 = vunpack.c.h.b16 %v5327
    %v5508 = vunpack.c.l.b16 %v5328
    %v5509 = vunpack.c.h.b16 %v5328
    %v5510 = vunpack.c.l.b16 %v5329
    %v5511 = vunpack.c.h.b16 %v5329
    %v5512 = vunpack.c.l.b16 %v5330
    %v5513 = vunpack.c.h.b16 %v5330
    %v5514 = vunpack.c.l.b16 %v5331
    %v5515 = vunpack.c.h.b16 %v5331
    %v5516 = vunpack.c.l.b16 %v5332
    %v5517 = vunpack.c.h.b16 %v5332
    %v5518 = vunpack.c.l.b16 %v5333
    %v5519 = vunpack.c.h.b16 %v5333
    %v5520 = vunpack.c.l.b16 %v5334
    %v5521 = vunpack.c.h.b16 %v5334
    %v5522 = vunpack.c.l.b16 %v5335
    %v5523 = vunpack.c.h.b16 %v5335
    %v5524 = vunpack.c.l.b16 %v5336
    %v5525 = vunpack.c.h.b16 %v5336
    %v5526 = vunpack.c.l.b16 %v5337
    %v5527 = vunpack.c.h.b16 %v5337
    %v5528 = vunpack.c.l.b16 %v5338
    %v5529 = vunpack.c.h.b16 %v5338
    %v5530 = vunpack.c.l.b16 %v5339
    %v5531 = vunpack.c.h.b16 %v5339
    %v5532 = vunpack.c.l.b16 %v5340
    %v5533 = vunpack.c.h.b16 %v5340
    %v5534 = vunpack.c.l.b16 %v5341
    %v5535 = vunpack.c.h.b16 %v5341
    %v5536 = vunpack.c.l.b16 %v5342
    %v5537 = vunpack.c.h.b16 %v5342
    %v5538 = vunpack.c.l.b16 %v5343
    %v5539 = vunpack.c.h.b16 %v5343
    %v5540 = vunpack.c.l.b16 %v5344
    %v5541 = vunpack.c.h.b16 %v5344
    %v5542 = vunpack.c.l.b16 %v5345
    %v5543 = vunpack.c.h.b16 %v5345
    %v5544 = vunpack.c.l.b16 %v5346
    %v5545 = vunpack.c.h.b16 %v5346
    %v5546 = vunpack.c.l.b16 %v5347
    %v5547 = vunpack.c.h.b16 %v5347
    %v5548 = vunpack.c.l.b16 %v5348
    %v5549 = vunpack.c.h.b16 %v5348
    %v5550 = vunpack.c.l.b16 %v5349
    %v5551 = vunpack.c.h.b16 %v5349
    %v5552 = vunpack.c.l.b16 %v5350
    %v5553 = vunpack.c.h.b16 %v5350
    %v5554 = vunpack.c.l.b16 %v5351
    %v5555 = vunpack.c.h.b16 %v5351
    %v5556 = vunpack.c.l.b16 %v5352
    %v5557 = vunpack.c.h.b16 %v5352
    %v5558 = vunpack.c.l.b16 %v5353
    %v5559 = vunpack.c.h.b16 %v5353
    %v5560 = vunpack.c.l.b16 %v5354
    %v5561 = vunpack.c.h.b16 %v5354
    %v5562 = vunpack.c.l.b16 %v5355
    %v5563 = vunpack.c.h.b16 %v5355
    %v5564 = vunpack.c.l.b16 %v5356
    %v5565 = vunpack.c.h.b16 %v5356
    %v5566 = vunpack.c.l.b16 %v5357
    %v5567 = vunpack.c.h.b16 %v5357
    %v5568 = vunpack.c.l.b16 %v5358
    %v5569 = vunpack.c.h.b16 %v5358
    %v5570 = vunpack.c.l.b16 %v5359
    %v5571 = vunpack.c.h.b16 %v5359
    %v5572 = vunpack.c.l.b16 %v5360
    %v5573 = vunpack.c.h.b16 %v5360
    %v5574 = vunpack.c.l.b16 %v5361
    %v5575 = vunpack.c.h.b16 %v5361
    %v5576 = vpack.c.b16 %v5452, %v5448
    %v5577 = vpack.c.b16 %v5453, %v5449
    %v5578 = vpack.c.b16 %v5454, %v5450
    %v5579 = vpack.c.b16 %v5455, %v5451
    %v5580 = vpack.c.b16 %v5460, %v5456
    %v5581 = vpack.c.b16 %v5461, %v5457
    %v5582 = vpack.c.b16 %v5462, %v5458
    %v5583 = vpack.c.b16 %v5463, %v5459
    %v5584 = vpack.c.b16 %v5468, %v5464
    %v5585 = vpack.c.b16 %v5469, %v5465
    %v5586 = vpack.c.b16 %v5470, %v5466
    %v5587 = vpack.c.b16 %v5471, %v5467
    %v5588 = vpack.c.b16 %v5476, %v5472
    %v5589 = vpack.c.b16 %v5477, %v5473
    %v5590 = vpack.c.b16 %v5478, %v5474
    %v5591 = vpack.c.b16 %v5479, %v5475
    %v5592 = vpack.c.b16 %v5484, %v5480
    %v5593 = vpack.c.b16 %v5485, %v5481
    %v5594 = vpack.c.b16 %v5486, %v5482
    %v5595 = vpack.c.b16 %v5487, %v5483
    %v5596 = vpack.c.b16 %v5492, %v5488
    %v5597 = vpack.c.b16 %v5493, %v5489
    %v5598 = vpack.c.b16 %v5494, %v5490
    %v5599 = vpack.c.b16 %v5495, %v5491
    %v5600 = vpack.c.b16 %v5500, %v5496
    %v5601 = vpack.c.b16 %v5501, %v5497
    %v5602 = vpack.c.b16 %v5502, %v5498
    %v5603 = vpack.c.b16 %v5503, %v5499
    %v5604 = vpack.c.b16 %v5508, %v5504
    %v5605 = vpack.c.b16 %v5509, %v5505
    %v5606 = vpack.c.b16 %v5510, %v5506
    %v5607 = vpack.c.b16 %v5511, %v5507
    %v5608 = vpack.c.b16 %v5516, %v5512
    %v5609 = vpack.c.b16 %v5517, %v5513
    %v5610 = vpack.c.b16 %v5518, %v5514
    %v5611 = vpack.c.b16 %v5519, %v5515
    %v5612 = vpack.c.b16 %v5524, %v5520
    %v5613 = vpack.c.b16 %v5525, %v5521
    %v5614 = vpack.c.b16 %v5526, %v5522
    %v5615 = vpack.c.b16 %v5527, %v5523
    %v5616 = vpack.c.b16 %v5532, %v5528
    %v5617 = vpack.c.b16 %v5533, %v5529
    %v5618 = vpack.c.b16 %v5534, %v5530
    %v5619 = vpack.c.b16 %v5535, %v5531
    %v5620 = vpack.c.b16 %v5540, %v5536
    %v5621 = vpack.c.b16 %v5541, %v5537
    %v5622 = vpack.c.b16 %v5542, %v5538
    %v5623 = vpack.c.b16 %v5543, %v5539
    %v5624 = vpack.c.b16 %v5548, %v5544
    %v5625 = vpack.c.b16 %v5549, %v5545
    %v5626 = vpack.c.b16 %v5550, %v5546
    %v5627 = vpack.c.b16 %v5551, %v5547
    %v5628 = vpack.c.b16 %v5556, %v5552
    %v5629 = vpack.c.b16 %v5557, %v5553
    %v5630 = vpack.c.b16 %v5558, %v5554
    %v5631 = vpack.c.b16 %v5559, %v5555
    %v5632 = vpack.c.b16 %v5564, %v5560
    %v5633 = vpack.c.b16 %v5565, %v5561
    %v5634 = vpack.c.b16 %v5566, %v5562
    %v5635 = vpack.c.b16 %v5567, %v5563
    %v5636 = vpack.c.b16 %v5572, %v5568
    %v5637 = vpack.c.b16 %v5573, %v5569
    %v5638 = vpack.c.b16 %v5574, %v5570
    %v5639 = vpack.c.b16 %v5575, %v5571
    %5704 = vmatprep.subr.bf16.mxu0 %v5605
    %5705 = vmatpush1.bf16.msra.mxu0 %v5604
    %5706 = vmatprep.subr.bf16.mxu0 %v5601
    %5707 = vmatpush1.bf16.msra.mxu0 %v5600
    %5708 = vmatprep.subr.bf16.mxu0 %v5597
    %5709 = vmatpush1.bf16.msra.mxu0 %v5596
    %5710 = vmatprep.subr.bf16.mxu0 %v5593
    %5711 = vmatpush1.bf16.msra.mxu0 %v5592
    %5712 = vmatprep.subr.bf16.mxu0 %v5589
    %5713 = vmatpush1.bf16.msra.mxu0 %v5588
    %5714 = vmatprep.subr.bf16.mxu0 %v5585
    %5715 = vmatpush1.bf16.msra.mxu0 %v5584
    %5716 = vmatprep.subr.bf16.mxu0 %v5581
    %5717 = vmatpush1.bf16.msra.mxu0 %v5580
    %5718 = vmatprep.subr.bf16.mxu0 %v5577
    %5719 = vmatpush1.bf16.msra.mxu0 %v5576
    %5720 = vmatprep.subr.bf16.mxu0 %v5637
    %5721 = vmatpush2.bf16.msra.mxu0 %v5636
    %5722 = vmatprep.subr.bf16.mxu0 %v5633
    %5723 = vmatpush2.bf16.msra.mxu0 %v5632
    %5724 = vmatprep.subr.bf16.mxu0 %v5629
    %5725 = vmatpush2.bf16.msra.mxu0 %v5628
    %5726 = vmatprep.subr.bf16.mxu0 %v5625
    %5727 = vmatpush2.bf16.msra.mxu0 %v5624
    %5728 = vmatprep.subr.bf16.mxu0 %v5621
    %5729 = vmatpush2.bf16.msra.mxu0 %v5620
    %5730 = vmatprep.subr.bf16.mxu0 %v5617
    %5731 = vmatpush2.bf16.msra.mxu0 %v5616
    %5732 = vmatprep.subr.bf16.mxu0 %v5613
    %5733 = vmatpush2.bf16.msra.mxu0 %v5612
    %5734 = vmatprep.subr.bf16.mxu0 %v5609
    %5735 = vmatpush2.bf16.msra.mxu0 %v5608
    %5736 = vmatprep.mubr.bf16.mxu0 %v5297
    %5737 = vmatmul.mubr.bf16.gmra.mxu0 %v5294
    %v5738 = vpop.f32.mrf.mxu0
    %v5739 = vadd.f32 %v5367, %v5738
    %v5740 = vpop.f32.mrf.mxu0
    %v5741 = vadd.f32 %v5371, %v5740
    %v5742 = vpop.f32.mrf.mxu0
    %v5743 = vpop.f32.mrf.mxu0
    %5744 = vdwg.mxu0
    %5745 = vmatprep.subr.bf16.mxu0 %v5607
    %5746 = vmatpush1.bf16.msra.mxu0 %v5606
    %5747 = vmatprep.subr.bf16.mxu0 %v5603
    %5748 = vmatpush1.bf16.msra.mxu0 %v5602
    %5749 = vmatprep.subr.bf16.mxu0 %v5599
    %5750 = vmatpush1.bf16.msra.mxu0 %v5598
    %5751 = vmatprep.subr.bf16.mxu0 %v5595
    %5752 = vmatpush1.bf16.msra.mxu0 %v5594
    %5753 = vmatprep.subr.bf16.mxu0 %v5591
    %5754 = vmatpush1.bf16.msra.mxu0 %v5590
    %5755 = vmatprep.subr.bf16.mxu0 %v5587
    %5756 = vmatpush1.bf16.msra.mxu0 %v5586
    %5757 = vmatprep.subr.bf16.mxu0 %v5583
    %5758 = vmatpush1.bf16.msra.mxu0 %v5582
    %5759 = vmatprep.subr.bf16.mxu0 %v5579
    %5760 = vmatpush1.bf16.msra.mxu0 %v5578
    %5761 = vmatprep.subr.bf16.mxu0 %v5639
    %5762 = vmatpush2.bf16.msra.mxu0 %v5638
    %5763 = vmatprep.subr.bf16.mxu0 %v5635
    %5764 = vmatpush2.bf16.msra.mxu0 %v5634
    %5765 = vmatprep.subr.bf16.mxu0 %v5631
    %5766 = vmatpush2.bf16.msra.mxu0 %v5630
    %5767 = vmatprep.subr.bf16.mxu0 %v5627
    %5768 = vmatpush2.bf16.msra.mxu0 %v5626
    %5769 = vmatprep.subr.bf16.mxu0 %v5623
    %5770 = vmatpush2.bf16.msra.mxu0 %v5622
    %5771 = vmatprep.subr.bf16.mxu0 %v5619
    %5772 = vmatpush2.bf16.msra.mxu0 %v5618
    %5773 = vmatprep.subr.bf16.mxu0 %v5615
    %5774 = vmatpush2.bf16.msra.mxu0 %v5614
    %5775 = vmatprep.subr.bf16.mxu0 %v5611
    %5776 = vmatpush2.bf16.msra.mxu0 %v5610
    %5777 = vmatprep.mubr.bf16.mxu0 %v5297
    %5778 = vmatmul.mubr.bf16.gmra.mxu0 %v5294
    %v5779 = vpop.f32.mrf.mxu0
    %v5780 = vadd.f32 %v5375, %v5779
    %v5781 = vpop.f32.mrf.mxu0
    %v5782 = vadd.f32 %v5379, %v5781
    %v5783 = vpop.f32.mrf.mxu0
    %v5784 = vpop.f32.mrf.mxu0
    %5785 = vdwg.mxu0
    %v5786 = vxor.u32 %v5739, 2147483648
    %v5787 = vxor.u32 %v5741, 2147483648
    %v5788 = vxor.u32 %v5780, 2147483648
    %v5789 = vmul.f32 %v5786, 1.442695
    %v5790 = vpow.pop %v5789
    %v5791 = vmul.f32 %v5787, 1.442695
    %v5792 = vpow.pop %v5791
    %v5793 = vmul.f32 %v5788, 1.442695
    %v5794 = vpow.pop %v5793
    %v5795 = vadd.f32 %v5790, 1.0
    %v5796 = vadd.f32 %v5792, 1.0
    %v5797 = vadd.f32 %v5794, 1.0
    %v5798 = vrcp.pop %v5795
    %v5799 = vmul.f32 1.0, %v5798
    %v5800 = vrcp.pop %v5796
    %v5801 = vmul.f32 1.0, %v5800
    %v5802 = vrcp.pop %v5797
    %v5803 = vmul.f32 1.0, %v5802
    %v5804 = vtanh.pop %v5782
    %v5805 = vmul.f32 %v5801, %v5296
    %v5806 = vmul.f32 %v5799, %v5804
    %v5807 = vadd.f32 %v5805, %v5806
    %v5808 = vtanh.pop %v5807
    %v5809 = vmul.f32 %v5803, %v5808
    %5810 = vst [vmem:[#allocation11] sm:$0xff] %v5809
    %5811 = vst [vmem:[#allocation13] sm:$0xff] %v5807
    %v5812 = vpack.c.bf16 %v5809, %v5809
    %v5813 = vld [vmem:[%s617] sm:$0xff]
    %v5814 = vld [vmem:[%s619] sm:$0xff]
    %v5815 = vpack.c.bf16 %v5813, %v5813
    %v5816 = vld [vmem:[#allocation8] sm:$0xff]
    %v5817 = vld [vmem:[#allocation8 + $0x8] sm:$0xff]
    %v5818 = vld [vmem:[#allocation8 + $0x10] sm:$0xff]
    %v5819 = vld [vmem:[#allocation8 + $0x18] sm:$0xff]
    %v5820 = vld [vmem:[#allocation8 + $0x20] sm:$0xff]
    %v5821 = vld [vmem:[#allocation8 + $0x28] sm:$0xff]
    %v5822 = vld [vmem:[#allocation8 + $0x30] sm:$0xff]
    %v5823 = vld [vmem:[#allocation8 + $0x38] sm:$0xff]
    %v5824 = vld [vmem:[#allocation8 + $0x40] sm:$0xff]
    %v5825 = vld [vmem:[#allocation8 + $0x48] sm:$0xff]
    %v5826 = vld [vmem:[#allocation8 + $0x50] sm:$0xff]
    %v5827 = vld [vmem:[#allocation8 + $0x58] sm:$0xff]
    %v5828 = vld [vmem:[#allocation8 + $0x60] sm:$0xff]
    %v5829 = vld [vmem:[#allocation8 + $0x68] sm:$0xff]
    %v5830 = vld [vmem:[#allocation8 + $0x70] sm:$0xff]
    %v5831 = vld [vmem:[#allocation8 + $0x78] sm:$0xff]
    %v5832 = vld [vmem:[#allocation8 + $0x80] sm:$0xff]
    %v5833 = vld [vmem:[#allocation8 + $0x88] sm:$0xff]
    %v5834 = vld [vmem:[#allocation8 + $0x90] sm:$0xff]
    %v5835 = vld [vmem:[#allocation8 + $0x98] sm:$0xff]
    %v5836 = vld [vmem:[#allocation8 + $0xa0] sm:$0xff]
    %v5837 = vld [vmem:[#allocation8 + $0xa8] sm:$0xff]
    %v5838 = vld [vmem:[#allocation8 + $0xb0] sm:$0xff]
    %v5839 = vld [vmem:[#allocation8 + $0xb8] sm:$0xff]
    %v5840 = vld [vmem:[#allocation8 + $0xc0] sm:$0xff]
    %v5841 = vld [vmem:[#allocation8 + $0xc8] sm:$0xff]
    %v5842 = vld [vmem:[#allocation8 + $0xd0] sm:$0xff]
    %v5843 = vld [vmem:[#allocation8 + $0xd8] sm:$0xff]
    %v5844 = vld [vmem:[#allocation8 + $0xe0] sm:$0xff]
    %v5845 = vld [vmem:[#allocation8 + $0xe8] sm:$0xff]
    %v5846 = vld [vmem:[#allocation8 + $0xf0] sm:$0xff]
    %v5847 = vld [vmem:[#allocation8 + $0xf8] sm:$0xff]
    %v5848 = vld [vmem:[#allocation8 + $0x100] sm:$0xff]
    %v5849 = vld [vmem:[#allocation8 + $0x108] sm:$0xff]
    %v5850 = vld [vmem:[#allocation8 + $0x110] sm:$0xff]
    %v5851 = vld [vmem:[#allocation8 + $0x118] sm:$0xff]
    %v5852 = vld [vmem:[#allocation8 + $0x120] sm:$0xff]
    %v5853 = vld [vmem:[#allocation8 + $0x128] sm:$0xff]
    %v5854 = vld [vmem:[#allocation8 + $0x130] sm:$0xff]
    %v5855 = vld [vmem:[#allocation8 + $0x138] sm:$0xff]
    %v5856 = vld [vmem:[#allocation8 + $0x140] sm:$0xff]
    %v5857 = vld [vmem:[#allocation8 + $0x148] sm:$0xff]
    %v5858 = vld [vmem:[#allocation8 + $0x150] sm:$0xff]
    %v5859 = vld [vmem:[#allocation8 + $0x158] sm:$0xff]
    %v5860 = vld [vmem:[#allocation8 + $0x160] sm:$0xff]
    %v5861 = vld [vmem:[#allocation8 + $0x168] sm:$0xff]
    %v5862 = vld [vmem:[#allocation8 + $0x170] sm:$0xff]
    %v5863 = vld [vmem:[#allocation8 + $0x178] sm:$0xff]
    %v5864 = vld [vmem:[#allocation8 + $0x180] sm:$0xff]
    %v5865 = vld [vmem:[#allocation8 + $0x188] sm:$0xff]
    %v5866 = vld [vmem:[#allocation8 + $0x190] sm:$0xff]
    %v5867 = vld [vmem:[#allocation8 + $0x198] sm:$0xff]
    %v5868 = vld [vmem:[#allocation8 + $0x1a0] sm:$0xff]
    %v5869 = vld [vmem:[#allocation8 + $0x1a8] sm:$0xff]
    %v5870 = vld [vmem:[#allocation8 + $0x1b0] sm:$0xff]
    %v5871 = vld [vmem:[#allocation8 + $0x1b8] sm:$0xff]
    %v5872 = vld [vmem:[#allocation8 + $0x1c0] sm:$0xff]
    %v5873 = vld [vmem:[#allocation8 + $0x1c8] sm:$0xff]
    %v5874 = vld [vmem:[#allocation8 + $0x1d0] sm:$0xff]
    %v5875 = vld [vmem:[#allocation8 + $0x1d8] sm:$0xff]
    %v5876 = vld [vmem:[#allocation8 + $0x1e0] sm:$0xff]
    %v5877 = vld [vmem:[#allocation8 + $0x1e8] sm:$0xff]
    %v5878 = vld [vmem:[#allocation8 + $0x1f0] sm:$0xff]
    %v5879 = vld [vmem:[#allocation8 + $0x1f8] sm:$0xff]
    %v5880 = vld [vmem:[%s6] sm:$0xf]
    %v5882 = vlaneseq
    %v5883 = vshrl.u32 %v5882, 7
    %v5884 = vsub.s32 0, %v5883
    %v5885 = vrot.slane %v5880, %v5884
    %v5886 = vlaneseq
    %v5887 = vshrl.u32 %v5886, 7
    %v5888 = vsub.s32 1, %v5887
    %v5889 = vrot.slane %v5880, %v5888
    %v5890 = vlaneseq
    %v5891 = vshrl.u32 %v5890, 7
    %v5892 = vsub.s32 2, %v5891
    %v5893 = vrot.slane %v5880, %v5892
    %v5894 = vlaneseq
    %v5895 = vshrl.u32 %v5894, 7
    %v5896 = vsub.s32 3, %v5895
    %v5897 = vrot.slane %v5880, %v5896
    %v5966 = vunpack.c.l.b16 %v5816
    %v5967 = vunpack.c.h.b16 %v5816
    %v5968 = vunpack.c.l.b16 %v5817
    %v5969 = vunpack.c.h.b16 %v5817
    %v5970 = vunpack.c.l.b16 %v5818
    %v5971 = vunpack.c.h.b16 %v5818
    %v5972 = vunpack.c.l.b16 %v5819
    %v5973 = vunpack.c.h.b16 %v5819
    %v5974 = vunpack.c.l.b16 %v5820
    %v5975 = vunpack.c.h.b16 %v5820
    %v5976 = vunpack.c.l.b16 %v5821
    %v5977 = vunpack.c.h.b16 %v5821
    %v5978 = vunpack.c.l.b16 %v5822
    %v5979 = vunpack.c.h.b16 %v5822
    %v5980 = vunpack.c.l.b16 %v5823
    %v5981 = vunpack.c.h.b16 %v5823
    %v5982 = vunpack.c.l.b16 %v5824
    %v5983 = vunpack.c.h.b16 %v5824
    %v5984 = vunpack.c.l.b16 %v5825
    %v5985 = vunpack.c.h.b16 %v5825
    %v5986 = vunpack.c.l.b16 %v5826
    %v5987 = vunpack.c.h.b16 %v5826
    %v5988 = vunpack.c.l.b16 %v5827
    %v5989 = vunpack.c.h.b16 %v5827
    %v5990 = vunpack.c.l.b16 %v5828
    %v5991 = vunpack.c.h.b16 %v5828
    %v5992 = vunpack.c.l.b16 %v5829
    %v5993 = vunpack.c.h.b16 %v5829
    %v5994 = vunpack.c.l.b16 %v5830
    %v5995 = vunpack.c.h.b16 %v5830
    %v5996 = vunpack.c.l.b16 %v5831
    %v5997 = vunpack.c.h.b16 %v5831
    %v5998 = vunpack.c.l.b16 %v5832
    %v5999 = vunpack.c.h.b16 %v5832
    %v6000 = vunpack.c.l.b16 %v5833
    %v6001 = vunpack.c.h.b16 %v5833
    %v6002 = vunpack.c.l.b16 %v5834
    %v6003 = vunpack.c.h.b16 %v5834
    %v6004 = vunpack.c.l.b16 %v5835
    %v6005 = vunpack.c.h.b16 %v5835
    %v6006 = vunpack.c.l.b16 %v5836
    %v6007 = vunpack.c.h.b16 %v5836
    %v6008 = vunpack.c.l.b16 %v5837
    %v6009 = vunpack.c.h.b16 %v5837
    %v6010 = vunpack.c.l.b16 %v5838
    %v6011 = vunpack.c.h.b16 %v5838
    %v6012 = vunpack.c.l.b16 %v5839
    %v6013 = vunpack.c.h.b16 %v5839
    %v6014 = vunpack.c.l.b16 %v5840
    %v6015 = vunpack.c.h.b16 %v5840
    %v6016 = vunpack.c.l.b16 %v5841
    %v6017 = vunpack.c.h.b16 %v5841
    %v6018 = vunpack.c.l.b16 %v5842
    %v6019 = vunpack.c.h.b16 %v5842
    %v6020 = vunpack.c.l.b16 %v5843
    %v6021 = vunpack.c.h.b16 %v5843
    %v6022 = vunpack.c.l.b16 %v5844
    %v6023 = vunpack.c.h.b16 %v5844
    %v6024 = vunpack.c.l.b16 %v5845
    %v6025 = vunpack.c.h.b16 %v5845
    %v6026 = vunpack.c.l.b16 %v5846
    %v6027 = vunpack.c.h.b16 %v5846
    %v6028 = vunpack.c.l.b16 %v5847
    %v6029 = vunpack.c.h.b16 %v5847
    %v6030 = vunpack.c.l.b16 %v5848
    %v6031 = vunpack.c.h.b16 %v5848
    %v6032 = vunpack.c.l.b16 %v5849
    %v6033 = vunpack.c.h.b16 %v5849
    %v6034 = vunpack.c.l.b16 %v5850
    %v6035 = vunpack.c.h.b16 %v5850
    %v6036 = vunpack.c.l.b16 %v5851
    %v6037 = vunpack.c.h.b16 %v5851
    %v6038 = vunpack.c.l.b16 %v5852
    %v6039 = vunpack.c.h.b16 %v5852
    %v6040 = vunpack.c.l.b16 %v5853
    %v6041 = vunpack.c.h.b16 %v5853
    %v6042 = vunpack.c.l.b16 %v5854
    %v6043 = vunpack.c.h.b16 %v5854
    %v6044 = vunpack.c.l.b16 %v5855
    %v6045 = vunpack.c.h.b16 %v5855
    %v6046 = vunpack.c.l.b16 %v5856
    %v6047 = vunpack.c.h.b16 %v5856
    %v6048 = vunpack.c.l.b16 %v5857
    %v6049 = vunpack.c.h.b16 %v5857
    %v6050 = vunpack.c.l.b16 %v5858
    %v6051 = vunpack.c.h.b16 %v5858
    %v6052 = vunpack.c.l.b16 %v5859
    %v6053 = vunpack.c.h.b16 %v5859
    %v6054 = vunpack.c.l.b16 %v5860
    %v6055 = vunpack.c.h.b16 %v5860
    %v6056 = vunpack.c.l.b16 %v5861
    %v6057 = vunpack.c.h.b16 %v5861
    %v6058 = vunpack.c.l.b16 %v5862
    %v6059 = vunpack.c.h.b16 %v5862
    %v6060 = vunpack.c.l.b16 %v5863
    %v6061 = vunpack.c.h.b16 %v5863
    %v6062 = vunpack.c.l.b16 %v5864
    %v6063 = vunpack.c.h.b16 %v5864
    %v6064 = vunpack.c.l.b16 %v5865
    %v6065 = vunpack.c.h.b16 %v5865
    %v6066 = vunpack.c.l.b16 %v5866
    %v6067 = vunpack.c.h.b16 %v5866
    %v6068 = vunpack.c.l.b16 %v5867
    %v6069 = vunpack.c.h.b16 %v5867
    %v6070 = vunpack.c.l.b16 %v5868
    %v6071 = vunpack.c.h.b16 %v5868
    %v6072 = vunpack.c.l.b16 %v5869
    %v6073 = vunpack.c.h.b16 %v5869
    %v6074 = vunpack.c.l.b16 %v5870
    %v6075 = vunpack.c.h.b16 %v5870
    %v6076 = vunpack.c.l.b16 %v5871
    %v6077 = vunpack.c.h.b16 %v5871
    %v6078 = vunpack.c.l.b16 %v5872
    %v6079 = vunpack.c.h.b16 %v5872
    %v6080 = vunpack.c.l.b16 %v5873
    %v6081 = vunpack.c.h.b16 %v5873
    %v6082 = vunpack.c.l.b16 %v5874
    %v6083 = vunpack.c.h.b16 %v5874
    %v6084 = vunpack.c.l.b16 %v5875
    %v6085 = vunpack.c.h.b16 %v5875
    %v6086 = vunpack.c.l.b16 %v5876
    %v6087 = vunpack.c.h.b16 %v5876
    %v6088 = vunpack.c.l.b16 %v5877
    %v6089 = vunpack.c.h.b16 %v5877
    %v6090 = vunpack.c.l.b16 %v5878
    %v6091 = vunpack.c.h.b16 %v5878
    %v6092 = vunpack.c.l.b16 %v5879
    %v6093 = vunpack.c.h.b16 %v5879
    %v6094 = vpack.c.b16 %v5970, %v5966
    %v6095 = vpack.c.b16 %v5971, %v5967
    %v6096 = vpack.c.b16 %v5972, %v5968
    %v6097 = vpack.c.b16 %v5973, %v5969
    %v6098 = vpack.c.b16 %v5978, %v5974
    %v6099 = vpack.c.b16 %v5979, %v5975
    %v6100 = vpack.c.b16 %v5980, %v5976
    %v6101 = vpack.c.b16 %v5981, %v5977
    %v6102 = vpack.c.b16 %v5986, %v5982
    %v6103 = vpack.c.b16 %v5987, %v5983
    %v6104 = vpack.c.b16 %v5988, %v5984
    %v6105 = vpack.c.b16 %v5989, %v5985
    %v6106 = vpack.c.b16 %v5994, %v5990
    %v6107 = vpack.c.b16 %v5995, %v5991
    %v6108 = vpack.c.b16 %v5996, %v5992
    %v6109 = vpack.c.b16 %v5997, %v5993
    %v6110 = vpack.c.b16 %v6002, %v5998
    %v6111 = vpack.c.b16 %v6003, %v5999
    %v6112 = vpack.c.b16 %v6004, %v6000
    %v6113 = vpack.c.b16 %v6005, %v6001
    %v6114 = vpack.c.b16 %v6010, %v6006
    %v6115 = vpack.c.b16 %v6011, %v6007
    %v6116 = vpack.c.b16 %v6012, %v6008
    %v6117 = vpack.c.b16 %v6013, %v6009
    %v6118 = vpack.c.b16 %v6018, %v6014
    %v6119 = vpack.c.b16 %v6019, %v6015
    %v6120 = vpack.c.b16 %v6020, %v6016
    %v6121 = vpack.c.b16 %v6021, %v6017
    %v6122 = vpack.c.b16 %v6026, %v6022
    %v6123 = vpack.c.b16 %v6027, %v6023
    %v6124 = vpack.c.b16 %v6028, %v6024
    %v6125 = vpack.c.b16 %v6029, %v6025
    %v6126 = vpack.c.b16 %v6034, %v6030
    %v6127 = vpack.c.b16 %v6035, %v6031
    %v6128 = vpack.c.b16 %v6036, %v6032
    %v6129 = vpack.c.b16 %v6037, %v6033
    %v6130 = vpack.c.b16 %v6042, %v6038
    %v6131 = vpack.c.b16 %v6043, %v6039
    %v6132 = vpack.c.b16 %v6044, %v6040
    %v6133 = vpack.c.b16 %v6045, %v6041
    %v6134 = vpack.c.b16 %v6050, %v6046
    %v6135 = vpack.c.b16 %v6051, %v6047
    %v6136 = vpack.c.b16 %v6052, %v6048
    %v6137 = vpack.c.b16 %v6053, %v6049
    %v6138 = vpack.c.b16 %v6058, %v6054
    %v6139 = vpack.c.b16 %v6059, %v6055
    %v6140 = vpack.c.b16 %v6060, %v6056
    %v6141 = vpack.c.b16 %v6061, %v6057
    %v6142 = vpack.c.b16 %v6066, %v6062
    %v6143 = vpack.c.b16 %v6067, %v6063
    %v6144 = vpack.c.b16 %v6068, %v6064
    %v6145 = vpack.c.b16 %v6069, %v6065
    %v6146 = vpack.c.b16 %v6074, %v6070
    %v6147 = vpack.c.b16 %v6075, %v6071
    %v6148 = vpack.c.b16 %v6076, %v6072
    %v6149 = vpack.c.b16 %v6077, %v6073
    %v6150 = vpack.c.b16 %v6082, %v6078
    %v6151 = vpack.c.b16 %v6083, %v6079
    %v6152 = vpack.c.b16 %v6084, %v6080
    %v6153 = vpack.c.b16 %v6085, %v6081
    %v6154 = vpack.c.b16 %v6090, %v6086
    %v6155 = vpack.c.b16 %v6091, %v6087
    %v6156 = vpack.c.b16 %v6092, %v6088
    %v6157 = vpack.c.b16 %v6093, %v6089
    %6222 = vmatprep.subr.bf16.mxu0 %v6123
    %6223 = vmatpush1.bf16.msra.mxu0 %v6122
    %6224 = vmatprep.subr.bf16.mxu0 %v6119
    %6225 = vmatpush1.bf16.msra.mxu0 %v6118
    %6226 = vmatprep.subr.bf16.mxu0 %v6115
    %6227 = vmatpush1.bf16.msra.mxu0 %v6114
    %6228 = vmatprep.subr.bf16.mxu0 %v6111
    %6229 = vmatpush1.bf16.msra.mxu0 %v6110
    %6230 = vmatprep.subr.bf16.mxu0 %v6107
    %6231 = vmatpush1.bf16.msra.mxu0 %v6106
    %6232 = vmatprep.subr.bf16.mxu0 %v6103
    %6233 = vmatpush1.bf16.msra.mxu0 %v6102
    %6234 = vmatprep.subr.bf16.mxu0 %v6099
    %6235 = vmatpush1.bf16.msra.mxu0 %v6098
    %6236 = vmatprep.subr.bf16.mxu0 %v6095
    %6237 = vmatpush1.bf16.msra.mxu0 %v6094
    %6238 = vmatprep.subr.bf16.mxu0 %v6155
    %6239 = vmatpush2.bf16.msra.mxu0 %v6154
    %6240 = vmatprep.subr.bf16.mxu0 %v6151
    %6241 = vmatpush2.bf16.msra.mxu0 %v6150
    %6242 = vmatprep.subr.bf16.mxu0 %v6147
    %6243 = vmatpush2.bf16.msra.mxu0 %v6146
    %6244 = vmatprep.subr.bf16.mxu0 %v6143
    %6245 = vmatpush2.bf16.msra.mxu0 %v6142
    %6246 = vmatprep.subr.bf16.mxu0 %v6139
    %6247 = vmatpush2.bf16.msra.mxu0 %v6138
    %6248 = vmatprep.subr.bf16.mxu0 %v6135
    %6249 = vmatpush2.bf16.msra.mxu0 %v6134
    %6250 = vmatprep.subr.bf16.mxu0 %v6131
    %6251 = vmatpush2.bf16.msra.mxu0 %v6130
    %6252 = vmatprep.subr.bf16.mxu0 %v6127
    %6253 = vmatpush2.bf16.msra.mxu0 %v6126
    %6254 = vmatprep.mubr.bf16.mxu0 %v5815
    %6255 = vmatmul.mubr.bf16.gmra.mxu0 %v5812
    %v6256 = vpop.f32.mrf.mxu0
    %v6257 = vadd.f32 %v5885, %v6256
    %v6258 = vpop.f32.mrf.mxu0
    %v6259 = vadd.f32 %v5889, %v6258
    %v6260 = vpop.f32.mrf.mxu0
    %v6261 = vpop.f32.mrf.mxu0
    %6262 = vdwg.mxu0
    %6263 = vmatprep.subr.bf16.mxu0 %v6125
    %6264 = vmatpush1.bf16.msra.mxu0 %v6124
    %6265 = vmatprep.subr.bf16.mxu0 %v6121
    %6266 = vmatpush1.bf16.msra.mxu0 %v6120
    %6267 = vmatprep.subr.bf16.mxu0 %v6117
    %6268 = vmatpush1.bf16.msra.mxu0 %v6116
    %6269 = vmatprep.subr.bf16.mxu0 %v6113
    %6270 = vmatpush1.bf16.msra.mxu0 %v6112
    %6271 = vmatprep.subr.bf16.mxu0 %v6109
    %6272 = vmatpush1.bf16.msra.mxu0 %v6108
    %6273 = vmatprep.subr.bf16.mxu0 %v6105
    %6274 = vmatpush1.bf16.msra.mxu0 %v6104
    %6275 = vmatprep.subr.bf16.mxu0 %v6101
    %6276 = vmatpush1.bf16.msra.mxu0 %v6100
    %6277 = vmatprep.subr.bf16.mxu0 %v6097
    %6278 = vmatpush1.bf16.msra.mxu0 %v6096
    %6279 = vmatprep.subr.bf16.mxu0 %v6157
    %6280 = vmatpush2.bf16.msra.mxu0 %v6156
    %6281 = vmatprep.subr.bf16.mxu0 %v6153
    %6282 = vmatpush2.bf16.msra.mxu0 %v6152
    %6283 = vmatprep.subr.bf16.mxu0 %v6149
    %6284 = vmatpush2.bf16.msra.mxu0 %v6148
    %6285 = vmatprep.subr.bf16.mxu0 %v6145
    %6286 = vmatpush2.bf16.msra.mxu0 %v6144
    %6287 = vmatprep.subr.bf16.mxu0 %v6141
    %6288 = vmatpush2.bf16.msra.mxu0 %v6140
    %6289 = vmatprep.subr.bf16.mxu0 %v6137
    %6290 = vmatpush2.bf16.msra.mxu0 %v6136
    %6291 = vmatprep.subr.bf16.mxu0 %v6133
    %6292 = vmatpush2.bf16.msra.mxu0 %v6132
    %6293 = vmatprep.subr.bf16.mxu0 %v6129
    %6294 = vmatpush2.bf16.msra.mxu0 %v6128
    %6295 = vmatprep.mubr.bf16.mxu0 %v5815
    %6296 = vmatmul.mubr.bf16.gmra.mxu0 %v5812
    %v6297 = vpop.f32.mrf.mxu0
    %v6298 = vadd.f32 %v5893, %v6297
    %v6299 = vpop.f32.mrf.mxu0
    %v6300 = vadd.f32 %v5897, %v6299
    %v6301 = vpop.f32.mrf.mxu0
    %v6302 = vpop.f32.mrf.mxu0
    %6303 = vdwg.mxu0
    %v6304 = vxor.u32 %v6257, 2147483648
    %v6305 = vxor.u32 %v6259, 2147483648
    %v6306 = vxor.u32 %v6298, 2147483648
    %v6307 = vmul.f32 %v6304, 1.442695
    %v6308 = vpow.pop %v6307
    %v6309 = vmul.f32 %v6305, 1.442695
    %v6310 = vpow.pop %v6309
    %v6311 = vmul.f32 %v6306, 1.442695
    %v6312 = vpow.pop %v6311
    %v6313 = vadd.f32 %v6308, 1.0
    %v6314 = vadd.f32 %v6310, 1.0
    %v6315 = vadd.f32 %v6312, 1.0
    %v6316 = vrcp.pop %v6313
    %v6317 = vmul.f32 1.0, %v6316
    %v6318 = vrcp.pop %v6314
    %v6319 = vmul.f32 1.0, %v6318
    %v6320 = vrcp.pop %v6315
    %v6321 = vmul.f32 1.0, %v6320
    %v6322 = vtanh.pop %v6300
    %v6323 = vmul.f32 %v6319, %v5814
    %v6324 = vmul.f32 %v6317, %v6322
    %v6325 = vadd.f32 %v6323, %v6324
    %v6326 = vtanh.pop %v6325
    %v6327 = vmul.f32 %v6321, %v6326
    %6328 = vst [vmem:[%s617] sm:$0xff] %v6327
    %6329 = vst [vmem:[%s619] sm:$0xff] %v6325
    %s6330 = scalar_lea.vmem [#allocation10], 40
    %6331 = vst [vmem:[%s6330] sm:$0xff] %v6327
    // Predicated region
    $region50: #{tpu_custom_call.1} parent=1 // pred_check
      _
    $region51: #{tpu_custom_call.1} parent=1 // pred_check_branch
      %6333 = sbr.rel (0) target = $region53
    $region52: #{tpu_custom_call.1} parent=1 // pred_region
      %s6335 = ssub.s32 768, 768
      %6336 = vsyncadd [#allocation4], %s6335
      %s6337 = sshll.u32 [#allocation10], 4
      %s6338 = int_to_ptr.vmem [resolvable:$true] %s6337
      %6343 = dma.vmem_to_hbm [thread:$0]  %s6338, 768, %s7, [#allocation4], 128, 128, 8
    $region53: #{tpu_custom_call.1} parent=1 // pred_fallthru
      _
    // Predicated region
    $region54: #{tpu_custom_call.1} parent=1 // pred_check
      _
    $region55: #{tpu_custom_call.1} parent=1 // pred_check_branch
      %6345 = sbr.rel (0) target = $region57
    $region56: #{tpu_custom_call.1} parent=1 // pred_region
      %s6347 = ssub.s32 256, 256
      %6348 = vsyncadd [#allocation12], %s6347
      %s6349 = sshll.u32 [#allocation11], 4
      %s6350 = int_to_ptr.vmem [resolvable:$true] %s6349
      %6355 = dma.vmem_to_hbm [thread:$0]  %s6350, 256, %s8, [#allocation12], 128, 128, 8
    $region57: #{tpu_custom_call.1} parent=1 // pred_fallthru
      _
    // Predicated region
    $region58: #{tpu_custom_call.1} parent=1 // pred_check
      _
    $region59: #{tpu_custom_call.1} parent=1 // pred_check_branch
      %6357 = sbr.rel (0) target = $region61
    $region60: #{tpu_custom_call.1} parent=1 // pred_region
      %s6359 = ssub.s32 256, 256
      %6360 = vsyncadd [#allocation12], %s6359
      %s6361 = sshll.u32 [#allocation13], 4
      %s6362 = int_to_ptr.vmem [resolvable:$true] %s6361
      %6367 = dma.vmem_to_hbm [thread:$0]  %s6362, 256, %s9, [#allocation12], 128, 128, 8
    $region61: #{tpu_custom_call.1} parent=1 // pred_fallthru
      _
    // Predicated region
    $region62: #{tpu_custom_call.1} parent=1 // pred_check
      _
    $region63: #{tpu_custom_call.1} parent=1 // pred_check_branch
      %6369 = sbr.rel (0) target = $region65
    $region64: #{tpu_custom_call.1} parent=1 // pred_region
      %6370 = dma.done [#allocation4], 768
    $region65: #{tpu_custom_call.1} parent=1 // pred_fallthru
      _
    // Predicated region
    $region66: #{tpu_custom_call.1} parent=1 // pred_check
      _
    $region67: #{tpu_custom_call.1} parent=1 // pred_check_branch
      %6372 = sbr.rel (0) target = $region69
    $region68: #{tpu_custom_call.1} parent=1 // pred_region
      %6373 = dma.done [#allocation12], 256
    $region69: #{tpu_custom_call.1} parent=1 // pred_fallthru
      _
    // Predicated region
    $region70: #{tpu_custom_call.1} parent=1 // pred_check
      _
    $region71: #{tpu_custom_call.1} parent=1 // pred_check_branch
      %6375 = sbr.rel (0) target = $region73
    $region72: #{tpu_custom_call.1} parent=1 // pred_region
      %6376 = dma.done [#allocation12], 256
    $region73: #{tpu_custom_call.1} parent=1 // pred_fallthru
      _
    %6377 = vsyncpa [#allocation3], 1
    %6378 = vsyncpa [#allocation6], 1
    %6379 = vsyncpa [#allocation9], 1
    %6380 = vsyncpa [#allocation4], 1
    %6381 = vsyncpa [#allocation12], 1

</llo_original>
